<compile_context>
chip_gen: v7x
topology: tpu7x:2x2x1
jax: 0.10.0
libtpu: 0.0.40
codegen_flags: <defaults>
</compile_context>

<pallas_src>
import numpy as np
import jax
import jax.numpy as jnp
from jax import lax
from jax.experimental import pallas as pl
from jax.experimental.pallas import tpu as pltpu

DIM = 512
HIDDEN = 2048          # MixerBlock hidden = 4 * dim
LN_EPS = 1e-5


# --------------------------------------------------------------------------- #
# Shared in-kernel math
# --------------------------------------------------------------------------- #
def _mixer_from_vf(vf, g, beta, w1, b1, w2, b2):
    """MixerBlock body minus the residual: fc2(gelu(fc1(LN(vf))))."""
    mu = jnp.mean(vf, axis=-1, keepdims=True)
    d = vf - mu
    var = jnp.mean(d * d, axis=-1, keepdims=True)
    xn = d * lax.rsqrt(var + LN_EPS)
    xn = xn * g + beta

    mid = jnp.dot(xn.astype(jnp.bfloat16), w1,
                  preferred_element_type=jnp.float32) + b1
    # tanh GELU -> EUP slot (VALU is the likely saturated slot with exact erf).
    mid = jax.nn.gelu(mid, approximate=True)

    return jnp.dot(mid.astype(jnp.bfloat16), w2,
                   preferred_element_type=jnp.float32) + b2


def _clip_loss(vf, pt, log_scale):
    """Symmetric CLIP loss; lane-major reductions only (no axis=0 reduce)."""
    vf_n = vf * lax.rsqrt(jnp.sum(vf * vf, axis=-1, keepdims=True))
    tf_n = pt * lax.rsqrt(jnp.sum(pt * pt, axis=-1, keepdims=True))
    scale = jnp.exp(log_scale)

    # logits_per_video and logits_per_text via two last-dim/last-dim
    # contractions — the MXU is idle here and this keeps every reduction
    # along the lane axis (no cross-sublane XLU work, no explicit transpose).
    logits_v = scale * lax.dot_general(vf_n, tf_n, (((1,), (1,)), ((), ())),
                                       preferred_element_type=jnp.float32)
    logits_t = scale * lax.dot_general(tf_n, vf_n, (((1,), (1,)), ((), ())),
                                       preferred_element_type=jnp.float32)
    b = logits_v.shape[0]

    # diag(logits) is the row-wise dot product — no (B,B) eye mask.
    diag_sum = scale * jnp.sum(vf_n * tf_n)

    def _lse_sum(lg):
        m = jnp.max(lg, axis=-1, keepdims=True)
        return jnp.sum(jnp.log(jnp.sum(jnp.exp(lg - m), axis=-1, keepdims=True)) + m)

    loss_h = (_lse_sum(logits_v) - diag_sum) / b
    loss_l = (_lse_sum(logits_t) - diag_sum) / b
    return (loss_h + loss_l) * 0.5


# --------------------------------------------------------------------------- #
# Kernel A1: fused encode + loss (single batch tile, grid-less call)
# --------------------------------------------------------------------------- #
def _fused_kernel(scale_ref,                     # SMEM (1,1): log logit-scale
                  h_ref,                         # (B, in_dim) bf16
                  wd_ref, bd_ref,                # (in_dim, 512) bf16, (1, 512) f32
                  g_ref, beta_ref,               # LN gamma/beta (1, 512) f32
                  w1_ref, b1_ref,                # (512, H) bf16, (1, H) f32
                  w2_ref, b2_ref,                # (H, 512) bf16, (1, 512) f32
                  pt_ref,                        # out: (B, 512) f32
                  loss_ref):                     # out: SMEM (1,1) f32
    vf = jnp.dot(h_ref[...], wd_ref[...],
                 preferred_element_type=jnp.float32) + bd_ref[...]
    out = _mixer_from_vf(vf, g_ref[...], beta_ref[...],
                         w1_ref[...], b1_ref[...], w2_ref[...], b2_ref[...])
    pt = vf + out
    pt_ref[...] = pt
    loss_ref[0, 0] = _clip_loss(vf, pt, scale_ref[0, 0])


# --------------------------------------------------------------------------- #
# Kernel A2: batch-gridded encoder (down_dim Linear + MixerBlock)
# --------------------------------------------------------------------------- #
def _encode_kernel(h_ref,                        # (tb, in_dim) bf16
                   wd_ref, bd_ref,
                   g_ref, beta_ref,
                   w1_ref, b1_ref,
                   w2_ref, b2_ref,
                   vf_ref, pt_ref):              # outs: (tb, 512) f32 each
    # Store vf immediately so its f32 live range does not span fc1/GELU/fc2.
    vf_ref[...] = jnp.dot(h_ref[...], wd_ref[...],
                          preferred_element_type=jnp.float32) + bd_ref[...]
    out = _mixer_from_vf(vf_ref[...], g_ref[...], beta_ref[...],
                         w1_ref[...], b1_ref[...], w2_ref[...], b2_ref[...])
    pt_ref[...] = vf_ref[...] + out


# --------------------------------------------------------------------------- #
# Kernel B: symmetric CLIP loss over the whole batch (multi-tile path only)
# --------------------------------------------------------------------------- #
def _loss_kernel(scale_ref, vf_ref, pt_ref, loss_ref):
    loss_ref[0, 0] = _clip_loss(vf_ref[...], pt_ref[...], scale_ref[0, 0])


# --------------------------------------------------------------------------- #
# Wrapper
# --------------------------------------------------------------------------- #
def _pick_batch_tile(B):
    if B < 16:
        return B                         # single tile -> fused encode+loss call
    # Prefer multiples of 16 (bf16 sublane packing) and >= 2 grid steps so the
    # "parallel" batch axis actually shards across the 2 TCs on v7x.
    for t in (256, 128, 64, 32, 16, 8):
        if B % t == 0 and B // t >= 2:
            return t
    return B


def _encode_gridded(h, weight_args, tb, single_buffer_weights):
    B, in_dim = h.shape
    grid = (B // tb,)
    row = lambda i: (i, 0)

    if single_buffer_weights:
        # Grid-invariant blocks: index_map never changes, so double buffering
        # only doubles resident VMEM without overlapping any DMA.
        def const(shape):
            return pl.BlockSpec(shape, lambda i: (0, 0),
                                pipeline_mode=pl.Buffered(buffer_count=1))
    else:
        def const(shape):
            return pl.BlockSpec(shape, lambda i: (0, 0))

    flops = 2 * B * (in_dim * DIM + DIM * HIDDEN + HIDDEN * DIM)
    w_bytes = sum(int(np.prod(w.shape)) * w.dtype.itemsize for w in weight_args)
    bytes_accessed = h.size * h.dtype.itemsize + w_bytes + 2 * B * DIM * 4

    # VMEM budget: (possibly double-buffered) weights + double-buffered h and
    # the two f32 output tiles + fc1 activation headroom.  Clamp to [32, 64] MiB
    # so it is safe on v7x (64 MiB physical) while covering large in_dim.
    stream_bytes = 2 * tb * in_dim * h.dtype.itemsize + 2 * 2 * tb * DIM * 4
    needed = 2 * w_bytes + stream_bytes + 2 * tb * HIDDEN * 4
    vmem_limit = int(min(64 * 2**20, max(32 * 2**20, 2 * needed)))

    return pl.pallas_call(
        _encode_kernel,
        out_shape=(jax.ShapeDtypeStruct((B, DIM), jnp.float32),
                   jax.ShapeDtypeStruct((B, DIM), jnp.float32)),
        grid_spec=pltpu.PrefetchScalarGridSpec(
            num_scalar_prefetch=0,
            grid=grid,
            in_specs=[
                pl.BlockSpec((tb, in_dim), row),     # h (bf16, streamed)
                const((in_dim, DIM)),                # wd (bf16, resident)
                const((1, DIM)),                     # bd
                const((1, DIM)),                     # ln gamma
                const((1, DIM)),                     # ln beta
                const((DIM, HIDDEN)),                # w1 (bf16, resident)
                const((1, HIDDEN)),                  # b1
                const((HIDDEN, DIM)),                # w2 (bf16, resident)
                const((1, DIM)),                     # b2
            ],
            out_specs=(pl.BlockSpec((tb, DIM), row),
                       pl.BlockSpec((tb, DIM), row)),
        ),
        compiler_params=pltpu.CompilerParams(
            dimension_semantics=("parallel",),
            vmem_limit_bytes=vmem_limit),
        cost_estimate=pl.CostEstimate(flops=flops,
                                      transcendentals=B * HIDDEN,
                                      bytes_accessed=int(bytes_accessed)),
    )(h, *weight_args)


def text_encoder_forward(h, params):
    """Full TextEncoder forward: returns (predict_text, clip_loss)."""
    B, in_dim = h.shape
    h = h.astype(jnp.bfloat16)       # halve streamed-input DMA bytes (bf16 MXU operand)
    tb = _pick_batch_tile(B)

    weight_args = (params["wd"], params["bd"],
                   params["ln_g"], params["ln_b"],
                   params["w1"], params["b1"],
                   params["w2"], params["b2"])

    if tb == B:
        # ---- single tile: one fused call (encode + CLIP loss).  No second
        # dispatch, no vf/pt HBM round-trip — dominant win at small B.
        predict_text, loss = pl.pallas_call(
            _fused_kernel,
            out_shape=(jax.ShapeDtypeStruct((B, DIM), jnp.float32),
                       jax.ShapeDtypeStruct((1, 1), jnp.float32)),
            in_specs=[pl.BlockSpec(memory_space=pltpu.MemorySpace.SMEM)]
                     + [pl.BlockSpec(memory_space=pltpu.MemorySpace.VMEM)] * 9,
            out_specs=(pl.BlockSpec(memory_space=pltpu.MemorySpace.VMEM),
                       pl.BlockSpec(memory_space=pltpu.MemorySpace.SMEM)),
        )(params["logit_scale"], h, *weight_args)
        return predict_text, loss[0, 0]

    # ---- multi-tile: batch-gridded encode, then a small separate loss call.
    try:
        vf, predict_text = _encode_gridded(h, weight_args, tb,
                                           single_buffer_weights=True)
    except Exception:
        # This Mosaic build rejected pl.Buffered(1) on the constant blocks;
        # fall back to default double buffering (correctness identical).
        vf, predict_text = _encode_gridded(h, weight_args, tb,
                                           single_buffer_weights=False)

    # TODO(synk): tile the (B,B) loss with an online (flash-style) LSE if B can
    # exceed ~2k; at that point the full logits matrix no longer fits VMEM.
    loss = pl.pallas_call(
        _loss_kernel,
        out_shape=jax.ShapeDtypeStruct((1, 1), jnp.float32),
        in_specs=[pl.BlockSpec(memory_space=pltpu.MemorySpace.SMEM),
                  pl.BlockSpec(memory_space=pltpu.MemorySpace.VMEM),
                  pl.BlockSpec(memory_space=pltpu.MemorySpace.VMEM)],
        out_specs=pl.BlockSpec(memory_space=pltpu.MemorySpace.SMEM),
    )(params["logit_scale"], vf, predict_text)

    return predict_text, loss[0, 0]


# --------------------------------------------------------------------------- #
# Params (weights stored pre-transposed as (in, out); heavy weights in bf16)
# --------------------------------------------------------------------------- #
def xavier_normal(key, fan_in, fan_out, dtype=jnp.bfloat16):
    std = float(np.sqrt(2.0 / (fan_in + fan_out)))
    w = std * jax.random.normal(key, (fan_in, fan_out), dtype=jnp.float32)
    return w.astype(dtype)


def init_params(key, in_dim, dim=DIM, hidden=HIDDEN):
    k1, k2, k3 = jax.random.split(key, 3)
    return {
        # down_dim: Linear(in_dim -> 512); unpadded (Mosaic lane-pads for free)
        "wd": xavier_normal(k1, in_dim, dim),            # (in_dim, 512) bf16
        "bd": jnp.zeros((1, dim), jnp.float32),
        # MixerBlock: LayerNorm + MLP (xavier_normal weights, zero biases)
        "ln_g": jnp.ones((1, dim), jnp.float32),
        "ln_b": jnp.zeros((1, dim), jnp.float32),
        "w1": xavier_normal(k2, dim, hidden),            # (512, 2048) bf16
        "b1": jnp.zeros((1, hidden), jnp.float32),
        "w2": xavier_normal(k3, hidden, dim),            # (2048, 512) bf16
        "b2": jnp.zeros((1, dim), jnp.float32),
        # logit_scale parameter = log(1/0.07)
        "logit_scale": jnp.full((1, 1), np.log(1.0 / 0.07), jnp.float32),
    }


if __name__ == "__main__":
    key = jax.random.PRNGKey(0)
    k_h, k_h2, k_p = jax.random.split(key, 3)

    B, IN_DIM = 8, 32               # small shapes: batch=8 "videos", in_dim=32
    params = init_params(k_p, IN_DIM)

    # Path 1: single-tile fused encode+loss (B=8).
    h = jax.random.normal(k_h, (B, IN_DIM), dtype=jnp.float32)
    predict_text, clip_loss = text_encoder_forward(h, params)
    jax.block_until_ready((predict_text, clip_loss))
    assert predict_text.shape == (B, 512)
    assert clip_loss.shape == ()
    assert bool(jnp.isfinite(clip_loss))
    assert bool(jnp.all(jnp.isfinite(predict_text)))

    # Path 2: batch-gridded encode + separate loss (B=32, grid of 2 tiles).
    B2 = 32
    h2 = jax.random.normal(k_h2, (B2, IN_DIM), dtype=jnp.float32)
    pt2, loss2 = text_encoder_forward(h2, params)
    jax.block_until_ready((pt2, loss2))
    assert pt2.shape == (B2, 512)
    assert bool(jnp.isfinite(loss2))
    assert bool(jnp.all(jnp.isfinite(pt2)))

    print("KERNEL_OK")
</pallas_src>

<mosaic_0001>
module attributes {stable_mosaic.version = 11 : i64} {
  func.func @_fused_kernel(%arg0: memref<1x1xf32, #tpu.memory_space<smem>>, %arg1: memref<8x32xbf16, #tpu.memory_space<vmem>>, %arg2: memref<32x512xbf16, #tpu.memory_space<vmem>>, %arg3: memref<1x512xf32, #tpu.memory_space<vmem>>, %arg4: memref<1x512xf32, #tpu.memory_space<vmem>>, %arg5: memref<1x512xf32, #tpu.memory_space<vmem>>, %arg6: memref<512x2048xbf16, #tpu.memory_space<vmem>>, %arg7: memref<1x2048xf32, #tpu.memory_space<vmem>>, %arg8: memref<2048x512xbf16, #tpu.memory_space<vmem>>, %arg9: memref<1x512xf32, #tpu.memory_space<vmem>>, %arg10: memref<8x512xf32, #tpu.memory_space<vmem>>, %arg11: memref<1x1xf32, #tpu.memory_space<smem>>) attributes {dimension_semantics = [], scalar_prefetch = 0 : i64, scratch_operands = 0 : i64, tpu.core_type = #tpu.core_type<tc>} {
    %c0 = arith.constant 0 : index
    %c0_0 = arith.constant 0 : index
    %0 = vector.load %arg1[%c0, %c0_0] : memref<8x32xbf16, #tpu.memory_space<vmem>>, vector<8x32xbf16>
    %c0_1 = arith.constant 0 : index
    %c0_2 = arith.constant 0 : index
    %1 = vector.load %arg2[%c0_1, %c0_2] : memref<32x512xbf16, #tpu.memory_space<vmem>>, vector<32x512xbf16>
    %cst = arith.constant dense<0.000000e+00> : vector<8x512xf32>
    %2 = tpu.matmul %0, %1, %cst {dimension_numbers = #tpu.dot_dimension_numbers<[1], [0], [0], [1], [0, 0, 1, 1], [], []>} : vector<8x32xbf16>, vector<32x512xbf16>, vector<8x512xf32> -> vector<8x512xf32>
    %c0_3 = arith.constant 0 : index
    %c0_4 = arith.constant 0 : index
    %3 = vector.load %arg3[%c0_3, %c0_4] : memref<1x512xf32, #tpu.memory_space<vmem>>, vector<1x512xf32>
    %4 = vector.broadcast %3 : vector<1x512xf32> to vector<8x512xf32>
    %5 = arith.addf %2, %4 : vector<8x512xf32>
    %c0_5 = arith.constant 0 : index
    %c0_6 = arith.constant 0 : index
    %6 = vector.load %arg4[%c0_5, %c0_6] : memref<1x512xf32, #tpu.memory_space<vmem>>, vector<1x512xf32>
    %c0_7 = arith.constant 0 : index
    %c0_8 = arith.constant 0 : index
    %7 = vector.load %arg5[%c0_7, %c0_8] : memref<1x512xf32, #tpu.memory_space<vmem>>, vector<1x512xf32>
    %c0_9 = arith.constant 0 : index
    %c0_10 = arith.constant 0 : index
    %8 = vector.load %arg6[%c0_9, %c0_10] : memref<512x2048xbf16, #tpu.memory_space<vmem>>, vector<512x2048xbf16>
    %c0_11 = arith.constant 0 : index
    %c0_12 = arith.constant 0 : index
    %9 = vector.load %arg7[%c0_11, %c0_12] : memref<1x2048xf32, #tpu.memory_space<vmem>>, vector<1x2048xf32>
    %c0_13 = arith.constant 0 : index
    %c0_14 = arith.constant 0 : index
    %10 = vector.load %arg8[%c0_13, %c0_14] : memref<2048x512xbf16, #tpu.memory_space<vmem>>, vector<2048x512xbf16>
    %c0_15 = arith.constant 0 : index
    %c0_16 = arith.constant 0 : index
    %11 = vector.load %arg9[%c0_15, %c0_16] : memref<1x512xf32, #tpu.memory_space<vmem>>, vector<1x512xf32>
    %cst_17 = arith.constant dense<0.000000e+00> : vector<8xf32>
    %12 = vector.multi_reduction <add>, %5, %cst_17 [1] : vector<8x512xf32> to vector<8xf32>
    %13 = vector.shape_cast %12 : vector<8xf32> to vector<8x1xf32>
    %cst_18 = arith.constant 5.120000e+02 : f32
    %14 = vector.broadcast %cst_18 : f32 to vector<8x1xf32>
    %15 = arith.divf %13, %14 : vector<8x1xf32>
    %16 = vector.broadcast %15 : vector<8x1xf32> to vector<8x512xf32>
    %17 = arith.subf %5, %16 : vector<8x512xf32>
    %18 = arith.mulf %17, %17 : vector<8x512xf32>
    %cst_19 = arith.constant dense<0.000000e+00> : vector<8xf32>
    %19 = vector.multi_reduction <add>, %18, %cst_19 [1] : vector<8x512xf32> to vector<8xf32>
    %20 = vector.shape_cast %19 : vector<8xf32> to vector<8x1xf32>
    %cst_20 = arith.constant 5.120000e+02 : f32
    %21 = vector.broadcast %cst_20 : f32 to vector<8x1xf32>
    %22 = arith.divf %20, %21 : vector<8x1xf32>
    %cst_21 = arith.constant 9.99999974E-6 : f32
    %23 = vector.broadcast %cst_21 : f32 to vector<8x1xf32>
    %24 = arith.addf %22, %23 : vector<8x1xf32>
    %25 = math.rsqrt %24 : vector<8x1xf32>
    %26 = vector.broadcast %25 : vector<8x1xf32> to vector<8x512xf32>
    %27 = arith.mulf %17, %26 : vector<8x512xf32>
    %28 = vector.broadcast %6 : vector<1x512xf32> to vector<8x512xf32>
    %29 = arith.mulf %27, %28 : vector<8x512xf32>
    %30 = vector.broadcast %7 : vector<1x512xf32> to vector<8x512xf32>
    %31 = arith.addf %29, %30 : vector<8x512xf32>
    %32 = arith.truncf %31 : vector<8x512xf32> to vector<8x512xbf16>
    %cst_22 = arith.constant dense<0.000000e+00> : vector<8x2048xf32>
    %33 = tpu.matmul %32, %8, %cst_22 {dimension_numbers = #tpu.dot_dimension_numbers<[1], [0], [0], [1], [0, 0, 1, 1], [], []>} : vector<8x512xbf16>, vector<512x2048xbf16>, vector<8x2048xf32> -> vector<8x2048xf32>
    %34 = vector.broadcast %9 : vector<1x2048xf32> to vector<8x2048xf32>
    %35 = arith.addf %33, %34 : vector<8x2048xf32>
    %36 = arith.mulf %35, %35 : vector<8x2048xf32>
    %37 = arith.mulf %35, %36 : vector<8x2048xf32>
    %cst_23 = arith.constant 4.471500e-02 : f32
    %38 = vector.broadcast %cst_23 : f32 to vector<8x2048xf32>
    %39 = arith.mulf %38, %37 : vector<8x2048xf32>
    %40 = arith.addf %35, %39 : vector<8x2048xf32>
    %cst_24 = arith.constant 0.797884583 : f32
    %41 = vector.broadcast %cst_24 : f32 to vector<8x2048xf32>
    %42 = arith.mulf %41, %40 : vector<8x2048xf32>
    %43 = math.tanh %42 : vector<8x2048xf32>
    %cst_25 = arith.constant 1.000000e+00 : f32
    %44 = vector.broadcast %cst_25 : f32 to vector<8x2048xf32>
    %45 = arith.addf %44, %43 : vector<8x2048xf32>
    %cst_26 = arith.constant 5.000000e-01 : f32
    %46 = vector.broadcast %cst_26 : f32 to vector<8x2048xf32>
    %47 = arith.mulf %46, %45 : vector<8x2048xf32>
    %48 = arith.mulf %35, %47 : vector<8x2048xf32>
    %49 = arith.truncf %48 : vector<8x2048xf32> to vector<8x2048xbf16>
    %cst_27 = arith.constant dense<0.000000e+00> : vector<8x512xf32>
    %50 = tpu.matmul %49, %10, %cst_27 {dimension_numbers = #tpu.dot_dimension_numbers<[1], [0], [0], [1], [0, 0, 1, 1], [], []>} : vector<8x2048xbf16>, vector<2048x512xbf16>, vector<8x512xf32> -> vector<8x512xf32>
    %51 = vector.broadcast %11 : vector<1x512xf32> to vector<8x512xf32>
    %52 = arith.addf %50, %51 : vector<8x512xf32>
    %53 = arith.addf %5, %52 : vector<8x512xf32>
    %c0_28 = arith.constant 0 : index
    %c0_29 = arith.constant 0 : index
    %54 = vector.load %arg10[%c0_28, %c0_29] : memref<8x512xf32, #tpu.memory_space<vmem>>, vector<8x512xf32>
    tpu.vector_store %arg10[%c0_28, %c0_29], %53 {strides = array<i32>} : memref<8x512xf32, #tpu.memory_space<vmem>>, vector<8x512xf32>,
    %c0_30 = arith.constant 0 : index
    %c0_31 = arith.constant 0 : index
    %55 = memref.load %arg0[%c0_30, %c0_31] : memref<1x1xf32, #tpu.memory_space<smem>>
    %56 = arith.mulf %5, %5 : vector<8x512xf32>
    %cst_32 = arith.constant dense<0.000000e+00> : vector<8xf32>
    %57 = vector.multi_reduction <add>, %56, %cst_32 [1] : vector<8x512xf32> to vector<8xf32>
    %58 = vector.shape_cast %57 : vector<8xf32> to vector<8x1xf32>
    %59 = math.rsqrt %58 : vector<8x1xf32>
    %60 = vector.broadcast %59 : vector<8x1xf32> to vector<8x512xf32>
    %61 = arith.mulf %5, %60 : vector<8x512xf32>
    %62 = arith.mulf %53, %53 : vector<8x512xf32>
    %cst_33 = arith.constant dense<0.000000e+00> : vector<8xf32>
    %63 = vector.multi_reduction <add>, %62, %cst_33 [1] : vector<8x512xf32> to vector<8xf32>
    %64 = vector.shape_cast %63 : vector<8xf32> to vector<8x1xf32>
    %65 = math.rsqrt %64 : vector<8x1xf32>
    %66 = vector.broadcast %65 : vector<8x1xf32> to vector<8x512xf32>
    %67 = arith.mulf %53, %66 : vector<8x512xf32>
    %68 = math.exp %55 : f32
    %cst_34 = arith.constant dense<0.000000e+00> : vector<8x8xf32>
    %69 = tpu.matmul %61, %67, %cst_34 {dimension_numbers = #tpu.dot_dimension_numbers<[1], [1], [0], [0], [0, 0, 1, 0], [], []>} : vector<8x512xf32>, vector<8x512xf32>, vector<8x8xf32> -> vector<8x8xf32>
    %70 = vector.broadcast %68 : f32 to vector<8x8xf32>
    %71 = arith.mulf %70, %69 : vector<8x8xf32>
    %cst_35 = arith.constant dense<0.000000e+00> : vector<8x8xf32>
    %72 = tpu.matmul %67, %61, %cst_35 {dimension_numbers = #tpu.dot_dimension_numbers<[1], [1], [0], [0], [0, 0, 1, 0], [], []>} : vector<8x512xf32>, vector<8x512xf32>, vector<8x8xf32> -> vector<8x8xf32>
    %73 = vector.broadcast %68 : f32 to vector<8x8xf32>
    %74 = arith.mulf %73, %72 : vector<8x8xf32>
    %75 = arith.mulf %61, %67 : vector<8x512xf32>
    %76 = vector.shape_cast %75 : vector<8x512xf32> to vector<1x8x512xf32>
    %cst_36 = arith.constant dense<0.000000e+00> : vector<1xf32>
    %77 = vector.multi_reduction <add>, %76, %cst_36 [1, 2] : vector<1x8x512xf32> to vector<1xf32>
    %78 = vector.shape_cast %77 : vector<1xf32> to vector<1x1x1xf32>
    %79 = vector.extract %78[0, 0, 0] : f32 from vector<1x1x1xf32>
    %80 = arith.mulf %68, %79 : f32
    %cst_37 = arith.constant dense<0xFF800000> : vector<8xf32>
    %81 = vector.multi_reduction <maximumf>, %71, %cst_37 [1] : vector<8x8xf32> to vector<8xf32>
    %82 = vector.shape_cast %81 : vector<8xf32> to vector<8x1xf32>
    %83 = vector.broadcast %82 : vector<8x1xf32> to vector<8x8xf32>
    %84 = arith.subf %71, %83 : vector<8x8xf32>
    %85 = math.exp %84 : vector<8x8xf32>
    %cst_38 = arith.constant dense<0.000000e+00> : vector<8xf32>
    %86 = vector.multi_reduction <add>, %85, %cst_38 [1] : vector<8x8xf32> to vector<8xf32>
    %87 = vector.shape_cast %86 : vector<8xf32> to vector<8x1xf32>
    %88 = math.log %87 : vector<8x1xf32>
    %89 = arith.addf %88, %82 : vector<8x1xf32>
    %90 = vector.shape_cast %89 : vector<8x1xf32> to vector<1x8x1xf32>
    %cst_39 = arith.constant dense<0.000000e+00> : vector<1xf32>
    %91 = vector.multi_reduction <add>, %90, %cst_39 [1, 2] : vector<1x8x1xf32> to vector<1xf32>
    %92 = vector.shape_cast %91 : vector<1xf32> to vector<1x1x1xf32>
    %93 = vector.extract %92[0, 0, 0] : f32 from vector<1x1x1xf32>
    %94 = arith.subf %93, %80 : f32
    %cst_40 = arith.constant 8.000000e+00 : f32
    %95 = arith.divf %94, %cst_40 : f32
    %cst_41 = arith.constant dense<0xFF800000> : vector<8xf32>
    %96 = vector.multi_reduction <maximumf>, %74, %cst_41 [1] : vector<8x8xf32> to vector<8xf32>
    %97 = vector.shape_cast %96 : vector<8xf32> to vector<8x1xf32>
    %98 = vector.broadcast %97 : vector<8x1xf32> to vector<8x8xf32>
    %99 = arith.subf %74, %98 : vector<8x8xf32>
    %100 = math.exp %99 : vector<8x8xf32>
    %cst_42 = arith.constant dense<0.000000e+00> : vector<8xf32>
    %101 = vector.multi_reduction <add>, %100, %cst_42 [1] : vector<8x8xf32> to vector<8xf32>
    %102 = vector.shape_cast %101 : vector<8xf32> to vector<8x1xf32>
    %103 = math.log %102 : vector<8x1xf32>
    %104 = arith.addf %103, %97 : vector<8x1xf32>
    %105 = vector.shape_cast %104 : vector<8x1xf32> to vector<1x8x1xf32>
    %cst_43 = arith.constant dense<0.000000e+00> : vector<1xf32>
    %106 = vector.multi_reduction <add>, %105, %cst_43 [1, 2] : vector<1x8x1xf32> to vector<1xf32>
    %107 = vector.shape_cast %106 : vector<1xf32> to vector<1x1x1xf32>
    %108 = vector.extract %107[0, 0, 0] : f32 from vector<1x1x1xf32>
    %109 = arith.subf %108, %80 : f32
    %cst_44 = arith.constant 8.000000e+00 : f32
    %110 = arith.divf %109, %cst_44 : f32
    %111 = arith.addf %95, %110 : f32
    %cst_45 = arith.constant 5.000000e-01 : f32
    %112 = arith.mulf %111, %cst_45 : f32
    %c0_46 = arith.constant 0 : index
    %c0_47 = arith.constant 0 : index
    %113 = memref.load %arg11[%c0_46, %c0_47] : memref<1x1xf32, #tpu.memory_space<smem>>
    memref.store %112, %arg11[%c0_46, %c0_47] : memref<1x1xf32, #tpu.memory_space<smem>>
    return
  }
}

</mosaic_0001>

<llo_original>
// kernel: tpu_custom_call.1
$region0: #{tpu_custom_call.1}
  #allocation0 [shape = 'u32[]', space=smem, size = 0x4, offset = 0x4, fixed_abs, tag = 'smem constant byte address 0x4 - core index']
  #allocation1 [shape = 'u32[144,128]{1,0:T(1,128)}', space=vmem, size = 0x12000, scoped, tag = 'internal scratch']
  #allocation2 [shape = 'f32[1,1]{1,0:T(1,128)S(6)}', space=smem, size = 0x200, scoped, tag = 'scoped memory for tpu_custom_call.1']
  %s0 = inlined_call_operand.<no memory space> [shape: f32[1,1], index: 0, kind: input, shape index: {}]
  %s1 = inlined_call_operand.hbm [shape: bf16[8,32], index: 1, kind: input, shape index: {}]
  %s2 = inlined_call_operand.hbm [shape: bf16[32,512], index: 2, kind: input, shape index: {}]
  %s3 = inlined_call_operand.hbm [shape: f32[1,512], index: 3, kind: input, shape index: {}]
  %s4 = inlined_call_operand.hbm [shape: f32[1,512], index: 4, kind: input, shape index: {}]
  %s5 = inlined_call_operand.hbm [shape: f32[1,512], index: 5, kind: input, shape index: {}]
  %s6 = inlined_call_operand.hbm [shape: bf16[512,2048], index: 6, kind: input, shape index: {}]
  %s7 = inlined_call_operand.hbm [shape: f32[1,2048], index: 7, kind: input, shape index: {}]
  %s8 = inlined_call_operand.hbm [shape: bf16[2048,512], index: 8, kind: input, shape index: {}]
  %s9 = inlined_call_operand.hbm [shape: f32[1,512], index: 9, kind: input, shape index: {}]
  %s10 = inlined_call_operand.hbm [shape: f32[8,512], index: 10, kind: output, shape index: {0}]
  %s11 = inlined_call_operand.hbm [shape: f32[1,1], index: 11, kind: output, shape index: {1}]
  %12 = xla_tuple %s10, %s11
  %s13 = sld [smem:[#allocation0]]
  $region94: #{tpu_custom_call.1} parent=0
    _
  %s15 = ssub.s32 1, %s13
  %s16 = scalar_select 0, %s15, %s13
  %17 = sst [smem:[#allocation2]] %s0
  $region1: #{tpu_custom_call.1} parent=0
    #allocation3 [shape = 'u8[2048]{0}', space=vmem, size = 0x800, scoped, tag = 'input window, operand 1, single buffered']
    #allocation4 [shape = 's32[1]{0}', space=sflag, size = 0x4, scoped, tag = 'scoped memory for tpu_custom_call.1']
    #allocation5 [shape = 's32[1]{0}', space=sflag, size = 0x4, scoped, tag = 'scoped memory for tpu_custom_call.1']
    #allocation6 [shape = 's32[1]{0}', space=sflag, size = 0x4, scoped, tag = 'scoped memory for tpu_custom_call.1']
    #allocation7 [shape = 'u8[32768]{0}', space=vmem, size = 0x8000, scoped, tag = 'input window, operand 2, single buffered']
    #allocation8 [shape = 's32[1]{0}', space=sflag, size = 0x4, scoped, tag = 'scoped memory for tpu_custom_call.1']
    #allocation9 [shape = 'u8[2048]{0}', space=vmem, size = 0x800, scoped, tag = 'input window, operand 3, single buffered']
    #allocation10 [shape = 'u8[2048]{0}', space=vmem, size = 0x800, scoped, tag = 'input window, operand 4, single buffered']
    #allocation11 [shape = 's32[1]{0}', space=sflag, size = 0x4, scoped, tag = 'scoped memory for tpu_custom_call.1']
    #allocation12 [shape = 'u8[2048]{0}', space=vmem, size = 0x800, scoped, tag = 'input window, operand 5, single buffered']
    #allocation13 [shape = 'u8[2097152]{0}', space=vmem, size = 0x200000, scoped, tag = 'input window, operand 6, single buffered']
    #allocation14 [shape = 's32[1]{0}', space=sflag, size = 0x4, scoped, tag = 'scoped memory for tpu_custom_call.1']
    #allocation15 [shape = 'u8[8192]{0}', space=vmem, size = 0x2000, scoped, tag = 'input window, operand 7, single buffered']
    #allocation16 [shape = 'u8[2097152]{0}', space=vmem, size = 0x200000, scoped, tag = 'input window, operand 8, single buffered']
    #allocation17 [shape = 's32[1]{0}', space=sflag, size = 0x4, scoped, tag = 'scoped memory for tpu_custom_call.1']
    #allocation18 [shape = 'u8[2048]{0}', space=vmem, size = 0x800, scoped, tag = 'input window, operand 9, single buffered']
    #allocation19 [shape = 'u8[16384]{0}', space=vmem, size = 0x4000, scoped, tag = 'output window, operand 0, single buffered']
    #allocation20 [shape = 'u8[512]{0}', space=smem, size = 0x200, scoped, tag = 'output window, operand 1, single buffered']
    %18 = vsyncpa [#allocation4], 0
    %19 = vsyncpa [#allocation8], 0
    %20 = vsyncpa [#allocation11], 0
    %21 = vsyncpa [#allocation14], 0
    %22 = vsyncpa [#allocation17], 0
    %23 = vsyncpa [#allocation5], 0
    %24 = vsyncpa [#allocation6], 0
    // Predicated region
    $region2: #{tpu_custom_call.1} parent=1 // pred_check
      _
    $region3: #{tpu_custom_call.1} parent=1 // pred_check_branch
      %26 = sbr.rel (0) target = $region5
    $region4: #{tpu_custom_call.1} parent=1 // pred_region
      _
    $region5: #{tpu_custom_call.1} parent=1 // pred_fallthru
      _
    // Predicated region
    $region6: #{tpu_custom_call.1} parent=1 // pred_check
      _
    $region7: #{tpu_custom_call.1} parent=1 // pred_check_branch
      %28 = sbr.rel (0) target = $region9
    $region8: #{tpu_custom_call.1} parent=1 // pred_region
      %s30 = ssub.s32 64, 64
      %31 = vsyncadd [#allocation4], %s30
      %s33 = sshll.u32 [#allocation3], 4
      %s34 = int_to_ptr.vmem [resolvable:$true] %s33
      %36 = dma.hbm_to_vmem [thread:$0]  %s1, 64, %s34, [#allocation4]
    $region9: #{tpu_custom_call.1} parent=1 // pred_fallthru
      _
    // Predicated region
    $region10: #{tpu_custom_call.1} parent=1 // pred_check
      _
    $region11: #{tpu_custom_call.1} parent=1 // pred_check_branch
      %38 = sbr.rel (0) target = $region13
    $region12: #{tpu_custom_call.1} parent=1 // pred_region
      %s40 = ssub.s32 1024, 1024
      %41 = vsyncadd [#allocation8], %s40
      %s42 = sshll.u32 [#allocation7], 4
      %s43 = int_to_ptr.vmem [resolvable:$true] %s42
      %48 = dma.hbm_to_vmem [thread:$0]  %s2, 1024, %s43, [#allocation8], 256, 256, 16
    $region13: #{tpu_custom_call.1} parent=1 // pred_fallthru
      _
    // Predicated region
    $region14: #{tpu_custom_call.1} parent=1 // pred_check
      _
    $region15: #{tpu_custom_call.1} parent=1 // pred_check_branch
      %50 = sbr.rel (0) target = $region17
    $region16: #{tpu_custom_call.1} parent=1 // pred_region
      %s52 = ssub.s32 64, 64
      %53 = vsyncadd [#allocation8], %s52
      %s55 = sshll.u32 [#allocation9], 4
      %s56 = int_to_ptr.vmem [resolvable:$true] %s55
      %58 = dma.hbm_to_vmem [thread:$0]  %s3, 64, %s56, [#allocation8]
    $region17: #{tpu_custom_call.1} parent=1 // pred_fallthru
      _
    // Predicated region
    $region18: #{tpu_custom_call.1} parent=1 // pred_check
      _
    $region19: #{tpu_custom_call.1} parent=1 // pred_check_branch
      %60 = sbr.rel (0) target = $region21
    $region20: #{tpu_custom_call.1} parent=1 // pred_region
      %s62 = ssub.s32 64, 64
      %63 = vsyncadd [#allocation11], %s62
      %s65 = sshll.u32 [#allocation10], 4
      %s66 = int_to_ptr.vmem [resolvable:$true] %s65
      %68 = dma.hbm_to_vmem [thread:$0]  %s4, 64, %s66, [#allocation11]
    $region21: #{tpu_custom_call.1} parent=1 // pred_fallthru
      _
    // Predicated region
    $region22: #{tpu_custom_call.1} parent=1 // pred_check
      _
    $region23: #{tpu_custom_call.1} parent=1 // pred_check_branch
      %70 = sbr.rel (0) target = $region25
    $region24: #{tpu_custom_call.1} parent=1 // pred_region
      %s72 = ssub.s32 64, 64
      %73 = vsyncadd [#allocation11], %s72
      %s75 = sshll.u32 [#allocation12], 4
      %s76 = int_to_ptr.vmem [resolvable:$true] %s75
      %78 = dma.hbm_to_vmem [thread:$0]  %s5, 64, %s76, [#allocation11]
    $region25: #{tpu_custom_call.1} parent=1 // pred_fallthru
      _
    // Predicated region
    $region26: #{tpu_custom_call.1} parent=1 // pred_check
      _
    $region27: #{tpu_custom_call.1} parent=1 // pred_check_branch
      %80 = sbr.rel (0) target = $region29
    $region28: #{tpu_custom_call.1} parent=1 // pred_region
      %s82 = ssub.s32 65536, 65536
      %83 = vsyncadd [#allocation14], %s82
      %s84 = sshll.u32 [#allocation13], 4
      %s85 = int_to_ptr.vmem [resolvable:$true] %s84
      %90 = dma.hbm_to_vmem [thread:$0]  %s6, 65536, %s85, [#allocation14], 1024, 1024, 64
    $region29: #{tpu_custom_call.1} parent=1 // pred_fallthru
      _
    // Predicated region
    $region30: #{tpu_custom_call.1} parent=1 // pred_check
      _
    $region31: #{tpu_custom_call.1} parent=1 // pred_check_branch
      %92 = sbr.rel (0) target = $region33
    $region32: #{tpu_custom_call.1} parent=1 // pred_region
      %s94 = ssub.s32 256, 256
      %95 = vsyncadd [#allocation14], %s94
      %s97 = sshll.u32 [#allocation15], 4
      %s98 = int_to_ptr.vmem [resolvable:$true] %s97
      %100 = dma.hbm_to_vmem [thread:$0]  %s7, 256, %s98, [#allocation14]
    $region33: #{tpu_custom_call.1} parent=1 // pred_fallthru
      _
    // Predicated region
    $region34: #{tpu_custom_call.1} parent=1 // pred_check
      _
    $region35: #{tpu_custom_call.1} parent=1 // pred_check_branch
      %102 = sbr.rel (0) target = $region37
    $region36: #{tpu_custom_call.1} parent=1 // pred_region
      %s104 = ssub.s32 65536, 65536
      %105 = vsyncadd [#allocation17], %s104
      %s106 = sshll.u32 [#allocation16], 4
      %s107 = int_to_ptr.vmem [resolvable:$true] %s106
      %112 = dma.hbm_to_vmem [thread:$0]  %s8, 65536, %s107, [#allocation17], 256, 256, 16
    $region37: #{tpu_custom_call.1} parent=1 // pred_fallthru
      _
    // Predicated region
    $region38: #{tpu_custom_call.1} parent=1 // pred_check
      _
    $region39: #{tpu_custom_call.1} parent=1 // pred_check_branch
      %114 = sbr.rel (0) target = $region41
    $region40: #{tpu_custom_call.1} parent=1 // pred_region
      %s116 = ssub.s32 64, 64
      %117 = vsyncadd [#allocation17], %s116
      %s119 = sshll.u32 [#allocation18], 4
      %s120 = int_to_ptr.vmem [resolvable:$true] %s119
      %122 = dma.hbm_to_vmem [thread:$0]  %s9, 64, %s120, [#allocation17]
    $region41: #{tpu_custom_call.1} parent=1 // pred_fallthru
      _
    // Predicated region
    $region42: #{tpu_custom_call.1} parent=1 // pred_check
      _
    $region43: #{tpu_custom_call.1} parent=1 // pred_check_branch
      %124 = sbr.rel (0) target = $region45
    $region44: #{tpu_custom_call.1} parent=1 // pred_region
      %125 = dma.done [#allocation4], 64
    $region45: #{tpu_custom_call.1} parent=1 // pred_fallthru
      _
    // Predicated region
    $region46: #{tpu_custom_call.1} parent=1 // pred_check
      _
    $region47: #{tpu_custom_call.1} parent=1 // pred_check_branch
      %127 = sbr.rel (0) target = $region49
    $region48: #{tpu_custom_call.1} parent=1 // pred_region
      %128 = dma.done [#allocation8], 1024
    $region49: #{tpu_custom_call.1} parent=1 // pred_fallthru
      _
    // Predicated region
    $region50: #{tpu_custom_call.1} parent=1 // pred_check
      _
    $region51: #{tpu_custom_call.1} parent=1 // pred_check_branch
      %130 = sbr.rel (0) target = $region53
    $region52: #{tpu_custom_call.1} parent=1 // pred_region
      %131 = dma.done [#allocation8], 64
    $region53: #{tpu_custom_call.1} parent=1 // pred_fallthru
      _
    // Predicated region
    $region54: #{tpu_custom_call.1} parent=1 // pred_check
      _
    $region55: #{tpu_custom_call.1} parent=1 // pred_check_branch
      %133 = sbr.rel (0) target = $region57
    $region56: #{tpu_custom_call.1} parent=1 // pred_region
      %134 = dma.done [#allocation11], 64
    $region57: #{tpu_custom_call.1} parent=1 // pred_fallthru
      _
    // Predicated region
    $region58: #{tpu_custom_call.1} parent=1 // pred_check
      _
    $region59: #{tpu_custom_call.1} parent=1 // pred_check_branch
      %136 = sbr.rel (0) target = $region61
    $region60: #{tpu_custom_call.1} parent=1 // pred_region
      %137 = dma.done [#allocation11], 64
    $region61: #{tpu_custom_call.1} parent=1 // pred_fallthru
      _
    // Predicated region
    $region62: #{tpu_custom_call.1} parent=1 // pred_check
      _
    $region63: #{tpu_custom_call.1} parent=1 // pred_check_branch
      %139 = sbr.rel (0) target = $region65
    $region64: #{tpu_custom_call.1} parent=1 // pred_region
      %140 = dma.done [#allocation14], 65536
    $region65: #{tpu_custom_call.1} parent=1 // pred_fallthru
      _
    // Predicated region
    $region66: #{tpu_custom_call.1} parent=1 // pred_check
      _
    $region67: #{tpu_custom_call.1} parent=1 // pred_check_branch
      %142 = sbr.rel (0) target = $region69
    $region68: #{tpu_custom_call.1} parent=1 // pred_region
      %143 = dma.done [#allocation14], 256
    $region69: #{tpu_custom_call.1} parent=1 // pred_fallthru
      _
    // Predicated region
    $region70: #{tpu_custom_call.1} parent=1 // pred_check
      _
    $region71: #{tpu_custom_call.1} parent=1 // pred_check_branch
      %145 = sbr.rel (0) target = $region73
    $region72: #{tpu_custom_call.1} parent=1 // pred_region
      %146 = dma.done [#allocation17], 65536
    $region73: #{tpu_custom_call.1} parent=1 // pred_fallthru
      _
    // Predicated region
    $region74: #{tpu_custom_call.1} parent=1 // pred_check
      _
    $region75: #{tpu_custom_call.1} parent=1 // pred_check_branch
      %148 = sbr.rel (0) target = $region77
    $region76: #{tpu_custom_call.1} parent=1 // pred_region
      %149 = dma.done [#allocation17], 64
    $region77: #{tpu_custom_call.1} parent=1 // pred_fallthru
      _
    %v151 = vld [vmem:[#allocation3] sm:$0xf]
    %v152 = vld [vmem:[#allocation7] sm:$0xff]
    %v153 = vld [vmem:[#allocation7 + $0x8] sm:$0xff]
    %v154 = vld [vmem:[#allocation7 + $0x10] sm:$0xff]
    %v155 = vld [vmem:[#allocation7 + $0x18] sm:$0xff]
    %v156 = vld [vmem:[#allocation7 + $0x20] sm:$0xff]
    %v157 = vld [vmem:[#allocation7 + $0x28] sm:$0xff]
    %v158 = vld [vmem:[#allocation7 + $0x30] sm:$0xff]
    %v159 = vld [vmem:[#allocation7 + $0x38] sm:$0xff]
    %v160 = vld [vmem:[#allocation9] sm:$0xf]
    %v162 = vlaneseq
    %v163 = vshrl.u32 %v162, 7
    %v164 = vsub.s32 0, %v163
    %v165 = vrot.slane %v160, %v164
    %v166 = vlaneseq
    %v167 = vshrl.u32 %v166, 7
    %v168 = vsub.s32 1, %v167
    %v169 = vrot.slane %v160, %v168
    %v170 = vlaneseq
    %v171 = vshrl.u32 %v170, 7
    %v172 = vsub.s32 2, %v171
    %v173 = vrot.slane %v160, %v172
    %v174 = vlaneseq
    %v175 = vshrl.u32 %v174, 7
    %v176 = vsub.s32 3, %v175
    %v177 = vrot.slane %v160, %v176
    %v190 = vunpack.c.l.b16 %v152
    %v191 = vunpack.c.h.b16 %v152
    %v192 = vunpack.c.l.b16 %v153
    %v193 = vunpack.c.h.b16 %v153
    %v194 = vunpack.c.l.b16 %v154
    %v195 = vunpack.c.h.b16 %v154
    %v196 = vunpack.c.l.b16 %v155
    %v197 = vunpack.c.h.b16 %v155
    %v198 = vunpack.c.l.b16 %v156
    %v199 = vunpack.c.h.b16 %v156
    %v200 = vunpack.c.l.b16 %v157
    %v201 = vunpack.c.h.b16 %v157
    %v202 = vunpack.c.l.b16 %v158
    %v203 = vunpack.c.h.b16 %v158
    %v204 = vunpack.c.l.b16 %v159
    %v205 = vunpack.c.h.b16 %v159
    %v206 = vpack.c.b16 %v194, %v190
    %v207 = vpack.c.b16 %v195, %v191
    %v208 = vpack.c.b16 %v196, %v192
    %v209 = vpack.c.b16 %v197, %v193
    %v210 = vpack.c.b16 %v202, %v198
    %v211 = vpack.c.b16 %v203, %v199
    %v212 = vpack.c.b16 %v204, %v200
    %v213 = vpack.c.b16 %v205, %v201
    %vm222 = vcmask 261120
    %v224 = vsel %vm222, %v151, 0
    %226 = vmatprep.subr.bf16.mxu0 %v207
    %227 = vmatpush1.bf16.msra.mxu0 %v206
    %228 = vmatprep.subr.bf16.mxu0 %v211
    %229 = vmatpush1.bf16.msra.mxu0 %v210
    %230 = vmatprep.subr.bf16.mxu0 0
    %231 = vmatpush1.bf16.msra.mxu0 0
    %232 = vmatprep.subr.bf16.mxu0 0
    %233 = vmatpush1.bf16.msra.mxu0 0
    %234 = vmatprep.subr.bf16.mxu0 0
    %235 = vmatpush1.bf16.msra.mxu0 0
    %236 = vmatprep.subr.bf16.mxu0 0
    %237 = vmatpush1.bf16.msra.mxu0 0
    %238 = vmatprep.subr.bf16.mxu0 0
    %239 = vmatpush1.bf16.msra.mxu0 0
    %240 = vmatprep.subr.bf16.mxu0 0
    %241 = vmatpush1.bf16.msra.mxu0 0
    %242 = vmatprep.subr.bf16.mxu0 0
    %243 = vmatpush1.bf16.msra.mxu0 0
    %244 = vmatprep.subr.bf16.mxu0 0
    %245 = vmatpush1.bf16.msra.mxu0 0
    %246 = vmatprep.subr.bf16.mxu0 0
    %247 = vmatpush1.bf16.msra.mxu0 0
    %248 = vmatprep.subr.bf16.mxu0 0
    %249 = vmatpush1.bf16.msra.mxu0 0
    %250 = vmatprep.subr.bf16.mxu0 0
    %251 = vmatpush1.bf16.msra.mxu0 0
    %252 = vmatprep.subr.bf16.mxu0 0
    %253 = vmatpush1.bf16.msra.mxu0 0
    %254 = vmatprep.subr.bf16.mxu0 0
    %255 = vmatpush1.bf16.msra.mxu0 0
    %256 = vmatprep.subr.bf16.mxu0 0
    %257 = vmatpush1.bf16.msra.mxu0 0
    %258 = vmatprep.mubr.bf16.mxu0 0
    %259 = vmatmul.mubr.bf16.gmra.mrb[0].mxu0 %v224
    %v260 = vpop.f32.mrb[0].mxu0
    %v261 = vadd.f32 %v165, %v260
    %v262 = vpop.f32.mrb[0].mxu0
    %v263 = vadd.f32 %v169, %v262
    %v264 = vpop.f32.mrb[0].mxu0
    %v265 = vpop.f32.mrb[0].mxu0
    %266 = vdwg.mxu0
    %267 = vmatprep.subr.bf16.mxu0 %v209
    %268 = vmatpush1.bf16.msra.mxu0 %v208
    %269 = vmatprep.subr.bf16.mxu0 %v213
    %270 = vmatpush1.bf16.msra.mxu0 %v212
    %271 = vmatprep.subr.bf16.mxu0 0
    %272 = vmatpush1.bf16.msra.mxu0 0
    %273 = vmatprep.subr.bf16.mxu0 0
    %274 = vmatpush1.bf16.msra.mxu0 0
    %275 = vmatprep.subr.bf16.mxu0 0
    %276 = vmatpush1.bf16.msra.mxu0 0
    %277 = vmatprep.subr.bf16.mxu0 0
    %278 = vmatpush1.bf16.msra.mxu0 0
    %279 = vmatprep.subr.bf16.mxu0 0
    %280 = vmatpush1.bf16.msra.mxu0 0
    %281 = vmatprep.subr.bf16.mxu0 0
    %282 = vmatpush1.bf16.msra.mxu0 0
    %283 = vmatprep.subr.bf16.mxu0 0
    %284 = vmatpush1.bf16.msra.mxu0 0
    %285 = vmatprep.subr.bf16.mxu0 0
    %286 = vmatpush1.bf16.msra.mxu0 0
    %287 = vmatprep.subr.bf16.mxu0 0
    %288 = vmatpush1.bf16.msra.mxu0 0
    %289 = vmatprep.subr.bf16.mxu0 0
    %290 = vmatpush1.bf16.msra.mxu0 0
    %291 = vmatprep.subr.bf16.mxu0 0
    %292 = vmatpush1.bf16.msra.mxu0 0
    %293 = vmatprep.subr.bf16.mxu0 0
    %294 = vmatpush1.bf16.msra.mxu0 0
    %295 = vmatprep.subr.bf16.mxu0 0
    %296 = vmatpush1.bf16.msra.mxu0 0
    %297 = vmatprep.subr.bf16.mxu0 0
    %298 = vmatpush1.bf16.msra.mxu0 0
    %299 = vmatprep.mubr.bf16.mxu0 0
    %300 = vmatmul.mubr.bf16.gmra.mrb[0].mxu0 %v224
    %v301 = vpop.f32.mrb[0].mxu0
    %v302 = vadd.f32 %v173, %v301
    %v303 = vpop.f32.mrb[0].mxu0
    %v304 = vadd.f32 %v177, %v303
    %v305 = vpop.f32.mrb[0].mxu0
    %v306 = vpop.f32.mrb[0].mxu0
    %307 = vdwg.mxu0
    %v308 = vld [vmem:[#allocation10] sm:$0xf]
    %v309 = vld [vmem:[#allocation12] sm:$0xf]
    %v310 = vld [vmem:[#allocation13] sm:$0xff]
    %v311 = vld [vmem:[#allocation13 + $0x8] sm:$0xff]
    %v312 = vld [vmem:[#allocation13 + $0x10] sm:$0xff]
    %v313 = vld [vmem:[#allocation13 + $0x18] sm:$0xff]
    %v314 = vld [vmem:[#allocation13 + $0x20] sm:$0xff]
    %v315 = vld [vmem:[#allocation13 + $0x28] sm:$0xff]
    %v316 = vld [vmem:[#allocation13 + $0x30] sm:$0xff]
    %v317 = vld [vmem:[#allocation13 + $0x38] sm:$0xff]
    %v318 = vld [vmem:[#allocation13 + $0x40] sm:$0xff]
    %v319 = vld [vmem:[#allocation13 + $0x48] sm:$0xff]
    %v320 = vld [vmem:[#allocation13 + $0x50] sm:$0xff]
    %v321 = vld [vmem:[#allocation13 + $0x58] sm:$0xff]
    %v322 = vld [vmem:[#allocation13 + $0x60] sm:$0xff]
    %v323 = vld [vmem:[#allocation13 + $0x68] sm:$0xff]
    %v324 = vld [vmem:[#allocation13 + $0x70] sm:$0xff]
    %v325 = vld [vmem:[#allocation13 + $0x78] sm:$0xff]
    %v326 = vld [vmem:[#allocation13 + $0x80] sm:$0xff]
    %v327 = vld [vmem:[#allocation13 + $0x88] sm:$0xff]
    %v328 = vld [vmem:[#allocation13 + $0x90] sm:$0xff]
    %v329 = vld [vmem:[#allocation13 + $0x98] sm:$0xff]
    %v330 = vld [vmem:[#allocation13 + $0xa0] sm:$0xff]
    %v331 = vld [vmem:[#allocation13 + $0xa8] sm:$0xff]
    %v332 = vld [vmem:[#allocation13 + $0xb0] sm:$0xff]
    %v333 = vld [vmem:[#allocation13 + $0xb8] sm:$0xff]
    %v334 = vld [vmem:[#allocation13 + $0xc0] sm:$0xff]
    %v335 = vld [vmem:[#allocation13 + $0xc8] sm:$0xff]
    %v336 = vld [vmem:[#allocation13 + $0xd0] sm:$0xff]
    %v337 = vld [vmem:[#allocation13 + $0xd8] sm:$0xff]
    %v338 = vld [vmem:[#allocation13 + $0xe0] sm:$0xff]
    %v339 = vld [vmem:[#allocation13 + $0xe8] sm:$0xff]
    %v340 = vld [vmem:[#allocation13 + $0xf0] sm:$0xff]
    %v341 = vld [vmem:[#allocation13 + $0xf8] sm:$0xff]
    %v342 = vld [vmem:[#allocation13 + $0x100] sm:$0xff]
    %v343 = vld [vmem:[#allocation13 + $0x108] sm:$0xff]
    %v344 = vld [vmem:[#allocation13 + $0x110] sm:$0xff]
    %v345 = vld [vmem:[#allocation13 + $0x118] sm:$0xff]
    %v346 = vld [vmem:[#allocation13 + $0x120] sm:$0xff]
    %v347 = vld [vmem:[#allocation13 + $0x128] sm:$0xff]
    %v348 = vld [vmem:[#allocation13 + $0x130] sm:$0xff]
    %v349 = vld [vmem:[#allocation13 + $0x138] sm:$0xff]
    %v350 = vld [vmem:[#allocation13 + $0x140] sm:$0xff]
    %v351 = vld [vmem:[#allocation13 + $0x148] sm:$0xff]
    %v352 = vld [vmem:[#allocation13 + $0x150] sm:$0xff]
    %v353 = vld [vmem:[#allocation13 + $0x158] sm:$0xff]
    %v354 = vld [vmem:[#allocation13 + $0x160] sm:$0xff]
    %v355 = vld [vmem:[#allocation13 + $0x168] sm:$0xff]
    %v356 = vld [vmem:[#allocation13 + $0x170] sm:$0xff]
    %v357 = vld [vmem:[#allocation13 + $0x178] sm:$0xff]
    %v358 = vld [vmem:[#allocation13 + $0x180] sm:$0xff]
    %v359 = vld [vmem:[#allocation13 + $0x188] sm:$0xff]
    %v360 = vld [vmem:[#allocation13 + $0x190] sm:$0xff]
    %v361 = vld [vmem:[#allocation13 + $0x198] sm:$0xff]
    %v362 = vld [vmem:[#allocation13 + $0x1a0] sm:$0xff]
    %v363 = vld [vmem:[#allocation13 + $0x1a8] sm:$0xff]
    %v364 = vld [vmem:[#allocation13 + $0x1b0] sm:$0xff]
    %v365 = vld [vmem:[#allocation13 + $0x1b8] sm:$0xff]
    %v366 = vld [vmem:[#allocation13 + $0x1c0] sm:$0xff]
    %v367 = vld [vmem:[#allocation13 + $0x1c8] sm:$0xff]
    %v368 = vld [vmem:[#allocation13 + $0x1d0] sm:$0xff]
    %v369 = vld [vmem:[#allocation13 + $0x1d8] sm:$0xff]
    %v370 = vld [vmem:[#allocation13 + $0x1e0] sm:$0xff]
    %v371 = vld [vmem:[#allocation13 + $0x1e8] sm:$0xff]
    %v372 = vld [vmem:[#allocation13 + $0x1f0] sm:$0xff]
    %v373 = vld [vmem:[#allocation13 + $0x1f8] sm:$0xff]
    %v374 = vld [vmem:[#allocation13 + $0x200] sm:$0xff]
    %v375 = vld [vmem:[#allocation13 + $0x208] sm:$0xff]
    %v376 = vld [vmem:[#allocation13 + $0x210] sm:$0xff]
    %v377 = vld [vmem:[#allocation13 + $0x218] sm:$0xff]
    %v378 = vld [vmem:[#allocation13 + $0x220] sm:$0xff]
    %v379 = vld [vmem:[#allocation13 + $0x228] sm:$0xff]
    %v380 = vld [vmem:[#allocation13 + $0x230] sm:$0xff]
    %v381 = vld [vmem:[#allocation13 + $0x238] sm:$0xff]
    %v382 = vld [vmem:[#allocation13 + $0x240] sm:$0xff]
    %v383 = vld [vmem:[#allocation13 + $0x248] sm:$0xff]
    %v384 = vld [vmem:[#allocation13 + $0x250] sm:$0xff]
    %v385 = vld [vmem:[#allocation13 + $0x258] sm:$0xff]
    %v386 = vld [vmem:[#allocation13 + $0x260] sm:$0xff]
    %v387 = vld [vmem:[#allocation13 + $0x268] sm:$0xff]
    %v388 = vld [vmem:[#allocation13 + $0x270] sm:$0xff]
    %v389 = vld [vmem:[#allocation13 + $0x278] sm:$0xff]
    %v390 = vld [vmem:[#allocation13 + $0x280] sm:$0xff]
    %v391 = vld [vmem:[#allocation13 + $0x288] sm:$0xff]
    %v392 = vld [vmem:[#allocation13 + $0x290] sm:$0xff]
    %v393 = vld [vmem:[#allocation13 + $0x298] sm:$0xff]
    %v394 = vld [vmem:[#allocation13 + $0x2a0] sm:$0xff]
    %v395 = vld [vmem:[#allocation13 + $0x2a8] sm:$0xff]
    %v396 = vld [vmem:[#allocation13 + $0x2b0] sm:$0xff]
    %v397 = vld [vmem:[#allocation13 + $0x2b8] sm:$0xff]
    %v398 = vld [vmem:[#allocation13 + $0x2c0] sm:$0xff]
    %v399 = vld [vmem:[#allocation13 + $0x2c8] sm:$0xff]
    %v400 = vld [vmem:[#allocation13 + $0x2d0] sm:$0xff]
    %v401 = vld [vmem:[#allocation13 + $0x2d8] sm:$0xff]
    %v402 = vld [vmem:[#allocation13 + $0x2e0] sm:$0xff]
    %v403 = vld [vmem:[#allocation13 + $0x2e8] sm:$0xff]
    %v404 = vld [vmem:[#allocation13 + $0x2f0] sm:$0xff]
    %v405 = vld [vmem:[#allocation13 + $0x2f8] sm:$0xff]
    %v406 = vld [vmem:[#allocation13 + $0x300] sm:$0xff]
    %v407 = vld [vmem:[#allocation13 + $0x308] sm:$0xff]
    %v408 = vld [vmem:[#allocation13 + $0x310] sm:$0xff]
    %v409 = vld [vmem:[#allocation13 + $0x318] sm:$0xff]
    %v410 = vld [vmem:[#allocation13 + $0x320] sm:$0xff]
    %v411 = vld [vmem:[#allocation13 + $0x328] sm:$0xff]
    %v412 = vld [vmem:[#allocation13 + $0x330] sm:$0xff]
    %v413 = vld [vmem:[#allocation13 + $0x338] sm:$0xff]
    %v414 = vld [vmem:[#allocation13 + $0x340] sm:$0xff]
    %v415 = vld [vmem:[#allocation13 + $0x348] sm:$0xff]
    %v416 = vld [vmem:[#allocation13 + $0x350] sm:$0xff]
    %v417 = vld [vmem:[#allocation13 + $0x358] sm:$0xff]
    %v418 = vld [vmem:[#allocation13 + $0x360] sm:$0xff]
    %v419 = vld [vmem:[#allocation13 + $0x368] sm:$0xff]
    %v420 = vld [vmem:[#allocation13 + $0x370] sm:$0xff]
    %v421 = vld [vmem:[#allocation13 + $0x378] sm:$0xff]
    %v422 = vld [vmem:[#allocation13 + $0x380] sm:$0xff]
    %v423 = vld [vmem:[#allocation13 + $0x388] sm:$0xff]
    %v424 = vld [vmem:[#allocation13 + $0x390] sm:$0xff]
    %v425 = vld [vmem:[#allocation13 + $0x398] sm:$0xff]
    %v426 = vld [vmem:[#allocation13 + $0x3a0] sm:$0xff]
    %v427 = vld [vmem:[#allocation13 + $0x3a8] sm:$0xff]
    %v428 = vld [vmem:[#allocation13 + $0x3b0] sm:$0xff]
    %v429 = vld [vmem:[#allocation13 + $0x3b8] sm:$0xff]
    %v430 = vld [vmem:[#allocation13 + $0x3c0] sm:$0xff]
    %v431 = vld [vmem:[#allocation13 + $0x3c8] sm:$0xff]
    %v432 = vld [vmem:[#allocation13 + $0x3d0] sm:$0xff]
    %v433 = vld [vmem:[#allocation13 + $0x3d8] sm:$0xff]
    %v434 = vld [vmem:[#allocation13 + $0x3e0] sm:$0xff]
    %v435 = vld [vmem:[#allocation13 + $0x3e8] sm:$0xff]
    %v436 = vld [vmem:[#allocation13 + $0x3f0] sm:$0xff]
    %v437 = vld [vmem:[#allocation13 + $0x3f8] sm:$0xff]
    %v438 = vld [vmem:[#allocation13 + $0x400] sm:$0xff]
    %v439 = vld [vmem:[#allocation13 + $0x408] sm:$0xff]
    %v440 = vld [vmem:[#allocation13 + $0x410] sm:$0xff]
    %v441 = vld [vmem:[#allocation13 + $0x418] sm:$0xff]
    %v442 = vld [vmem:[#allocation13 + $0x420] sm:$0xff]
    %v443 = vld [vmem:[#allocation13 + $0x428] sm:$0xff]
    %v444 = vld [vmem:[#allocation13 + $0x430] sm:$0xff]
    %v445 = vld [vmem:[#allocation13 + $0x438] sm:$0xff]
    %v446 = vld [vmem:[#allocation13 + $0x440] sm:$0xff]
    %v447 = vld [vmem:[#allocation13 + $0x448] sm:$0xff]
    %v448 = vld [vmem:[#allocation13 + $0x450] sm:$0xff]
    %v449 = vld [vmem:[#allocation13 + $0x458] sm:$0xff]
    %v450 = vld [vmem:[#allocation13 + $0x460] sm:$0xff]
    %v451 = vld [vmem:[#allocation13 + $0x468] sm:$0xff]
    %v452 = vld [vmem:[#allocation13 + $0x470] sm:$0xff]
    %v453 = vld [vmem:[#allocation13 + $0x478] sm:$0xff]
    %v454 = vld [vmem:[#allocation13 + $0x480] sm:$0xff]
    %v455 = vld [vmem:[#allocation13 + $0x488] sm:$0xff]
    %v456 = vld [vmem:[#allocation13 + $0x490] sm:$0xff]
    %v457 = vld [vmem:[#allocation13 + $0x498] sm:$0xff]
    %v458 = vld [vmem:[#allocation13 + $0x4a0] sm:$0xff]
    %v459 = vld [vmem:[#allocation13 + $0x4a8] sm:$0xff]
    %v460 = vld [vmem:[#allocation13 + $0x4b0] sm:$0xff]
    %v461 = vld [vmem:[#allocation13 + $0x4b8] sm:$0xff]
    %v462 = vld [vmem:[#allocation13 + $0x4c0] sm:$0xff]
    %v463 = vld [vmem:[#allocation13 + $0x4c8] sm:$0xff]
    %v464 = vld [vmem:[#allocation13 + $0x4d0] sm:$0xff]
    %v465 = vld [vmem:[#allocation13 + $0x4d8] sm:$0xff]
    %v466 = vld [vmem:[#allocation13 + $0x4e0] sm:$0xff]
    %v467 = vld [vmem:[#allocation13 + $0x4e8] sm:$0xff]
    %v468 = vld [vmem:[#allocation13 + $0x4f0] sm:$0xff]
    %v469 = vld [vmem:[#allocation13 + $0x4f8] sm:$0xff]
    %v470 = vld [vmem:[#allocation13 + $0x500] sm:$0xff]
    %v471 = vld [vmem:[#allocation13 + $0x508] sm:$0xff]
    %v472 = vld [vmem:[#allocation13 + $0x510] sm:$0xff]
    %v473 = vld [vmem:[#allocation13 + $0x518] sm:$0xff]
    %v474 = vld [vmem:[#allocation13 + $0x520] sm:$0xff]
    %v475 = vld [vmem:[#allocation13 + $0x528] sm:$0xff]
    %v476 = vld [vmem:[#allocation13 + $0x530] sm:$0xff]
    %v477 = vld [vmem:[#allocation13 + $0x538] sm:$0xff]
    %v478 = vld [vmem:[#allocation13 + $0x540] sm:$0xff]
    %v479 = vld [vmem:[#allocation13 + $0x548] sm:$0xff]
    %v480 = vld [vmem:[#allocation13 + $0x550] sm:$0xff]
    %v481 = vld [vmem:[#allocation13 + $0x558] sm:$0xff]
    %v482 = vld [vmem:[#allocation13 + $0x560] sm:$0xff]
    %v483 = vld [vmem:[#allocation13 + $0x568] sm:$0xff]
    %v484 = vld [vmem:[#allocation13 + $0x570] sm:$0xff]
    %v485 = vld [vmem:[#allocation13 + $0x578] sm:$0xff]
    %v486 = vld [vmem:[#allocation13 + $0x580] sm:$0xff]
    %v487 = vld [vmem:[#allocation13 + $0x588] sm:$0xff]
    %v488 = vld [vmem:[#allocation13 + $0x590] sm:$0xff]
    %v489 = vld [vmem:[#allocation13 + $0x598] sm:$0xff]
    %v490 = vld [vmem:[#allocation13 + $0x5a0] sm:$0xff]
    %v491 = vld [vmem:[#allocation13 + $0x5a8] sm:$0xff]
    %v492 = vld [vmem:[#allocation13 + $0x5b0] sm:$0xff]
    %v493 = vld [vmem:[#allocation13 + $0x5b8] sm:$0xff]
    %v494 = vld [vmem:[#allocation13 + $0x5c0] sm:$0xff]
    %v495 = vld [vmem:[#allocation13 + $0x5c8] sm:$0xff]
    %v496 = vld [vmem:[#allocation13 + $0x5d0] sm:$0xff]
    %v497 = vld [vmem:[#allocation13 + $0x5d8] sm:$0xff]
    %v498 = vld [vmem:[#allocation13 + $0x5e0] sm:$0xff]
    %v499 = vld [vmem:[#allocation13 + $0x5e8] sm:$0xff]
    %v500 = vld [vmem:[#allocation13 + $0x5f0] sm:$0xff]
    %v501 = vld [vmem:[#allocation13 + $0x5f8] sm:$0xff]
    %v502 = vld [vmem:[#allocation13 + $0x600] sm:$0xff]
    %v503 = vld [vmem:[#allocation13 + $0x608] sm:$0xff]
    %v504 = vld [vmem:[#allocation13 + $0x610] sm:$0xff]
    %v505 = vld [vmem:[#allocation13 + $0x618] sm:$0xff]
    %v506 = vld [vmem:[#allocation13 + $0x620] sm:$0xff]
    %v507 = vld [vmem:[#allocation13 + $0x628] sm:$0xff]
    %v508 = vld [vmem:[#allocation13 + $0x630] sm:$0xff]
    %v509 = vld [vmem:[#allocation13 + $0x638] sm:$0xff]
    %v510 = vld [vmem:[#allocation13 + $0x640] sm:$0xff]
    %v511 = vld [vmem:[#allocation13 + $0x648] sm:$0xff]
    %v512 = vld [vmem:[#allocation13 + $0x650] sm:$0xff]
    %v513 = vld [vmem:[#allocation13 + $0x658] sm:$0xff]
    %v514 = vld [vmem:[#allocation13 + $0x660] sm:$0xff]
    %v515 = vld [vmem:[#allocation13 + $0x668] sm:$0xff]
    %v516 = vld [vmem:[#allocation13 + $0x670] sm:$0xff]
    %v517 = vld [vmem:[#allocation13 + $0x678] sm:$0xff]
    %v518 = vld [vmem:[#allocation13 + $0x680] sm:$0xff]
    %v519 = vld [vmem:[#allocation13 + $0x688] sm:$0xff]
    %v520 = vld [vmem:[#allocation13 + $0x690] sm:$0xff]
    %v521 = vld [vmem:[#allocation13 + $0x698] sm:$0xff]
    %v522 = vld [vmem:[#allocation13 + $0x6a0] sm:$0xff]
    %v523 = vld [vmem:[#allocation13 + $0x6a8] sm:$0xff]
    %v524 = vld [vmem:[#allocation13 + $0x6b0] sm:$0xff]
    %v525 = vld [vmem:[#allocation13 + $0x6b8] sm:$0xff]
    %v526 = vld [vmem:[#allocation13 + $0x6c0] sm:$0xff]
    %v527 = vld [vmem:[#allocation13 + $0x6c8] sm:$0xff]
    %v528 = vld [vmem:[#allocation13 + $0x6d0] sm:$0xff]
    %v529 = vld [vmem:[#allocation13 + $0x6d8] sm:$0xff]
    %v530 = vld [vmem:[#allocation13 + $0x6e0] sm:$0xff]
    %v531 = vld [vmem:[#allocation13 + $0x6e8] sm:$0xff]
    %v532 = vld [vmem:[#allocation13 + $0x6f0] sm:$0xff]
    %v533 = vld [vmem:[#allocation13 + $0x6f8] sm:$0xff]
    %v534 = vld [vmem:[#allocation13 + $0x700] sm:$0xff]
    %v535 = vld [vmem:[#allocation13 + $0x708] sm:$0xff]
    %v536 = vld [vmem:[#allocation13 + $0x710] sm:$0xff]
    %v537 = vld [vmem:[#allocation13 + $0x718] sm:$0xff]
    %v538 = vld [vmem:[#allocation13 + $0x720] sm:$0xff]
    %v539 = vld [vmem:[#allocation13 + $0x728] sm:$0xff]
    %v540 = vld [vmem:[#allocation13 + $0x730] sm:$0xff]
    %v541 = vld [vmem:[#allocation13 + $0x738] sm:$0xff]
    %v542 = vld [vmem:[#allocation13 + $0x740] sm:$0xff]
    %v543 = vld [vmem:[#allocation13 + $0x748] sm:$0xff]
    %v544 = vld [vmem:[#allocation13 + $0x750] sm:$0xff]
    %v545 = vld [vmem:[#allocation13 + $0x758] sm:$0xff]
    %v546 = vld [vmem:[#allocation13 + $0x760] sm:$0xff]
    %v547 = vld [vmem:[#allocation13 + $0x768] sm:$0xff]
    %v548 = vld [vmem:[#allocation13 + $0x770] sm:$0xff]
    %v549 = vld [vmem:[#allocation13 + $0x778] sm:$0xff]
    %v550 = vld [vmem:[#allocation13 + $0x780] sm:$0xff]
    %v551 = vld [vmem:[#allocation13 + $0x788] sm:$0xff]
    %v552 = vld [vmem:[#allocation13 + $0x790] sm:$0xff]
    %v553 = vld [vmem:[#allocation13 + $0x798] sm:$0xff]
    %v554 = vld [vmem:[#allocation13 + $0x7a0] sm:$0xff]
    %v555 = vld [vmem:[#allocation13 + $0x7a8] sm:$0xff]
    %v556 = vld [vmem:[#allocation13 + $0x7b0] sm:$0xff]
    %v557 = vld [vmem:[#allocation13 + $0x7b8] sm:$0xff]
    %v558 = vld [vmem:[#allocation13 + $0x7c0] sm:$0xff]
    %v559 = vld [vmem:[#allocation13 + $0x7c8] sm:$0xff]
    %v560 = vld [vmem:[#allocation13 + $0x7d0] sm:$0xff]
    %v561 = vld [vmem:[#allocation13 + $0x7d8] sm:$0xff]
    %v562 = vld [vmem:[#allocation13 + $0x7e0] sm:$0xff]
    %v563 = vld [vmem:[#allocation13 + $0x7e8] sm:$0xff]
    %v564 = vld [vmem:[#allocation13 + $0x7f0] sm:$0xff]
    %v565 = vld [vmem:[#allocation13 + $0x7f8] sm:$0xff]
    %v566 = vld [vmem:[#allocation13 + $0x800] sm:$0xff]
    %v567 = vld [vmem:[#allocation13 + $0x808] sm:$0xff]
    %v568 = vld [vmem:[#allocation13 + $0x810] sm:$0xff]
    %v569 = vld [vmem:[#allocation13 + $0x818] sm:$0xff]
    %v570 = vld [vmem:[#allocation13 + $0x820] sm:$0xff]
    %v571 = vld [vmem:[#allocation13 + $0x828] sm:$0xff]
    %v572 = vld [vmem:[#allocation13 + $0x830] sm:$0xff]
    %v573 = vld [vmem:[#allocation13 + $0x838] sm:$0xff]
    %v574 = vld [vmem:[#allocation13 + $0x840] sm:$0xff]
    %v575 = vld [vmem:[#allocation13 + $0x848] sm:$0xff]
    %v576 = vld [vmem:[#allocation13 + $0x850] sm:$0xff]
    %v577 = vld [vmem:[#allocation13 + $0x858] sm:$0xff]
    %v578 = vld [vmem:[#allocation13 + $0x860] sm:$0xff]
    %v579 = vld [vmem:[#allocation13 + $0x868] sm:$0xff]
    %v580 = vld [vmem:[#allocation13 + $0x870] sm:$0xff]
    %v581 = vld [vmem:[#allocation13 + $0x878] sm:$0xff]
    %v582 = vld [vmem:[#allocation13 + $0x880] sm:$0xff]
    %v583 = vld [vmem:[#allocation13 + $0x888] sm:$0xff]
    %v584 = vld [vmem:[#allocation13 + $0x890] sm:$0xff]
    %v585 = vld [vmem:[#allocation13 + $0x898] sm:$0xff]
    %v586 = vld [vmem:[#allocation13 + $0x8a0] sm:$0xff]
    %v587 = vld [vmem:[#allocation13 + $0x8a8] sm:$0xff]
    %v588 = vld [vmem:[#allocation13 + $0x8b0] sm:$0xff]
    %v589 = vld [vmem:[#allocation13 + $0x8b8] sm:$0xff]
    %v590 = vld [vmem:[#allocation13 + $0x8c0] sm:$0xff]
    %v591 = vld [vmem:[#allocation13 + $0x8c8] sm:$0xff]
    %v592 = vld [vmem:[#allocation13 + $0x8d0] sm:$0xff]
    %v593 = vld [vmem:[#allocation13 + $0x8d8] sm:$0xff]
    %v594 = vld [vmem:[#allocation13 + $0x8e0] sm:$0xff]
    %v595 = vld [vmem:[#allocation13 + $0x8e8] sm:$0xff]
    %v596 = vld [vmem:[#allocation13 + $0x8f0] sm:$0xff]
    %v597 = vld [vmem:[#allocation13 + $0x8f8] sm:$0xff]
    %v598 = vld [vmem:[#allocation13 + $0x900] sm:$0xff]
    %v599 = vld [vmem:[#allocation13 + $0x908] sm:$0xff]
    %v600 = vld [vmem:[#allocation13 + $0x910] sm:$0xff]
    %v601 = vld [vmem:[#allocation13 + $0x918] sm:$0xff]
    %v602 = vld [vmem:[#allocation13 + $0x920] sm:$0xff]
    %v603 = vld [vmem:[#allocation13 + $0x928] sm:$0xff]
    %v604 = vld [vmem:[#allocation13 + $0x930] sm:$0xff]
    %v605 = vld [vmem:[#allocation13 + $0x938] sm:$0xff]
    %v606 = vld [vmem:[#allocation13 + $0x940] sm:$0xff]
    %v607 = vld [vmem:[#allocation13 + $0x948] sm:$0xff]
    %v608 = vld [vmem:[#allocation13 + $0x950] sm:$0xff]
    %v609 = vld [vmem:[#allocation13 + $0x958] sm:$0xff]
    %v610 = vld [vmem:[#allocation13 + $0x960] sm:$0xff]
    %v611 = vld [vmem:[#allocation13 + $0x968] sm:$0xff]
    %v612 = vld [vmem:[#allocation13 + $0x970] sm:$0xff]
    %v613 = vld [vmem:[#allocation13 + $0x978] sm:$0xff]
    %v614 = vld [vmem:[#allocation13 + $0x980] sm:$0xff]
    %v615 = vld [vmem:[#allocation13 + $0x988] sm:$0xff]
    %v616 = vld [vmem:[#allocation13 + $0x990] sm:$0xff]
    %v617 = vld [vmem:[#allocation13 + $0x998] sm:$0xff]
    %v618 = vld [vmem:[#allocation13 + $0x9a0] sm:$0xff]
    %v619 = vld [vmem:[#allocation13 + $0x9a8] sm:$0xff]
    %v620 = vld [vmem:[#allocation13 + $0x9b0] sm:$0xff]
    %v621 = vld [vmem:[#allocation13 + $0x9b8] sm:$0xff]
    %v622 = vld [vmem:[#allocation13 + $0x9c0] sm:$0xff]
    %v623 = vld [vmem:[#allocation13 + $0x9c8] sm:$0xff]
    %v624 = vld [vmem:[#allocation13 + $0x9d0] sm:$0xff]
    %v625 = vld [vmem:[#allocation13 + $0x9d8] sm:$0xff]
    %v626 = vld [vmem:[#allocation13 + $0x9e0] sm:$0xff]
    %v627 = vld [vmem:[#allocation13 + $0x9e8] sm:$0xff]
    %v628 = vld [vmem:[#allocation13 + $0x9f0] sm:$0xff]
    %v629 = vld [vmem:[#allocation13 + $0x9f8] sm:$0xff]
    %v630 = vld [vmem:[#allocation13 + $0xa00] sm:$0xff]
    %v631 = vld [vmem:[#allocation13 + $0xa08] sm:$0xff]
    %v632 = vld [vmem:[#allocation13 + $0xa10] sm:$0xff]
    %v633 = vld [vmem:[#allocation13 + $0xa18] sm:$0xff]
    %v634 = vld [vmem:[#allocation13 + $0xa20] sm:$0xff]
    %v635 = vld [vmem:[#allocation13 + $0xa28] sm:$0xff]
    %v636 = vld [vmem:[#allocation13 + $0xa30] sm:$0xff]
    %v637 = vld [vmem:[#allocation13 + $0xa38] sm:$0xff]
    %v638 = vld [vmem:[#allocation13 + $0xa40] sm:$0xff]
    %v639 = vld [vmem:[#allocation13 + $0xa48] sm:$0xff]
    %v640 = vld [vmem:[#allocation13 + $0xa50] sm:$0xff]
    %v641 = vld [vmem:[#allocation13 + $0xa58] sm:$0xff]
    %v642 = vld [vmem:[#allocation13 + $0xa60] sm:$0xff]
    %v643 = vld [vmem:[#allocation13 + $0xa68] sm:$0xff]
    %v644 = vld [vmem:[#allocation13 + $0xa70] sm:$0xff]
    %v645 = vld [vmem:[#allocation13 + $0xa78] sm:$0xff]
    %v646 = vld [vmem:[#allocation13 + $0xa80] sm:$0xff]
    %v647 = vld [vmem:[#allocation13 + $0xa88] sm:$0xff]
    %v648 = vld [vmem:[#allocation13 + $0xa90] sm:$0xff]
    %v649 = vld [vmem:[#allocation13 + $0xa98] sm:$0xff]
    %v650 = vld [vmem:[#allocation13 + $0xaa0] sm:$0xff]
    %v651 = vld [vmem:[#allocation13 + $0xaa8] sm:$0xff]
    %v652 = vld [vmem:[#allocation13 + $0xab0] sm:$0xff]
    %v653 = vld [vmem:[#allocation13 + $0xab8] sm:$0xff]
    %v654 = vld [vmem:[#allocation13 + $0xac0] sm:$0xff]
    %v655 = vld [vmem:[#allocation13 + $0xac8] sm:$0xff]
    %v656 = vld [vmem:[#allocation13 + $0xad0] sm:$0xff]
    %v657 = vld [vmem:[#allocation13 + $0xad8] sm:$0xff]
    %v658 = vld [vmem:[#allocation13 + $0xae0] sm:$0xff]
    %v659 = vld [vmem:[#allocation13 + $0xae8] sm:$0xff]
    %v660 = vld [vmem:[#allocation13 + $0xaf0] sm:$0xff]
    %v661 = vld [vmem:[#allocation13 + $0xaf8] sm:$0xff]
    %v662 = vld [vmem:[#allocation13 + $0xb00] sm:$0xff]
    %v663 = vld [vmem:[#allocation13 + $0xb08] sm:$0xff]
    %v664 = vld [vmem:[#allocation13 + $0xb10] sm:$0xff]
    %v665 = vld [vmem:[#allocation13 + $0xb18] sm:$0xff]
    %v666 = vld [vmem:[#allocation13 + $0xb20] sm:$0xff]
    %v667 = vld [vmem:[#allocation13 + $0xb28] sm:$0xff]
    %v668 = vld [vmem:[#allocation13 + $0xb30] sm:$0xff]
    %v669 = vld [vmem:[#allocation13 + $0xb38] sm:$0xff]
    %v670 = vld [vmem:[#allocation13 + $0xb40] sm:$0xff]
    %v671 = vld [vmem:[#allocation13 + $0xb48] sm:$0xff]
    %v672 = vld [vmem:[#allocation13 + $0xb50] sm:$0xff]
    %v673 = vld [vmem:[#allocation13 + $0xb58] sm:$0xff]
    %v674 = vld [vmem:[#allocation13 + $0xb60] sm:$0xff]
    %v675 = vld [vmem:[#allocation13 + $0xb68] sm:$0xff]
    %v676 = vld [vmem:[#allocation13 + $0xb70] sm:$0xff]
    %v677 = vld [vmem:[#allocation13 + $0xb78] sm:$0xff]
    %v678 = vld [vmem:[#allocation13 + $0xb80] sm:$0xff]
    %v679 = vld [vmem:[#allocation13 + $0xb88] sm:$0xff]
    %v680 = vld [vmem:[#allocation13 + $0xb90] sm:$0xff]
    %v681 = vld [vmem:[#allocation13 + $0xb98] sm:$0xff]
    %v682 = vld [vmem:[#allocation13 + $0xba0] sm:$0xff]
    %v683 = vld [vmem:[#allocation13 + $0xba8] sm:$0xff]
    %v684 = vld [vmem:[#allocation13 + $0xbb0] sm:$0xff]
    %v685 = vld [vmem:[#allocation13 + $0xbb8] sm:$0xff]
    %v686 = vld [vmem:[#allocation13 + $0xbc0] sm:$0xff]
    %v687 = vld [vmem:[#allocation13 + $0xbc8] sm:$0xff]
    %v688 = vld [vmem:[#allocation13 + $0xbd0] sm:$0xff]
    %v689 = vld [vmem:[#allocation13 + $0xbd8] sm:$0xff]
    %v690 = vld [vmem:[#allocation13 + $0xbe0] sm:$0xff]
    %v691 = vld [vmem:[#allocation13 + $0xbe8] sm:$0xff]
    %v692 = vld [vmem:[#allocation13 + $0xbf0] sm:$0xff]
    %v693 = vld [vmem:[#allocation13 + $0xbf8] sm:$0xff]
    %v694 = vld [vmem:[#allocation13 + $0xc00] sm:$0xff]
    %v695 = vld [vmem:[#allocation13 + $0xc08] sm:$0xff]
    %v696 = vld [vmem:[#allocation13 + $0xc10] sm:$0xff]
    %v697 = vld [vmem:[#allocation13 + $0xc18] sm:$0xff]
    %v698 = vld [vmem:[#allocation13 + $0xc20] sm:$0xff]
    %v699 = vld [vmem:[#allocation13 + $0xc28] sm:$0xff]
    %v700 = vld [vmem:[#allocation13 + $0xc30] sm:$0xff]
    %v701 = vld [vmem:[#allocation13 + $0xc38] sm:$0xff]
    %v702 = vld [vmem:[#allocation13 + $0xc40] sm:$0xff]
    %v703 = vld [vmem:[#allocation13 + $0xc48] sm:$0xff]
    %v704 = vld [vmem:[#allocation13 + $0xc50] sm:$0xff]
    %v705 = vld [vmem:[#allocation13 + $0xc58] sm:$0xff]
    %v706 = vld [vmem:[#allocation13 + $0xc60] sm:$0xff]
    %v707 = vld [vmem:[#allocation13 + $0xc68] sm:$0xff]
    %v708 = vld [vmem:[#allocation13 + $0xc70] sm:$0xff]
    %v709 = vld [vmem:[#allocation13 + $0xc78] sm:$0xff]
    %v710 = vld [vmem:[#allocation13 + $0xc80] sm:$0xff]
    %v711 = vld [vmem:[#allocation13 + $0xc88] sm:$0xff]
    %v712 = vld [vmem:[#allocation13 + $0xc90] sm:$0xff]
    %v713 = vld [vmem:[#allocation13 + $0xc98] sm:$0xff]
    %v714 = vld [vmem:[#allocation13 + $0xca0] sm:$0xff]
    %v715 = vld [vmem:[#allocation13 + $0xca8] sm:$0xff]
    %v716 = vld [vmem:[#allocation13 + $0xcb0] sm:$0xff]
    %v717 = vld [vmem:[#allocation13 + $0xcb8] sm:$0xff]
    %v718 = vld [vmem:[#allocation13 + $0xcc0] sm:$0xff]
    %v719 = vld [vmem:[#allocation13 + $0xcc8] sm:$0xff]
    %v720 = vld [vmem:[#allocation13 + $0xcd0] sm:$0xff]
    %v721 = vld [vmem:[#allocation13 + $0xcd8] sm:$0xff]
    %v722 = vld [vmem:[#allocation13 + $0xce0] sm:$0xff]
    %v723 = vld [vmem:[#allocation13 + $0xce8] sm:$0xff]
    %v724 = vld [vmem:[#allocation13 + $0xcf0] sm:$0xff]
    %v725 = vld [vmem:[#allocation13 + $0xcf8] sm:$0xff]
    %v726 = vld [vmem:[#allocation13 + $0xd00] sm:$0xff]
    %v727 = vld [vmem:[#allocation13 + $0xd08] sm:$0xff]
    %v728 = vld [vmem:[#allocation13 + $0xd10] sm:$0xff]
    %v729 = vld [vmem:[#allocation13 + $0xd18] sm:$0xff]
    %v730 = vld [vmem:[#allocation13 + $0xd20] sm:$0xff]
    %v731 = vld [vmem:[#allocation13 + $0xd28] sm:$0xff]
    %v732 = vld [vmem:[#allocation13 + $0xd30] sm:$0xff]
    %v733 = vld [vmem:[#allocation13 + $0xd38] sm:$0xff]
    %v734 = vld [vmem:[#allocation13 + $0xd40] sm:$0xff]
    %v735 = vld [vmem:[#allocation13 + $0xd48] sm:$0xff]
    %v736 = vld [vmem:[#allocation13 + $0xd50] sm:$0xff]
    %v737 = vld [vmem:[#allocation13 + $0xd58] sm:$0xff]
    %v738 = vld [vmem:[#allocation13 + $0xd60] sm:$0xff]
    %v739 = vld [vmem:[#allocation13 + $0xd68] sm:$0xff]
    %v740 = vld [vmem:[#allocation13 + $0xd70] sm:$0xff]
    %v741 = vld [vmem:[#allocation13 + $0xd78] sm:$0xff]
    %v742 = vld [vmem:[#allocation13 + $0xd80] sm:$0xff]
    %v743 = vld [vmem:[#allocation13 + $0xd88] sm:$0xff]
    %v744 = vld [vmem:[#allocation13 + $0xd90] sm:$0xff]
    %v745 = vld [vmem:[#allocation13 + $0xd98] sm:$0xff]
    %v746 = vld [vmem:[#allocation13 + $0xda0] sm:$0xff]
    %v747 = vld [vmem:[#allocation13 + $0xda8] sm:$0xff]
    %v748 = vld [vmem:[#allocation13 + $0xdb0] sm:$0xff]
    %v749 = vld [vmem:[#allocation13 + $0xdb8] sm:$0xff]
    %v750 = vld [vmem:[#allocation13 + $0xdc0] sm:$0xff]
    %v751 = vld [vmem:[#allocation13 + $0xdc8] sm:$0xff]
    %v752 = vld [vmem:[#allocation13 + $0xdd0] sm:$0xff]
    %v753 = vld [vmem:[#allocation13 + $0xdd8] sm:$0xff]
    %v754 = vld [vmem:[#allocation13 + $0xde0] sm:$0xff]
    %v755 = vld [vmem:[#allocation13 + $0xde8] sm:$0xff]
    %v756 = vld [vmem:[#allocation13 + $0xdf0] sm:$0xff]
    %v757 = vld [vmem:[#allocation13 + $0xdf8] sm:$0xff]
    %v758 = vld [vmem:[#allocation13 + $0xe00] sm:$0xff]
    %v759 = vld [vmem:[#allocation13 + $0xe08] sm:$0xff]
    %v760 = vld [vmem:[#allocation13 + $0xe10] sm:$0xff]
    %v761 = vld [vmem:[#allocation13 + $0xe18] sm:$0xff]
    %v762 = vld [vmem:[#allocation13 + $0xe20] sm:$0xff]
    %v763 = vld [vmem:[#allocation13 + $0xe28] sm:$0xff]
    %v764 = vld [vmem:[#allocation13 + $0xe30] sm:$0xff]
    %v765 = vld [vmem:[#allocation13 + $0xe38] sm:$0xff]
    %v766 = vld [vmem:[#allocation13 + $0xe40] sm:$0xff]
    %v767 = vld [vmem:[#allocation13 + $0xe48] sm:$0xff]
    %v768 = vld [vmem:[#allocation13 + $0xe50] sm:$0xff]
    %v769 = vld [vmem:[#allocation13 + $0xe58] sm:$0xff]
    %v770 = vld [vmem:[#allocation13 + $0xe60] sm:$0xff]
    %v771 = vld [vmem:[#allocation13 + $0xe68] sm:$0xff]
    %v772 = vld [vmem:[#allocation13 + $0xe70] sm:$0xff]
    %v773 = vld [vmem:[#allocation13 + $0xe78] sm:$0xff]
    %v774 = vld [vmem:[#allocation13 + $0xe80] sm:$0xff]
    %v775 = vld [vmem:[#allocation13 + $0xe88] sm:$0xff]
    %v776 = vld [vmem:[#allocation13 + $0xe90] sm:$0xff]
    %v777 = vld [vmem:[#allocation13 + $0xe98] sm:$0xff]
    %v778 = vld [vmem:[#allocation13 + $0xea0] sm:$0xff]
    %v779 = vld [vmem:[#allocation13 + $0xea8] sm:$0xff]
    %v780 = vld [vmem:[#allocation13 + $0xeb0] sm:$0xff]
    %v781 = vld [vmem:[#allocation13 + $0xeb8] sm:$0xff]
    %v782 = vld [vmem:[#allocation13 + $0xec0] sm:$0xff]
    %v783 = vld [vmem:[#allocation13 + $0xec8] sm:$0xff]
    %v784 = vld [vmem:[#allocation13 + $0xed0] sm:$0xff]
    %v785 = vld [vmem:[#allocation13 + $0xed8] sm:$0xff]
    %v786 = vld [vmem:[#allocation13 + $0xee0] sm:$0xff]
    %v787 = vld [vmem:[#allocation13 + $0xee8] sm:$0xff]
    %v788 = vld [vmem:[#allocation13 + $0xef0] sm:$0xff]
    %v789 = vld [vmem:[#allocation13 + $0xef8] sm:$0xff]
    %v790 = vld [vmem:[#allocation13 + $0xf00] sm:$0xff]
    %v791 = vld [vmem:[#allocation13 + $0xf08] sm:$0xff]
    %v792 = vld [vmem:[#allocation13 + $0xf10] sm:$0xff]
    %v793 = vld [vmem:[#allocation13 + $0xf18] sm:$0xff]
    %v794 = vld [vmem:[#allocation13 + $0xf20] sm:$0xff]
    %v795 = vld [vmem:[#allocation13 + $0xf28] sm:$0xff]
    %v796 = vld [vmem:[#allocation13 + $0xf30] sm:$0xff]
    %v797 = vld [vmem:[#allocation13 + $0xf38] sm:$0xff]
    %v798 = vld [vmem:[#allocation13 + $0xf40] sm:$0xff]
    %v799 = vld [vmem:[#allocation13 + $0xf48] sm:$0xff]
    %v800 = vld [vmem:[#allocation13 + $0xf50] sm:$0xff]
    %v801 = vld [vmem:[#allocation13 + $0xf58] sm:$0xff]
    %v802 = vld [vmem:[#allocation13 + $0xf60] sm:$0xff]
    %v803 = vld [vmem:[#allocation13 + $0xf68] sm:$0xff]
    %v804 = vld [vmem:[#allocation13 + $0xf70] sm:$0xff]
    %v805 = vld [vmem:[#allocation13 + $0xf78] sm:$0xff]
    %v806 = vld [vmem:[#allocation13 + $0xf80] sm:$0xff]
    %v807 = vld [vmem:[#allocation13 + $0xf88] sm:$0xff]
    %v808 = vld [vmem:[#allocation13 + $0xf90] sm:$0xff]
    %v809 = vld [vmem:[#allocation13 + $0xf98] sm:$0xff]
    %v810 = vld [vmem:[#allocation13 + $0xfa0] sm:$0xff]
    %v811 = vld [vmem:[#allocation13 + $0xfa8] sm:$0xff]
    %v812 = vld [vmem:[#allocation13 + $0xfb0] sm:$0xff]
    %v813 = vld [vmem:[#allocation13 + $0xfb8] sm:$0xff]
    %v814 = vld [vmem:[#allocation13 + $0xfc0] sm:$0xff]
    %v815 = vld [vmem:[#allocation13 + $0xfc8] sm:$0xff]
    %v816 = vld [vmem:[#allocation13 + $0xfd0] sm:$0xff]
    %v817 = vld [vmem:[#allocation13 + $0xfd8] sm:$0xff]
    %v818 = vld [vmem:[#allocation13 + $0xfe0] sm:$0xff]
    %v819 = vld [vmem:[#allocation13 + $0xfe8] sm:$0xff]
    %v820 = vld [vmem:[#allocation13 + $0xff0] sm:$0xff]
    %v821 = vld [vmem:[#allocation13 + $0xff8] sm:$0xff]
    %v822 = vld [vmem:[#allocation15] sm:$0xff]
    %v823 = vld [vmem:[#allocation15 + $0x8] sm:$0xff]
    %v824 = vld [vmem:[#allocation16] sm:$0xff]
    %v825 = vld [vmem:[#allocation16 + $0x8] sm:$0xff]
    %v826 = vld [vmem:[#allocation16 + $0x10] sm:$0xff]
    %v827 = vld [vmem:[#allocation16 + $0x18] sm:$0xff]
    %v828 = vld [vmem:[#allocation16 + $0x20] sm:$0xff]
    %v829 = vld [vmem:[#allocation16 + $0x28] sm:$0xff]
    %v830 = vld [vmem:[#allocation16 + $0x30] sm:$0xff]
    %v831 = vld [vmem:[#allocation16 + $0x38] sm:$0xff]
    %v832 = vld [vmem:[#allocation16 + $0x40] sm:$0xff]
    %v833 = vld [vmem:[#allocation16 + $0x48] sm:$0xff]
    %v834 = vld [vmem:[#allocation16 + $0x50] sm:$0xff]
    %v835 = vld [vmem:[#allocation16 + $0x58] sm:$0xff]
    %v836 = vld [vmem:[#allocation16 + $0x60] sm:$0xff]
    %v837 = vld [vmem:[#allocation16 + $0x68] sm:$0xff]
    %v838 = vld [vmem:[#allocation16 + $0x70] sm:$0xff]
    %v839 = vld [vmem:[#allocation16 + $0x78] sm:$0xff]
    %v840 = vld [vmem:[#allocation16 + $0x80] sm:$0xff]
    %v841 = vld [vmem:[#allocation16 + $0x88] sm:$0xff]
    %v842 = vld [vmem:[#allocation16 + $0x90] sm:$0xff]
    %v843 = vld [vmem:[#allocation16 + $0x98] sm:$0xff]
    %v844 = vld [vmem:[#allocation16 + $0xa0] sm:$0xff]
    %v845 = vld [vmem:[#allocation16 + $0xa8] sm:$0xff]
    %v846 = vld [vmem:[#allocation16 + $0xb0] sm:$0xff]
    %v847 = vld [vmem:[#allocation16 + $0xb8] sm:$0xff]
    %v848 = vld [vmem:[#allocation16 + $0xc0] sm:$0xff]
    %v849 = vld [vmem:[#allocation16 + $0xc8] sm:$0xff]
    %v850 = vld [vmem:[#allocation16 + $0xd0] sm:$0xff]
    %v851 = vld [vmem:[#allocation16 + $0xd8] sm:$0xff]
    %v852 = vld [vmem:[#allocation16 + $0xe0] sm:$0xff]
    %v853 = vld [vmem:[#allocation16 + $0xe8] sm:$0xff]
    %v854 = vld [vmem:[#allocation16 + $0xf0] sm:$0xff]
    %v855 = vld [vmem:[#allocation16 + $0xf8] sm:$0xff]
    %v856 = vld [vmem:[#allocation16 + $0x100] sm:$0xff]
    %v857 = vld [vmem:[#allocation16 + $0x108] sm:$0xff]
    %v858 = vld [vmem:[#allocation16 + $0x110] sm:$0xff]
    %v859 = vld [vmem:[#allocation16 + $0x118] sm:$0xff]
    %v860 = vld [vmem:[#allocation16 + $0x120] sm:$0xff]
    %v861 = vld [vmem:[#allocation16 + $0x128] sm:$0xff]
    %v862 = vld [vmem:[#allocation16 + $0x130] sm:$0xff]
    %v863 = vld [vmem:[#allocation16 + $0x138] sm:$0xff]
    %v864 = vld [vmem:[#allocation16 + $0x140] sm:$0xff]
    %v865 = vld [vmem:[#allocation16 + $0x148] sm:$0xff]
    %v866 = vld [vmem:[#allocation16 + $0x150] sm:$0xff]
    %v867 = vld [vmem:[#allocation16 + $0x158] sm:$0xff]
    %v868 = vld [vmem:[#allocation16 + $0x160] sm:$0xff]
    %v869 = vld [vmem:[#allocation16 + $0x168] sm:$0xff]
    %v870 = vld [vmem:[#allocation16 + $0x170] sm:$0xff]
    %v871 = vld [vmem:[#allocation16 + $0x178] sm:$0xff]
    %v872 = vld [vmem:[#allocation16 + $0x180] sm:$0xff]
    %v873 = vld [vmem:[#allocation16 + $0x188] sm:$0xff]
    %v874 = vld [vmem:[#allocation16 + $0x190] sm:$0xff]
    %v875 = vld [vmem:[#allocation16 + $0x198] sm:$0xff]
    %v876 = vld [vmem:[#allocation16 + $0x1a0] sm:$0xff]
    %v877 = vld [vmem:[#allocation16 + $0x1a8] sm:$0xff]
    %v878 = vld [vmem:[#allocation16 + $0x1b0] sm:$0xff]
    %v879 = vld [vmem:[#allocation16 + $0x1b8] sm:$0xff]
    %v880 = vld [vmem:[#allocation16 + $0x1c0] sm:$0xff]
    %v881 = vld [vmem:[#allocation16 + $0x1c8] sm:$0xff]
    %v882 = vld [vmem:[#allocation16 + $0x1d0] sm:$0xff]
    %v883 = vld [vmem:[#allocation16 + $0x1d8] sm:$0xff]
    %v884 = vld [vmem:[#allocation16 + $0x1e0] sm:$0xff]
    %v885 = vld [vmem:[#allocation16 + $0x1e8] sm:$0xff]
    %v886 = vld [vmem:[#allocation16 + $0x1f0] sm:$0xff]
    %v887 = vld [vmem:[#allocation16 + $0x1f8] sm:$0xff]
    %v888 = vld [vmem:[#allocation16 + $0x200] sm:$0xff]
    %v889 = vld [vmem:[#allocation16 + $0x208] sm:$0xff]
    %v890 = vld [vmem:[#allocation16 + $0x210] sm:$0xff]
    %v891 = vld [vmem:[#allocation16 + $0x218] sm:$0xff]
    %v892 = vld [vmem:[#allocation16 + $0x220] sm:$0xff]
    %v893 = vld [vmem:[#allocation16 + $0x228] sm:$0xff]
    %v894 = vld [vmem:[#allocation16 + $0x230] sm:$0xff]
    %v895 = vld [vmem:[#allocation16 + $0x238] sm:$0xff]
    %v896 = vld [vmem:[#allocation16 + $0x240] sm:$0xff]
    %v897 = vld [vmem:[#allocation16 + $0x248] sm:$0xff]
    %v898 = vld [vmem:[#allocation16 + $0x250] sm:$0xff]
    %v899 = vld [vmem:[#allocation16 + $0x258] sm:$0xff]
    %v900 = vld [vmem:[#allocation16 + $0x260] sm:$0xff]
    %v901 = vld [vmem:[#allocation16 + $0x268] sm:$0xff]
    %v902 = vld [vmem:[#allocation16 + $0x270] sm:$0xff]
    %v903 = vld [vmem:[#allocation16 + $0x278] sm:$0xff]
    %v904 = vld [vmem:[#allocation16 + $0x280] sm:$0xff]
    %v905 = vld [vmem:[#allocation16 + $0x288] sm:$0xff]
    %v906 = vld [vmem:[#allocation16 + $0x290] sm:$0xff]
    %v907 = vld [vmem:[#allocation16 + $0x298] sm:$0xff]
    %v908 = vld [vmem:[#allocation16 + $0x2a0] sm:$0xff]
    %v909 = vld [vmem:[#allocation16 + $0x2a8] sm:$0xff]
    %v910 = vld [vmem:[#allocation16 + $0x2b0] sm:$0xff]
    %v911 = vld [vmem:[#allocation16 + $0x2b8] sm:$0xff]
    %v912 = vld [vmem:[#allocation16 + $0x2c0] sm:$0xff]
    %v913 = vld [vmem:[#allocation16 + $0x2c8] sm:$0xff]
    %v914 = vld [vmem:[#allocation16 + $0x2d0] sm:$0xff]
    %v915 = vld [vmem:[#allocation16 + $0x2d8] sm:$0xff]
    %v916 = vld [vmem:[#allocation16 + $0x2e0] sm:$0xff]
    %v917 = vld [vmem:[#allocation16 + $0x2e8] sm:$0xff]
    %v918 = vld [vmem:[#allocation16 + $0x2f0] sm:$0xff]
    %v919 = vld [vmem:[#allocation16 + $0x2f8] sm:$0xff]
    %v920 = vld [vmem:[#allocation16 + $0x300] sm:$0xff]
    %v921 = vld [vmem:[#allocation16 + $0x308] sm:$0xff]
    %v922 = vld [vmem:[#allocation16 + $0x310] sm:$0xff]
    %v923 = vld [vmem:[#allocation16 + $0x318] sm:$0xff]
    %v924 = vld [vmem:[#allocation16 + $0x320] sm:$0xff]
    %v925 = vld [vmem:[#allocation16 + $0x328] sm:$0xff]
    %v926 = vld [vmem:[#allocation16 + $0x330] sm:$0xff]
    %v927 = vld [vmem:[#allocation16 + $0x338] sm:$0xff]
    %v928 = vld [vmem:[#allocation16 + $0x340] sm:$0xff]
    %v929 = vld [vmem:[#allocation16 + $0x348] sm:$0xff]
    %v930 = vld [vmem:[#allocation16 + $0x350] sm:$0xff]
    %v931 = vld [vmem:[#allocation16 + $0x358] sm:$0xff]
    %v932 = vld [vmem:[#allocation16 + $0x360] sm:$0xff]
    %v933 = vld [vmem:[#allocation16 + $0x368] sm:$0xff]
    %v934 = vld [vmem:[#allocation16 + $0x370] sm:$0xff]
    %v935 = vld [vmem:[#allocation16 + $0x378] sm:$0xff]
    %v936 = vld [vmem:[#allocation16 + $0x380] sm:$0xff]
    %v937 = vld [vmem:[#allocation16 + $0x388] sm:$0xff]
    %v938 = vld [vmem:[#allocation16 + $0x390] sm:$0xff]
    %v939 = vld [vmem:[#allocation16 + $0x398] sm:$0xff]
    %v940 = vld [vmem:[#allocation16 + $0x3a0] sm:$0xff]
    %v941 = vld [vmem:[#allocation16 + $0x3a8] sm:$0xff]
    %v942 = vld [vmem:[#allocation16 + $0x3b0] sm:$0xff]
    %v943 = vld [vmem:[#allocation16 + $0x3b8] sm:$0xff]
    %v944 = vld [vmem:[#allocation16 + $0x3c0] sm:$0xff]
    %v945 = vld [vmem:[#allocation16 + $0x3c8] sm:$0xff]
    %v946 = vld [vmem:[#allocation16 + $0x3d0] sm:$0xff]
    %v947 = vld [vmem:[#allocation16 + $0x3d8] sm:$0xff]
    %v948 = vld [vmem:[#allocation16 + $0x3e0] sm:$0xff]
    %v949 = vld [vmem:[#allocation16 + $0x3e8] sm:$0xff]
    %v950 = vld [vmem:[#allocation16 + $0x3f0] sm:$0xff]
    %v951 = vld [vmem:[#allocation16 + $0x3f8] sm:$0xff]
    %v952 = vld [vmem:[#allocation16 + $0x400] sm:$0xff]
    %v953 = vld [vmem:[#allocation16 + $0x408] sm:$0xff]
    %v954 = vld [vmem:[#allocation16 + $0x410] sm:$0xff]
    %v955 = vld [vmem:[#allocation16 + $0x418] sm:$0xff]
    %v956 = vld [vmem:[#allocation16 + $0x420] sm:$0xff]
    %v957 = vld [vmem:[#allocation16 + $0x428] sm:$0xff]
    %v958 = vld [vmem:[#allocation16 + $0x430] sm:$0xff]
    %v959 = vld [vmem:[#allocation16 + $0x438] sm:$0xff]
    %v960 = vld [vmem:[#allocation16 + $0x440] sm:$0xff]
    %v961 = vld [vmem:[#allocation16 + $0x448] sm:$0xff]
    %v962 = vld [vmem:[#allocation16 + $0x450] sm:$0xff]
    %v963 = vld [vmem:[#allocation16 + $0x458] sm:$0xff]
    %v964 = vld [vmem:[#allocation16 + $0x460] sm:$0xff]
    %v965 = vld [vmem:[#allocation16 + $0x468] sm:$0xff]
    %v966 = vld [vmem:[#allocation16 + $0x470] sm:$0xff]
    %v967 = vld [vmem:[#allocation16 + $0x478] sm:$0xff]
    %v968 = vld [vmem:[#allocation16 + $0x480] sm:$0xff]
    %v969 = vld [vmem:[#allocation16 + $0x488] sm:$0xff]
    %v970 = vld [vmem:[#allocation16 + $0x490] sm:$0xff]
    %v971 = vld [vmem:[#allocation16 + $0x498] sm:$0xff]
    %v972 = vld [vmem:[#allocation16 + $0x4a0] sm:$0xff]
    %v973 = vld [vmem:[#allocation16 + $0x4a8] sm:$0xff]
    %v974 = vld [vmem:[#allocation16 + $0x4b0] sm:$0xff]
    %v975 = vld [vmem:[#allocation16 + $0x4b8] sm:$0xff]
    %v976 = vld [vmem:[#allocation16 + $0x4c0] sm:$0xff]
    %v977 = vld [vmem:[#allocation16 + $0x4c8] sm:$0xff]
    %v978 = vld [vmem:[#allocation16 + $0x4d0] sm:$0xff]
    %v979 = vld [vmem:[#allocation16 + $0x4d8] sm:$0xff]
    %v980 = vld [vmem:[#allocation16 + $0x4e0] sm:$0xff]
    %v981 = vld [vmem:[#allocation16 + $0x4e8] sm:$0xff]
    %v982 = vld [vmem:[#allocation16 + $0x4f0] sm:$0xff]
    %v983 = vld [vmem:[#allocation16 + $0x4f8] sm:$0xff]
    %v984 = vld [vmem:[#allocation16 + $0x500] sm:$0xff]
    %v985 = vld [vmem:[#allocation16 + $0x508] sm:$0xff]
    %v986 = vld [vmem:[#allocation16 + $0x510] sm:$0xff]
    %v987 = vld [vmem:[#allocation16 + $0x518] sm:$0xff]
    %v988 = vld [vmem:[#allocation16 + $0x520] sm:$0xff]
    %v989 = vld [vmem:[#allocation16 + $0x528] sm:$0xff]
    %v990 = vld [vmem:[#allocation16 + $0x530] sm:$0xff]
    %v991 = vld [vmem:[#allocation16 + $0x538] sm:$0xff]
    %v992 = vld [vmem:[#allocation16 + $0x540] sm:$0xff]
    %v993 = vld [vmem:[#allocation16 + $0x548] sm:$0xff]
    %v994 = vld [vmem:[#allocation16 + $0x550] sm:$0xff]
    %v995 = vld [vmem:[#allocation16 + $0x558] sm:$0xff]
    %v996 = vld [vmem:[#allocation16 + $0x560] sm:$0xff]
    %v997 = vld [vmem:[#allocation16 + $0x568] sm:$0xff]
    %v998 = vld [vmem:[#allocation16 + $0x570] sm:$0xff]
    %v999 = vld [vmem:[#allocation16 + $0x578] sm:$0xff]
    %v1000 = vld [vmem:[#allocation16 + $0x580] sm:$0xff]
    %v1001 = vld [vmem:[#allocation16 + $0x588] sm:$0xff]
    %v1002 = vld [vmem:[#allocation16 + $0x590] sm:$0xff]
    %v1003 = vld [vmem:[#allocation16 + $0x598] sm:$0xff]
    %v1004 = vld [vmem:[#allocation16 + $0x5a0] sm:$0xff]
    %v1005 = vld [vmem:[#allocation16 + $0x5a8] sm:$0xff]
    %v1006 = vld [vmem:[#allocation16 + $0x5b0] sm:$0xff]
    %v1007 = vld [vmem:[#allocation16 + $0x5b8] sm:$0xff]
    %v1008 = vld [vmem:[#allocation16 + $0x5c0] sm:$0xff]
    %v1009 = vld [vmem:[#allocation16 + $0x5c8] sm:$0xff]
    %v1010 = vld [vmem:[#allocation16 + $0x5d0] sm:$0xff]
    %v1011 = vld [vmem:[#allocation16 + $0x5d8] sm:$0xff]
    %v1012 = vld [vmem:[#allocation16 + $0x5e0] sm:$0xff]
    %v1013 = vld [vmem:[#allocation16 + $0x5e8] sm:$0xff]
    %v1014 = vld [vmem:[#allocation16 + $0x5f0] sm:$0xff]
    %v1015 = vld [vmem:[#allocation16 + $0x5f8] sm:$0xff]
    %v1016 = vld [vmem:[#allocation16 + $0x600] sm:$0xff]
    %v1017 = vld [vmem:[#allocation16 + $0x608] sm:$0xff]
    %v1018 = vld [vmem:[#allocation16 + $0x610] sm:$0xff]
    %v1019 = vld [vmem:[#allocation16 + $0x618] sm:$0xff]
    %v1020 = vld [vmem:[#allocation16 + $0x620] sm:$0xff]
    %v1021 = vld [vmem:[#allocation16 + $0x628] sm:$0xff]
    %v1022 = vld [vmem:[#allocation16 + $0x630] sm:$0xff]
    %v1023 = vld [vmem:[#allocation16 + $0x638] sm:$0xff]
    %v1024 = vld [vmem:[#allocation16 + $0x640] sm:$0xff]
    %v1025 = vld [vmem:[#allocation16 + $0x648] sm:$0xff]
    %v1026 = vld [vmem:[#allocation16 + $0x650] sm:$0xff]
    %v1027 = vld [vmem:[#allocation16 + $0x658] sm:$0xff]
    %v1028 = vld [vmem:[#allocation16 + $0x660] sm:$0xff]
    %v1029 = vld [vmem:[#allocation16 + $0x668] sm:$0xff]
    %v1030 = vld [vmem:[#allocation16 + $0x670] sm:$0xff]
    %v1031 = vld [vmem:[#allocation16 + $0x678] sm:$0xff]
    %v1032 = vld [vmem:[#allocation16 + $0x680] sm:$0xff]
    %v1033 = vld [vmem:[#allocation16 + $0x688] sm:$0xff]
    %v1034 = vld [vmem:[#allocation16 + $0x690] sm:$0xff]
    %v1035 = vld [vmem:[#allocation16 + $0x698] sm:$0xff]
    %v1036 = vld [vmem:[#allocation16 + $0x6a0] sm:$0xff]
    %v1037 = vld [vmem:[#allocation16 + $0x6a8] sm:$0xff]
    %v1038 = vld [vmem:[#allocation16 + $0x6b0] sm:$0xff]
    %v1039 = vld [vmem:[#allocation16 + $0x6b8] sm:$0xff]
    %v1040 = vld [vmem:[#allocation16 + $0x6c0] sm:$0xff]
    %v1041 = vld [vmem:[#allocation16 + $0x6c8] sm:$0xff]
    %v1042 = vld [vmem:[#allocation16 + $0x6d0] sm:$0xff]
    %v1043 = vld [vmem:[#allocation16 + $0x6d8] sm:$0xff]
    %v1044 = vld [vmem:[#allocation16 + $0x6e0] sm:$0xff]
    %v1045 = vld [vmem:[#allocation16 + $0x6e8] sm:$0xff]
    %v1046 = vld [vmem:[#allocation16 + $0x6f0] sm:$0xff]
    %v1047 = vld [vmem:[#allocation16 + $0x6f8] sm:$0xff]
    %v1048 = vld [vmem:[#allocation16 + $0x700] sm:$0xff]
    %v1049 = vld [vmem:[#allocation16 + $0x708] sm:$0xff]
    %v1050 = vld [vmem:[#allocation16 + $0x710] sm:$0xff]
    %v1051 = vld [vmem:[#allocation16 + $0x718] sm:$0xff]
    %v1052 = vld [vmem:[#allocation16 + $0x720] sm:$0xff]
    %v1053 = vld [vmem:[#allocation16 + $0x728] sm:$0xff]
    %v1054 = vld [vmem:[#allocation16 + $0x730] sm:$0xff]
    %v1055 = vld [vmem:[#allocation16 + $0x738] sm:$0xff]
    %v1056 = vld [vmem:[#allocation16 + $0x740] sm:$0xff]
    %v1057 = vld [vmem:[#allocation16 + $0x748] sm:$0xff]
    %v1058 = vld [vmem:[#allocation16 + $0x750] sm:$0xff]
    %v1059 = vld [vmem:[#allocation16 + $0x758] sm:$0xff]
    %v1060 = vld [vmem:[#allocation16 + $0x760] sm:$0xff]
    %v1061 = vld [vmem:[#allocation16 + $0x768] sm:$0xff]
    %v1062 = vld [vmem:[#allocation16 + $0x770] sm:$0xff]
    %v1063 = vld [vmem:[#allocation16 + $0x778] sm:$0xff]
    %v1064 = vld [vmem:[#allocation16 + $0x780] sm:$0xff]
    %v1065 = vld [vmem:[#allocation16 + $0x788] sm:$0xff]
    %v1066 = vld [vmem:[#allocation16 + $0x790] sm:$0xff]
    %v1067 = vld [vmem:[#allocation16 + $0x798] sm:$0xff]
    %v1068 = vld [vmem:[#allocation16 + $0x7a0] sm:$0xff]
    %v1069 = vld [vmem:[#allocation16 + $0x7a8] sm:$0xff]
    %v1070 = vld [vmem:[#allocation16 + $0x7b0] sm:$0xff]
    %v1071 = vld [vmem:[#allocation16 + $0x7b8] sm:$0xff]
    %v1072 = vld [vmem:[#allocation16 + $0x7c0] sm:$0xff]
    %v1073 = vld [vmem:[#allocation16 + $0x7c8] sm:$0xff]
    %v1074 = vld [vmem:[#allocation16 + $0x7d0] sm:$0xff]
    %v1075 = vld [vmem:[#allocation16 + $0x7d8] sm:$0xff]
    %v1076 = vld [vmem:[#allocation16 + $0x7e0] sm:$0xff]
    %v1077 = vld [vmem:[#allocation16 + $0x7e8] sm:$0xff]
    %v1078 = vld [vmem:[#allocation16 + $0x7f0] sm:$0xff]
    %v1079 = vld [vmem:[#allocation16 + $0x7f8] sm:$0xff]
    %v1080 = vld [vmem:[#allocation16 + $0x800] sm:$0xff]
    %v1081 = vld [vmem:[#allocation16 + $0x808] sm:$0xff]
    %v1082 = vld [vmem:[#allocation16 + $0x810] sm:$0xff]
    %v1083 = vld [vmem:[#allocation16 + $0x818] sm:$0xff]
    %v1084 = vld [vmem:[#allocation16 + $0x820] sm:$0xff]
    %v1085 = vld [vmem:[#allocation16 + $0x828] sm:$0xff]
    %v1086 = vld [vmem:[#allocation16 + $0x830] sm:$0xff]
    %v1087 = vld [vmem:[#allocation16 + $0x838] sm:$0xff]
    %v1088 = vld [vmem:[#allocation16 + $0x840] sm:$0xff]
    %v1089 = vld [vmem:[#allocation16 + $0x848] sm:$0xff]
    %v1090 = vld [vmem:[#allocation16 + $0x850] sm:$0xff]
    %v1091 = vld [vmem:[#allocation16 + $0x858] sm:$0xff]
    %v1092 = vld [vmem:[#allocation16 + $0x860] sm:$0xff]
    %v1093 = vld [vmem:[#allocation16 + $0x868] sm:$0xff]
    %v1094 = vld [vmem:[#allocation16 + $0x870] sm:$0xff]
    %v1095 = vld [vmem:[#allocation16 + $0x878] sm:$0xff]
    %v1096 = vld [vmem:[#allocation16 + $0x880] sm:$0xff]
    %v1097 = vld [vmem:[#allocation16 + $0x888] sm:$0xff]
    %v1098 = vld [vmem:[#allocation16 + $0x890] sm:$0xff]
    %v1099 = vld [vmem:[#allocation16 + $0x898] sm:$0xff]
    %v1100 = vld [vmem:[#allocation16 + $0x8a0] sm:$0xff]
    %v1101 = vld [vmem:[#allocation16 + $0x8a8] sm:$0xff]
    %v1102 = vld [vmem:[#allocation16 + $0x8b0] sm:$0xff]
    %v1103 = vld [vmem:[#allocation16 + $0x8b8] sm:$0xff]
    %v1104 = vld [vmem:[#allocation16 + $0x8c0] sm:$0xff]
    %v1105 = vld [vmem:[#allocation16 + $0x8c8] sm:$0xff]
    %v1106 = vld [vmem:[#allocation16 + $0x8d0] sm:$0xff]
    %v1107 = vld [vmem:[#allocation16 + $0x8d8] sm:$0xff]
    %v1108 = vld [vmem:[#allocation16 + $0x8e0] sm:$0xff]
    %v1109 = vld [vmem:[#allocation16 + $0x8e8] sm:$0xff]
    %v1110 = vld [vmem:[#allocation16 + $0x8f0] sm:$0xff]
    %v1111 = vld [vmem:[#allocation16 + $0x8f8] sm:$0xff]
    %v1112 = vld [vmem:[#allocation16 + $0x900] sm:$0xff]
    %v1113 = vld [vmem:[#allocation16 + $0x908] sm:$0xff]
    %v1114 = vld [vmem:[#allocation16 + $0x910] sm:$0xff]
    %v1115 = vld [vmem:[#allocation16 + $0x918] sm:$0xff]
    %v1116 = vld [vmem:[#allocation16 + $0x920] sm:$0xff]
    %v1117 = vld [vmem:[#allocation16 + $0x928] sm:$0xff]
    %v1118 = vld [vmem:[#allocation16 + $0x930] sm:$0xff]
    %v1119 = vld [vmem:[#allocation16 + $0x938] sm:$0xff]
    %v1120 = vld [vmem:[#allocation16 + $0x940] sm:$0xff]
    %v1121 = vld [vmem:[#allocation16 + $0x948] sm:$0xff]
    %v1122 = vld [vmem:[#allocation16 + $0x950] sm:$0xff]
    %v1123 = vld [vmem:[#allocation16 + $0x958] sm:$0xff]
    %v1124 = vld [vmem:[#allocation16 + $0x960] sm:$0xff]
    %v1125 = vld [vmem:[#allocation16 + $0x968] sm:$0xff]
    %v1126 = vld [vmem:[#allocation16 + $0x970] sm:$0xff]
    %v1127 = vld [vmem:[#allocation16 + $0x978] sm:$0xff]
    %v1128 = vld [vmem:[#allocation16 + $0x980] sm:$0xff]
    %v1129 = vld [vmem:[#allocation16 + $0x988] sm:$0xff]
    %v1130 = vld [vmem:[#allocation16 + $0x990] sm:$0xff]
    %v1131 = vld [vmem:[#allocation16 + $0x998] sm:$0xff]
    %v1132 = vld [vmem:[#allocation16 + $0x9a0] sm:$0xff]
    %v1133 = vld [vmem:[#allocation16 + $0x9a8] sm:$0xff]
    %v1134 = vld [vmem:[#allocation16 + $0x9b0] sm:$0xff]
    %v1135 = vld [vmem:[#allocation16 + $0x9b8] sm:$0xff]
    %v1136 = vld [vmem:[#allocation16 + $0x9c0] sm:$0xff]
    %v1137 = vld [vmem:[#allocation16 + $0x9c8] sm:$0xff]
    %v1138 = vld [vmem:[#allocation16 + $0x9d0] sm:$0xff]
    %v1139 = vld [vmem:[#allocation16 + $0x9d8] sm:$0xff]
    %v1140 = vld [vmem:[#allocation16 + $0x9e0] sm:$0xff]
    %v1141 = vld [vmem:[#allocation16 + $0x9e8] sm:$0xff]
    %v1142 = vld [vmem:[#allocation16 + $0x9f0] sm:$0xff]
    %v1143 = vld [vmem:[#allocation16 + $0x9f8] sm:$0xff]
    %v1144 = vld [vmem:[#allocation16 + $0xa00] sm:$0xff]
    %v1145 = vld [vmem:[#allocation16 + $0xa08] sm:$0xff]
    %v1146 = vld [vmem:[#allocation16 + $0xa10] sm:$0xff]
    %v1147 = vld [vmem:[#allocation16 + $0xa18] sm:$0xff]
    %v1148 = vld [vmem:[#allocation16 + $0xa20] sm:$0xff]
    %v1149 = vld [vmem:[#allocation16 + $0xa28] sm:$0xff]
    %v1150 = vld [vmem:[#allocation16 + $0xa30] sm:$0xff]
    %v1151 = vld [vmem:[#allocation16 + $0xa38] sm:$0xff]
    %v1152 = vld [vmem:[#allocation16 + $0xa40] sm:$0xff]
    %v1153 = vld [vmem:[#allocation16 + $0xa48] sm:$0xff]
    %v1154 = vld [vmem:[#allocation16 + $0xa50] sm:$0xff]
    %v1155 = vld [vmem:[#allocation16 + $0xa58] sm:$0xff]
    %v1156 = vld [vmem:[#allocation16 + $0xa60] sm:$0xff]
    %v1157 = vld [vmem:[#allocation16 + $0xa68] sm:$0xff]
    %v1158 = vld [vmem:[#allocation16 + $0xa70] sm:$0xff]
    %v1159 = vld [vmem:[#allocation16 + $0xa78] sm:$0xff]
    %v1160 = vld [vmem:[#allocation16 + $0xa80] sm:$0xff]
    %v1161 = vld [vmem:[#allocation16 + $0xa88] sm:$0xff]
    %v1162 = vld [vmem:[#allocation16 + $0xa90] sm:$0xff]
    %v1163 = vld [vmem:[#allocation16 + $0xa98] sm:$0xff]
    %v1164 = vld [vmem:[#allocation16 + $0xaa0] sm:$0xff]
    %v1165 = vld [vmem:[#allocation16 + $0xaa8] sm:$0xff]
    %v1166 = vld [vmem:[#allocation16 + $0xab0] sm:$0xff]
    %v1167 = vld [vmem:[#allocation16 + $0xab8] sm:$0xff]
    %v1168 = vld [vmem:[#allocation16 + $0xac0] sm:$0xff]
    %v1169 = vld [vmem:[#allocation16 + $0xac8] sm:$0xff]
    %v1170 = vld [vmem:[#allocation16 + $0xad0] sm:$0xff]
    %v1171 = vld [vmem:[#allocation16 + $0xad8] sm:$0xff]
    %v1172 = vld [vmem:[#allocation16 + $0xae0] sm:$0xff]
    %v1173 = vld [vmem:[#allocation16 + $0xae8] sm:$0xff]
    %v1174 = vld [vmem:[#allocation16 + $0xaf0] sm:$0xff]
    %v1175 = vld [vmem:[#allocation16 + $0xaf8] sm:$0xff]
    %v1176 = vld [vmem:[#allocation16 + $0xb00] sm:$0xff]
    %v1177 = vld [vmem:[#allocation16 + $0xb08] sm:$0xff]
    %v1178 = vld [vmem:[#allocation16 + $0xb10] sm:$0xff]
    %v1179 = vld [vmem:[#allocation16 + $0xb18] sm:$0xff]
    %v1180 = vld [vmem:[#allocation16 + $0xb20] sm:$0xff]
    %v1181 = vld [vmem:[#allocation16 + $0xb28] sm:$0xff]
    %v1182 = vld [vmem:[#allocation16 + $0xb30] sm:$0xff]
    %v1183 = vld [vmem:[#allocation16 + $0xb38] sm:$0xff]
    %v1184 = vld [vmem:[#allocation16 + $0xb40] sm:$0xff]
    %v1185 = vld [vmem:[#allocation16 + $0xb48] sm:$0xff]
    %v1186 = vld [vmem:[#allocation16 + $0xb50] sm:$0xff]
    %v1187 = vld [vmem:[#allocation16 + $0xb58] sm:$0xff]
    %v1188 = vld [vmem:[#allocation16 + $0xb60] sm:$0xff]
    %v1189 = vld [vmem:[#allocation16 + $0xb68] sm:$0xff]
    %v1190 = vld [vmem:[#allocation16 + $0xb70] sm:$0xff]
    %v1191 = vld [vmem:[#allocation16 + $0xb78] sm:$0xff]
    %v1192 = vld [vmem:[#allocation16 + $0xb80] sm:$0xff]
    %v1193 = vld [vmem:[#allocation16 + $0xb88] sm:$0xff]
    %v1194 = vld [vmem:[#allocation16 + $0xb90] sm:$0xff]
    %v1195 = vld [vmem:[#allocation16 + $0xb98] sm:$0xff]
    %v1196 = vld [vmem:[#allocation16 + $0xba0] sm:$0xff]
    %v1197 = vld [vmem:[#allocation16 + $0xba8] sm:$0xff]
    %v1198 = vld [vmem:[#allocation16 + $0xbb0] sm:$0xff]
    %v1199 = vld [vmem:[#allocation16 + $0xbb8] sm:$0xff]
    %v1200 = vld [vmem:[#allocation16 + $0xbc0] sm:$0xff]
    %v1201 = vld [vmem:[#allocation16 + $0xbc8] sm:$0xff]
    %v1202 = vld [vmem:[#allocation16 + $0xbd0] sm:$0xff]
    %v1203 = vld [vmem:[#allocation16 + $0xbd8] sm:$0xff]
    %v1204 = vld [vmem:[#allocation16 + $0xbe0] sm:$0xff]
    %v1205 = vld [vmem:[#allocation16 + $0xbe8] sm:$0xff]
    %v1206 = vld [vmem:[#allocation16 + $0xbf0] sm:$0xff]
    %v1207 = vld [vmem:[#allocation16 + $0xbf8] sm:$0xff]
    %v1208 = vld [vmem:[#allocation16 + $0xc00] sm:$0xff]
    %v1209 = vld [vmem:[#allocation16 + $0xc08] sm:$0xff]
    %v1210 = vld [vmem:[#allocation16 + $0xc10] sm:$0xff]
    %v1211 = vld [vmem:[#allocation16 + $0xc18] sm:$0xff]
    %v1212 = vld [vmem:[#allocation16 + $0xc20] sm:$0xff]
    %v1213 = vld [vmem:[#allocation16 + $0xc28] sm:$0xff]
    %v1214 = vld [vmem:[#allocation16 + $0xc30] sm:$0xff]
    %v1215 = vld [vmem:[#allocation16 + $0xc38] sm:$0xff]
    %v1216 = vld [vmem:[#allocation16 + $0xc40] sm:$0xff]
    %v1217 = vld [vmem:[#allocation16 + $0xc48] sm:$0xff]
    %v1218 = vld [vmem:[#allocation16 + $0xc50] sm:$0xff]
    %v1219 = vld [vmem:[#allocation16 + $0xc58] sm:$0xff]
    %v1220 = vld [vmem:[#allocation16 + $0xc60] sm:$0xff]
    %v1221 = vld [vmem:[#allocation16 + $0xc68] sm:$0xff]
    %v1222 = vld [vmem:[#allocation16 + $0xc70] sm:$0xff]
    %v1223 = vld [vmem:[#allocation16 + $0xc78] sm:$0xff]
    %v1224 = vld [vmem:[#allocation16 + $0xc80] sm:$0xff]
    %v1225 = vld [vmem:[#allocation16 + $0xc88] sm:$0xff]
    %v1226 = vld [vmem:[#allocation16 + $0xc90] sm:$0xff]
    %v1227 = vld [vmem:[#allocation16 + $0xc98] sm:$0xff]
    %v1228 = vld [vmem:[#allocation16 + $0xca0] sm:$0xff]
    %v1229 = vld [vmem:[#allocation16 + $0xca8] sm:$0xff]
    %v1230 = vld [vmem:[#allocation16 + $0xcb0] sm:$0xff]
    %v1231 = vld [vmem:[#allocation16 + $0xcb8] sm:$0xff]
    %v1232 = vld [vmem:[#allocation16 + $0xcc0] sm:$0xff]
    %v1233 = vld [vmem:[#allocation16 + $0xcc8] sm:$0xff]
    %v1234 = vld [vmem:[#allocation16 + $0xcd0] sm:$0xff]
    %v1235 = vld [vmem:[#allocation16 + $0xcd8] sm:$0xff]
    %v1236 = vld [vmem:[#allocation16 + $0xce0] sm:$0xff]
    %v1237 = vld [vmem:[#allocation16 + $0xce8] sm:$0xff]
    %v1238 = vld [vmem:[#allocation16 + $0xcf0] sm:$0xff]
    %v1239 = vld [vmem:[#allocation16 + $0xcf8] sm:$0xff]
    %v1240 = vld [vmem:[#allocation16 + $0xd00] sm:$0xff]
    %v1241 = vld [vmem:[#allocation16 + $0xd08] sm:$0xff]
    %v1242 = vld [vmem:[#allocation16 + $0xd10] sm:$0xff]
    %v1243 = vld [vmem:[#allocation16 + $0xd18] sm:$0xff]
    %v1244 = vld [vmem:[#allocation16 + $0xd20] sm:$0xff]
    %v1245 = vld [vmem:[#allocation16 + $0xd28] sm:$0xff]
    %v1246 = vld [vmem:[#allocation16 + $0xd30] sm:$0xff]
    %v1247 = vld [vmem:[#allocation16 + $0xd38] sm:$0xff]
    %v1248 = vld [vmem:[#allocation16 + $0xd40] sm:$0xff]
    %v1249 = vld [vmem:[#allocation16 + $0xd48] sm:$0xff]
    %v1250 = vld [vmem:[#allocation16 + $0xd50] sm:$0xff]
    %v1251 = vld [vmem:[#allocation16 + $0xd58] sm:$0xff]
    %v1252 = vld [vmem:[#allocation16 + $0xd60] sm:$0xff]
    %v1253 = vld [vmem:[#allocation16 + $0xd68] sm:$0xff]
    %v1254 = vld [vmem:[#allocation16 + $0xd70] sm:$0xff]
    %v1255 = vld [vmem:[#allocation16 + $0xd78] sm:$0xff]
    %v1256 = vld [vmem:[#allocation16 + $0xd80] sm:$0xff]
    %v1257 = vld [vmem:[#allocation16 + $0xd88] sm:$0xff]
    %v1258 = vld [vmem:[#allocation16 + $0xd90] sm:$0xff]
    %v1259 = vld [vmem:[#allocation16 + $0xd98] sm:$0xff]
    %v1260 = vld [vmem:[#allocation16 + $0xda0] sm:$0xff]
    %v1261 = vld [vmem:[#allocation16 + $0xda8] sm:$0xff]
    %v1262 = vld [vmem:[#allocation16 + $0xdb0] sm:$0xff]
    %v1263 = vld [vmem:[#allocation16 + $0xdb8] sm:$0xff]
    %v1264 = vld [vmem:[#allocation16 + $0xdc0] sm:$0xff]
    %v1265 = vld [vmem:[#allocation16 + $0xdc8] sm:$0xff]
    %v1266 = vld [vmem:[#allocation16 + $0xdd0] sm:$0xff]
    %v1267 = vld [vmem:[#allocation16 + $0xdd8] sm:$0xff]
    %v1268 = vld [vmem:[#allocation16 + $0xde0] sm:$0xff]
    %v1269 = vld [vmem:[#allocation16 + $0xde8] sm:$0xff]
    %v1270 = vld [vmem:[#allocation16 + $0xdf0] sm:$0xff]
    %v1271 = vld [vmem:[#allocation16 + $0xdf8] sm:$0xff]
    %v1272 = vld [vmem:[#allocation16 + $0xe00] sm:$0xff]
    %v1273 = vld [vmem:[#allocation16 + $0xe08] sm:$0xff]
    %v1274 = vld [vmem:[#allocation16 + $0xe10] sm:$0xff]
    %v1275 = vld [vmem:[#allocation16 + $0xe18] sm:$0xff]
    %v1276 = vld [vmem:[#allocation16 + $0xe20] sm:$0xff]
    %v1277 = vld [vmem:[#allocation16 + $0xe28] sm:$0xff]
    %v1278 = vld [vmem:[#allocation16 + $0xe30] sm:$0xff]
    %v1279 = vld [vmem:[#allocation16 + $0xe38] sm:$0xff]
    %v1280 = vld [vmem:[#allocation16 + $0xe40] sm:$0xff]
    %v1281 = vld [vmem:[#allocation16 + $0xe48] sm:$0xff]
    %v1282 = vld [vmem:[#allocation16 + $0xe50] sm:$0xff]
    %v1283 = vld [vmem:[#allocation16 + $0xe58] sm:$0xff]
    %v1284 = vld [vmem:[#allocation16 + $0xe60] sm:$0xff]
    %v1285 = vld [vmem:[#allocation16 + $0xe68] sm:$0xff]
    %v1286 = vld [vmem:[#allocation16 + $0xe70] sm:$0xff]
    %v1287 = vld [vmem:[#allocation16 + $0xe78] sm:$0xff]
    %v1288 = vld [vmem:[#allocation16 + $0xe80] sm:$0xff]
    %v1289 = vld [vmem:[#allocation16 + $0xe88] sm:$0xff]
    %v1290 = vld [vmem:[#allocation16 + $0xe90] sm:$0xff]
    %v1291 = vld [vmem:[#allocation16 + $0xe98] sm:$0xff]
    %v1292 = vld [vmem:[#allocation16 + $0xea0] sm:$0xff]
    %v1293 = vld [vmem:[#allocation16 + $0xea8] sm:$0xff]
    %v1294 = vld [vmem:[#allocation16 + $0xeb0] sm:$0xff]
    %v1295 = vld [vmem:[#allocation16 + $0xeb8] sm:$0xff]
    %v1296 = vld [vmem:[#allocation16 + $0xec0] sm:$0xff]
    %v1297 = vld [vmem:[#allocation16 + $0xec8] sm:$0xff]
    %v1298 = vld [vmem:[#allocation16 + $0xed0] sm:$0xff]
    %v1299 = vld [vmem:[#allocation16 + $0xed8] sm:$0xff]
    %v1300 = vld [vmem:[#allocation16 + $0xee0] sm:$0xff]
    %v1301 = vld [vmem:[#allocation16 + $0xee8] sm:$0xff]
    %v1302 = vld [vmem:[#allocation16 + $0xef0] sm:$0xff]
    %v1303 = vld [vmem:[#allocation16 + $0xef8] sm:$0xff]
    %v1304 = vld [vmem:[#allocation16 + $0xf00] sm:$0xff]
    %v1305 = vld [vmem:[#allocation16 + $0xf08] sm:$0xff]
    %v1306 = vld [vmem:[#allocation16 + $0xf10] sm:$0xff]
    %v1307 = vld [vmem:[#allocation16 + $0xf18] sm:$0xff]
    %v1308 = vld [vmem:[#allocation16 + $0xf20] sm:$0xff]
    %v1309 = vld [vmem:[#allocation16 + $0xf28] sm:$0xff]
    %v1310 = vld [vmem:[#allocation16 + $0xf30] sm:$0xff]
    %v1311 = vld [vmem:[#allocation16 + $0xf38] sm:$0xff]
    %v1312 = vld [vmem:[#allocation16 + $0xf40] sm:$0xff]
    %v1313 = vld [vmem:[#allocation16 + $0xf48] sm:$0xff]
    %v1314 = vld [vmem:[#allocation16 + $0xf50] sm:$0xff]
    %v1315 = vld [vmem:[#allocation16 + $0xf58] sm:$0xff]
    %v1316 = vld [vmem:[#allocation16 + $0xf60] sm:$0xff]
    %v1317 = vld [vmem:[#allocation16 + $0xf68] sm:$0xff]
    %v1318 = vld [vmem:[#allocation16 + $0xf70] sm:$0xff]
    %v1319 = vld [vmem:[#allocation16 + $0xf78] sm:$0xff]
    %v1320 = vld [vmem:[#allocation16 + $0xf80] sm:$0xff]
    %v1321 = vld [vmem:[#allocation16 + $0xf88] sm:$0xff]
    %v1322 = vld [vmem:[#allocation16 + $0xf90] sm:$0xff]
    %v1323 = vld [vmem:[#allocation16 + $0xf98] sm:$0xff]
    %v1324 = vld [vmem:[#allocation16 + $0xfa0] sm:$0xff]
    %v1325 = vld [vmem:[#allocation16 + $0xfa8] sm:$0xff]
    %v1326 = vld [vmem:[#allocation16 + $0xfb0] sm:$0xff]
    %v1327 = vld [vmem:[#allocation16 + $0xfb8] sm:$0xff]
    %v1328 = vld [vmem:[#allocation16 + $0xfc0] sm:$0xff]
    %v1329 = vld [vmem:[#allocation16 + $0xfc8] sm:$0xff]
    %v1330 = vld [vmem:[#allocation16 + $0xfd0] sm:$0xff]
    %v1331 = vld [vmem:[#allocation16 + $0xfd8] sm:$0xff]
    %v1332 = vld [vmem:[#allocation16 + $0xfe0] sm:$0xff]
    %v1333 = vld [vmem:[#allocation16 + $0xfe8] sm:$0xff]
    %v1334 = vld [vmem:[#allocation16 + $0xff0] sm:$0xff]
    %v1335 = vld [vmem:[#allocation16 + $0xff8] sm:$0xff]
    %v1336 = vld [vmem:[#allocation18] sm:$0xf]
    %v1337 = vadd.f32 %v261, %v263
    %v1338 = vadd.f32 %v1337, %v302
    %v1339 = vadd.f32 %v1338, %v304
    %1340 = vadd.xlane.f32.xlu0 %v1339
    %v1341 = vpop.xlane.xlu0 %1340
    %v1342 = vrcp.pop 512.0
    %v1343 = vmul.f32 %v1341, %v1342
    %v1344 = vsub.f32 %v261, %v1343
    %v1345 = vsub.f32 %v263, %v1343
    %v1346 = vsub.f32 %v302, %v1343
    %v1347 = vsub.f32 %v304, %v1343
    %v1348 = vmul.f32 %v1344, %v1344
    %v1349 = vmul.f32 %v1345, %v1345
    %v1350 = vmul.f32 %v1346, %v1346
    %v1351 = vmul.f32 %v1347, %v1347
    %v1352 = vadd.f32 %v1348, %v1349
    %v1353 = vadd.f32 %v1352, %v1350
    %v1354 = vadd.f32 %v1353, %v1351
    %1355 = vadd.xlane.f32.xlu0 %v1354
    %v1356 = vpop.xlane.xlu0 %1355
    %v1357 = vmul.f32 %v1356, %v1342
    %v1358 = vadd.f32 %v1357, 1e-05
    %v1359 = vrsqrt.pop %v1358
    %v1360 = vmul.f32 %v1344, %v1359
    %v1361 = vmul.f32 %v1345, %v1359
    %v1362 = vmul.f32 %v1346, %v1359
    %v1363 = vmul.f32 %v1347, %v1359
    %v1365 = vlaneseq
    %v1366 = vshrl.u32 %v1365, 7
    %v1367 = vsub.s32 0, %v1366
    %v1368 = vrot.slane %v308, %v1367
    %v1369 = vlaneseq
    %v1370 = vshrl.u32 %v1369, 7
    %v1371 = vsub.s32 1, %v1370
    %v1372 = vrot.slane %v308, %v1371
    %v1373 = vlaneseq
    %v1374 = vshrl.u32 %v1373, 7
    %v1375 = vsub.s32 2, %v1374
    %v1376 = vrot.slane %v308, %v1375
    %v1377 = vlaneseq
    %v1378 = vshrl.u32 %v1377, 7
    %v1379 = vsub.s32 3, %v1378
    %v1380 = vrot.slane %v308, %v1379
    %v1385 = vmul.f32 %v1360, %v1368
    %v1386 = vmul.f32 %v1361, %v1372
    %v1387 = vmul.f32 %v1362, %v1376
    %v1388 = vmul.f32 %v1363, %v1380
    %v1390 = vlaneseq
    %v1391 = vshrl.u32 %v1390, 7
    %v1392 = vsub.s32 0, %v1391
    %v1393 = vrot.slane %v309, %v1392
    %v1394 = vlaneseq
    %v1395 = vshrl.u32 %v1394, 7
    %v1396 = vsub.s32 1, %v1395
    %v1397 = vrot.slane %v309, %v1396
    %v1398 = vlaneseq
    %v1399 = vshrl.u32 %v1398, 7
    %v1400 = vsub.s32 2, %v1399
    %v1401 = vrot.slane %v309, %v1400
    %v1402 = vlaneseq
    %v1403 = vshrl.u32 %v1402, 7
    %v1404 = vsub.s32 3, %v1403
    %v1405 = vrot.slane %v309, %v1404
    %v1410 = vadd.f32 %v1385, %v1393
    %v1411 = vadd.f32 %v1386, %v1397
    %v1412 = vadd.f32 %v1387, %v1401
    %v1413 = vadd.f32 %v1388, %v1405
    %v1414 = vpack.c.bf16 %v1410, %v1410
    %v1415 = vpack.c.bf16 %v1411, %v1411
    %v1416 = vpack.c.bf16 %v1412, %v1412
    %v1417 = vpack.c.bf16 %v1413, %v1413
    %v1420 = vlaneseq
    %v1421 = vshrl.u32 %v1420, 7
    %v1422 = vsub.s32 0, %v1421
    %v1423 = vrot.slane %v822, %v1422
    %v1424 = vlaneseq
    %v1425 = vshrl.u32 %v1424, 7
    %v1426 = vsub.s32 1, %v1425
    %v1427 = vrot.slane %v822, %v1426
    %v1428 = vlaneseq
    %v1429 = vshrl.u32 %v1428, 7
    %v1430 = vsub.s32 2, %v1429
    %v1431 = vrot.slane %v822, %v1430
    %v1432 = vlaneseq
    %v1433 = vshrl.u32 %v1432, 7
    %v1434 = vsub.s32 3, %v1433
    %v1435 = vrot.slane %v822, %v1434
    %v1436 = vlaneseq
    %v1437 = vshrl.u32 %v1436, 7
    %v1438 = vsub.s32 4, %v1437
    %v1439 = vrot.slane %v822, %v1438
    %v1440 = vlaneseq
    %v1441 = vshrl.u32 %v1440, 7
    %v1442 = vsub.s32 5, %v1441
    %v1443 = vrot.slane %v822, %v1442
    %v1444 = vlaneseq
    %v1445 = vshrl.u32 %v1444, 7
    %v1446 = vsub.s32 6, %v1445
    %v1447 = vrot.slane %v822, %v1446
    %v1448 = vlaneseq
    %v1449 = vshrl.u32 %v1448, 7
    %v1450 = vsub.s32 7, %v1449
    %v1451 = vrot.slane %v822, %v1450
    %v1452 = vlaneseq
    %v1453 = vshrl.u32 %v1452, 7
    %v1454 = vsub.s32 0, %v1453
    %v1455 = vrot.slane %v823, %v1454
    %v1456 = vlaneseq
    %v1457 = vshrl.u32 %v1456, 7
    %v1458 = vsub.s32 1, %v1457
    %v1459 = vrot.slane %v823, %v1458
    %v1460 = vlaneseq
    %v1461 = vshrl.u32 %v1460, 7
    %v1462 = vsub.s32 2, %v1461
    %v1463 = vrot.slane %v823, %v1462
    %v1464 = vlaneseq
    %v1465 = vshrl.u32 %v1464, 7
    %v1466 = vsub.s32 3, %v1465
    %v1467 = vrot.slane %v823, %v1466
    %v1468 = vlaneseq
    %v1469 = vshrl.u32 %v1468, 7
    %v1470 = vsub.s32 4, %v1469
    %v1471 = vrot.slane %v823, %v1470
    %v1472 = vlaneseq
    %v1473 = vshrl.u32 %v1472, 7
    %v1474 = vsub.s32 5, %v1473
    %v1475 = vrot.slane %v823, %v1474
    %v1476 = vlaneseq
    %v1477 = vshrl.u32 %v1476, 7
    %v1478 = vsub.s32 6, %v1477
    %v1479 = vrot.slane %v823, %v1478
    %v1480 = vlaneseq
    %v1481 = vshrl.u32 %v1480, 7
    %v1482 = vsub.s32 7, %v1481
    %v1483 = vrot.slane %v823, %v1482
    %v2012 = vunpack.c.l.b16 %v310
    %v2013 = vunpack.c.h.b16 %v310
    %v2014 = vunpack.c.l.b16 %v311
    %v2015 = vunpack.c.h.b16 %v311
    %v2016 = vunpack.c.l.b16 %v312
    %v2017 = vunpack.c.h.b16 %v312
    %v2018 = vunpack.c.l.b16 %v313
    %v2019 = vunpack.c.h.b16 %v313
    %v2020 = vunpack.c.l.b16 %v314
    %v2021 = vunpack.c.h.b16 %v314
    %v2022 = vunpack.c.l.b16 %v315
    %v2023 = vunpack.c.h.b16 %v315
    %v2024 = vunpack.c.l.b16 %v316
    %v2025 = vunpack.c.h.b16 %v316
    %v2026 = vunpack.c.l.b16 %v317
    %v2027 = vunpack.c.h.b16 %v317
    %v2028 = vunpack.c.l.b16 %v318
    %v2029 = vunpack.c.h.b16 %v318
    %v2030 = vunpack.c.l.b16 %v319
    %v2031 = vunpack.c.h.b16 %v319
    %v2032 = vunpack.c.l.b16 %v320
    %v2033 = vunpack.c.h.b16 %v320
    %v2034 = vunpack.c.l.b16 %v321
    %v2035 = vunpack.c.h.b16 %v321
    %v2036 = vunpack.c.l.b16 %v322
    %v2037 = vunpack.c.h.b16 %v322
    %v2038 = vunpack.c.l.b16 %v323
    %v2039 = vunpack.c.h.b16 %v323
    %v2040 = vunpack.c.l.b16 %v324
    %v2041 = vunpack.c.h.b16 %v324
    %v2042 = vunpack.c.l.b16 %v325
    %v2043 = vunpack.c.h.b16 %v325
    %v2044 = vunpack.c.l.b16 %v326
    %v2045 = vunpack.c.h.b16 %v326
    %v2046 = vunpack.c.l.b16 %v327
    %v2047 = vunpack.c.h.b16 %v327
    %v2048 = vunpack.c.l.b16 %v328
    %v2049 = vunpack.c.h.b16 %v328
    %v2050 = vunpack.c.l.b16 %v329
    %v2051 = vunpack.c.h.b16 %v329
    %v2052 = vunpack.c.l.b16 %v330
    %v2053 = vunpack.c.h.b16 %v330
    %v2054 = vunpack.c.l.b16 %v331
    %v2055 = vunpack.c.h.b16 %v331
    %v2056 = vunpack.c.l.b16 %v332
    %v2057 = vunpack.c.h.b16 %v332
    %v2058 = vunpack.c.l.b16 %v333
    %v2059 = vunpack.c.h.b16 %v333
    %v2060 = vunpack.c.l.b16 %v334
    %v2061 = vunpack.c.h.b16 %v334
    %v2062 = vunpack.c.l.b16 %v335
    %v2063 = vunpack.c.h.b16 %v335
    %v2064 = vunpack.c.l.b16 %v336
    %v2065 = vunpack.c.h.b16 %v336
    %v2066 = vunpack.c.l.b16 %v337
    %v2067 = vunpack.c.h.b16 %v337
    %v2068 = vunpack.c.l.b16 %v338
    %v2069 = vunpack.c.h.b16 %v338
    %v2070 = vunpack.c.l.b16 %v339
    %v2071 = vunpack.c.h.b16 %v339
    %v2072 = vunpack.c.l.b16 %v340
    %v2073 = vunpack.c.h.b16 %v340
    %v2074 = vunpack.c.l.b16 %v341
    %v2075 = vunpack.c.h.b16 %v341
    %v2076 = vunpack.c.l.b16 %v342
    %v2077 = vunpack.c.h.b16 %v342
    %v2078 = vunpack.c.l.b16 %v343
    %v2079 = vunpack.c.h.b16 %v343
    %v2080 = vunpack.c.l.b16 %v344
    %v2081 = vunpack.c.h.b16 %v344
    %v2082 = vunpack.c.l.b16 %v345
    %v2083 = vunpack.c.h.b16 %v345
    %v2084 = vunpack.c.l.b16 %v346
    %v2085 = vunpack.c.h.b16 %v346
    %v2086 = vunpack.c.l.b16 %v347
    %v2087 = vunpack.c.h.b16 %v347
    %v2088 = vunpack.c.l.b16 %v348
    %v2089 = vunpack.c.h.b16 %v348
    %v2090 = vunpack.c.l.b16 %v349
    %v2091 = vunpack.c.h.b16 %v349
    %v2092 = vunpack.c.l.b16 %v350
    %v2093 = vunpack.c.h.b16 %v350
    %v2094 = vunpack.c.l.b16 %v351
    %v2095 = vunpack.c.h.b16 %v351
    %v2096 = vunpack.c.l.b16 %v352
    %v2097 = vunpack.c.h.b16 %v352
    %v2098 = vunpack.c.l.b16 %v353
    %v2099 = vunpack.c.h.b16 %v353
    %v2100 = vunpack.c.l.b16 %v354
    %v2101 = vunpack.c.h.b16 %v354
    %v2102 = vunpack.c.l.b16 %v355
    %v2103 = vunpack.c.h.b16 %v355
    %v2104 = vunpack.c.l.b16 %v356
    %v2105 = vunpack.c.h.b16 %v356
    %v2106 = vunpack.c.l.b16 %v357
    %v2107 = vunpack.c.h.b16 %v357
    %v2108 = vunpack.c.l.b16 %v358
    %v2109 = vunpack.c.h.b16 %v358
    %v2110 = vunpack.c.l.b16 %v359
    %v2111 = vunpack.c.h.b16 %v359
    %v2112 = vunpack.c.l.b16 %v360
    %v2113 = vunpack.c.h.b16 %v360
    %v2114 = vunpack.c.l.b16 %v361
    %v2115 = vunpack.c.h.b16 %v361
    %v2116 = vunpack.c.l.b16 %v362
    %v2117 = vunpack.c.h.b16 %v362
    %v2118 = vunpack.c.l.b16 %v363
    %v2119 = vunpack.c.h.b16 %v363
    %v2120 = vunpack.c.l.b16 %v364
    %v2121 = vunpack.c.h.b16 %v364
    %v2122 = vunpack.c.l.b16 %v365
    %v2123 = vunpack.c.h.b16 %v365
    %v2124 = vunpack.c.l.b16 %v366
    %v2125 = vunpack.c.h.b16 %v366
    %v2126 = vunpack.c.l.b16 %v367
    %v2127 = vunpack.c.h.b16 %v367
    %v2128 = vunpack.c.l.b16 %v368
    %v2129 = vunpack.c.h.b16 %v368
    %v2130 = vunpack.c.l.b16 %v369
    %v2131 = vunpack.c.h.b16 %v369
    %v2132 = vunpack.c.l.b16 %v370
    %v2133 = vunpack.c.h.b16 %v370
    %v2134 = vunpack.c.l.b16 %v371
    %v2135 = vunpack.c.h.b16 %v371
    %v2136 = vunpack.c.l.b16 %v372
    %v2137 = vunpack.c.h.b16 %v372
    %v2138 = vunpack.c.l.b16 %v373
    %v2139 = vunpack.c.h.b16 %v373
    %v2140 = vunpack.c.l.b16 %v374
    %v2141 = vunpack.c.h.b16 %v374
    %v2142 = vunpack.c.l.b16 %v375
    %v2143 = vunpack.c.h.b16 %v375
    %v2144 = vunpack.c.l.b16 %v376
    %v2145 = vunpack.c.h.b16 %v376
    %v2146 = vunpack.c.l.b16 %v377
    %v2147 = vunpack.c.h.b16 %v377
    %v2148 = vunpack.c.l.b16 %v378
    %v2149 = vunpack.c.h.b16 %v378
    %v2150 = vunpack.c.l.b16 %v379
    %v2151 = vunpack.c.h.b16 %v379
    %v2152 = vunpack.c.l.b16 %v380
    %v2153 = vunpack.c.h.b16 %v380
    %v2154 = vunpack.c.l.b16 %v381
    %v2155 = vunpack.c.h.b16 %v381
    %v2156 = vunpack.c.l.b16 %v382
    %v2157 = vunpack.c.h.b16 %v382
    %v2158 = vunpack.c.l.b16 %v383
    %v2159 = vunpack.c.h.b16 %v383
    %v2160 = vunpack.c.l.b16 %v384
    %v2161 = vunpack.c.h.b16 %v384
    %v2162 = vunpack.c.l.b16 %v385
    %v2163 = vunpack.c.h.b16 %v385
    %v2164 = vunpack.c.l.b16 %v386
    %v2165 = vunpack.c.h.b16 %v386
    %v2166 = vunpack.c.l.b16 %v387
    %v2167 = vunpack.c.h.b16 %v387
    %v2168 = vunpack.c.l.b16 %v388
    %v2169 = vunpack.c.h.b16 %v388
    %v2170 = vunpack.c.l.b16 %v389
    %v2171 = vunpack.c.h.b16 %v389
    %v2172 = vunpack.c.l.b16 %v390
    %v2173 = vunpack.c.h.b16 %v390
    %v2174 = vunpack.c.l.b16 %v391
    %v2175 = vunpack.c.h.b16 %v391
    %v2176 = vunpack.c.l.b16 %v392
    %v2177 = vunpack.c.h.b16 %v392
    %v2178 = vunpack.c.l.b16 %v393
    %v2179 = vunpack.c.h.b16 %v393
    %v2180 = vunpack.c.l.b16 %v394
    %v2181 = vunpack.c.h.b16 %v394
    %v2182 = vunpack.c.l.b16 %v395
    %v2183 = vunpack.c.h.b16 %v395
    %v2184 = vunpack.c.l.b16 %v396
    %v2185 = vunpack.c.h.b16 %v396
    %v2186 = vunpack.c.l.b16 %v397
    %v2187 = vunpack.c.h.b16 %v397
    %v2188 = vunpack.c.l.b16 %v398
    %v2189 = vunpack.c.h.b16 %v398
    %v2190 = vunpack.c.l.b16 %v399
    %v2191 = vunpack.c.h.b16 %v399
    %v2192 = vunpack.c.l.b16 %v400
    %v2193 = vunpack.c.h.b16 %v400
    %v2194 = vunpack.c.l.b16 %v401
    %v2195 = vunpack.c.h.b16 %v401
    %v2196 = vunpack.c.l.b16 %v402
    %v2197 = vunpack.c.h.b16 %v402
    %v2198 = vunpack.c.l.b16 %v403
    %v2199 = vunpack.c.h.b16 %v403
    %v2200 = vunpack.c.l.b16 %v404
    %v2201 = vunpack.c.h.b16 %v404
    %v2202 = vunpack.c.l.b16 %v405
    %v2203 = vunpack.c.h.b16 %v405
    %v2204 = vunpack.c.l.b16 %v406
    %v2205 = vunpack.c.h.b16 %v406
    %v2206 = vunpack.c.l.b16 %v407
    %v2207 = vunpack.c.h.b16 %v407
    %v2208 = vunpack.c.l.b16 %v408
    %v2209 = vunpack.c.h.b16 %v408
    %v2210 = vunpack.c.l.b16 %v409
    %v2211 = vunpack.c.h.b16 %v409
    %v2212 = vunpack.c.l.b16 %v410
    %v2213 = vunpack.c.h.b16 %v410
    %v2214 = vunpack.c.l.b16 %v411
    %v2215 = vunpack.c.h.b16 %v411
    %v2216 = vunpack.c.l.b16 %v412
    %v2217 = vunpack.c.h.b16 %v412
    %v2218 = vunpack.c.l.b16 %v413
    %v2219 = vunpack.c.h.b16 %v413
    %v2220 = vunpack.c.l.b16 %v414
    %v2221 = vunpack.c.h.b16 %v414
    %v2222 = vunpack.c.l.b16 %v415
    %v2223 = vunpack.c.h.b16 %v415
    %v2224 = vunpack.c.l.b16 %v416
    %v2225 = vunpack.c.h.b16 %v416
    %v2226 = vunpack.c.l.b16 %v417
    %v2227 = vunpack.c.h.b16 %v417
    %v2228 = vunpack.c.l.b16 %v418
    %v2229 = vunpack.c.h.b16 %v418
    %v2230 = vunpack.c.l.b16 %v419
    %v2231 = vunpack.c.h.b16 %v419
    %v2232 = vunpack.c.l.b16 %v420
    %v2233 = vunpack.c.h.b16 %v420
    %v2234 = vunpack.c.l.b16 %v421
    %v2235 = vunpack.c.h.b16 %v421
    %v2236 = vunpack.c.l.b16 %v422
    %v2237 = vunpack.c.h.b16 %v422
    %v2238 = vunpack.c.l.b16 %v423
    %v2239 = vunpack.c.h.b16 %v423
    %v2240 = vunpack.c.l.b16 %v424
    %v2241 = vunpack.c.h.b16 %v424
    %v2242 = vunpack.c.l.b16 %v425
    %v2243 = vunpack.c.h.b16 %v425
    %v2244 = vunpack.c.l.b16 %v426
    %v2245 = vunpack.c.h.b16 %v426
    %v2246 = vunpack.c.l.b16 %v427
    %v2247 = vunpack.c.h.b16 %v427
    %v2248 = vunpack.c.l.b16 %v428
    %v2249 = vunpack.c.h.b16 %v428
    %v2250 = vunpack.c.l.b16 %v429
    %v2251 = vunpack.c.h.b16 %v429
    %v2252 = vunpack.c.l.b16 %v430
    %v2253 = vunpack.c.h.b16 %v430
    %v2254 = vunpack.c.l.b16 %v431
    %v2255 = vunpack.c.h.b16 %v431
    %v2256 = vunpack.c.l.b16 %v432
    %v2257 = vunpack.c.h.b16 %v432
    %v2258 = vunpack.c.l.b16 %v433
    %v2259 = vunpack.c.h.b16 %v433
    %v2260 = vunpack.c.l.b16 %v434
    %v2261 = vunpack.c.h.b16 %v434
    %v2262 = vunpack.c.l.b16 %v435
    %v2263 = vunpack.c.h.b16 %v435
    %v2264 = vunpack.c.l.b16 %v436
    %v2265 = vunpack.c.h.b16 %v436
    %v2266 = vunpack.c.l.b16 %v437
    %v2267 = vunpack.c.h.b16 %v437
    %v2268 = vunpack.c.l.b16 %v438
    %v2269 = vunpack.c.h.b16 %v438
    %v2270 = vunpack.c.l.b16 %v439
    %v2271 = vunpack.c.h.b16 %v439
    %v2272 = vunpack.c.l.b16 %v440
    %v2273 = vunpack.c.h.b16 %v440
    %v2274 = vunpack.c.l.b16 %v441
    %v2275 = vunpack.c.h.b16 %v441
    %v2276 = vunpack.c.l.b16 %v442
    %v2277 = vunpack.c.h.b16 %v442
    %v2278 = vunpack.c.l.b16 %v443
    %v2279 = vunpack.c.h.b16 %v443
    %v2280 = vunpack.c.l.b16 %v444
    %v2281 = vunpack.c.h.b16 %v444
    %v2282 = vunpack.c.l.b16 %v445
    %v2283 = vunpack.c.h.b16 %v445
    %v2284 = vunpack.c.l.b16 %v446
    %v2285 = vunpack.c.h.b16 %v446
    %v2286 = vunpack.c.l.b16 %v447
    %v2287 = vunpack.c.h.b16 %v447
    %v2288 = vunpack.c.l.b16 %v448
    %v2289 = vunpack.c.h.b16 %v448
    %v2290 = vunpack.c.l.b16 %v449
    %v2291 = vunpack.c.h.b16 %v449
    %v2292 = vunpack.c.l.b16 %v450
    %v2293 = vunpack.c.h.b16 %v450
    %v2294 = vunpack.c.l.b16 %v451
    %v2295 = vunpack.c.h.b16 %v451
    %v2296 = vunpack.c.l.b16 %v452
    %v2297 = vunpack.c.h.b16 %v452
    %v2298 = vunpack.c.l.b16 %v453
    %v2299 = vunpack.c.h.b16 %v453
    %v2300 = vunpack.c.l.b16 %v454
    %v2301 = vunpack.c.h.b16 %v454
    %v2302 = vunpack.c.l.b16 %v455
    %v2303 = vunpack.c.h.b16 %v455
    %v2304 = vunpack.c.l.b16 %v456
    %v2305 = vunpack.c.h.b16 %v456
    %v2306 = vunpack.c.l.b16 %v457
    %v2307 = vunpack.c.h.b16 %v457
    %v2308 = vunpack.c.l.b16 %v458
    %v2309 = vunpack.c.h.b16 %v458
    %v2310 = vunpack.c.l.b16 %v459
    %v2311 = vunpack.c.h.b16 %v459
    %v2312 = vunpack.c.l.b16 %v460
    %v2313 = vunpack.c.h.b16 %v460
    %v2314 = vunpack.c.l.b16 %v461
    %v2315 = vunpack.c.h.b16 %v461
    %v2316 = vunpack.c.l.b16 %v462
    %v2317 = vunpack.c.h.b16 %v462
    %v2318 = vunpack.c.l.b16 %v463
    %v2319 = vunpack.c.h.b16 %v463
    %v2320 = vunpack.c.l.b16 %v464
    %v2321 = vunpack.c.h.b16 %v464
    %v2322 = vunpack.c.l.b16 %v465
    %v2323 = vunpack.c.h.b16 %v465
    %v2324 = vunpack.c.l.b16 %v466
    %v2325 = vunpack.c.h.b16 %v466
    %v2326 = vunpack.c.l.b16 %v467
    %v2327 = vunpack.c.h.b16 %v467
    %v2328 = vunpack.c.l.b16 %v468
    %v2329 = vunpack.c.h.b16 %v468
    %v2330 = vunpack.c.l.b16 %v469
    %v2331 = vunpack.c.h.b16 %v469
    %v2332 = vunpack.c.l.b16 %v470
    %v2333 = vunpack.c.h.b16 %v470
    %v2334 = vunpack.c.l.b16 %v471
    %v2335 = vunpack.c.h.b16 %v471
    %v2336 = vunpack.c.l.b16 %v472
    %v2337 = vunpack.c.h.b16 %v472
    %v2338 = vunpack.c.l.b16 %v473
    %v2339 = vunpack.c.h.b16 %v473
    %v2340 = vunpack.c.l.b16 %v474
    %v2341 = vunpack.c.h.b16 %v474
    %v2342 = vunpack.c.l.b16 %v475
    %v2343 = vunpack.c.h.b16 %v475
    %v2344 = vunpack.c.l.b16 %v476
    %v2345 = vunpack.c.h.b16 %v476
    %v2346 = vunpack.c.l.b16 %v477
    %v2347 = vunpack.c.h.b16 %v477
    %v2348 = vunpack.c.l.b16 %v478
    %v2349 = vunpack.c.h.b16 %v478
    %v2350 = vunpack.c.l.b16 %v479
    %v2351 = vunpack.c.h.b16 %v479
    %v2352 = vunpack.c.l.b16 %v480
    %v2353 = vunpack.c.h.b16 %v480
    %v2354 = vunpack.c.l.b16 %v481
    %v2355 = vunpack.c.h.b16 %v481
    %v2356 = vunpack.c.l.b16 %v482
    %v2357 = vunpack.c.h.b16 %v482
    %v2358 = vunpack.c.l.b16 %v483
    %v2359 = vunpack.c.h.b16 %v483
    %v2360 = vunpack.c.l.b16 %v484
    %v2361 = vunpack.c.h.b16 %v484
    %v2362 = vunpack.c.l.b16 %v485
    %v2363 = vunpack.c.h.b16 %v485
    %v2364 = vunpack.c.l.b16 %v486
    %v2365 = vunpack.c.h.b16 %v486
    %v2366 = vunpack.c.l.b16 %v487
    %v2367 = vunpack.c.h.b16 %v487
    %v2368 = vunpack.c.l.b16 %v488
    %v2369 = vunpack.c.h.b16 %v488
    %v2370 = vunpack.c.l.b16 %v489
    %v2371 = vunpack.c.h.b16 %v489
    %v2372 = vunpack.c.l.b16 %v490
    %v2373 = vunpack.c.h.b16 %v490
    %v2374 = vunpack.c.l.b16 %v491
    %v2375 = vunpack.c.h.b16 %v491
    %v2376 = vunpack.c.l.b16 %v492
    %v2377 = vunpack.c.h.b16 %v492
    %v2378 = vunpack.c.l.b16 %v493
    %v2379 = vunpack.c.h.b16 %v493
    %v2380 = vunpack.c.l.b16 %v494
    %v2381 = vunpack.c.h.b16 %v494
    %v2382 = vunpack.c.l.b16 %v495
    %v2383 = vunpack.c.h.b16 %v495
    %v2384 = vunpack.c.l.b16 %v496
    %v2385 = vunpack.c.h.b16 %v496
    %v2386 = vunpack.c.l.b16 %v497
    %v2387 = vunpack.c.h.b16 %v497
    %v2388 = vunpack.c.l.b16 %v498
    %v2389 = vunpack.c.h.b16 %v498
    %v2390 = vunpack.c.l.b16 %v499
    %v2391 = vunpack.c.h.b16 %v499
    %v2392 = vunpack.c.l.b16 %v500
    %v2393 = vunpack.c.h.b16 %v500
    %v2394 = vunpack.c.l.b16 %v501
    %v2395 = vunpack.c.h.b16 %v501
    %v2396 = vunpack.c.l.b16 %v502
    %v2397 = vunpack.c.h.b16 %v502
    %v2398 = vunpack.c.l.b16 %v503
    %v2399 = vunpack.c.h.b16 %v503
    %v2400 = vunpack.c.l.b16 %v504
    %v2401 = vunpack.c.h.b16 %v504
    %v2402 = vunpack.c.l.b16 %v505
    %v2403 = vunpack.c.h.b16 %v505
    %v2404 = vunpack.c.l.b16 %v506
    %v2405 = vunpack.c.h.b16 %v506
    %v2406 = vunpack.c.l.b16 %v507
    %v2407 = vunpack.c.h.b16 %v507
    %v2408 = vunpack.c.l.b16 %v508
    %v2409 = vunpack.c.h.b16 %v508
    %v2410 = vunpack.c.l.b16 %v509
    %v2411 = vunpack.c.h.b16 %v509
    %v2412 = vunpack.c.l.b16 %v510
    %v2413 = vunpack.c.h.b16 %v510
    %v2414 = vunpack.c.l.b16 %v511
    %v2415 = vunpack.c.h.b16 %v511
    %v2416 = vunpack.c.l.b16 %v512
    %v2417 = vunpack.c.h.b16 %v512
    %v2418 = vunpack.c.l.b16 %v513
    %v2419 = vunpack.c.h.b16 %v513
    %v2420 = vunpack.c.l.b16 %v514
    %v2421 = vunpack.c.h.b16 %v514
    %v2422 = vunpack.c.l.b16 %v515
    %v2423 = vunpack.c.h.b16 %v515
    %v2424 = vunpack.c.l.b16 %v516
    %v2425 = vunpack.c.h.b16 %v516
    %v2426 = vunpack.c.l.b16 %v517
    %v2427 = vunpack.c.h.b16 %v517
    %v2428 = vunpack.c.l.b16 %v518
    %v2429 = vunpack.c.h.b16 %v518
    %v2430 = vunpack.c.l.b16 %v519
    %v2431 = vunpack.c.h.b16 %v519
    %v2432 = vunpack.c.l.b16 %v520
    %v2433 = vunpack.c.h.b16 %v520
    %v2434 = vunpack.c.l.b16 %v521
    %v2435 = vunpack.c.h.b16 %v521
    %v2436 = vunpack.c.l.b16 %v522
    %v2437 = vunpack.c.h.b16 %v522
    %v2438 = vunpack.c.l.b16 %v523
    %v2439 = vunpack.c.h.b16 %v523
    %v2440 = vunpack.c.l.b16 %v524
    %v2441 = vunpack.c.h.b16 %v524
    %v2442 = vunpack.c.l.b16 %v525
    %v2443 = vunpack.c.h.b16 %v525
    %v2444 = vunpack.c.l.b16 %v526
    %v2445 = vunpack.c.h.b16 %v526
    %v2446 = vunpack.c.l.b16 %v527
    %v2447 = vunpack.c.h.b16 %v527
    %v2448 = vunpack.c.l.b16 %v528
    %v2449 = vunpack.c.h.b16 %v528
    %v2450 = vunpack.c.l.b16 %v529
    %v2451 = vunpack.c.h.b16 %v529
    %v2452 = vunpack.c.l.b16 %v530
    %v2453 = vunpack.c.h.b16 %v530
    %v2454 = vunpack.c.l.b16 %v531
    %v2455 = vunpack.c.h.b16 %v531
    %v2456 = vunpack.c.l.b16 %v532
    %v2457 = vunpack.c.h.b16 %v532
    %v2458 = vunpack.c.l.b16 %v533
    %v2459 = vunpack.c.h.b16 %v533
    %v2460 = vunpack.c.l.b16 %v534
    %v2461 = vunpack.c.h.b16 %v534
    %v2462 = vunpack.c.l.b16 %v535
    %v2463 = vunpack.c.h.b16 %v535
    %v2464 = vunpack.c.l.b16 %v536
    %v2465 = vunpack.c.h.b16 %v536
    %v2466 = vunpack.c.l.b16 %v537
    %v2467 = vunpack.c.h.b16 %v537
    %v2468 = vunpack.c.l.b16 %v538
    %v2469 = vunpack.c.h.b16 %v538
    %v2470 = vunpack.c.l.b16 %v539
    %v2471 = vunpack.c.h.b16 %v539
    %v2472 = vunpack.c.l.b16 %v540
    %v2473 = vunpack.c.h.b16 %v540
    %v2474 = vunpack.c.l.b16 %v541
    %v2475 = vunpack.c.h.b16 %v541
    %v2476 = vunpack.c.l.b16 %v542
    %v2477 = vunpack.c.h.b16 %v542
    %v2478 = vunpack.c.l.b16 %v543
    %v2479 = vunpack.c.h.b16 %v543
    %v2480 = vunpack.c.l.b16 %v544
    %v2481 = vunpack.c.h.b16 %v544
    %v2482 = vunpack.c.l.b16 %v545
    %v2483 = vunpack.c.h.b16 %v545
    %v2484 = vunpack.c.l.b16 %v546
    %v2485 = vunpack.c.h.b16 %v546
    %v2486 = vunpack.c.l.b16 %v547
    %v2487 = vunpack.c.h.b16 %v547
    %v2488 = vunpack.c.l.b16 %v548
    %v2489 = vunpack.c.h.b16 %v548
    %v2490 = vunpack.c.l.b16 %v549
    %v2491 = vunpack.c.h.b16 %v549
    %v2492 = vunpack.c.l.b16 %v550
    %v2493 = vunpack.c.h.b16 %v550
    %v2494 = vunpack.c.l.b16 %v551
    %v2495 = vunpack.c.h.b16 %v551
    %v2496 = vunpack.c.l.b16 %v552
    %v2497 = vunpack.c.h.b16 %v552
    %v2498 = vunpack.c.l.b16 %v553
    %v2499 = vunpack.c.h.b16 %v553
    %v2500 = vunpack.c.l.b16 %v554
    %v2501 = vunpack.c.h.b16 %v554
    %v2502 = vunpack.c.l.b16 %v555
    %v2503 = vunpack.c.h.b16 %v555
    %v2504 = vunpack.c.l.b16 %v556
    %v2505 = vunpack.c.h.b16 %v556
    %v2506 = vunpack.c.l.b16 %v557
    %v2507 = vunpack.c.h.b16 %v557
    %v2508 = vunpack.c.l.b16 %v558
    %v2509 = vunpack.c.h.b16 %v558
    %v2510 = vunpack.c.l.b16 %v559
    %v2511 = vunpack.c.h.b16 %v559
    %v2512 = vunpack.c.l.b16 %v560
    %v2513 = vunpack.c.h.b16 %v560
    %v2514 = vunpack.c.l.b16 %v561
    %v2515 = vunpack.c.h.b16 %v561
    %v2516 = vunpack.c.l.b16 %v562
    %v2517 = vunpack.c.h.b16 %v562
    %v2518 = vunpack.c.l.b16 %v563
    %v2519 = vunpack.c.h.b16 %v563
    %v2520 = vunpack.c.l.b16 %v564
    %v2521 = vunpack.c.h.b16 %v564
    %v2522 = vunpack.c.l.b16 %v565
    %v2523 = vunpack.c.h.b16 %v565
    %v2524 = vunpack.c.l.b16 %v566
    %v2525 = vunpack.c.h.b16 %v566
    %v2526 = vunpack.c.l.b16 %v567
    %v2527 = vunpack.c.h.b16 %v567
    %v2528 = vunpack.c.l.b16 %v568
    %v2529 = vunpack.c.h.b16 %v568
    %v2530 = vunpack.c.l.b16 %v569
    %v2531 = vunpack.c.h.b16 %v569
    %v2532 = vunpack.c.l.b16 %v570
    %v2533 = vunpack.c.h.b16 %v570
    %v2534 = vunpack.c.l.b16 %v571
    %v2535 = vunpack.c.h.b16 %v571
    %v2536 = vunpack.c.l.b16 %v572
    %v2537 = vunpack.c.h.b16 %v572
    %v2538 = vunpack.c.l.b16 %v573
    %v2539 = vunpack.c.h.b16 %v573
    %v2540 = vunpack.c.l.b16 %v574
    %v2541 = vunpack.c.h.b16 %v574
    %v2542 = vunpack.c.l.b16 %v575
    %v2543 = vunpack.c.h.b16 %v575
    %v2544 = vunpack.c.l.b16 %v576
    %v2545 = vunpack.c.h.b16 %v576
    %v2546 = vunpack.c.l.b16 %v577
    %v2547 = vunpack.c.h.b16 %v577
    %v2548 = vunpack.c.l.b16 %v578
    %v2549 = vunpack.c.h.b16 %v578
    %v2550 = vunpack.c.l.b16 %v579
    %v2551 = vunpack.c.h.b16 %v579
    %v2552 = vunpack.c.l.b16 %v580
    %v2553 = vunpack.c.h.b16 %v580
    %v2554 = vunpack.c.l.b16 %v581
    %v2555 = vunpack.c.h.b16 %v581
    %v2556 = vunpack.c.l.b16 %v582
    %v2557 = vunpack.c.h.b16 %v582
    %v2558 = vunpack.c.l.b16 %v583
    %v2559 = vunpack.c.h.b16 %v583
    %v2560 = vunpack.c.l.b16 %v584
    %v2561 = vunpack.c.h.b16 %v584
    %v2562 = vunpack.c.l.b16 %v585
    %v2563 = vunpack.c.h.b16 %v585
    %v2564 = vunpack.c.l.b16 %v586
    %v2565 = vunpack.c.h.b16 %v586
    %v2566 = vunpack.c.l.b16 %v587
    %v2567 = vunpack.c.h.b16 %v587
    %v2568 = vunpack.c.l.b16 %v588
    %v2569 = vunpack.c.h.b16 %v588
    %v2570 = vunpack.c.l.b16 %v589
    %v2571 = vunpack.c.h.b16 %v589
    %v2572 = vunpack.c.l.b16 %v590
    %v2573 = vunpack.c.h.b16 %v590
    %v2574 = vunpack.c.l.b16 %v591
    %v2575 = vunpack.c.h.b16 %v591
    %v2576 = vunpack.c.l.b16 %v592
    %v2577 = vunpack.c.h.b16 %v592
    %v2578 = vunpack.c.l.b16 %v593
    %v2579 = vunpack.c.h.b16 %v593
    %v2580 = vunpack.c.l.b16 %v594
    %v2581 = vunpack.c.h.b16 %v594
    %v2582 = vunpack.c.l.b16 %v595
    %v2583 = vunpack.c.h.b16 %v595
    %v2584 = vunpack.c.l.b16 %v596
    %v2585 = vunpack.c.h.b16 %v596
    %v2586 = vunpack.c.l.b16 %v597
    %v2587 = vunpack.c.h.b16 %v597
    %v2588 = vunpack.c.l.b16 %v598
    %v2589 = vunpack.c.h.b16 %v598
    %v2590 = vunpack.c.l.b16 %v599
    %v2591 = vunpack.c.h.b16 %v599
    %v2592 = vunpack.c.l.b16 %v600
    %v2593 = vunpack.c.h.b16 %v600
    %v2594 = vunpack.c.l.b16 %v601
    %v2595 = vunpack.c.h.b16 %v601
    %v2596 = vunpack.c.l.b16 %v602
    %v2597 = vunpack.c.h.b16 %v602
    %v2598 = vunpack.c.l.b16 %v603
    %v2599 = vunpack.c.h.b16 %v603
    %v2600 = vunpack.c.l.b16 %v604
    %v2601 = vunpack.c.h.b16 %v604
    %v2602 = vunpack.c.l.b16 %v605
    %v2603 = vunpack.c.h.b16 %v605
    %v2604 = vunpack.c.l.b16 %v606
    %v2605 = vunpack.c.h.b16 %v606
    %v2606 = vunpack.c.l.b16 %v607
    %v2607 = vunpack.c.h.b16 %v607
    %v2608 = vunpack.c.l.b16 %v608
    %v2609 = vunpack.c.h.b16 %v608
    %v2610 = vunpack.c.l.b16 %v609
    %v2611 = vunpack.c.h.b16 %v609
    %v2612 = vunpack.c.l.b16 %v610
    %v2613 = vunpack.c.h.b16 %v610
    %v2614 = vunpack.c.l.b16 %v611
    %v2615 = vunpack.c.h.b16 %v611
    %v2616 = vunpack.c.l.b16 %v612
    %v2617 = vunpack.c.h.b16 %v612
    %v2618 = vunpack.c.l.b16 %v613
    %v2619 = vunpack.c.h.b16 %v613
    %v2620 = vunpack.c.l.b16 %v614
    %v2621 = vunpack.c.h.b16 %v614
    %v2622 = vunpack.c.l.b16 %v615
    %v2623 = vunpack.c.h.b16 %v615
    %v2624 = vunpack.c.l.b16 %v616
    %v2625 = vunpack.c.h.b16 %v616
    %v2626 = vunpack.c.l.b16 %v617
    %v2627 = vunpack.c.h.b16 %v617
    %v2628 = vunpack.c.l.b16 %v618
    %v2629 = vunpack.c.h.b16 %v618
    %v2630 = vunpack.c.l.b16 %v619
    %v2631 = vunpack.c.h.b16 %v619
    %v2632 = vunpack.c.l.b16 %v620
    %v2633 = vunpack.c.h.b16 %v620
    %v2634 = vunpack.c.l.b16 %v621
    %v2635 = vunpack.c.h.b16 %v621
    %v2636 = vunpack.c.l.b16 %v622
    %v2637 = vunpack.c.h.b16 %v622
    %v2638 = vunpack.c.l.b16 %v623
    %v2639 = vunpack.c.h.b16 %v623
    %v2640 = vunpack.c.l.b16 %v624
    %v2641 = vunpack.c.h.b16 %v624
    %v2642 = vunpack.c.l.b16 %v625
    %v2643 = vunpack.c.h.b16 %v625
    %v2644 = vunpack.c.l.b16 %v626
    %v2645 = vunpack.c.h.b16 %v626
    %v2646 = vunpack.c.l.b16 %v627
    %v2647 = vunpack.c.h.b16 %v627
    %v2648 = vunpack.c.l.b16 %v628
    %v2649 = vunpack.c.h.b16 %v628
    %v2650 = vunpack.c.l.b16 %v629
    %v2651 = vunpack.c.h.b16 %v629
    %v2652 = vunpack.c.l.b16 %v630
    %v2653 = vunpack.c.h.b16 %v630
    %v2654 = vunpack.c.l.b16 %v631
    %v2655 = vunpack.c.h.b16 %v631
    %v2656 = vunpack.c.l.b16 %v632
    %v2657 = vunpack.c.h.b16 %v632
    %v2658 = vunpack.c.l.b16 %v633
    %v2659 = vunpack.c.h.b16 %v633
    %v2660 = vunpack.c.l.b16 %v634
    %v2661 = vunpack.c.h.b16 %v634
    %v2662 = vunpack.c.l.b16 %v635
    %v2663 = vunpack.c.h.b16 %v635
    %v2664 = vunpack.c.l.b16 %v636
    %v2665 = vunpack.c.h.b16 %v636
    %v2666 = vunpack.c.l.b16 %v637
    %v2667 = vunpack.c.h.b16 %v637
    %v2668 = vunpack.c.l.b16 %v638
    %v2669 = vunpack.c.h.b16 %v638
    %v2670 = vunpack.c.l.b16 %v639
    %v2671 = vunpack.c.h.b16 %v639
    %v2672 = vunpack.c.l.b16 %v640
    %v2673 = vunpack.c.h.b16 %v640
    %v2674 = vunpack.c.l.b16 %v641
    %v2675 = vunpack.c.h.b16 %v641
    %v2676 = vunpack.c.l.b16 %v642
    %v2677 = vunpack.c.h.b16 %v642
    %v2678 = vunpack.c.l.b16 %v643
    %v2679 = vunpack.c.h.b16 %v643
    %v2680 = vunpack.c.l.b16 %v644
    %v2681 = vunpack.c.h.b16 %v644
    %v2682 = vunpack.c.l.b16 %v645
    %v2683 = vunpack.c.h.b16 %v645
    %v2684 = vunpack.c.l.b16 %v646
    %v2685 = vunpack.c.h.b16 %v646
    %v2686 = vunpack.c.l.b16 %v647
    %v2687 = vunpack.c.h.b16 %v647
    %v2688 = vunpack.c.l.b16 %v648
    %v2689 = vunpack.c.h.b16 %v648
    %v2690 = vunpack.c.l.b16 %v649
    %v2691 = vunpack.c.h.b16 %v649
    %v2692 = vunpack.c.l.b16 %v650
    %v2693 = vunpack.c.h.b16 %v650
    %v2694 = vunpack.c.l.b16 %v651
    %v2695 = vunpack.c.h.b16 %v651
    %v2696 = vunpack.c.l.b16 %v652
    %v2697 = vunpack.c.h.b16 %v652
    %v2698 = vunpack.c.l.b16 %v653
    %v2699 = vunpack.c.h.b16 %v653
    %v2700 = vunpack.c.l.b16 %v654
    %v2701 = vunpack.c.h.b16 %v654
    %v2702 = vunpack.c.l.b16 %v655
    %v2703 = vunpack.c.h.b16 %v655
    %v2704 = vunpack.c.l.b16 %v656
    %v2705 = vunpack.c.h.b16 %v656
    %v2706 = vunpack.c.l.b16 %v657
    %v2707 = vunpack.c.h.b16 %v657
    %v2708 = vunpack.c.l.b16 %v658
    %v2709 = vunpack.c.h.b16 %v658
    %v2710 = vunpack.c.l.b16 %v659
    %v2711 = vunpack.c.h.b16 %v659
    %v2712 = vunpack.c.l.b16 %v660
    %v2713 = vunpack.c.h.b16 %v660
    %v2714 = vunpack.c.l.b16 %v661
    %v2715 = vunpack.c.h.b16 %v661
    %v2716 = vunpack.c.l.b16 %v662
    %v2717 = vunpack.c.h.b16 %v662
    %v2718 = vunpack.c.l.b16 %v663
    %v2719 = vunpack.c.h.b16 %v663
    %v2720 = vunpack.c.l.b16 %v664
    %v2721 = vunpack.c.h.b16 %v664
    %v2722 = vunpack.c.l.b16 %v665
    %v2723 = vunpack.c.h.b16 %v665
    %v2724 = vunpack.c.l.b16 %v666
    %v2725 = vunpack.c.h.b16 %v666
    %v2726 = vunpack.c.l.b16 %v667
    %v2727 = vunpack.c.h.b16 %v667
    %v2728 = vunpack.c.l.b16 %v668
    %v2729 = vunpack.c.h.b16 %v668
    %v2730 = vunpack.c.l.b16 %v669
    %v2731 = vunpack.c.h.b16 %v669
    %v2732 = vunpack.c.l.b16 %v670
    %v2733 = vunpack.c.h.b16 %v670
    %v2734 = vunpack.c.l.b16 %v671
    %v2735 = vunpack.c.h.b16 %v671
    %v2736 = vunpack.c.l.b16 %v672
    %v2737 = vunpack.c.h.b16 %v672
    %v2738 = vunpack.c.l.b16 %v673
    %v2739 = vunpack.c.h.b16 %v673
    %v2740 = vunpack.c.l.b16 %v674
    %v2741 = vunpack.c.h.b16 %v674
    %v2742 = vunpack.c.l.b16 %v675
    %v2743 = vunpack.c.h.b16 %v675
    %v2744 = vunpack.c.l.b16 %v676
    %v2745 = vunpack.c.h.b16 %v676
    %v2746 = vunpack.c.l.b16 %v677
    %v2747 = vunpack.c.h.b16 %v677
    %v2748 = vunpack.c.l.b16 %v678
    %v2749 = vunpack.c.h.b16 %v678
    %v2750 = vunpack.c.l.b16 %v679
    %v2751 = vunpack.c.h.b16 %v679
    %v2752 = vunpack.c.l.b16 %v680
    %v2753 = vunpack.c.h.b16 %v680
    %v2754 = vunpack.c.l.b16 %v681
    %v2755 = vunpack.c.h.b16 %v681
    %v2756 = vunpack.c.l.b16 %v682
    %v2757 = vunpack.c.h.b16 %v682
    %v2758 = vunpack.c.l.b16 %v683
    %v2759 = vunpack.c.h.b16 %v683
    %v2760 = vunpack.c.l.b16 %v684
    %v2761 = vunpack.c.h.b16 %v684
    %v2762 = vunpack.c.l.b16 %v685
    %v2763 = vunpack.c.h.b16 %v685
    %v2764 = vunpack.c.l.b16 %v686
    %v2765 = vunpack.c.h.b16 %v686
    %v2766 = vunpack.c.l.b16 %v687
    %v2767 = vunpack.c.h.b16 %v687
    %v2768 = vunpack.c.l.b16 %v688
    %v2769 = vunpack.c.h.b16 %v688
    %v2770 = vunpack.c.l.b16 %v689
    %v2771 = vunpack.c.h.b16 %v689
    %v2772 = vunpack.c.l.b16 %v690
    %v2773 = vunpack.c.h.b16 %v690
    %v2774 = vunpack.c.l.b16 %v691
    %v2775 = vunpack.c.h.b16 %v691
    %v2776 = vunpack.c.l.b16 %v692
    %v2777 = vunpack.c.h.b16 %v692
    %v2778 = vunpack.c.l.b16 %v693
    %v2779 = vunpack.c.h.b16 %v693
    %v2780 = vunpack.c.l.b16 %v694
    %v2781 = vunpack.c.h.b16 %v694
    %v2782 = vunpack.c.l.b16 %v695
    %v2783 = vunpack.c.h.b16 %v695
    %v2784 = vunpack.c.l.b16 %v696
    %v2785 = vunpack.c.h.b16 %v696
    %v2786 = vunpack.c.l.b16 %v697
    %v2787 = vunpack.c.h.b16 %v697
    %v2788 = vunpack.c.l.b16 %v698
    %v2789 = vunpack.c.h.b16 %v698
    %v2790 = vunpack.c.l.b16 %v699
    %v2791 = vunpack.c.h.b16 %v699
    %v2792 = vunpack.c.l.b16 %v700
    %v2793 = vunpack.c.h.b16 %v700
    %v2794 = vunpack.c.l.b16 %v701
    %v2795 = vunpack.c.h.b16 %v701
    %v2796 = vunpack.c.l.b16 %v702
    %v2797 = vunpack.c.h.b16 %v702
    %v2798 = vunpack.c.l.b16 %v703
    %v2799 = vunpack.c.h.b16 %v703
    %v2800 = vunpack.c.l.b16 %v704
    %v2801 = vunpack.c.h.b16 %v704
    %v2802 = vunpack.c.l.b16 %v705
    %v2803 = vunpack.c.h.b16 %v705
    %v2804 = vunpack.c.l.b16 %v706
    %v2805 = vunpack.c.h.b16 %v706
    %v2806 = vunpack.c.l.b16 %v707
    %v2807 = vunpack.c.h.b16 %v707
    %v2808 = vunpack.c.l.b16 %v708
    %v2809 = vunpack.c.h.b16 %v708
    %v2810 = vunpack.c.l.b16 %v709
    %v2811 = vunpack.c.h.b16 %v709
    %v2812 = vunpack.c.l.b16 %v710
    %v2813 = vunpack.c.h.b16 %v710
    %v2814 = vunpack.c.l.b16 %v711
    %v2815 = vunpack.c.h.b16 %v711
    %v2816 = vunpack.c.l.b16 %v712
    %v2817 = vunpack.c.h.b16 %v712
    %v2818 = vunpack.c.l.b16 %v713
    %v2819 = vunpack.c.h.b16 %v713
    %v2820 = vunpack.c.l.b16 %v714
    %v2821 = vunpack.c.h.b16 %v714
    %v2822 = vunpack.c.l.b16 %v715
    %v2823 = vunpack.c.h.b16 %v715
    %v2824 = vunpack.c.l.b16 %v716
    %v2825 = vunpack.c.h.b16 %v716
    %v2826 = vunpack.c.l.b16 %v717
    %v2827 = vunpack.c.h.b16 %v717
    %v2828 = vunpack.c.l.b16 %v718
    %v2829 = vunpack.c.h.b16 %v718
    %v2830 = vunpack.c.l.b16 %v719
    %v2831 = vunpack.c.h.b16 %v719
    %v2832 = vunpack.c.l.b16 %v720
    %v2833 = vunpack.c.h.b16 %v720
    %v2834 = vunpack.c.l.b16 %v721
    %v2835 = vunpack.c.h.b16 %v721
    %v2836 = vunpack.c.l.b16 %v722
    %v2837 = vunpack.c.h.b16 %v722
    %v2838 = vunpack.c.l.b16 %v723
    %v2839 = vunpack.c.h.b16 %v723
    %v2840 = vunpack.c.l.b16 %v724
    %v2841 = vunpack.c.h.b16 %v724
    %v2842 = vunpack.c.l.b16 %v725
    %v2843 = vunpack.c.h.b16 %v725
    %v2844 = vunpack.c.l.b16 %v726
    %v2845 = vunpack.c.h.b16 %v726
    %v2846 = vunpack.c.l.b16 %v727
    %v2847 = vunpack.c.h.b16 %v727
    %v2848 = vunpack.c.l.b16 %v728
    %v2849 = vunpack.c.h.b16 %v728
    %v2850 = vunpack.c.l.b16 %v729
    %v2851 = vunpack.c.h.b16 %v729
    %v2852 = vunpack.c.l.b16 %v730
    %v2853 = vunpack.c.h.b16 %v730
    %v2854 = vunpack.c.l.b16 %v731
    %v2855 = vunpack.c.h.b16 %v731
    %v2856 = vunpack.c.l.b16 %v732
    %v2857 = vunpack.c.h.b16 %v732
    %v2858 = vunpack.c.l.b16 %v733
    %v2859 = vunpack.c.h.b16 %v733
    %v2860 = vunpack.c.l.b16 %v734
    %v2861 = vunpack.c.h.b16 %v734
    %v2862 = vunpack.c.l.b16 %v735
    %v2863 = vunpack.c.h.b16 %v735
    %v2864 = vunpack.c.l.b16 %v736
    %v2865 = vunpack.c.h.b16 %v736
    %v2866 = vunpack.c.l.b16 %v737
    %v2867 = vunpack.c.h.b16 %v737
    %v2868 = vunpack.c.l.b16 %v738
    %v2869 = vunpack.c.h.b16 %v738
    %v2870 = vunpack.c.l.b16 %v739
    %v2871 = vunpack.c.h.b16 %v739
    %v2872 = vunpack.c.l.b16 %v740
    %v2873 = vunpack.c.h.b16 %v740
    %v2874 = vunpack.c.l.b16 %v741
    %v2875 = vunpack.c.h.b16 %v741
    %v2876 = vunpack.c.l.b16 %v742
    %v2877 = vunpack.c.h.b16 %v742
    %v2878 = vunpack.c.l.b16 %v743
    %v2879 = vunpack.c.h.b16 %v743
    %v2880 = vunpack.c.l.b16 %v744
    %v2881 = vunpack.c.h.b16 %v744
    %v2882 = vunpack.c.l.b16 %v745
    %v2883 = vunpack.c.h.b16 %v745
    %v2884 = vunpack.c.l.b16 %v746
    %v2885 = vunpack.c.h.b16 %v746
    %v2886 = vunpack.c.l.b16 %v747
    %v2887 = vunpack.c.h.b16 %v747
    %v2888 = vunpack.c.l.b16 %v748
    %v2889 = vunpack.c.h.b16 %v748
    %v2890 = vunpack.c.l.b16 %v749
    %v2891 = vunpack.c.h.b16 %v749
    %v2892 = vunpack.c.l.b16 %v750
    %v2893 = vunpack.c.h.b16 %v750
    %v2894 = vunpack.c.l.b16 %v751
    %v2895 = vunpack.c.h.b16 %v751
    %v2896 = vunpack.c.l.b16 %v752
    %v2897 = vunpack.c.h.b16 %v752
    %v2898 = vunpack.c.l.b16 %v753
    %v2899 = vunpack.c.h.b16 %v753
    %v2900 = vunpack.c.l.b16 %v754
    %v2901 = vunpack.c.h.b16 %v754
    %v2902 = vunpack.c.l.b16 %v755
    %v2903 = vunpack.c.h.b16 %v755
    %v2904 = vunpack.c.l.b16 %v756
    %v2905 = vunpack.c.h.b16 %v756
    %v2906 = vunpack.c.l.b16 %v757
    %v2907 = vunpack.c.h.b16 %v757
    %v2908 = vunpack.c.l.b16 %v758
    %v2909 = vunpack.c.h.b16 %v758
    %v2910 = vunpack.c.l.b16 %v759
    %v2911 = vunpack.c.h.b16 %v759
    %v2912 = vunpack.c.l.b16 %v760
    %v2913 = vunpack.c.h.b16 %v760
    %v2914 = vunpack.c.l.b16 %v761
    %v2915 = vunpack.c.h.b16 %v761
    %v2916 = vunpack.c.l.b16 %v762
    %v2917 = vunpack.c.h.b16 %v762
    %v2918 = vunpack.c.l.b16 %v763
    %v2919 = vunpack.c.h.b16 %v763
    %v2920 = vunpack.c.l.b16 %v764
    %v2921 = vunpack.c.h.b16 %v764
    %v2922 = vunpack.c.l.b16 %v765
    %v2923 = vunpack.c.h.b16 %v765
    %v2924 = vunpack.c.l.b16 %v766
    %v2925 = vunpack.c.h.b16 %v766
    %v2926 = vunpack.c.l.b16 %v767
    %v2927 = vunpack.c.h.b16 %v767
    %v2928 = vunpack.c.l.b16 %v768
    %v2929 = vunpack.c.h.b16 %v768
    %v2930 = vunpack.c.l.b16 %v769
    %v2931 = vunpack.c.h.b16 %v769
    %v2932 = vunpack.c.l.b16 %v770
    %v2933 = vunpack.c.h.b16 %v770
    %v2934 = vunpack.c.l.b16 %v771
    %v2935 = vunpack.c.h.b16 %v771
    %v2936 = vunpack.c.l.b16 %v772
    %v2937 = vunpack.c.h.b16 %v772
    %v2938 = vunpack.c.l.b16 %v773
    %v2939 = vunpack.c.h.b16 %v773
    %v2940 = vunpack.c.l.b16 %v774
    %v2941 = vunpack.c.h.b16 %v774
    %v2942 = vunpack.c.l.b16 %v775
    %v2943 = vunpack.c.h.b16 %v775
    %v2944 = vunpack.c.l.b16 %v776
    %v2945 = vunpack.c.h.b16 %v776
    %v2946 = vunpack.c.l.b16 %v777
    %v2947 = vunpack.c.h.b16 %v777
    %v2948 = vunpack.c.l.b16 %v778
    %v2949 = vunpack.c.h.b16 %v778
    %v2950 = vunpack.c.l.b16 %v779
    %v2951 = vunpack.c.h.b16 %v779
    %v2952 = vunpack.c.l.b16 %v780
    %v2953 = vunpack.c.h.b16 %v780
    %v2954 = vunpack.c.l.b16 %v781
    %v2955 = vunpack.c.h.b16 %v781
    %v2956 = vunpack.c.l.b16 %v782
    %v2957 = vunpack.c.h.b16 %v782
    %v2958 = vunpack.c.l.b16 %v783
    %v2959 = vunpack.c.h.b16 %v783
    %v2960 = vunpack.c.l.b16 %v784
    %v2961 = vunpack.c.h.b16 %v784
    %v2962 = vunpack.c.l.b16 %v785
    %v2963 = vunpack.c.h.b16 %v785
    %v2964 = vunpack.c.l.b16 %v786
    %v2965 = vunpack.c.h.b16 %v786
    %v2966 = vunpack.c.l.b16 %v787
    %v2967 = vunpack.c.h.b16 %v787
    %v2968 = vunpack.c.l.b16 %v788
    %v2969 = vunpack.c.h.b16 %v788
    %v2970 = vunpack.c.l.b16 %v789
    %v2971 = vunpack.c.h.b16 %v789
    %v2972 = vunpack.c.l.b16 %v790
    %v2973 = vunpack.c.h.b16 %v790
    %v2974 = vunpack.c.l.b16 %v791
    %v2975 = vunpack.c.h.b16 %v791
    %v2976 = vunpack.c.l.b16 %v792
    %v2977 = vunpack.c.h.b16 %v792
    %v2978 = vunpack.c.l.b16 %v793
    %v2979 = vunpack.c.h.b16 %v793
    %v2980 = vunpack.c.l.b16 %v794
    %v2981 = vunpack.c.h.b16 %v794
    %v2982 = vunpack.c.l.b16 %v795
    %v2983 = vunpack.c.h.b16 %v795
    %v2984 = vunpack.c.l.b16 %v796
    %v2985 = vunpack.c.h.b16 %v796
    %v2986 = vunpack.c.l.b16 %v797
    %v2987 = vunpack.c.h.b16 %v797
    %v2988 = vunpack.c.l.b16 %v798
    %v2989 = vunpack.c.h.b16 %v798
    %v2990 = vunpack.c.l.b16 %v799
    %v2991 = vunpack.c.h.b16 %v799
    %v2992 = vunpack.c.l.b16 %v800
    %v2993 = vunpack.c.h.b16 %v800
    %v2994 = vunpack.c.l.b16 %v801
    %v2995 = vunpack.c.h.b16 %v801
    %v2996 = vunpack.c.l.b16 %v802
    %v2997 = vunpack.c.h.b16 %v802
    %v2998 = vunpack.c.l.b16 %v803
    %v2999 = vunpack.c.h.b16 %v803
    %v3000 = vunpack.c.l.b16 %v804
    %v3001 = vunpack.c.h.b16 %v804
    %v3002 = vunpack.c.l.b16 %v805
    %v3003 = vunpack.c.h.b16 %v805
    %v3004 = vunpack.c.l.b16 %v806
    %v3005 = vunpack.c.h.b16 %v806
    %v3006 = vunpack.c.l.b16 %v807
    %v3007 = vunpack.c.h.b16 %v807
    %v3008 = vunpack.c.l.b16 %v808
    %v3009 = vunpack.c.h.b16 %v808
    %v3010 = vunpack.c.l.b16 %v809
    %v3011 = vunpack.c.h.b16 %v809
    %v3012 = vunpack.c.l.b16 %v810
    %v3013 = vunpack.c.h.b16 %v810
    %v3014 = vunpack.c.l.b16 %v811
    %v3015 = vunpack.c.h.b16 %v811
    %v3016 = vunpack.c.l.b16 %v812
    %v3017 = vunpack.c.h.b16 %v812
    %v3018 = vunpack.c.l.b16 %v813
    %v3019 = vunpack.c.h.b16 %v813
    %v3020 = vunpack.c.l.b16 %v814
    %v3021 = vunpack.c.h.b16 %v814
    %v3022 = vunpack.c.l.b16 %v815
    %v3023 = vunpack.c.h.b16 %v815
    %v3024 = vunpack.c.l.b16 %v816
    %v3025 = vunpack.c.h.b16 %v816
    %v3026 = vunpack.c.l.b16 %v817
    %v3027 = vunpack.c.h.b16 %v817
    %v3028 = vunpack.c.l.b16 %v818
    %v3029 = vunpack.c.h.b16 %v818
    %v3030 = vunpack.c.l.b16 %v819
    %v3031 = vunpack.c.h.b16 %v819
    %v3032 = vunpack.c.l.b16 %v820
    %v3033 = vunpack.c.h.b16 %v820
    %v3034 = vunpack.c.l.b16 %v821
    %v3035 = vunpack.c.h.b16 %v821
    %v3036 = vpack.c.b16 %v2028, %v2012
    %v3037 = vpack.c.b16 %v2029, %v2013
    %v3038 = vpack.c.b16 %v2030, %v2014
    %v3039 = vpack.c.b16 %v2031, %v2015
    %v3040 = vpack.c.b16 %v2032, %v2016
    %v3041 = vpack.c.b16 %v2033, %v2017
    %v3042 = vpack.c.b16 %v2034, %v2018
    %v3043 = vpack.c.b16 %v2035, %v2019
    %v3044 = vpack.c.b16 %v2036, %v2020
    %v3045 = vpack.c.b16 %v2037, %v2021
    %v3046 = vpack.c.b16 %v2038, %v2022
    %v3047 = vpack.c.b16 %v2039, %v2023
    %v3048 = vpack.c.b16 %v2040, %v2024
    %v3049 = vpack.c.b16 %v2041, %v2025
    %v3050 = vpack.c.b16 %v2042, %v2026
    %v3051 = vpack.c.b16 %v2043, %v2027
    %v3052 = vpack.c.b16 %v2060, %v2044
    %v3053 = vpack.c.b16 %v2061, %v2045
    %v3054 = vpack.c.b16 %v2062, %v2046
    %v3055 = vpack.c.b16 %v2063, %v2047
    %v3056 = vpack.c.b16 %v2064, %v2048
    %v3057 = vpack.c.b16 %v2065, %v2049
    %v3058 = vpack.c.b16 %v2066, %v2050
    %v3059 = vpack.c.b16 %v2067, %v2051
    %v3060 = vpack.c.b16 %v2068, %v2052
    %v3061 = vpack.c.b16 %v2069, %v2053
    %v3062 = vpack.c.b16 %v2070, %v2054
    %v3063 = vpack.c.b16 %v2071, %v2055
    %v3064 = vpack.c.b16 %v2072, %v2056
    %v3065 = vpack.c.b16 %v2073, %v2057
    %v3066 = vpack.c.b16 %v2074, %v2058
    %v3067 = vpack.c.b16 %v2075, %v2059
    %v3068 = vpack.c.b16 %v2092, %v2076
    %v3069 = vpack.c.b16 %v2093, %v2077
    %v3070 = vpack.c.b16 %v2094, %v2078
    %v3071 = vpack.c.b16 %v2095, %v2079
    %v3072 = vpack.c.b16 %v2096, %v2080
    %v3073 = vpack.c.b16 %v2097, %v2081
    %v3074 = vpack.c.b16 %v2098, %v2082
    %v3075 = vpack.c.b16 %v2099, %v2083
    %v3076 = vpack.c.b16 %v2100, %v2084
    %v3077 = vpack.c.b16 %v2101, %v2085
    %v3078 = vpack.c.b16 %v2102, %v2086
    %v3079 = vpack.c.b16 %v2103, %v2087
    %v3080 = vpack.c.b16 %v2104, %v2088
    %v3081 = vpack.c.b16 %v2105, %v2089
    %v3082 = vpack.c.b16 %v2106, %v2090
    %v3083 = vpack.c.b16 %v2107, %v2091
    %v3084 = vpack.c.b16 %v2124, %v2108
    %v3085 = vpack.c.b16 %v2125, %v2109
    %v3086 = vpack.c.b16 %v2126, %v2110
    %v3087 = vpack.c.b16 %v2127, %v2111
    %v3088 = vpack.c.b16 %v2128, %v2112
    %v3089 = vpack.c.b16 %v2129, %v2113
    %v3090 = vpack.c.b16 %v2130, %v2114
    %v3091 = vpack.c.b16 %v2131, %v2115
    %v3092 = vpack.c.b16 %v2132, %v2116
    %v3093 = vpack.c.b16 %v2133, %v2117
    %v3094 = vpack.c.b16 %v2134, %v2118
    %v3095 = vpack.c.b16 %v2135, %v2119
    %v3096 = vpack.c.b16 %v2136, %v2120
    %v3097 = vpack.c.b16 %v2137, %v2121
    %v3098 = vpack.c.b16 %v2138, %v2122
    %v3099 = vpack.c.b16 %v2139, %v2123
    %v3100 = vpack.c.b16 %v2156, %v2140
    %v3101 = vpack.c.b16 %v2157, %v2141
    %v3102 = vpack.c.b16 %v2158, %v2142
    %v3103 = vpack.c.b16 %v2159, %v2143
    %v3104 = vpack.c.b16 %v2160, %v2144
    %v3105 = vpack.c.b16 %v2161, %v2145
    %v3106 = vpack.c.b16 %v2162, %v2146
    %v3107 = vpack.c.b16 %v2163, %v2147
    %v3108 = vpack.c.b16 %v2164, %v2148
    %v3109 = vpack.c.b16 %v2165, %v2149
    %v3110 = vpack.c.b16 %v2166, %v2150
    %v3111 = vpack.c.b16 %v2167, %v2151
    %v3112 = vpack.c.b16 %v2168, %v2152
    %v3113 = vpack.c.b16 %v2169, %v2153
    %v3114 = vpack.c.b16 %v2170, %v2154
    %v3115 = vpack.c.b16 %v2171, %v2155
    %v3116 = vpack.c.b16 %v2188, %v2172
    %v3117 = vpack.c.b16 %v2189, %v2173
    %v3118 = vpack.c.b16 %v2190, %v2174
    %v3119 = vpack.c.b16 %v2191, %v2175
    %v3120 = vpack.c.b16 %v2192, %v2176
    %v3121 = vpack.c.b16 %v2193, %v2177
    %v3122 = vpack.c.b16 %v2194, %v2178
    %v3123 = vpack.c.b16 %v2195, %v2179
    %v3124 = vpack.c.b16 %v2196, %v2180
    %v3125 = vpack.c.b16 %v2197, %v2181
    %v3126 = vpack.c.b16 %v2198, %v2182
    %v3127 = vpack.c.b16 %v2199, %v2183
    %v3128 = vpack.c.b16 %v2200, %v2184
    %v3129 = vpack.c.b16 %v2201, %v2185
    %v3130 = vpack.c.b16 %v2202, %v2186
    %v3131 = vpack.c.b16 %v2203, %v2187
    %v3132 = vpack.c.b16 %v2220, %v2204
    %v3133 = vpack.c.b16 %v2221, %v2205
    %v3134 = vpack.c.b16 %v2222, %v2206
    %v3135 = vpack.c.b16 %v2223, %v2207
    %v3136 = vpack.c.b16 %v2224, %v2208
    %v3137 = vpack.c.b16 %v2225, %v2209
    %v3138 = vpack.c.b16 %v2226, %v2210
    %v3139 = vpack.c.b16 %v2227, %v2211
    %v3140 = vpack.c.b16 %v2228, %v2212
    %v3141 = vpack.c.b16 %v2229, %v2213
    %v3142 = vpack.c.b16 %v2230, %v2214
    %v3143 = vpack.c.b16 %v2231, %v2215
    %v3144 = vpack.c.b16 %v2232, %v2216
    %v3145 = vpack.c.b16 %v2233, %v2217
    %v3146 = vpack.c.b16 %v2234, %v2218
    %v3147 = vpack.c.b16 %v2235, %v2219
    %v3148 = vpack.c.b16 %v2252, %v2236
    %v3149 = vpack.c.b16 %v2253, %v2237
    %v3150 = vpack.c.b16 %v2254, %v2238
    %v3151 = vpack.c.b16 %v2255, %v2239
    %v3152 = vpack.c.b16 %v2256, %v2240
    %v3153 = vpack.c.b16 %v2257, %v2241
    %v3154 = vpack.c.b16 %v2258, %v2242
    %v3155 = vpack.c.b16 %v2259, %v2243
    %v3156 = vpack.c.b16 %v2260, %v2244
    %v3157 = vpack.c.b16 %v2261, %v2245
    %v3158 = vpack.c.b16 %v2262, %v2246
    %v3159 = vpack.c.b16 %v2263, %v2247
    %v3160 = vpack.c.b16 %v2264, %v2248
    %v3161 = vpack.c.b16 %v2265, %v2249
    %v3162 = vpack.c.b16 %v2266, %v2250
    %v3163 = vpack.c.b16 %v2267, %v2251
    %v3164 = vpack.c.b16 %v2284, %v2268
    %v3165 = vpack.c.b16 %v2285, %v2269
    %v3166 = vpack.c.b16 %v2286, %v2270
    %v3167 = vpack.c.b16 %v2287, %v2271
    %v3168 = vpack.c.b16 %v2288, %v2272
    %v3169 = vpack.c.b16 %v2289, %v2273
    %v3170 = vpack.c.b16 %v2290, %v2274
    %v3171 = vpack.c.b16 %v2291, %v2275
    %v3172 = vpack.c.b16 %v2292, %v2276
    %v3173 = vpack.c.b16 %v2293, %v2277
    %v3174 = vpack.c.b16 %v2294, %v2278
    %v3175 = vpack.c.b16 %v2295, %v2279
    %v3176 = vpack.c.b16 %v2296, %v2280
    %v3177 = vpack.c.b16 %v2297, %v2281
    %v3178 = vpack.c.b16 %v2298, %v2282
    %v3179 = vpack.c.b16 %v2299, %v2283
    %v3180 = vpack.c.b16 %v2316, %v2300
    %v3181 = vpack.c.b16 %v2317, %v2301
    %v3182 = vpack.c.b16 %v2318, %v2302
    %v3183 = vpack.c.b16 %v2319, %v2303
    %v3184 = vpack.c.b16 %v2320, %v2304
    %v3185 = vpack.c.b16 %v2321, %v2305
    %v3186 = vpack.c.b16 %v2322, %v2306
    %v3187 = vpack.c.b16 %v2323, %v2307
    %v3188 = vpack.c.b16 %v2324, %v2308
    %v3189 = vpack.c.b16 %v2325, %v2309
    %v3190 = vpack.c.b16 %v2326, %v2310
    %v3191 = vpack.c.b16 %v2327, %v2311
    %v3192 = vpack.c.b16 %v2328, %v2312
    %v3193 = vpack.c.b16 %v2329, %v2313
    %v3194 = vpack.c.b16 %v2330, %v2314
    %v3195 = vpack.c.b16 %v2331, %v2315
    %v3196 = vpack.c.b16 %v2348, %v2332
    %v3197 = vpack.c.b16 %v2349, %v2333
    %v3198 = vpack.c.b16 %v2350, %v2334
    %v3199 = vpack.c.b16 %v2351, %v2335
    %v3200 = vpack.c.b16 %v2352, %v2336
    %v3201 = vpack.c.b16 %v2353, %v2337
    %v3202 = vpack.c.b16 %v2354, %v2338
    %v3203 = vpack.c.b16 %v2355, %v2339
    %v3204 = vpack.c.b16 %v2356, %v2340
    %v3205 = vpack.c.b16 %v2357, %v2341
    %v3206 = vpack.c.b16 %v2358, %v2342
    %v3207 = vpack.c.b16 %v2359, %v2343
    %v3208 = vpack.c.b16 %v2360, %v2344
    %v3209 = vpack.c.b16 %v2361, %v2345
    %v3210 = vpack.c.b16 %v2362, %v2346
    %v3211 = vpack.c.b16 %v2363, %v2347
    %v3212 = vpack.c.b16 %v2380, %v2364
    %v3213 = vpack.c.b16 %v2381, %v2365
    %v3214 = vpack.c.b16 %v2382, %v2366
    %v3215 = vpack.c.b16 %v2383, %v2367
    %v3216 = vpack.c.b16 %v2384, %v2368
    %v3217 = vpack.c.b16 %v2385, %v2369
    %v3218 = vpack.c.b16 %v2386, %v2370
    %v3219 = vpack.c.b16 %v2387, %v2371
    %v3220 = vpack.c.b16 %v2388, %v2372
    %v3221 = vpack.c.b16 %v2389, %v2373
    %v3222 = vpack.c.b16 %v2390, %v2374
    %v3223 = vpack.c.b16 %v2391, %v2375
    %v3224 = vpack.c.b16 %v2392, %v2376
    %v3225 = vpack.c.b16 %v2393, %v2377
    %v3226 = vpack.c.b16 %v2394, %v2378
    %v3227 = vpack.c.b16 %v2395, %v2379
    %v3228 = vpack.c.b16 %v2412, %v2396
    %v3229 = vpack.c.b16 %v2413, %v2397
    %v3230 = vpack.c.b16 %v2414, %v2398
    %v3231 = vpack.c.b16 %v2415, %v2399
    %v3232 = vpack.c.b16 %v2416, %v2400
    %v3233 = vpack.c.b16 %v2417, %v2401
    %v3234 = vpack.c.b16 %v2418, %v2402
    %v3235 = vpack.c.b16 %v2419, %v2403
    %v3236 = vpack.c.b16 %v2420, %v2404
    %v3237 = vpack.c.b16 %v2421, %v2405
    %v3238 = vpack.c.b16 %v2422, %v2406
    %v3239 = vpack.c.b16 %v2423, %v2407
    %v3240 = vpack.c.b16 %v2424, %v2408
    %v3241 = vpack.c.b16 %v2425, %v2409
    %v3242 = vpack.c.b16 %v2426, %v2410
    %v3243 = vpack.c.b16 %v2427, %v2411
    %v3244 = vpack.c.b16 %v2444, %v2428
    %v3245 = vpack.c.b16 %v2445, %v2429
    %v3246 = vpack.c.b16 %v2446, %v2430
    %v3247 = vpack.c.b16 %v2447, %v2431
    %v3248 = vpack.c.b16 %v2448, %v2432
    %v3249 = vpack.c.b16 %v2449, %v2433
    %v3250 = vpack.c.b16 %v2450, %v2434
    %v3251 = vpack.c.b16 %v2451, %v2435
    %v3252 = vpack.c.b16 %v2452, %v2436
    %v3253 = vpack.c.b16 %v2453, %v2437
    %v3254 = vpack.c.b16 %v2454, %v2438
    %v3255 = vpack.c.b16 %v2455, %v2439
    %v3256 = vpack.c.b16 %v2456, %v2440
    %v3257 = vpack.c.b16 %v2457, %v2441
    %v3258 = vpack.c.b16 %v2458, %v2442
    %v3259 = vpack.c.b16 %v2459, %v2443
    %v3260 = vpack.c.b16 %v2476, %v2460
    %v3261 = vpack.c.b16 %v2477, %v2461
    %v3262 = vpack.c.b16 %v2478, %v2462
    %v3263 = vpack.c.b16 %v2479, %v2463
    %v3264 = vpack.c.b16 %v2480, %v2464
    %v3265 = vpack.c.b16 %v2481, %v2465
    %v3266 = vpack.c.b16 %v2482, %v2466
    %v3267 = vpack.c.b16 %v2483, %v2467
    %v3268 = vpack.c.b16 %v2484, %v2468
    %v3269 = vpack.c.b16 %v2485, %v2469
    %v3270 = vpack.c.b16 %v2486, %v2470
    %v3271 = vpack.c.b16 %v2487, %v2471
    %v3272 = vpack.c.b16 %v2488, %v2472
    %v3273 = vpack.c.b16 %v2489, %v2473
    %v3274 = vpack.c.b16 %v2490, %v2474
    %v3275 = vpack.c.b16 %v2491, %v2475
    %v3276 = vpack.c.b16 %v2508, %v2492
    %v3277 = vpack.c.b16 %v2509, %v2493
    %v3278 = vpack.c.b16 %v2510, %v2494
    %v3279 = vpack.c.b16 %v2511, %v2495
    %v3280 = vpack.c.b16 %v2512, %v2496
    %v3281 = vpack.c.b16 %v2513, %v2497
    %v3282 = vpack.c.b16 %v2514, %v2498
    %v3283 = vpack.c.b16 %v2515, %v2499
    %v3284 = vpack.c.b16 %v2516, %v2500
    %v3285 = vpack.c.b16 %v2517, %v2501
    %v3286 = vpack.c.b16 %v2518, %v2502
    %v3287 = vpack.c.b16 %v2519, %v2503
    %v3288 = vpack.c.b16 %v2520, %v2504
    %v3289 = vpack.c.b16 %v2521, %v2505
    %v3290 = vpack.c.b16 %v2522, %v2506
    %v3291 = vpack.c.b16 %v2523, %v2507
    %v3292 = vpack.c.b16 %v2540, %v2524
    %v3293 = vpack.c.b16 %v2541, %v2525
    %v3294 = vpack.c.b16 %v2542, %v2526
    %v3295 = vpack.c.b16 %v2543, %v2527
    %v3296 = vpack.c.b16 %v2544, %v2528
    %v3297 = vpack.c.b16 %v2545, %v2529
    %v3298 = vpack.c.b16 %v2546, %v2530
    %v3299 = vpack.c.b16 %v2547, %v2531
    %v3300 = vpack.c.b16 %v2548, %v2532
    %v3301 = vpack.c.b16 %v2549, %v2533
    %v3302 = vpack.c.b16 %v2550, %v2534
    %v3303 = vpack.c.b16 %v2551, %v2535
    %v3304 = vpack.c.b16 %v2552, %v2536
    %v3305 = vpack.c.b16 %v2553, %v2537
    %v3306 = vpack.c.b16 %v2554, %v2538
    %v3307 = vpack.c.b16 %v2555, %v2539
    %v3308 = vpack.c.b16 %v2572, %v2556
    %v3309 = vpack.c.b16 %v2573, %v2557
    %v3310 = vpack.c.b16 %v2574, %v2558
    %v3311 = vpack.c.b16 %v2575, %v2559
    %v3312 = vpack.c.b16 %v2576, %v2560
    %v3313 = vpack.c.b16 %v2577, %v2561
    %v3314 = vpack.c.b16 %v2578, %v2562
    %v3315 = vpack.c.b16 %v2579, %v2563
    %v3316 = vpack.c.b16 %v2580, %v2564
    %v3317 = vpack.c.b16 %v2581, %v2565
    %v3318 = vpack.c.b16 %v2582, %v2566
    %v3319 = vpack.c.b16 %v2583, %v2567
    %v3320 = vpack.c.b16 %v2584, %v2568
    %v3321 = vpack.c.b16 %v2585, %v2569
    %v3322 = vpack.c.b16 %v2586, %v2570
    %v3323 = vpack.c.b16 %v2587, %v2571
    %v3324 = vpack.c.b16 %v2604, %v2588
    %v3325 = vpack.c.b16 %v2605, %v2589
    %v3326 = vpack.c.b16 %v2606, %v2590
    %v3327 = vpack.c.b16 %v2607, %v2591
    %v3328 = vpack.c.b16 %v2608, %v2592
    %v3329 = vpack.c.b16 %v2609, %v2593
    %v3330 = vpack.c.b16 %v2610, %v2594
    %v3331 = vpack.c.b16 %v2611, %v2595
    %v3332 = vpack.c.b16 %v2612, %v2596
    %v3333 = vpack.c.b16 %v2613, %v2597
    %v3334 = vpack.c.b16 %v2614, %v2598
    %v3335 = vpack.c.b16 %v2615, %v2599
    %v3336 = vpack.c.b16 %v2616, %v2600
    %v3337 = vpack.c.b16 %v2617, %v2601
    %v3338 = vpack.c.b16 %v2618, %v2602
    %v3339 = vpack.c.b16 %v2619, %v2603
    %v3340 = vpack.c.b16 %v2636, %v2620
    %v3341 = vpack.c.b16 %v2637, %v2621
    %v3342 = vpack.c.b16 %v2638, %v2622
    %v3343 = vpack.c.b16 %v2639, %v2623
    %v3344 = vpack.c.b16 %v2640, %v2624
    %v3345 = vpack.c.b16 %v2641, %v2625
    %v3346 = vpack.c.b16 %v2642, %v2626
    %v3347 = vpack.c.b16 %v2643, %v2627
    %v3348 = vpack.c.b16 %v2644, %v2628
    %v3349 = vpack.c.b16 %v2645, %v2629
    %v3350 = vpack.c.b16 %v2646, %v2630
    %v3351 = vpack.c.b16 %v2647, %v2631
    %v3352 = vpack.c.b16 %v2648, %v2632
    %v3353 = vpack.c.b16 %v2649, %v2633
    %v3354 = vpack.c.b16 %v2650, %v2634
    %v3355 = vpack.c.b16 %v2651, %v2635
    %v3356 = vpack.c.b16 %v2668, %v2652
    %v3357 = vpack.c.b16 %v2669, %v2653
    %v3358 = vpack.c.b16 %v2670, %v2654
    %v3359 = vpack.c.b16 %v2671, %v2655
    %v3360 = vpack.c.b16 %v2672, %v2656
    %v3361 = vpack.c.b16 %v2673, %v2657
    %v3362 = vpack.c.b16 %v2674, %v2658
    %v3363 = vpack.c.b16 %v2675, %v2659
    %v3364 = vpack.c.b16 %v2676, %v2660
    %v3365 = vpack.c.b16 %v2677, %v2661
    %v3366 = vpack.c.b16 %v2678, %v2662
    %v3367 = vpack.c.b16 %v2679, %v2663
    %v3368 = vpack.c.b16 %v2680, %v2664
    %v3369 = vpack.c.b16 %v2681, %v2665
    %v3370 = vpack.c.b16 %v2682, %v2666
    %v3371 = vpack.c.b16 %v2683, %v2667
    %v3372 = vpack.c.b16 %v2700, %v2684
    %v3373 = vpack.c.b16 %v2701, %v2685
    %v3374 = vpack.c.b16 %v2702, %v2686
    %v3375 = vpack.c.b16 %v2703, %v2687
    %v3376 = vpack.c.b16 %v2704, %v2688
    %v3377 = vpack.c.b16 %v2705, %v2689
    %v3378 = vpack.c.b16 %v2706, %v2690
    %v3379 = vpack.c.b16 %v2707, %v2691
    %v3380 = vpack.c.b16 %v2708, %v2692
    %v3381 = vpack.c.b16 %v2709, %v2693
    %v3382 = vpack.c.b16 %v2710, %v2694
    %v3383 = vpack.c.b16 %v2711, %v2695
    %v3384 = vpack.c.b16 %v2712, %v2696
    %v3385 = vpack.c.b16 %v2713, %v2697
    %v3386 = vpack.c.b16 %v2714, %v2698
    %v3387 = vpack.c.b16 %v2715, %v2699
    %v3388 = vpack.c.b16 %v2732, %v2716
    %v3389 = vpack.c.b16 %v2733, %v2717
    %v3390 = vpack.c.b16 %v2734, %v2718
    %v3391 = vpack.c.b16 %v2735, %v2719
    %v3392 = vpack.c.b16 %v2736, %v2720
    %v3393 = vpack.c.b16 %v2737, %v2721
    %v3394 = vpack.c.b16 %v2738, %v2722
    %v3395 = vpack.c.b16 %v2739, %v2723
    %v3396 = vpack.c.b16 %v2740, %v2724
    %v3397 = vpack.c.b16 %v2741, %v2725
    %v3398 = vpack.c.b16 %v2742, %v2726
    %v3399 = vpack.c.b16 %v2743, %v2727
    %v3400 = vpack.c.b16 %v2744, %v2728
    %v3401 = vpack.c.b16 %v2745, %v2729
    %v3402 = vpack.c.b16 %v2746, %v2730
    %v3403 = vpack.c.b16 %v2747, %v2731
    %v3404 = vpack.c.b16 %v2764, %v2748
    %v3405 = vpack.c.b16 %v2765, %v2749
    %v3406 = vpack.c.b16 %v2766, %v2750
    %v3407 = vpack.c.b16 %v2767, %v2751
    %v3408 = vpack.c.b16 %v2768, %v2752
    %v3409 = vpack.c.b16 %v2769, %v2753
    %v3410 = vpack.c.b16 %v2770, %v2754
    %v3411 = vpack.c.b16 %v2771, %v2755
    %v3412 = vpack.c.b16 %v2772, %v2756
    %v3413 = vpack.c.b16 %v2773, %v2757
    %v3414 = vpack.c.b16 %v2774, %v2758
    %v3415 = vpack.c.b16 %v2775, %v2759
    %v3416 = vpack.c.b16 %v2776, %v2760
    %v3417 = vpack.c.b16 %v2777, %v2761
    %v3418 = vpack.c.b16 %v2778, %v2762
    %v3419 = vpack.c.b16 %v2779, %v2763
    %v3420 = vpack.c.b16 %v2796, %v2780
    %v3421 = vpack.c.b16 %v2797, %v2781
    %v3422 = vpack.c.b16 %v2798, %v2782
    %v3423 = vpack.c.b16 %v2799, %v2783
    %v3424 = vpack.c.b16 %v2800, %v2784
    %v3425 = vpack.c.b16 %v2801, %v2785
    %v3426 = vpack.c.b16 %v2802, %v2786
    %v3427 = vpack.c.b16 %v2803, %v2787
    %v3428 = vpack.c.b16 %v2804, %v2788
    %v3429 = vpack.c.b16 %v2805, %v2789
    %v3430 = vpack.c.b16 %v2806, %v2790
    %v3431 = vpack.c.b16 %v2807, %v2791
    %v3432 = vpack.c.b16 %v2808, %v2792
    %v3433 = vpack.c.b16 %v2809, %v2793
    %v3434 = vpack.c.b16 %v2810, %v2794
    %v3435 = vpack.c.b16 %v2811, %v2795
    %v3436 = vpack.c.b16 %v2828, %v2812
    %v3437 = vpack.c.b16 %v2829, %v2813
    %v3438 = vpack.c.b16 %v2830, %v2814
    %v3439 = vpack.c.b16 %v2831, %v2815
    %v3440 = vpack.c.b16 %v2832, %v2816
    %v3441 = vpack.c.b16 %v2833, %v2817
    %v3442 = vpack.c.b16 %v2834, %v2818
    %v3443 = vpack.c.b16 %v2835, %v2819
    %v3444 = vpack.c.b16 %v2836, %v2820
    %v3445 = vpack.c.b16 %v2837, %v2821
    %v3446 = vpack.c.b16 %v2838, %v2822
    %v3447 = vpack.c.b16 %v2839, %v2823
    %v3448 = vpack.c.b16 %v2840, %v2824
    %v3449 = vpack.c.b16 %v2841, %v2825
    %v3450 = vpack.c.b16 %v2842, %v2826
    %v3451 = vpack.c.b16 %v2843, %v2827
    %v3452 = vpack.c.b16 %v2860, %v2844
    %v3453 = vpack.c.b16 %v2861, %v2845
    %v3454 = vpack.c.b16 %v2862, %v2846
    %v3455 = vpack.c.b16 %v2863, %v2847
    %v3456 = vpack.c.b16 %v2864, %v2848
    %v3457 = vpack.c.b16 %v2865, %v2849
    %v3458 = vpack.c.b16 %v2866, %v2850
    %v3459 = vpack.c.b16 %v2867, %v2851
    %v3460 = vpack.c.b16 %v2868, %v2852
    %v3461 = vpack.c.b16 %v2869, %v2853
    %v3462 = vpack.c.b16 %v2870, %v2854
    %v3463 = vpack.c.b16 %v2871, %v2855
    %v3464 = vpack.c.b16 %v2872, %v2856
    %v3465 = vpack.c.b16 %v2873, %v2857
    %v3466 = vpack.c.b16 %v2874, %v2858
    %v3467 = vpack.c.b16 %v2875, %v2859
    %v3468 = vpack.c.b16 %v2892, %v2876
    %v3469 = vpack.c.b16 %v2893, %v2877
    %v3470 = vpack.c.b16 %v2894, %v2878
    %v3471 = vpack.c.b16 %v2895, %v2879
    %v3472 = vpack.c.b16 %v2896, %v2880
    %v3473 = vpack.c.b16 %v2897, %v2881
    %v3474 = vpack.c.b16 %v2898, %v2882
    %v3475 = vpack.c.b16 %v2899, %v2883
    %v3476 = vpack.c.b16 %v2900, %v2884
    %v3477 = vpack.c.b16 %v2901, %v2885
    %v3478 = vpack.c.b16 %v2902, %v2886
    %v3479 = vpack.c.b16 %v2903, %v2887
    %v3480 = vpack.c.b16 %v2904, %v2888
    %v3481 = vpack.c.b16 %v2905, %v2889
    %v3482 = vpack.c.b16 %v2906, %v2890
    %v3483 = vpack.c.b16 %v2907, %v2891
    %v3484 = vpack.c.b16 %v2924, %v2908
    %v3485 = vpack.c.b16 %v2925, %v2909
    %v3486 = vpack.c.b16 %v2926, %v2910
    %v3487 = vpack.c.b16 %v2927, %v2911
    %v3488 = vpack.c.b16 %v2928, %v2912
    %v3489 = vpack.c.b16 %v2929, %v2913
    %v3490 = vpack.c.b16 %v2930, %v2914
    %v3491 = vpack.c.b16 %v2931, %v2915
    %v3492 = vpack.c.b16 %v2932, %v2916
    %v3493 = vpack.c.b16 %v2933, %v2917
    %v3494 = vpack.c.b16 %v2934, %v2918
    %v3495 = vpack.c.b16 %v2935, %v2919
    %v3496 = vpack.c.b16 %v2936, %v2920
    %v3497 = vpack.c.b16 %v2937, %v2921
    %v3498 = vpack.c.b16 %v2938, %v2922
    %v3499 = vpack.c.b16 %v2939, %v2923
    %v3500 = vpack.c.b16 %v2956, %v2940
    %v3501 = vpack.c.b16 %v2957, %v2941
    %v3502 = vpack.c.b16 %v2958, %v2942
    %v3503 = vpack.c.b16 %v2959, %v2943
    %v3504 = vpack.c.b16 %v2960, %v2944
    %v3505 = vpack.c.b16 %v2961, %v2945
    %v3506 = vpack.c.b16 %v2962, %v2946
    %v3507 = vpack.c.b16 %v2963, %v2947
    %v3508 = vpack.c.b16 %v2964, %v2948
    %v3509 = vpack.c.b16 %v2965, %v2949
    %v3510 = vpack.c.b16 %v2966, %v2950
    %v3511 = vpack.c.b16 %v2967, %v2951
    %v3512 = vpack.c.b16 %v2968, %v2952
    %v3513 = vpack.c.b16 %v2969, %v2953
    %v3514 = vpack.c.b16 %v2970, %v2954
    %v3515 = vpack.c.b16 %v2971, %v2955
    %v3516 = vpack.c.b16 %v2988, %v2972
    %v3517 = vpack.c.b16 %v2989, %v2973
    %v3518 = vpack.c.b16 %v2990, %v2974
    %v3519 = vpack.c.b16 %v2991, %v2975
    %v3520 = vpack.c.b16 %v2992, %v2976
    %v3521 = vpack.c.b16 %v2993, %v2977
    %v3522 = vpack.c.b16 %v2994, %v2978
    %v3523 = vpack.c.b16 %v2995, %v2979
    %v3524 = vpack.c.b16 %v2996, %v2980
    %v3525 = vpack.c.b16 %v2997, %v2981
    %v3526 = vpack.c.b16 %v2998, %v2982
    %v3527 = vpack.c.b16 %v2999, %v2983
    %v3528 = vpack.c.b16 %v3000, %v2984
    %v3529 = vpack.c.b16 %v3001, %v2985
    %v3530 = vpack.c.b16 %v3002, %v2986
    %v3531 = vpack.c.b16 %v3003, %v2987
    %v3532 = vpack.c.b16 %v3020, %v3004
    %v3533 = vpack.c.b16 %v3021, %v3005
    %v3534 = vpack.c.b16 %v3022, %v3006
    %v3535 = vpack.c.b16 %v3023, %v3007
    %v3536 = vpack.c.b16 %v3024, %v3008
    %v3537 = vpack.c.b16 %v3025, %v3009
    %v3538 = vpack.c.b16 %v3026, %v3010
    %v3539 = vpack.c.b16 %v3027, %v3011
    %v3540 = vpack.c.b16 %v3028, %v3012
    %v3541 = vpack.c.b16 %v3029, %v3013
    %v3542 = vpack.c.b16 %v3030, %v3014
    %v3543 = vpack.c.b16 %v3031, %v3015
    %v3544 = vpack.c.b16 %v3032, %v3016
    %v3545 = vpack.c.b16 %v3033, %v3017
    %v3546 = vpack.c.b16 %v3034, %v3018
    %v3547 = vpack.c.b16 %v3035, %v3019
    %4060 = vmatprep.subr.bf16.mxu0 %v3037
    %4061 = vmatpush1.bf16.msra.mxu0 %v3036
    %4062 = vmatprep.subr.bf16.mxu0 %v3053
    %4063 = vmatpush1.bf16.msra.mxu0 %v3052
    %4064 = vmatprep.subr.bf16.mxu0 %v3069
    %4065 = vmatpush1.bf16.msra.mxu0 %v3068
    %4066 = vmatprep.subr.bf16.mxu0 %v3085
    %4067 = vmatpush1.bf16.msra.mxu0 %v3084
    %4068 = vmatprep.subr.bf16.mxu0 %v3101
    %4069 = vmatpush1.bf16.msra.mxu0 %v3100
    %4070 = vmatprep.subr.bf16.mxu0 %v3117
    %4071 = vmatpush1.bf16.msra.mxu0 %v3116
    %4072 = vmatprep.subr.bf16.mxu0 %v3133
    %4073 = vmatpush1.bf16.msra.mxu0 %v3132
    %4074 = vmatprep.subr.bf16.mxu0 %v3149
    %4075 = vmatpush1.bf16.msra.mxu0 %v3148
    %4076 = vmatprep.subr.bf16.mxu0 %v3165
    %4077 = vmatpush1.bf16.msra.mxu0 %v3164
    %4078 = vmatprep.subr.bf16.mxu0 %v3181
    %4079 = vmatpush1.bf16.msra.mxu0 %v3180
    %4080 = vmatprep.subr.bf16.mxu0 %v3197
    %4081 = vmatpush1.bf16.msra.mxu0 %v3196
    %4082 = vmatprep.subr.bf16.mxu0 %v3213
    %4083 = vmatpush1.bf16.msra.mxu0 %v3212
    %4084 = vmatprep.subr.bf16.mxu0 %v3229
    %4085 = vmatpush1.bf16.msra.mxu0 %v3228
    %4086 = vmatprep.subr.bf16.mxu0 %v3245
    %4087 = vmatpush1.bf16.msra.mxu0 %v3244
    %4088 = vmatprep.subr.bf16.mxu0 %v3261
    %4089 = vmatpush1.bf16.msra.mxu0 %v3260
    %4090 = vmatprep.subr.bf16.mxu0 %v3277
    %4091 = vmatpush1.bf16.msra.mxu0 %v3276
    %4092 = vmatprep.mubr.bf16.mxu0 %v1415
    %4093 = vmatmul.mubr.bf16.gmra.mrb[0].mxu0 %v1414
    %v4094 = vpop.f32.mrb[0].mxu0
    %v4095 = vadd.f32 %v1423, %v4094
    %v4096 = vpop.f32.mrb[0].mxu0
    %v4097 = vadd.f32 %v1427, %v4096
    %v4098 = vpop.f32.mrb[0].mxu0
    %v4099 = vpop.f32.mrb[0].mxu0
    %4100 = vdwg.mxu0
    %4101 = vmatprep.subr.bf16.mxu0 %v3293
    %4102 = vmatpush1.bf16.msra.mxu0 %v3292
    %4103 = vmatprep.subr.bf16.mxu0 %v3309
    %4104 = vmatpush1.bf16.msra.mxu0 %v3308
    %4105 = vmatprep.subr.bf16.mxu0 %v3325
    %4106 = vmatpush1.bf16.msra.mxu0 %v3324
    %4107 = vmatprep.subr.bf16.mxu0 %v3341
    %4108 = vmatpush1.bf16.msra.mxu0 %v3340
    %4109 = vmatprep.subr.bf16.mxu0 %v3357
    %4110 = vmatpush1.bf16.msra.mxu0 %v3356
    %4111 = vmatprep.subr.bf16.mxu0 %v3373
    %4112 = vmatpush1.bf16.msra.mxu0 %v3372
    %4113 = vmatprep.subr.bf16.mxu0 %v3389
    %4114 = vmatpush1.bf16.msra.mxu0 %v3388
    %4115 = vmatprep.subr.bf16.mxu0 %v3405
    %4116 = vmatpush1.bf16.msra.mxu0 %v3404
    %4117 = vmatprep.subr.bf16.mxu0 %v3421
    %4118 = vmatpush1.bf16.msra.mxu0 %v3420
    %4119 = vmatprep.subr.bf16.mxu0 %v3437
    %4120 = vmatpush1.bf16.msra.mxu0 %v3436
    %4121 = vmatprep.subr.bf16.mxu0 %v3453
    %4122 = vmatpush1.bf16.msra.mxu0 %v3452
    %4123 = vmatprep.subr.bf16.mxu0 %v3469
    %4124 = vmatpush1.bf16.msra.mxu0 %v3468
    %4125 = vmatprep.subr.bf16.mxu0 %v3485
    %4126 = vmatpush1.bf16.msra.mxu0 %v3484
    %4127 = vmatprep.subr.bf16.mxu0 %v3501
    %4128 = vmatpush1.bf16.msra.mxu0 %v3500
    %4129 = vmatprep.subr.bf16.mxu0 %v3517
    %4130 = vmatpush1.bf16.msra.mxu0 %v3516
    %4131 = vmatprep.subr.bf16.mxu0 %v3533
    %4132 = vmatpush1.bf16.msra.mxu0 %v3532
    %4133 = vmatprep.mubr.bf16.mxu0 %v1417
    %4134 = vmatmul.mubr.bf16.gmra.mrb[0].mxu0 %v1416
    %v4135 = vpop.f32.mrb[0].mxu0
    %v4136 = vadd.f32 %v4095, %v4135
    %v4137 = vpop.f32.mrb[0].mxu0
    %v4138 = vadd.f32 %v4097, %v4137
    %v4139 = vpop.f32.mrb[0].mxu0
    %v4140 = vpop.f32.mrb[0].mxu0
    %4141 = vdwg.mxu0
    %4142 = vmatprep.subr.bf16.mxu0 %v3039
    %4143 = vmatpush1.bf16.msra.mxu0 %v3038
    %4144 = vmatprep.subr.bf16.mxu0 %v3055
    %4145 = vmatpush1.bf16.msra.mxu0 %v3054
    %4146 = vmatprep.subr.bf16.mxu0 %v3071
    %4147 = vmatpush1.bf16.msra.mxu0 %v3070
    %4148 = vmatprep.subr.bf16.mxu0 %v3087
    %4149 = vmatpush1.bf16.msra.mxu0 %v3086
    %4150 = vmatprep.subr.bf16.mxu0 %v3103
    %4151 = vmatpush1.bf16.msra.mxu0 %v3102
    %4152 = vmatprep.subr.bf16.mxu0 %v3119
    %4153 = vmatpush1.bf16.msra.mxu0 %v3118
    %4154 = vmatprep.subr.bf16.mxu0 %v3135
    %4155 = vmatpush1.bf16.msra.mxu0 %v3134
    %4156 = vmatprep.subr.bf16.mxu0 %v3151
    %4157 = vmatpush1.bf16.msra.mxu0 %v3150
    %4158 = vmatprep.subr.bf16.mxu0 %v3167
    %4159 = vmatpush1.bf16.msra.mxu0 %v3166
    %4160 = vmatprep.subr.bf16.mxu0 %v3183
    %4161 = vmatpush1.bf16.msra.mxu0 %v3182
    %4162 = vmatprep.subr.bf16.mxu0 %v3199
    %4163 = vmatpush1.bf16.msra.mxu0 %v3198
    %4164 = vmatprep.subr.bf16.mxu0 %v3215
    %4165 = vmatpush1.bf16.msra.mxu0 %v3214
    %4166 = vmatprep.subr.bf16.mxu0 %v3231
    %4167 = vmatpush1.bf16.msra.mxu0 %v3230
    %4168 = vmatprep.subr.bf16.mxu0 %v3247
    %4169 = vmatpush1.bf16.msra.mxu0 %v3246
    %4170 = vmatprep.subr.bf16.mxu0 %v3263
    %4171 = vmatpush1.bf16.msra.mxu0 %v3262
    %4172 = vmatprep.subr.bf16.mxu0 %v3279
    %4173 = vmatpush1.bf16.msra.mxu0 %v3278
    %4174 = vmatprep.mubr.bf16.mxu0 %v1415
    %4175 = vmatmul.mubr.bf16.gmra.mrb[0].mxu0 %v1414
    %v4176 = vpop.f32.mrb[0].mxu0
    %v4177 = vadd.f32 %v1431, %v4176
    %v4178 = vpop.f32.mrb[0].mxu0
    %v4179 = vadd.f32 %v1435, %v4178
    %v4180 = vpop.f32.mrb[0].mxu0
    %v4181 = vpop.f32.mrb[0].mxu0
    %4182 = vdwg.mxu0
    %4183 = vmatprep.subr.bf16.mxu0 %v3295
    %4184 = vmatpush1.bf16.msra.mxu0 %v3294
    %4185 = vmatprep.subr.bf16.mxu0 %v3311
    %4186 = vmatpush1.bf16.msra.mxu0 %v3310
    %4187 = vmatprep.subr.bf16.mxu0 %v3327
    %4188 = vmatpush1.bf16.msra.mxu0 %v3326
    %4189 = vmatprep.subr.bf16.mxu0 %v3343
    %4190 = vmatpush1.bf16.msra.mxu0 %v3342
    %4191 = vmatprep.subr.bf16.mxu0 %v3359
    %4192 = vmatpush1.bf16.msra.mxu0 %v3358
    %4193 = vmatprep.subr.bf16.mxu0 %v3375
    %4194 = vmatpush1.bf16.msra.mxu0 %v3374
    %4195 = vmatprep.subr.bf16.mxu0 %v3391
    %4196 = vmatpush1.bf16.msra.mxu0 %v3390
    %4197 = vmatprep.subr.bf16.mxu0 %v3407
    %4198 = vmatpush1.bf16.msra.mxu0 %v3406
    %4199 = vmatprep.subr.bf16.mxu0 %v3423
    %4200 = vmatpush1.bf16.msra.mxu0 %v3422
    %4201 = vmatprep.subr.bf16.mxu0 %v3439
    %4202 = vmatpush1.bf16.msra.mxu0 %v3438
    %4203 = vmatprep.subr.bf16.mxu0 %v3455
    %4204 = vmatpush1.bf16.msra.mxu0 %v3454
    %4205 = vmatprep.subr.bf16.mxu0 %v3471
    %4206 = vmatpush1.bf16.msra.mxu0 %v3470
    %4207 = vmatprep.subr.bf16.mxu0 %v3487
    %4208 = vmatpush1.bf16.msra.mxu0 %v3486
    %4209 = vmatprep.subr.bf16.mxu0 %v3503
    %4210 = vmatpush1.bf16.msra.mxu0 %v3502
    %4211 = vmatprep.subr.bf16.mxu0 %v3519
    %4212 = vmatpush1.bf16.msra.mxu0 %v3518
    %4213 = vmatprep.subr.bf16.mxu0 %v3535
    %4214 = vmatpush1.bf16.msra.mxu0 %v3534
    %4215 = vmatprep.mubr.bf16.mxu0 %v1417
    %4216 = vmatmul.mubr.bf16.gmra.mrb[0].mxu0 %v1416
    %v4217 = vpop.f32.mrb[0].mxu0
    %v4218 = vadd.f32 %v4177, %v4217
    %v4219 = vpop.f32.mrb[0].mxu0
    %v4220 = vadd.f32 %v4179, %v4219
    %v4221 = vpop.f32.mrb[0].mxu0
    %v4222 = vpop.f32.mrb[0].mxu0
    %4223 = vdwg.mxu0
    %4224 = vmatprep.subr.bf16.mxu0 %v3041
    %4225 = vmatpush1.bf16.msra.mxu0 %v3040
    %4226 = vmatprep.subr.bf16.mxu0 %v3057
    %4227 = vmatpush1.bf16.msra.mxu0 %v3056
    %4228 = vmatprep.subr.bf16.mxu0 %v3073
    %4229 = vmatpush1.bf16.msra.mxu0 %v3072
    %4230 = vmatprep.subr.bf16.mxu0 %v3089
    %4231 = vmatpush1.bf16.msra.mxu0 %v3088
    %4232 = vmatprep.subr.bf16.mxu0 %v3105
    %4233 = vmatpush1.bf16.msra.mxu0 %v3104
    %4234 = vmatprep.subr.bf16.mxu0 %v3121
    %4235 = vmatpush1.bf16.msra.mxu0 %v3120
    %4236 = vmatprep.subr.bf16.mxu0 %v3137
    %4237 = vmatpush1.bf16.msra.mxu0 %v3136
    %4238 = vmatprep.subr.bf16.mxu0 %v3153
    %4239 = vmatpush1.bf16.msra.mxu0 %v3152
    %4240 = vmatprep.subr.bf16.mxu0 %v3169
    %4241 = vmatpush1.bf16.msra.mxu0 %v3168
    %4242 = vmatprep.subr.bf16.mxu0 %v3185
    %4243 = vmatpush1.bf16.msra.mxu0 %v3184
    %4244 = vmatprep.subr.bf16.mxu0 %v3201
    %4245 = vmatpush1.bf16.msra.mxu0 %v3200
    %4246 = vmatprep.subr.bf16.mxu0 %v3217
    %4247 = vmatpush1.bf16.msra.mxu0 %v3216
    %4248 = vmatprep.subr.bf16.mxu0 %v3233
    %4249 = vmatpush1.bf16.msra.mxu0 %v3232
    %4250 = vmatprep.subr.bf16.mxu0 %v3249
    %4251 = vmatpush1.bf16.msra.mxu0 %v3248
    %4252 = vmatprep.subr.bf16.mxu0 %v3265
    %4253 = vmatpush1.bf16.msra.mxu0 %v3264
    %4254 = vmatprep.subr.bf16.mxu0 %v3281
    %4255 = vmatpush1.bf16.msra.mxu0 %v3280
    %4256 = vmatprep.mubr.bf16.mxu0 %v1415
    %4257 = vmatmul.mubr.bf16.gmra.mrb[0].mxu0 %v1414
    %v4258 = vpop.f32.mrb[0].mxu0
    %v4259 = vadd.f32 %v1439, %v4258
    %v4260 = vpop.f32.mrb[0].mxu0
    %v4261 = vadd.f32 %v1443, %v4260
    %v4262 = vpop.f32.mrb[0].mxu0
    %v4263 = vpop.f32.mrb[0].mxu0
    %4264 = vdwg.mxu0
    %4265 = vmatprep.subr.bf16.mxu0 %v3297
    %4266 = vmatpush1.bf16.msra.mxu0 %v3296
    %4267 = vmatprep.subr.bf16.mxu0 %v3313
    %4268 = vmatpush1.bf16.msra.mxu0 %v3312
    %4269 = vmatprep.subr.bf16.mxu0 %v3329
    %4270 = vmatpush1.bf16.msra.mxu0 %v3328
    %4271 = vmatprep.subr.bf16.mxu0 %v3345
    %4272 = vmatpush1.bf16.msra.mxu0 %v3344
    %4273 = vmatprep.subr.bf16.mxu0 %v3361
    %4274 = vmatpush1.bf16.msra.mxu0 %v3360
    %4275 = vmatprep.subr.bf16.mxu0 %v3377
    %4276 = vmatpush1.bf16.msra.mxu0 %v3376
    %4277 = vmatprep.subr.bf16.mxu0 %v3393
    %4278 = vmatpush1.bf16.msra.mxu0 %v3392
    %4279 = vmatprep.subr.bf16.mxu0 %v3409
    %4280 = vmatpush1.bf16.msra.mxu0 %v3408
    %4281 = vmatprep.subr.bf16.mxu0 %v3425
    %4282 = vmatpush1.bf16.msra.mxu0 %v3424
    %4283 = vmatprep.subr.bf16.mxu0 %v3441
    %4284 = vmatpush1.bf16.msra.mxu0 %v3440
    %4285 = vmatprep.subr.bf16.mxu0 %v3457
    %4286 = vmatpush1.bf16.msra.mxu0 %v3456
    %4287 = vmatprep.subr.bf16.mxu0 %v3473
    %4288 = vmatpush1.bf16.msra.mxu0 %v3472
    %4289 = vmatprep.subr.bf16.mxu0 %v3489
    %4290 = vmatpush1.bf16.msra.mxu0 %v3488
    %4291 = vmatprep.subr.bf16.mxu0 %v3505
    %4292 = vmatpush1.bf16.msra.mxu0 %v3504
    %4293 = vmatprep.subr.bf16.mxu0 %v3521
    %4294 = vmatpush1.bf16.msra.mxu0 %v3520
    %4295 = vmatprep.subr.bf16.mxu0 %v3537
    %4296 = vmatpush1.bf16.msra.mxu0 %v3536
    %4297 = vmatprep.mubr.bf16.mxu0 %v1417
    %4298 = vmatmul.mubr.bf16.gmra.mrb[0].mxu0 %v1416
    %v4299 = vpop.f32.mrb[0].mxu0
    %v4300 = vadd.f32 %v4259, %v4299
    %v4301 = vpop.f32.mrb[0].mxu0
    %v4302 = vadd.f32 %v4261, %v4301
    %v4303 = vpop.f32.mrb[0].mxu0
    %v4304 = vpop.f32.mrb[0].mxu0
    %4305 = vdwg.mxu0
    %4306 = vmatprep.subr.bf16.mxu0 %v3043
    %4307 = vmatpush1.bf16.msra.mxu0 %v3042
    %4308 = vmatprep.subr.bf16.mxu0 %v3059
    %4309 = vmatpush1.bf16.msra.mxu0 %v3058
    %4310 = vmatprep.subr.bf16.mxu0 %v3075
    %4311 = vmatpush1.bf16.msra.mxu0 %v3074
    %4312 = vmatprep.subr.bf16.mxu0 %v3091
    %4313 = vmatpush1.bf16.msra.mxu0 %v3090
    %4314 = vmatprep.subr.bf16.mxu0 %v3107
    %4315 = vmatpush1.bf16.msra.mxu0 %v3106
    %4316 = vmatprep.subr.bf16.mxu0 %v3123
    %4317 = vmatpush1.bf16.msra.mxu0 %v3122
    %4318 = vmatprep.subr.bf16.mxu0 %v3139
    %4319 = vmatpush1.bf16.msra.mxu0 %v3138
    %4320 = vmatprep.subr.bf16.mxu0 %v3155
    %4321 = vmatpush1.bf16.msra.mxu0 %v3154
    %4322 = vmatprep.subr.bf16.mxu0 %v3171
    %4323 = vmatpush1.bf16.msra.mxu0 %v3170
    %4324 = vmatprep.subr.bf16.mxu0 %v3187
    %4325 = vmatpush1.bf16.msra.mxu0 %v3186
    %4326 = vmatprep.subr.bf16.mxu0 %v3203
    %4327 = vmatpush1.bf16.msra.mxu0 %v3202
    %4328 = vmatprep.subr.bf16.mxu0 %v3219
    %4329 = vmatpush1.bf16.msra.mxu0 %v3218
    %4330 = vmatprep.subr.bf16.mxu0 %v3235
    %4331 = vmatpush1.bf16.msra.mxu0 %v3234
    %4332 = vmatprep.subr.bf16.mxu0 %v3251
    %4333 = vmatpush1.bf16.msra.mxu0 %v3250
    %4334 = vmatprep.subr.bf16.mxu0 %v3267
    %4335 = vmatpush1.bf16.msra.mxu0 %v3266
    %4336 = vmatprep.subr.bf16.mxu0 %v3283
    %4337 = vmatpush1.bf16.msra.mxu0 %v3282
    %4338 = vmatprep.mubr.bf16.mxu0 %v1415
    %4339 = vmatmul.mubr.bf16.gmra.mrb[0].mxu0 %v1414
    %v4340 = vpop.f32.mrb[0].mxu0
    %v4341 = vadd.f32 %v1447, %v4340
    %v4342 = vpop.f32.mrb[0].mxu0
    %v4343 = vadd.f32 %v1451, %v4342
    %v4344 = vpop.f32.mrb[0].mxu0
    %v4345 = vpop.f32.mrb[0].mxu0
    %4346 = vdwg.mxu0
    %4347 = vmatprep.subr.bf16.mxu0 %v3299
    %4348 = vmatpush1.bf16.msra.mxu0 %v3298
    %4349 = vmatprep.subr.bf16.mxu0 %v3315
    %4350 = vmatpush1.bf16.msra.mxu0 %v3314
    %4351 = vmatprep.subr.bf16.mxu0 %v3331
    %4352 = vmatpush1.bf16.msra.mxu0 %v3330
    %4353 = vmatprep.subr.bf16.mxu0 %v3347
    %4354 = vmatpush1.bf16.msra.mxu0 %v3346
    %4355 = vmatprep.subr.bf16.mxu0 %v3363
    %4356 = vmatpush1.bf16.msra.mxu0 %v3362
    %4357 = vmatprep.subr.bf16.mxu0 %v3379
    %4358 = vmatpush1.bf16.msra.mxu0 %v3378
    %4359 = vmatprep.subr.bf16.mxu0 %v3395
    %4360 = vmatpush1.bf16.msra.mxu0 %v3394
    %4361 = vmatprep.subr.bf16.mxu0 %v3411
    %4362 = vmatpush1.bf16.msra.mxu0 %v3410
    %4363 = vmatprep.subr.bf16.mxu0 %v3427
    %4364 = vmatpush1.bf16.msra.mxu0 %v3426
    %4365 = vmatprep.subr.bf16.mxu0 %v3443
    %4366 = vmatpush1.bf16.msra.mxu0 %v3442
    %4367 = vmatprep.subr.bf16.mxu0 %v3459
    %4368 = vmatpush1.bf16.msra.mxu0 %v3458
    %4369 = vmatprep.subr.bf16.mxu0 %v3475
    %4370 = vmatpush1.bf16.msra.mxu0 %v3474
    %4371 = vmatprep.subr.bf16.mxu0 %v3491
    %4372 = vmatpush1.bf16.msra.mxu0 %v3490
    %4373 = vmatprep.subr.bf16.mxu0 %v3507
    %4374 = vmatpush1.bf16.msra.mxu0 %v3506
    %4375 = vmatprep.subr.bf16.mxu0 %v3523
    %4376 = vmatpush1.bf16.msra.mxu0 %v3522
    %4377 = vmatprep.subr.bf16.mxu0 %v3539
    %4378 = vmatpush1.bf16.msra.mxu0 %v3538
    %4379 = vmatprep.mubr.bf16.mxu0 %v1417
    %4380 = vmatmul.mubr.bf16.gmra.mrb[0].mxu0 %v1416
    %v4381 = vpop.f32.mrb[0].mxu0
    %v4382 = vadd.f32 %v4341, %v4381
    %v4383 = vpop.f32.mrb[0].mxu0
    %v4384 = vadd.f32 %v4343, %v4383
    %v4385 = vpop.f32.mrb[0].mxu0
    %v4386 = vpop.f32.mrb[0].mxu0
    %4387 = vdwg.mxu0
    %4388 = vmatprep.subr.bf16.mxu0 %v3045
    %4389 = vmatpush1.bf16.msra.mxu0 %v3044
    %4390 = vmatprep.subr.bf16.mxu0 %v3061
    %4391 = vmatpush1.bf16.msra.mxu0 %v3060
    %4392 = vmatprep.subr.bf16.mxu0 %v3077
    %4393 = vmatpush1.bf16.msra.mxu0 %v3076
    %4394 = vmatprep.subr.bf16.mxu0 %v3093
    %4395 = vmatpush1.bf16.msra.mxu0 %v3092
    %4396 = vmatprep.subr.bf16.mxu0 %v3109
    %4397 = vmatpush1.bf16.msra.mxu0 %v3108
    %4398 = vmatprep.subr.bf16.mxu0 %v3125
    %4399 = vmatpush1.bf16.msra.mxu0 %v3124
    %4400 = vmatprep.subr.bf16.mxu0 %v3141
    %4401 = vmatpush1.bf16.msra.mxu0 %v3140
    %4402 = vmatprep.subr.bf16.mxu0 %v3157
    %4403 = vmatpush1.bf16.msra.mxu0 %v3156
    %4404 = vmatprep.subr.bf16.mxu0 %v3173
    %4405 = vmatpush1.bf16.msra.mxu0 %v3172
    %4406 = vmatprep.subr.bf16.mxu0 %v3189
    %4407 = vmatpush1.bf16.msra.mxu0 %v3188
    %4408 = vmatprep.subr.bf16.mxu0 %v3205
    %4409 = vmatpush1.bf16.msra.mxu0 %v3204
    %4410 = vmatprep.subr.bf16.mxu0 %v3221
    %4411 = vmatpush1.bf16.msra.mxu0 %v3220
    %4412 = vmatprep.subr.bf16.mxu0 %v3237
    %4413 = vmatpush1.bf16.msra.mxu0 %v3236
    %4414 = vmatprep.subr.bf16.mxu0 %v3253
    %4415 = vmatpush1.bf16.msra.mxu0 %v3252
    %4416 = vmatprep.subr.bf16.mxu0 %v3269
    %4417 = vmatpush1.bf16.msra.mxu0 %v3268
    %4418 = vmatprep.subr.bf16.mxu0 %v3285
    %4419 = vmatpush1.bf16.msra.mxu0 %v3284
    %4420 = vmatprep.mubr.bf16.mxu0 %v1415
    %4421 = vmatmul.mubr.bf16.gmra.mrb[0].mxu0 %v1414
    %v4422 = vpop.f32.mrb[0].mxu0
    %v4423 = vadd.f32 %v1455, %v4422
    %v4424 = vpop.f32.mrb[0].mxu0
    %v4425 = vadd.f32 %v1459, %v4424
    %v4426 = vpop.f32.mrb[0].mxu0
    %v4427 = vpop.f32.mrb[0].mxu0
    %4428 = vdwg.mxu0
    %4429 = vmatprep.subr.bf16.mxu0 %v3301
    %4430 = vmatpush1.bf16.msra.mxu0 %v3300
    %4431 = vmatprep.subr.bf16.mxu0 %v3317
    %4432 = vmatpush1.bf16.msra.mxu0 %v3316
    %4433 = vmatprep.subr.bf16.mxu0 %v3333
    %4434 = vmatpush1.bf16.msra.mxu0 %v3332
    %4435 = vmatprep.subr.bf16.mxu0 %v3349
    %4436 = vmatpush1.bf16.msra.mxu0 %v3348
    %4437 = vmatprep.subr.bf16.mxu0 %v3365
    %4438 = vmatpush1.bf16.msra.mxu0 %v3364
    %4439 = vmatprep.subr.bf16.mxu0 %v3381
    %4440 = vmatpush1.bf16.msra.mxu0 %v3380
    %4441 = vmatprep.subr.bf16.mxu0 %v3397
    %4442 = vmatpush1.bf16.msra.mxu0 %v3396
    %4443 = vmatprep.subr.bf16.mxu0 %v3413
    %4444 = vmatpush1.bf16.msra.mxu0 %v3412
    %4445 = vmatprep.subr.bf16.mxu0 %v3429
    %4446 = vmatpush1.bf16.msra.mxu0 %v3428
    %4447 = vmatprep.subr.bf16.mxu0 %v3445
    %4448 = vmatpush1.bf16.msra.mxu0 %v3444
    %4449 = vmatprep.subr.bf16.mxu0 %v3461
    %4450 = vmatpush1.bf16.msra.mxu0 %v3460
    %4451 = vmatprep.subr.bf16.mxu0 %v3477
    %4452 = vmatpush1.bf16.msra.mxu0 %v3476
    %4453 = vmatprep.subr.bf16.mxu0 %v3493
    %4454 = vmatpush1.bf16.msra.mxu0 %v3492
    %4455 = vmatprep.subr.bf16.mxu0 %v3509
    %4456 = vmatpush1.bf16.msra.mxu0 %v3508
    %4457 = vmatprep.subr.bf16.mxu0 %v3525
    %4458 = vmatpush1.bf16.msra.mxu0 %v3524
    %4459 = vmatprep.subr.bf16.mxu0 %v3541
    %4460 = vmatpush1.bf16.msra.mxu0 %v3540
    %4461 = vmatprep.mubr.bf16.mxu0 %v1417
    %4462 = vmatmul.mubr.bf16.gmra.mrb[0].mxu0 %v1416
    %v4463 = vpop.f32.mrb[0].mxu0
    %v4464 = vadd.f32 %v4423, %v4463
    %v4465 = vpop.f32.mrb[0].mxu0
    %v4466 = vadd.f32 %v4425, %v4465
    %v4467 = vpop.f32.mrb[0].mxu0
    %v4468 = vpop.f32.mrb[0].mxu0
    %4469 = vdwg.mxu0
    %4470 = vmatprep.subr.bf16.mxu0 %v3047
    %4471 = vmatpush1.bf16.msra.mxu0 %v3046
    %4472 = vmatprep.subr.bf16.mxu0 %v3063
    %4473 = vmatpush1.bf16.msra.mxu0 %v3062
    %4474 = vmatprep.subr.bf16.mxu0 %v3079
    %4475 = vmatpush1.bf16.msra.mxu0 %v3078
    %4476 = vmatprep.subr.bf16.mxu0 %v3095
    %4477 = vmatpush1.bf16.msra.mxu0 %v3094
    %4478 = vmatprep.subr.bf16.mxu0 %v3111
    %4479 = vmatpush1.bf16.msra.mxu0 %v3110
    %4480 = vmatprep.subr.bf16.mxu0 %v3127
    %4481 = vmatpush1.bf16.msra.mxu0 %v3126
    %4482 = vmatprep.subr.bf16.mxu0 %v3143
    %4483 = vmatpush1.bf16.msra.mxu0 %v3142
    %4484 = vmatprep.subr.bf16.mxu0 %v3159
    %4485 = vmatpush1.bf16.msra.mxu0 %v3158
    %4486 = vmatprep.subr.bf16.mxu0 %v3175
    %4487 = vmatpush1.bf16.msra.mxu0 %v3174
    %4488 = vmatprep.subr.bf16.mxu0 %v3191
    %4489 = vmatpush1.bf16.msra.mxu0 %v3190
    %4490 = vmatprep.subr.bf16.mxu0 %v3207
    %4491 = vmatpush1.bf16.msra.mxu0 %v3206
    %4492 = vmatprep.subr.bf16.mxu0 %v3223
    %4493 = vmatpush1.bf16.msra.mxu0 %v3222
    %4494 = vmatprep.subr.bf16.mxu0 %v3239
    %4495 = vmatpush1.bf16.msra.mxu0 %v3238
    %4496 = vmatprep.subr.bf16.mxu0 %v3255
    %4497 = vmatpush1.bf16.msra.mxu0 %v3254
    %4498 = vmatprep.subr.bf16.mxu0 %v3271
    %4499 = vmatpush1.bf16.msra.mxu0 %v3270
    %4500 = vmatprep.subr.bf16.mxu0 %v3287
    %4501 = vmatpush1.bf16.msra.mxu0 %v3286
    %4502 = vmatprep.mubr.bf16.mxu0 %v1415
    %4503 = vmatmul.mubr.bf16.gmra.mrb[0].mxu0 %v1414
    %v4504 = vpop.f32.mrb[0].mxu0
    %v4505 = vadd.f32 %v1463, %v4504
    %v4506 = vpop.f32.mrb[0].mxu0
    %v4507 = vadd.f32 %v1467, %v4506
    %v4508 = vpop.f32.mrb[0].mxu0
    %v4509 = vpop.f32.mrb[0].mxu0
    %4510 = vdwg.mxu0
    %4511 = vmatprep.subr.bf16.mxu0 %v3303
    %4512 = vmatpush1.bf16.msra.mxu0 %v3302
    %4513 = vmatprep.subr.bf16.mxu0 %v3319
    %4514 = vmatpush1.bf16.msra.mxu0 %v3318
    %4515 = vmatprep.subr.bf16.mxu0 %v3335
    %4516 = vmatpush1.bf16.msra.mxu0 %v3334
    %4517 = vmatprep.subr.bf16.mxu0 %v3351
    %4518 = vmatpush1.bf16.msra.mxu0 %v3350
    %4519 = vmatprep.subr.bf16.mxu0 %v3367
    %4520 = vmatpush1.bf16.msra.mxu0 %v3366
    %4521 = vmatprep.subr.bf16.mxu0 %v3383
    %4522 = vmatpush1.bf16.msra.mxu0 %v3382
    %4523 = vmatprep.subr.bf16.mxu0 %v3399
    %4524 = vmatpush1.bf16.msra.mxu0 %v3398
    %4525 = vmatprep.subr.bf16.mxu0 %v3415
    %4526 = vmatpush1.bf16.msra.mxu0 %v3414
    %4527 = vmatprep.subr.bf16.mxu0 %v3431
    %4528 = vmatpush1.bf16.msra.mxu0 %v3430
    %4529 = vmatprep.subr.bf16.mxu0 %v3447
    %4530 = vmatpush1.bf16.msra.mxu0 %v3446
    %4531 = vmatprep.subr.bf16.mxu0 %v3463
    %4532 = vmatpush1.bf16.msra.mxu0 %v3462
    %4533 = vmatprep.subr.bf16.mxu0 %v3479
    %4534 = vmatpush1.bf16.msra.mxu0 %v3478
    %4535 = vmatprep.subr.bf16.mxu0 %v3495
    %4536 = vmatpush1.bf16.msra.mxu0 %v3494
    %4537 = vmatprep.subr.bf16.mxu0 %v3511
    %4538 = vmatpush1.bf16.msra.mxu0 %v3510
    %4539 = vmatprep.subr.bf16.mxu0 %v3527
    %4540 = vmatpush1.bf16.msra.mxu0 %v3526
    %4541 = vmatprep.subr.bf16.mxu0 %v3543
    %4542 = vmatpush1.bf16.msra.mxu0 %v3542
    %4543 = vmatprep.mubr.bf16.mxu0 %v1417
    %4544 = vmatmul.mubr.bf16.gmra.mrb[0].mxu0 %v1416
    %v4545 = vpop.f32.mrb[0].mxu0
    %v4546 = vadd.f32 %v4505, %v4545
    %v4547 = vpop.f32.mrb[0].mxu0
    %v4548 = vadd.f32 %v4507, %v4547
    %v4549 = vpop.f32.mrb[0].mxu0
    %v4550 = vpop.f32.mrb[0].mxu0
    %4551 = vdwg.mxu0
    %4552 = vmatprep.subr.bf16.mxu0 %v3049
    %4553 = vmatpush1.bf16.msra.mxu0 %v3048
    %4554 = vmatprep.subr.bf16.mxu0 %v3065
    %4555 = vmatpush1.bf16.msra.mxu0 %v3064
    %4556 = vmatprep.subr.bf16.mxu0 %v3081
    %4557 = vmatpush1.bf16.msra.mxu0 %v3080
    %4558 = vmatprep.subr.bf16.mxu0 %v3097
    %4559 = vmatpush1.bf16.msra.mxu0 %v3096
    %4560 = vmatprep.subr.bf16.mxu0 %v3113
    %4561 = vmatpush1.bf16.msra.mxu0 %v3112
    %4562 = vmatprep.subr.bf16.mxu0 %v3129
    %4563 = vmatpush1.bf16.msra.mxu0 %v3128
    %4564 = vmatprep.subr.bf16.mxu0 %v3145
    %4565 = vmatpush1.bf16.msra.mxu0 %v3144
    %4566 = vmatprep.subr.bf16.mxu0 %v3161
    %4567 = vmatpush1.bf16.msra.mxu0 %v3160
    %4568 = vmatprep.subr.bf16.mxu0 %v3177
    %4569 = vmatpush1.bf16.msra.mxu0 %v3176
    %4570 = vmatprep.subr.bf16.mxu0 %v3193
    %4571 = vmatpush1.bf16.msra.mxu0 %v3192
    %4572 = vmatprep.subr.bf16.mxu0 %v3209
    %4573 = vmatpush1.bf16.msra.mxu0 %v3208
    %4574 = vmatprep.subr.bf16.mxu0 %v3225
    %4575 = vmatpush1.bf16.msra.mxu0 %v3224
    %4576 = vmatprep.subr.bf16.mxu0 %v3241
    %4577 = vmatpush1.bf16.msra.mxu0 %v3240
    %4578 = vmatprep.subr.bf16.mxu0 %v3257
    %4579 = vmatpush1.bf16.msra.mxu0 %v3256
    %4580 = vmatprep.subr.bf16.mxu0 %v3273
    %4581 = vmatpush1.bf16.msra.mxu0 %v3272
    %4582 = vmatprep.subr.bf16.mxu0 %v3289
    %4583 = vmatpush1.bf16.msra.mxu0 %v3288
    %4584 = vmatprep.mubr.bf16.mxu0 %v1415
    %4585 = vmatmul.mubr.bf16.gmra.mrb[0].mxu0 %v1414
    %v4586 = vpop.f32.mrb[0].mxu0
    %v4587 = vadd.f32 %v1471, %v4586
    %v4588 = vpop.f32.mrb[0].mxu0
    %v4589 = vadd.f32 %v1475, %v4588
    %v4590 = vpop.f32.mrb[0].mxu0
    %v4591 = vpop.f32.mrb[0].mxu0
    %4592 = vdwg.mxu0
    %4593 = vmatprep.subr.bf16.mxu0 %v3305
    %4594 = vmatpush1.bf16.msra.mxu0 %v3304
    %4595 = vmatprep.subr.bf16.mxu0 %v3321
    %4596 = vmatpush1.bf16.msra.mxu0 %v3320
    %4597 = vmatprep.subr.bf16.mxu0 %v3337
    %4598 = vmatpush1.bf16.msra.mxu0 %v3336
    %4599 = vmatprep.subr.bf16.mxu0 %v3353
    %4600 = vmatpush1.bf16.msra.mxu0 %v3352
    %4601 = vmatprep.subr.bf16.mxu0 %v3369
    %4602 = vmatpush1.bf16.msra.mxu0 %v3368
    %4603 = vmatprep.subr.bf16.mxu0 %v3385
    %4604 = vmatpush1.bf16.msra.mxu0 %v3384
    %4605 = vmatprep.subr.bf16.mxu0 %v3401
    %4606 = vmatpush1.bf16.msra.mxu0 %v3400
    %4607 = vmatprep.subr.bf16.mxu0 %v3417
    %4608 = vmatpush1.bf16.msra.mxu0 %v3416
    %4609 = vmatprep.subr.bf16.mxu0 %v3433
    %4610 = vmatpush1.bf16.msra.mxu0 %v3432
    %4611 = vmatprep.subr.bf16.mxu0 %v3449
    %4612 = vmatpush1.bf16.msra.mxu0 %v3448
    %4613 = vmatprep.subr.bf16.mxu0 %v3465
    %4614 = vmatpush1.bf16.msra.mxu0 %v3464
    %4615 = vmatprep.subr.bf16.mxu0 %v3481
    %4616 = vmatpush1.bf16.msra.mxu0 %v3480
    %4617 = vmatprep.subr.bf16.mxu0 %v3497
    %4618 = vmatpush1.bf16.msra.mxu0 %v3496
    %4619 = vmatprep.subr.bf16.mxu0 %v3513
    %4620 = vmatpush1.bf16.msra.mxu0 %v3512
    %4621 = vmatprep.subr.bf16.mxu0 %v3529
    %4622 = vmatpush1.bf16.msra.mxu0 %v3528
    %4623 = vmatprep.subr.bf16.mxu0 %v3545
    %4624 = vmatpush1.bf16.msra.mxu0 %v3544
    %4625 = vmatprep.mubr.bf16.mxu0 %v1417
    %4626 = vmatmul.mubr.bf16.gmra.mrb[0].mxu0 %v1416
    %v4627 = vpop.f32.mrb[0].mxu0
    %v4628 = vadd.f32 %v4587, %v4627
    %v4629 = vpop.f32.mrb[0].mxu0
    %v4630 = vadd.f32 %v4589, %v4629
    %v4631 = vpop.f32.mrb[0].mxu0
    %v4632 = vpop.f32.mrb[0].mxu0
    %4633 = vdwg.mxu0
    %4634 = vmatprep.subr.bf16.mxu0 %v3051
    %4635 = vmatpush1.bf16.msra.mxu0 %v3050
    %4636 = vmatprep.subr.bf16.mxu0 %v3067
    %4637 = vmatpush1.bf16.msra.mxu0 %v3066
    %4638 = vmatprep.subr.bf16.mxu0 %v3083
    %4639 = vmatpush1.bf16.msra.mxu0 %v3082
    %4640 = vmatprep.subr.bf16.mxu0 %v3099
    %4641 = vmatpush1.bf16.msra.mxu0 %v3098
    %4642 = vmatprep.subr.bf16.mxu0 %v3115
    %4643 = vmatpush1.bf16.msra.mxu0 %v3114
    %4644 = vmatprep.subr.bf16.mxu0 %v3131
    %4645 = vmatpush1.bf16.msra.mxu0 %v3130
    %4646 = vmatprep.subr.bf16.mxu0 %v3147
    %4647 = vmatpush1.bf16.msra.mxu0 %v3146
    %4648 = vmatprep.subr.bf16.mxu0 %v3163
    %4649 = vmatpush1.bf16.msra.mxu0 %v3162
    %4650 = vmatprep.subr.bf16.mxu0 %v3179
    %4651 = vmatpush1.bf16.msra.mxu0 %v3178
    %4652 = vmatprep.subr.bf16.mxu0 %v3195
    %4653 = vmatpush1.bf16.msra.mxu0 %v3194
    %4654 = vmatprep.subr.bf16.mxu0 %v3211
    %4655 = vmatpush1.bf16.msra.mxu0 %v3210
    %4656 = vmatprep.subr.bf16.mxu0 %v3227
    %4657 = vmatpush1.bf16.msra.mxu0 %v3226
    %4658 = vmatprep.subr.bf16.mxu0 %v3243
    %4659 = vmatpush1.bf16.msra.mxu0 %v3242
    %4660 = vmatprep.subr.bf16.mxu0 %v3259
    %4661 = vmatpush1.bf16.msra.mxu0 %v3258
    %4662 = vmatprep.subr.bf16.mxu0 %v3275
    %4663 = vmatpush1.bf16.msra.mxu0 %v3274
    %4664 = vmatprep.subr.bf16.mxu0 %v3291
    %4665 = vmatpush1.bf16.msra.mxu0 %v3290
    %4666 = vmatprep.mubr.bf16.mxu0 %v1415
    %4667 = vmatmul.mubr.bf16.gmra.mrb[0].mxu0 %v1414
    %v4668 = vpop.f32.mrb[0].mxu0
    %v4669 = vadd.f32 %v1479, %v4668
    %v4670 = vpop.f32.mrb[0].mxu0
    %v4671 = vadd.f32 %v1483, %v4670
    %v4672 = vpop.f32.mrb[0].mxu0
    %v4673 = vpop.f32.mrb[0].mxu0
    %4674 = vdwg.mxu0
    %4675 = vmatprep.subr.bf16.mxu0 %v3307
    %4676 = vmatpush1.bf16.msra.mxu0 %v3306
    %4677 = vmatprep.subr.bf16.mxu0 %v3323
    %4678 = vmatpush1.bf16.msra.mxu0 %v3322
    %4679 = vmatprep.subr.bf16.mxu0 %v3339
    %4680 = vmatpush1.bf16.msra.mxu0 %v3338
    %4681 = vmatprep.subr.bf16.mxu0 %v3355
    %4682 = vmatpush1.bf16.msra.mxu0 %v3354
    %4683 = vmatprep.subr.bf16.mxu0 %v3371
    %4684 = vmatpush1.bf16.msra.mxu0 %v3370
    %4685 = vmatprep.subr.bf16.mxu0 %v3387
    %4686 = vmatpush1.bf16.msra.mxu0 %v3386
    %4687 = vmatprep.subr.bf16.mxu0 %v3403
    %4688 = vmatpush1.bf16.msra.mxu0 %v3402
    %4689 = vmatprep.subr.bf16.mxu0 %v3419
    %4690 = vmatpush1.bf16.msra.mxu0 %v3418
    %4691 = vmatprep.subr.bf16.mxu0 %v3435
    %4692 = vmatpush1.bf16.msra.mxu0 %v3434
    %4693 = vmatprep.subr.bf16.mxu0 %v3451
    %4694 = vmatpush1.bf16.msra.mxu0 %v3450
    %4695 = vmatprep.subr.bf16.mxu0 %v3467
    %4696 = vmatpush1.bf16.msra.mxu0 %v3466
    %4697 = vmatprep.subr.bf16.mxu0 %v3483
    %4698 = vmatpush1.bf16.msra.mxu0 %v3482
    %4699 = vmatprep.subr.bf16.mxu0 %v3499
    %4700 = vmatpush1.bf16.msra.mxu0 %v3498
    %4701 = vmatprep.subr.bf16.mxu0 %v3515
    %4702 = vmatpush1.bf16.msra.mxu0 %v3514
    %4703 = vmatprep.subr.bf16.mxu0 %v3531
    %4704 = vmatpush1.bf16.msra.mxu0 %v3530
    %4705 = vmatprep.subr.bf16.mxu0 %v3547
    %4706 = vmatpush1.bf16.msra.mxu0 %v3546
    %4707 = vmatprep.mubr.bf16.mxu0 %v1417
    %4708 = vmatmul.mubr.bf16.gmra.mrb[0].mxu0 %v1416
    %v4709 = vpop.f32.mrb[0].mxu0
    %v4710 = vadd.f32 %v4669, %v4709
    %v4711 = vpop.f32.mrb[0].mxu0
    %v4712 = vadd.f32 %v4671, %v4711
    %v4713 = vpop.f32.mrb[0].mxu0
    %v4714 = vpop.f32.mrb[0].mxu0
    %4715 = vdwg.mxu0
    %v4716 = vmul.f32 %v4136, %v4136
    %v4717 = vmul.f32 %v4138, %v4138
    %v4718 = vmul.f32 %v4218, %v4218
    %v4719 = vmul.f32 %v4220, %v4220
    %v4720 = vmul.f32 %v4300, %v4300
    %v4721 = vmul.f32 %v4302, %v4302
    %v4722 = vmul.f32 %v4382, %v4382
    %v4723 = vmul.f32 %v4384, %v4384
    %v4724 = vmul.f32 %v4464, %v4464
    %v4725 = vmul.f32 %v4466, %v4466
    %v4726 = vmul.f32 %v4546, %v4546
    %v4727 = vmul.f32 %v4548, %v4548
    %v4728 = vmul.f32 %v4628, %v4628
    %v4729 = vmul.f32 %v4630, %v4630
    %v4730 = vmul.f32 %v4710, %v4710
    %v4731 = vmul.f32 %v4712, %v4712
    %v4732 = vmul.f32 %v4136, %v4716
    %v4733 = vmul.f32 %v4138, %v4717
    %v4734 = vmul.f32 %v4218, %v4718
    %v4735 = vmul.f32 %v4220, %v4719
    %v4736 = vmul.f32 %v4300, %v4720
    %v4737 = vmul.f32 %v4302, %v4721
    %v4738 = vmul.f32 %v4382, %v4722
    %v4739 = vmul.f32 %v4384, %v4723
    %v4740 = vmul.f32 %v4464, %v4724
    %v4741 = vmul.f32 %v4466, %v4725
    %v4742 = vmul.f32 %v4546, %v4726
    %v4743 = vmul.f32 %v4548, %v4727
    %v4744 = vmul.f32 %v4628, %v4728
    %v4745 = vmul.f32 %v4630, %v4729
    %v4746 = vmul.f32 %v4710, %v4730
    %v4747 = vmul.f32 %v4712, %v4731
    %v4748 = vmul.f32 %v4732, 0.044715
    %v4749 = vmul.f32 %v4733, 0.044715
    %v4750 = vmul.f32 %v4734, 0.044715
    %v4751 = vmul.f32 %v4735, 0.044715
    %v4752 = vmul.f32 %v4736, 0.044715
    %v4753 = vmul.f32 %v4737, 0.044715
    %v4754 = vmul.f32 %v4738, 0.044715
    %v4755 = vmul.f32 %v4739, 0.044715
    %v4756 = vmul.f32 %v4740, 0.044715
    %v4757 = vmul.f32 %v4741, 0.044715
    %v4758 = vmul.f32 %v4742, 0.044715
    %v4759 = vmul.f32 %v4743, 0.044715
    %v4760 = vmul.f32 %v4744, 0.044715
    %v4761 = vmul.f32 %v4745, 0.044715
    %v4762 = vmul.f32 %v4746, 0.044715
    %v4763 = vmul.f32 %v4747, 0.044715
    %v4764 = vadd.f32 %v4136, %v4748
    %v4765 = vadd.f32 %v4138, %v4749
    %v4766 = vadd.f32 %v4218, %v4750
    %v4767 = vadd.f32 %v4220, %v4751
    %v4768 = vadd.f32 %v4300, %v4752
    %v4769 = vadd.f32 %v4302, %v4753
    %v4770 = vadd.f32 %v4382, %v4754
    %v4771 = vadd.f32 %v4384, %v4755
    %v4772 = vadd.f32 %v4464, %v4756
    %v4773 = vadd.f32 %v4466, %v4757
    %v4774 = vadd.f32 %v4546, %v4758
    %v4775 = vadd.f32 %v4548, %v4759
    %v4776 = vadd.f32 %v4628, %v4760
    %v4777 = vadd.f32 %v4630, %v4761
    %v4778 = vadd.f32 %v4710, %v4762
    %v4779 = vadd.f32 %v4712, %v4763
    %v4780 = vmul.f32 %v4764, 0.7978846
    %v4781 = vmul.f32 %v4765, 0.7978846
    %v4782 = vmul.f32 %v4766, 0.7978846
    %v4783 = vmul.f32 %v4767, 0.7978846
    %v4784 = vmul.f32 %v4768, 0.7978846
    %v4785 = vmul.f32 %v4769, 0.7978846
    %v4786 = vmul.f32 %v4770, 0.7978846
    %v4787 = vmul.f32 %v4771, 0.7978846
    %v4788 = vmul.f32 %v4772, 0.7978846
    %v4789 = vmul.f32 %v4773, 0.7978846
    %v4790 = vmul.f32 %v4774, 0.7978846
    %v4791 = vmul.f32 %v4775, 0.7978846
    %v4792 = vmul.f32 %v4776, 0.7978846
    %v4793 = vmul.f32 %v4777, 0.7978846
    %v4794 = vmul.f32 %v4778, 0.7978846
    %v4795 = vmul.f32 %v4779, 0.7978846
    %v4796 = vtanh.pop %v4780
    %v4797 = vtanh.pop %v4781
    %v4798 = vtanh.pop %v4782
    %v4799 = vtanh.pop %v4783
    %v4800 = vtanh.pop %v4784
    %v4801 = vtanh.pop %v4785
    %v4802 = vtanh.pop %v4786
    %v4803 = vtanh.pop %v4787
    %v4804 = vtanh.pop %v4788
    %v4805 = vtanh.pop %v4789
    %v4806 = vtanh.pop %v4790
    %v4807 = vtanh.pop %v4791
    %v4808 = vtanh.pop %v4792
    %v4809 = vtanh.pop %v4793
    %v4810 = vtanh.pop %v4794
    %v4811 = vtanh.pop %v4795
    %v4812 = vadd.f32 %v4796, 1.0
    %v4813 = vadd.f32 %v4797, 1.0
    %v4814 = vadd.f32 %v4798, 1.0
    %v4815 = vadd.f32 %v4799, 1.0
    %v4816 = vadd.f32 %v4800, 1.0
    %v4817 = vadd.f32 %v4801, 1.0
    %v4818 = vadd.f32 %v4802, 1.0
    %v4819 = vadd.f32 %v4803, 1.0
    %v4820 = vadd.f32 %v4804, 1.0
    %v4821 = vadd.f32 %v4805, 1.0
    %v4822 = vadd.f32 %v4806, 1.0
    %v4823 = vadd.f32 %v4807, 1.0
    %v4824 = vadd.f32 %v4808, 1.0
    %v4825 = vadd.f32 %v4809, 1.0
    %v4826 = vadd.f32 %v4810, 1.0
    %v4827 = vadd.f32 %v4811, 1.0
    %v4828 = vmul.f32 %v4812, 0.5
    %v4829 = vmul.f32 %v4813, 0.5
    %v4830 = vmul.f32 %v4814, 0.5
    %v4831 = vmul.f32 %v4815, 0.5
    %v4832 = vmul.f32 %v4816, 0.5
    %v4833 = vmul.f32 %v4817, 0.5
    %v4834 = vmul.f32 %v4818, 0.5
    %v4835 = vmul.f32 %v4819, 0.5
    %v4836 = vmul.f32 %v4820, 0.5
    %v4837 = vmul.f32 %v4821, 0.5
    %v4838 = vmul.f32 %v4822, 0.5
    %v4839 = vmul.f32 %v4823, 0.5
    %v4840 = vmul.f32 %v4824, 0.5
    %v4841 = vmul.f32 %v4825, 0.5
    %v4842 = vmul.f32 %v4826, 0.5
    %v4843 = vmul.f32 %v4827, 0.5
    %v4844 = vmul.f32 %v4136, %v4828
    %v4845 = vmul.f32 %v4138, %v4829
    %v4846 = vmul.f32 %v4218, %v4830
    %v4847 = vmul.f32 %v4220, %v4831
    %v4848 = vmul.f32 %v4300, %v4832
    %v4849 = vmul.f32 %v4302, %v4833
    %v4850 = vmul.f32 %v4382, %v4834
    %v4851 = vmul.f32 %v4384, %v4835
    %v4852 = vmul.f32 %v4464, %v4836
    %v4853 = vmul.f32 %v4466, %v4837
    %v4854 = vmul.f32 %v4546, %v4838
    %v4855 = vmul.f32 %v4548, %v4839
    %v4856 = vmul.f32 %v4628, %v4840
    %v4857 = vmul.f32 %v4630, %v4841
    %v4858 = vmul.f32 %v4710, %v4842
    %v4859 = vmul.f32 %v4712, %v4843
    %v4860 = vpack.c.bf16 %v4844, %v4844
    %v4861 = vpack.c.bf16 %v4845, %v4845
    %v4862 = vpack.c.bf16 %v4846, %v4846
    %v4863 = vpack.c.bf16 %v4847, %v4847
    %v4864 = vpack.c.bf16 %v4848, %v4848
    %v4865 = vpack.c.bf16 %v4849, %v4849
    %v4866 = vpack.c.bf16 %v4850, %v4850
    %v4867 = vpack.c.bf16 %v4851, %v4851
    %v4868 = vpack.c.bf16 %v4852, %v4852
    %v4869 = vpack.c.bf16 %v4853, %v4853
    %v4870 = vpack.c.bf16 %v4854, %v4854
    %v4871 = vpack.c.bf16 %v4855, %v4855
    %v4872 = vpack.c.bf16 %v4856, %v4856
    %v4873 = vpack.c.bf16 %v4857, %v4857
    %v4874 = vpack.c.bf16 %v4858, %v4858
    %v4875 = vpack.c.bf16 %v4859, %v4859
    %v4877 = vlaneseq
    %v4878 = vshrl.u32 %v4877, 7
    %v4879 = vsub.s32 0, %v4878
    %v4880 = vrot.slane %v1336, %v4879
    %v4881 = vlaneseq
    %v4882 = vshrl.u32 %v4881, 7
    %v4883 = vsub.s32 1, %v4882
    %v4884 = vrot.slane %v1336, %v4883
    %v4885 = vlaneseq
    %v4886 = vshrl.u32 %v4885, 7
    %v4887 = vsub.s32 2, %v4886
    %v4888 = vrot.slane %v1336, %v4887
    %v4889 = vlaneseq
    %v4890 = vshrl.u32 %v4889, 7
    %v4891 = vsub.s32 3, %v4890
    %v4892 = vrot.slane %v1336, %v4891
    %v5409 = vunpack.c.l.b16 %v824
    %v5410 = vunpack.c.h.b16 %v824
    %v5411 = vunpack.c.l.b16 %v825
    %v5412 = vunpack.c.h.b16 %v825
    %v5413 = vunpack.c.l.b16 %v826
    %v5414 = vunpack.c.h.b16 %v826
    %v5415 = vunpack.c.l.b16 %v827
    %v5416 = vunpack.c.h.b16 %v827
    %v5417 = vunpack.c.l.b16 %v828
    %v5418 = vunpack.c.h.b16 %v828
    %v5419 = vunpack.c.l.b16 %v829
    %v5420 = vunpack.c.h.b16 %v829
    %v5421 = vunpack.c.l.b16 %v830
    %v5422 = vunpack.c.h.b16 %v830
    %v5423 = vunpack.c.l.b16 %v831
    %v5424 = vunpack.c.h.b16 %v831
    %v5425 = vunpack.c.l.b16 %v832
    %v5426 = vunpack.c.h.b16 %v832
    %v5427 = vunpack.c.l.b16 %v833
    %v5428 = vunpack.c.h.b16 %v833
    %v5429 = vunpack.c.l.b16 %v834
    %v5430 = vunpack.c.h.b16 %v834
    %v5431 = vunpack.c.l.b16 %v835
    %v5432 = vunpack.c.h.b16 %v835
    %v5433 = vunpack.c.l.b16 %v836
    %v5434 = vunpack.c.h.b16 %v836
    %v5435 = vunpack.c.l.b16 %v837
    %v5436 = vunpack.c.h.b16 %v837
    %v5437 = vunpack.c.l.b16 %v838
    %v5438 = vunpack.c.h.b16 %v838
    %v5439 = vunpack.c.l.b16 %v839
    %v5440 = vunpack.c.h.b16 %v839
    %v5441 = vunpack.c.l.b16 %v840
    %v5442 = vunpack.c.h.b16 %v840
    %v5443 = vunpack.c.l.b16 %v841
    %v5444 = vunpack.c.h.b16 %v841
    %v5445 = vunpack.c.l.b16 %v842
    %v5446 = vunpack.c.h.b16 %v842
    %v5447 = vunpack.c.l.b16 %v843
    %v5448 = vunpack.c.h.b16 %v843
    %v5449 = vunpack.c.l.b16 %v844
    %v5450 = vunpack.c.h.b16 %v844
    %v5451 = vunpack.c.l.b16 %v845
    %v5452 = vunpack.c.h.b16 %v845
    %v5453 = vunpack.c.l.b16 %v846
    %v5454 = vunpack.c.h.b16 %v846
    %v5455 = vunpack.c.l.b16 %v847
    %v5456 = vunpack.c.h.b16 %v847
    %v5457 = vunpack.c.l.b16 %v848
    %v5458 = vunpack.c.h.b16 %v848
    %v5459 = vunpack.c.l.b16 %v849
    %v5460 = vunpack.c.h.b16 %v849
    %v5461 = vunpack.c.l.b16 %v850
    %v5462 = vunpack.c.h.b16 %v850
    %v5463 = vunpack.c.l.b16 %v851
    %v5464 = vunpack.c.h.b16 %v851
    %v5465 = vunpack.c.l.b16 %v852
    %v5466 = vunpack.c.h.b16 %v852
    %v5467 = vunpack.c.l.b16 %v853
    %v5468 = vunpack.c.h.b16 %v853
    %v5469 = vunpack.c.l.b16 %v854
    %v5470 = vunpack.c.h.b16 %v854
    %v5471 = vunpack.c.l.b16 %v855
    %v5472 = vunpack.c.h.b16 %v855
    %v5473 = vunpack.c.l.b16 %v856
    %v5474 = vunpack.c.h.b16 %v856
    %v5475 = vunpack.c.l.b16 %v857
    %v5476 = vunpack.c.h.b16 %v857
    %v5477 = vunpack.c.l.b16 %v858
    %v5478 = vunpack.c.h.b16 %v858
    %v5479 = vunpack.c.l.b16 %v859
    %v5480 = vunpack.c.h.b16 %v859
    %v5481 = vunpack.c.l.b16 %v860
    %v5482 = vunpack.c.h.b16 %v860
    %v5483 = vunpack.c.l.b16 %v861
    %v5484 = vunpack.c.h.b16 %v861
    %v5485 = vunpack.c.l.b16 %v862
    %v5486 = vunpack.c.h.b16 %v862
    %v5487 = vunpack.c.l.b16 %v863
    %v5488 = vunpack.c.h.b16 %v863
    %v5489 = vunpack.c.l.b16 %v864
    %v5490 = vunpack.c.h.b16 %v864
    %v5491 = vunpack.c.l.b16 %v865
    %v5492 = vunpack.c.h.b16 %v865
    %v5493 = vunpack.c.l.b16 %v866
    %v5494 = vunpack.c.h.b16 %v866
    %v5495 = vunpack.c.l.b16 %v867
    %v5496 = vunpack.c.h.b16 %v867
    %v5497 = vunpack.c.l.b16 %v868
    %v5498 = vunpack.c.h.b16 %v868
    %v5499 = vunpack.c.l.b16 %v869
    %v5500 = vunpack.c.h.b16 %v869
    %v5501 = vunpack.c.l.b16 %v870
    %v5502 = vunpack.c.h.b16 %v870
    %v5503 = vunpack.c.l.b16 %v871
    %v5504 = vunpack.c.h.b16 %v871
    %v5505 = vunpack.c.l.b16 %v872
    %v5506 = vunpack.c.h.b16 %v872
    %v5507 = vunpack.c.l.b16 %v873
    %v5508 = vunpack.c.h.b16 %v873
    %v5509 = vunpack.c.l.b16 %v874
    %v5510 = vunpack.c.h.b16 %v874
    %v5511 = vunpack.c.l.b16 %v875
    %v5512 = vunpack.c.h.b16 %v875
    %v5513 = vunpack.c.l.b16 %v876
    %v5514 = vunpack.c.h.b16 %v876
    %v5515 = vunpack.c.l.b16 %v877
    %v5516 = vunpack.c.h.b16 %v877
    %v5517 = vunpack.c.l.b16 %v878
    %v5518 = vunpack.c.h.b16 %v878
    %v5519 = vunpack.c.l.b16 %v879
    %v5520 = vunpack.c.h.b16 %v879
    %v5521 = vunpack.c.l.b16 %v880
    %v5522 = vunpack.c.h.b16 %v880
    %v5523 = vunpack.c.l.b16 %v881
    %v5524 = vunpack.c.h.b16 %v881
    %v5525 = vunpack.c.l.b16 %v882
    %v5526 = vunpack.c.h.b16 %v882
    %v5527 = vunpack.c.l.b16 %v883
    %v5528 = vunpack.c.h.b16 %v883
    %v5529 = vunpack.c.l.b16 %v884
    %v5530 = vunpack.c.h.b16 %v884
    %v5531 = vunpack.c.l.b16 %v885
    %v5532 = vunpack.c.h.b16 %v885
    %v5533 = vunpack.c.l.b16 %v886
    %v5534 = vunpack.c.h.b16 %v886
    %v5535 = vunpack.c.l.b16 %v887
    %v5536 = vunpack.c.h.b16 %v887
    %v5537 = vunpack.c.l.b16 %v888
    %v5538 = vunpack.c.h.b16 %v888
    %v5539 = vunpack.c.l.b16 %v889
    %v5540 = vunpack.c.h.b16 %v889
    %v5541 = vunpack.c.l.b16 %v890
    %v5542 = vunpack.c.h.b16 %v890
    %v5543 = vunpack.c.l.b16 %v891
    %v5544 = vunpack.c.h.b16 %v891
    %v5545 = vunpack.c.l.b16 %v892
    %v5546 = vunpack.c.h.b16 %v892
    %v5547 = vunpack.c.l.b16 %v893
    %v5548 = vunpack.c.h.b16 %v893
    %v5549 = vunpack.c.l.b16 %v894
    %v5550 = vunpack.c.h.b16 %v894
    %v5551 = vunpack.c.l.b16 %v895
    %v5552 = vunpack.c.h.b16 %v895
    %v5553 = vunpack.c.l.b16 %v896
    %v5554 = vunpack.c.h.b16 %v896
    %v5555 = vunpack.c.l.b16 %v897
    %v5556 = vunpack.c.h.b16 %v897
    %v5557 = vunpack.c.l.b16 %v898
    %v5558 = vunpack.c.h.b16 %v898
    %v5559 = vunpack.c.l.b16 %v899
    %v5560 = vunpack.c.h.b16 %v899
    %v5561 = vunpack.c.l.b16 %v900
    %v5562 = vunpack.c.h.b16 %v900
    %v5563 = vunpack.c.l.b16 %v901
    %v5564 = vunpack.c.h.b16 %v901
    %v5565 = vunpack.c.l.b16 %v902
    %v5566 = vunpack.c.h.b16 %v902
    %v5567 = vunpack.c.l.b16 %v903
    %v5568 = vunpack.c.h.b16 %v903
    %v5569 = vunpack.c.l.b16 %v904
    %v5570 = vunpack.c.h.b16 %v904
    %v5571 = vunpack.c.l.b16 %v905
    %v5572 = vunpack.c.h.b16 %v905
    %v5573 = vunpack.c.l.b16 %v906
    %v5574 = vunpack.c.h.b16 %v906
    %v5575 = vunpack.c.l.b16 %v907
    %v5576 = vunpack.c.h.b16 %v907
    %v5577 = vunpack.c.l.b16 %v908
    %v5578 = vunpack.c.h.b16 %v908
    %v5579 = vunpack.c.l.b16 %v909
    %v5580 = vunpack.c.h.b16 %v909
    %v5581 = vunpack.c.l.b16 %v910
    %v5582 = vunpack.c.h.b16 %v910
    %v5583 = vunpack.c.l.b16 %v911
    %v5584 = vunpack.c.h.b16 %v911
    %v5585 = vunpack.c.l.b16 %v912
    %v5586 = vunpack.c.h.b16 %v912
    %v5587 = vunpack.c.l.b16 %v913
    %v5588 = vunpack.c.h.b16 %v913
    %v5589 = vunpack.c.l.b16 %v914
    %v5590 = vunpack.c.h.b16 %v914
    %v5591 = vunpack.c.l.b16 %v915
    %v5592 = vunpack.c.h.b16 %v915
    %v5593 = vunpack.c.l.b16 %v916
    %v5594 = vunpack.c.h.b16 %v916
    %v5595 = vunpack.c.l.b16 %v917
    %v5596 = vunpack.c.h.b16 %v917
    %v5597 = vunpack.c.l.b16 %v918
    %v5598 = vunpack.c.h.b16 %v918
    %v5599 = vunpack.c.l.b16 %v919
    %v5600 = vunpack.c.h.b16 %v919
    %v5601 = vunpack.c.l.b16 %v920
    %v5602 = vunpack.c.h.b16 %v920
    %v5603 = vunpack.c.l.b16 %v921
    %v5604 = vunpack.c.h.b16 %v921
    %v5605 = vunpack.c.l.b16 %v922
    %v5606 = vunpack.c.h.b16 %v922
    %v5607 = vunpack.c.l.b16 %v923
    %v5608 = vunpack.c.h.b16 %v923
    %v5609 = vunpack.c.l.b16 %v924
    %v5610 = vunpack.c.h.b16 %v924
    %v5611 = vunpack.c.l.b16 %v925
    %v5612 = vunpack.c.h.b16 %v925
    %v5613 = vunpack.c.l.b16 %v926
    %v5614 = vunpack.c.h.b16 %v926
    %v5615 = vunpack.c.l.b16 %v927
    %v5616 = vunpack.c.h.b16 %v927
    %v5617 = vunpack.c.l.b16 %v928
    %v5618 = vunpack.c.h.b16 %v928
    %v5619 = vunpack.c.l.b16 %v929
    %v5620 = vunpack.c.h.b16 %v929
    %v5621 = vunpack.c.l.b16 %v930
    %v5622 = vunpack.c.h.b16 %v930
    %v5623 = vunpack.c.l.b16 %v931
    %v5624 = vunpack.c.h.b16 %v931
    %v5625 = vunpack.c.l.b16 %v932
    %v5626 = vunpack.c.h.b16 %v932
    %v5627 = vunpack.c.l.b16 %v933
    %v5628 = vunpack.c.h.b16 %v933
    %v5629 = vunpack.c.l.b16 %v934
    %v5630 = vunpack.c.h.b16 %v934
    %v5631 = vunpack.c.l.b16 %v935
    %v5632 = vunpack.c.h.b16 %v935
    %v5633 = vunpack.c.l.b16 %v936
    %v5634 = vunpack.c.h.b16 %v936
    %v5635 = vunpack.c.l.b16 %v937
    %v5636 = vunpack.c.h.b16 %v937
    %v5637 = vunpack.c.l.b16 %v938
    %v5638 = vunpack.c.h.b16 %v938
    %v5639 = vunpack.c.l.b16 %v939
    %v5640 = vunpack.c.h.b16 %v939
    %v5641 = vunpack.c.l.b16 %v940
    %v5642 = vunpack.c.h.b16 %v940
    %v5643 = vunpack.c.l.b16 %v941
    %v5644 = vunpack.c.h.b16 %v941
    %v5645 = vunpack.c.l.b16 %v942
    %v5646 = vunpack.c.h.b16 %v942
    %v5647 = vunpack.c.l.b16 %v943
    %v5648 = vunpack.c.h.b16 %v943
    %v5649 = vunpack.c.l.b16 %v944
    %v5650 = vunpack.c.h.b16 %v944
    %v5651 = vunpack.c.l.b16 %v945
    %v5652 = vunpack.c.h.b16 %v945
    %v5653 = vunpack.c.l.b16 %v946
    %v5654 = vunpack.c.h.b16 %v946
    %v5655 = vunpack.c.l.b16 %v947
    %v5656 = vunpack.c.h.b16 %v947
    %v5657 = vunpack.c.l.b16 %v948
    %v5658 = vunpack.c.h.b16 %v948
    %v5659 = vunpack.c.l.b16 %v949
    %v5660 = vunpack.c.h.b16 %v949
    %v5661 = vunpack.c.l.b16 %v950
    %v5662 = vunpack.c.h.b16 %v950
    %v5663 = vunpack.c.l.b16 %v951
    %v5664 = vunpack.c.h.b16 %v951
    %v5665 = vunpack.c.l.b16 %v952
    %v5666 = vunpack.c.h.b16 %v952
    %v5667 = vunpack.c.l.b16 %v953
    %v5668 = vunpack.c.h.b16 %v953
    %v5669 = vunpack.c.l.b16 %v954
    %v5670 = vunpack.c.h.b16 %v954
    %v5671 = vunpack.c.l.b16 %v955
    %v5672 = vunpack.c.h.b16 %v955
    %v5673 = vunpack.c.l.b16 %v956
    %v5674 = vunpack.c.h.b16 %v956
    %v5675 = vunpack.c.l.b16 %v957
    %v5676 = vunpack.c.h.b16 %v957
    %v5677 = vunpack.c.l.b16 %v958
    %v5678 = vunpack.c.h.b16 %v958
    %v5679 = vunpack.c.l.b16 %v959
    %v5680 = vunpack.c.h.b16 %v959
    %v5681 = vunpack.c.l.b16 %v960
    %v5682 = vunpack.c.h.b16 %v960
    %v5683 = vunpack.c.l.b16 %v961
    %v5684 = vunpack.c.h.b16 %v961
    %v5685 = vunpack.c.l.b16 %v962
    %v5686 = vunpack.c.h.b16 %v962
    %v5687 = vunpack.c.l.b16 %v963
    %v5688 = vunpack.c.h.b16 %v963
    %v5689 = vunpack.c.l.b16 %v964
    %v5690 = vunpack.c.h.b16 %v964
    %v5691 = vunpack.c.l.b16 %v965
    %v5692 = vunpack.c.h.b16 %v965
    %v5693 = vunpack.c.l.b16 %v966
    %v5694 = vunpack.c.h.b16 %v966
    %v5695 = vunpack.c.l.b16 %v967
    %v5696 = vunpack.c.h.b16 %v967
    %v5697 = vunpack.c.l.b16 %v968
    %v5698 = vunpack.c.h.b16 %v968
    %v5699 = vunpack.c.l.b16 %v969
    %v5700 = vunpack.c.h.b16 %v969
    %v5701 = vunpack.c.l.b16 %v970
    %v5702 = vunpack.c.h.b16 %v970
    %v5703 = vunpack.c.l.b16 %v971
    %v5704 = vunpack.c.h.b16 %v971
    %v5705 = vunpack.c.l.b16 %v972
    %v5706 = vunpack.c.h.b16 %v972
    %v5707 = vunpack.c.l.b16 %v973
    %v5708 = vunpack.c.h.b16 %v973
    %v5709 = vunpack.c.l.b16 %v974
    %v5710 = vunpack.c.h.b16 %v974
    %v5711 = vunpack.c.l.b16 %v975
    %v5712 = vunpack.c.h.b16 %v975
    %v5713 = vunpack.c.l.b16 %v976
    %v5714 = vunpack.c.h.b16 %v976
    %v5715 = vunpack.c.l.b16 %v977
    %v5716 = vunpack.c.h.b16 %v977
    %v5717 = vunpack.c.l.b16 %v978
    %v5718 = vunpack.c.h.b16 %v978
    %v5719 = vunpack.c.l.b16 %v979
    %v5720 = vunpack.c.h.b16 %v979
    %v5721 = vunpack.c.l.b16 %v980
    %v5722 = vunpack.c.h.b16 %v980
    %v5723 = vunpack.c.l.b16 %v981
    %v5724 = vunpack.c.h.b16 %v981
    %v5725 = vunpack.c.l.b16 %v982
    %v5726 = vunpack.c.h.b16 %v982
    %v5727 = vunpack.c.l.b16 %v983
    %v5728 = vunpack.c.h.b16 %v983
    %v5729 = vunpack.c.l.b16 %v984
    %v5730 = vunpack.c.h.b16 %v984
    %v5731 = vunpack.c.l.b16 %v985
    %v5732 = vunpack.c.h.b16 %v985
    %v5733 = vunpack.c.l.b16 %v986
    %v5734 = vunpack.c.h.b16 %v986
    %v5735 = vunpack.c.l.b16 %v987
    %v5736 = vunpack.c.h.b16 %v987
    %v5737 = vunpack.c.l.b16 %v988
    %v5738 = vunpack.c.h.b16 %v988
    %v5739 = vunpack.c.l.b16 %v989
    %v5740 = vunpack.c.h.b16 %v989
    %v5741 = vunpack.c.l.b16 %v990
    %v5742 = vunpack.c.h.b16 %v990
    %v5743 = vunpack.c.l.b16 %v991
    %v5744 = vunpack.c.h.b16 %v991
    %v5745 = vunpack.c.l.b16 %v992
    %v5746 = vunpack.c.h.b16 %v992
    %v5747 = vunpack.c.l.b16 %v993
    %v5748 = vunpack.c.h.b16 %v993
    %v5749 = vunpack.c.l.b16 %v994
    %v5750 = vunpack.c.h.b16 %v994
    %v5751 = vunpack.c.l.b16 %v995
    %v5752 = vunpack.c.h.b16 %v995
    %v5753 = vunpack.c.l.b16 %v996
    %v5754 = vunpack.c.h.b16 %v996
    %v5755 = vunpack.c.l.b16 %v997
    %v5756 = vunpack.c.h.b16 %v997
    %v5757 = vunpack.c.l.b16 %v998
    %v5758 = vunpack.c.h.b16 %v998
    %v5759 = vunpack.c.l.b16 %v999
    %v5760 = vunpack.c.h.b16 %v999
    %v5761 = vunpack.c.l.b16 %v1000
    %v5762 = vunpack.c.h.b16 %v1000
    %v5763 = vunpack.c.l.b16 %v1001
    %v5764 = vunpack.c.h.b16 %v1001
    %v5765 = vunpack.c.l.b16 %v1002
    %v5766 = vunpack.c.h.b16 %v1002
    %v5767 = vunpack.c.l.b16 %v1003
    %v5768 = vunpack.c.h.b16 %v1003
    %v5769 = vunpack.c.l.b16 %v1004
    %v5770 = vunpack.c.h.b16 %v1004
    %v5771 = vunpack.c.l.b16 %v1005
    %v5772 = vunpack.c.h.b16 %v1005
    %v5773 = vunpack.c.l.b16 %v1006
    %v5774 = vunpack.c.h.b16 %v1006
    %v5775 = vunpack.c.l.b16 %v1007
    %v5776 = vunpack.c.h.b16 %v1007
    %v5777 = vunpack.c.l.b16 %v1008
    %v5778 = vunpack.c.h.b16 %v1008
    %v5779 = vunpack.c.l.b16 %v1009
    %v5780 = vunpack.c.h.b16 %v1009
    %v5781 = vunpack.c.l.b16 %v1010
    %v5782 = vunpack.c.h.b16 %v1010
    %v5783 = vunpack.c.l.b16 %v1011
    %v5784 = vunpack.c.h.b16 %v1011
    %v5785 = vunpack.c.l.b16 %v1012
    %v5786 = vunpack.c.h.b16 %v1012
    %v5787 = vunpack.c.l.b16 %v1013
    %v5788 = vunpack.c.h.b16 %v1013
    %v5789 = vunpack.c.l.b16 %v1014
    %v5790 = vunpack.c.h.b16 %v1014
    %v5791 = vunpack.c.l.b16 %v1015
    %v5792 = vunpack.c.h.b16 %v1015
    %v5793 = vunpack.c.l.b16 %v1016
    %v5794 = vunpack.c.h.b16 %v1016
    %v5795 = vunpack.c.l.b16 %v1017
    %v5796 = vunpack.c.h.b16 %v1017
    %v5797 = vunpack.c.l.b16 %v1018
    %v5798 = vunpack.c.h.b16 %v1018
    %v5799 = vunpack.c.l.b16 %v1019
    %v5800 = vunpack.c.h.b16 %v1019
    %v5801 = vunpack.c.l.b16 %v1020
    %v5802 = vunpack.c.h.b16 %v1020
    %v5803 = vunpack.c.l.b16 %v1021
    %v5804 = vunpack.c.h.b16 %v1021
    %v5805 = vunpack.c.l.b16 %v1022
    %v5806 = vunpack.c.h.b16 %v1022
    %v5807 = vunpack.c.l.b16 %v1023
    %v5808 = vunpack.c.h.b16 %v1023
    %v5809 = vunpack.c.l.b16 %v1024
    %v5810 = vunpack.c.h.b16 %v1024
    %v5811 = vunpack.c.l.b16 %v1025
    %v5812 = vunpack.c.h.b16 %v1025
    %v5813 = vunpack.c.l.b16 %v1026
    %v5814 = vunpack.c.h.b16 %v1026
    %v5815 = vunpack.c.l.b16 %v1027
    %v5816 = vunpack.c.h.b16 %v1027
    %v5817 = vunpack.c.l.b16 %v1028
    %v5818 = vunpack.c.h.b16 %v1028
    %v5819 = vunpack.c.l.b16 %v1029
    %v5820 = vunpack.c.h.b16 %v1029
    %v5821 = vunpack.c.l.b16 %v1030
    %v5822 = vunpack.c.h.b16 %v1030
    %v5823 = vunpack.c.l.b16 %v1031
    %v5824 = vunpack.c.h.b16 %v1031
    %v5825 = vunpack.c.l.b16 %v1032
    %v5826 = vunpack.c.h.b16 %v1032
    %v5827 = vunpack.c.l.b16 %v1033
    %v5828 = vunpack.c.h.b16 %v1033
    %v5829 = vunpack.c.l.b16 %v1034
    %v5830 = vunpack.c.h.b16 %v1034
    %v5831 = vunpack.c.l.b16 %v1035
    %v5832 = vunpack.c.h.b16 %v1035
    %v5833 = vunpack.c.l.b16 %v1036
    %v5834 = vunpack.c.h.b16 %v1036
    %v5835 = vunpack.c.l.b16 %v1037
    %v5836 = vunpack.c.h.b16 %v1037
    %v5837 = vunpack.c.l.b16 %v1038
    %v5838 = vunpack.c.h.b16 %v1038
    %v5839 = vunpack.c.l.b16 %v1039
    %v5840 = vunpack.c.h.b16 %v1039
    %v5841 = vunpack.c.l.b16 %v1040
    %v5842 = vunpack.c.h.b16 %v1040
    %v5843 = vunpack.c.l.b16 %v1041
    %v5844 = vunpack.c.h.b16 %v1041
    %v5845 = vunpack.c.l.b16 %v1042
    %v5846 = vunpack.c.h.b16 %v1042
    %v5847 = vunpack.c.l.b16 %v1043
    %v5848 = vunpack.c.h.b16 %v1043
    %v5849 = vunpack.c.l.b16 %v1044
    %v5850 = vunpack.c.h.b16 %v1044
    %v5851 = vunpack.c.l.b16 %v1045
    %v5852 = vunpack.c.h.b16 %v1045
    %v5853 = vunpack.c.l.b16 %v1046
    %v5854 = vunpack.c.h.b16 %v1046
    %v5855 = vunpack.c.l.b16 %v1047
    %v5856 = vunpack.c.h.b16 %v1047
    %v5857 = vunpack.c.l.b16 %v1048
    %v5858 = vunpack.c.h.b16 %v1048
    %v5859 = vunpack.c.l.b16 %v1049
    %v5860 = vunpack.c.h.b16 %v1049
    %v5861 = vunpack.c.l.b16 %v1050
    %v5862 = vunpack.c.h.b16 %v1050
    %v5863 = vunpack.c.l.b16 %v1051
    %v5864 = vunpack.c.h.b16 %v1051
    %v5865 = vunpack.c.l.b16 %v1052
    %v5866 = vunpack.c.h.b16 %v1052
    %v5867 = vunpack.c.l.b16 %v1053
    %v5868 = vunpack.c.h.b16 %v1053
    %v5869 = vunpack.c.l.b16 %v1054
    %v5870 = vunpack.c.h.b16 %v1054
    %v5871 = vunpack.c.l.b16 %v1055
    %v5872 = vunpack.c.h.b16 %v1055
    %v5873 = vunpack.c.l.b16 %v1056
    %v5874 = vunpack.c.h.b16 %v1056
    %v5875 = vunpack.c.l.b16 %v1057
    %v5876 = vunpack.c.h.b16 %v1057
    %v5877 = vunpack.c.l.b16 %v1058
    %v5878 = vunpack.c.h.b16 %v1058
    %v5879 = vunpack.c.l.b16 %v1059
    %v5880 = vunpack.c.h.b16 %v1059
    %v5881 = vunpack.c.l.b16 %v1060
    %v5882 = vunpack.c.h.b16 %v1060
    %v5883 = vunpack.c.l.b16 %v1061
    %v5884 = vunpack.c.h.b16 %v1061
    %v5885 = vunpack.c.l.b16 %v1062
    %v5886 = vunpack.c.h.b16 %v1062
    %v5887 = vunpack.c.l.b16 %v1063
    %v5888 = vunpack.c.h.b16 %v1063
    %v5889 = vunpack.c.l.b16 %v1064
    %v5890 = vunpack.c.h.b16 %v1064
    %v5891 = vunpack.c.l.b16 %v1065
    %v5892 = vunpack.c.h.b16 %v1065
    %v5893 = vunpack.c.l.b16 %v1066
    %v5894 = vunpack.c.h.b16 %v1066
    %v5895 = vunpack.c.l.b16 %v1067
    %v5896 = vunpack.c.h.b16 %v1067
    %v5897 = vunpack.c.l.b16 %v1068
    %v5898 = vunpack.c.h.b16 %v1068
    %v5899 = vunpack.c.l.b16 %v1069
    %v5900 = vunpack.c.h.b16 %v1069
    %v5901 = vunpack.c.l.b16 %v1070
    %v5902 = vunpack.c.h.b16 %v1070
    %v5903 = vunpack.c.l.b16 %v1071
    %v5904 = vunpack.c.h.b16 %v1071
    %v5905 = vunpack.c.l.b16 %v1072
    %v5906 = vunpack.c.h.b16 %v1072
    %v5907 = vunpack.c.l.b16 %v1073
    %v5908 = vunpack.c.h.b16 %v1073
    %v5909 = vunpack.c.l.b16 %v1074
    %v5910 = vunpack.c.h.b16 %v1074
    %v5911 = vunpack.c.l.b16 %v1075
    %v5912 = vunpack.c.h.b16 %v1075
    %v5913 = vunpack.c.l.b16 %v1076
    %v5914 = vunpack.c.h.b16 %v1076
    %v5915 = vunpack.c.l.b16 %v1077
    %v5916 = vunpack.c.h.b16 %v1077
    %v5917 = vunpack.c.l.b16 %v1078
    %v5918 = vunpack.c.h.b16 %v1078
    %v5919 = vunpack.c.l.b16 %v1079
    %v5920 = vunpack.c.h.b16 %v1079
    %v5921 = vunpack.c.l.b16 %v1080
    %v5922 = vunpack.c.h.b16 %v1080
    %v5923 = vunpack.c.l.b16 %v1081
    %v5924 = vunpack.c.h.b16 %v1081
    %v5925 = vunpack.c.l.b16 %v1082
    %v5926 = vunpack.c.h.b16 %v1082
    %v5927 = vunpack.c.l.b16 %v1083
    %v5928 = vunpack.c.h.b16 %v1083
    %v5929 = vunpack.c.l.b16 %v1084
    %v5930 = vunpack.c.h.b16 %v1084
    %v5931 = vunpack.c.l.b16 %v1085
    %v5932 = vunpack.c.h.b16 %v1085
    %v5933 = vunpack.c.l.b16 %v1086
    %v5934 = vunpack.c.h.b16 %v1086
    %v5935 = vunpack.c.l.b16 %v1087
    %v5936 = vunpack.c.h.b16 %v1087
    %v5937 = vunpack.c.l.b16 %v1088
    %v5938 = vunpack.c.h.b16 %v1088
    %v5939 = vunpack.c.l.b16 %v1089
    %v5940 = vunpack.c.h.b16 %v1089
    %v5941 = vunpack.c.l.b16 %v1090
    %v5942 = vunpack.c.h.b16 %v1090
    %v5943 = vunpack.c.l.b16 %v1091
    %v5944 = vunpack.c.h.b16 %v1091
    %v5945 = vunpack.c.l.b16 %v1092
    %v5946 = vunpack.c.h.b16 %v1092
    %v5947 = vunpack.c.l.b16 %v1093
    %v5948 = vunpack.c.h.b16 %v1093
    %v5949 = vunpack.c.l.b16 %v1094
    %v5950 = vunpack.c.h.b16 %v1094
    %v5951 = vunpack.c.l.b16 %v1095
    %v5952 = vunpack.c.h.b16 %v1095
    %v5953 = vunpack.c.l.b16 %v1096
    %v5954 = vunpack.c.h.b16 %v1096
    %v5955 = vunpack.c.l.b16 %v1097
    %v5956 = vunpack.c.h.b16 %v1097
    %v5957 = vunpack.c.l.b16 %v1098
    %v5958 = vunpack.c.h.b16 %v1098
    %v5959 = vunpack.c.l.b16 %v1099
    %v5960 = vunpack.c.h.b16 %v1099
    %v5961 = vunpack.c.l.b16 %v1100
    %v5962 = vunpack.c.h.b16 %v1100
    %v5963 = vunpack.c.l.b16 %v1101
    %v5964 = vunpack.c.h.b16 %v1101
    %v5965 = vunpack.c.l.b16 %v1102
    %v5966 = vunpack.c.h.b16 %v1102
    %v5967 = vunpack.c.l.b16 %v1103
    %v5968 = vunpack.c.h.b16 %v1103
    %v5969 = vunpack.c.l.b16 %v1104
    %v5970 = vunpack.c.h.b16 %v1104
    %v5971 = vunpack.c.l.b16 %v1105
    %v5972 = vunpack.c.h.b16 %v1105
    %v5973 = vunpack.c.l.b16 %v1106
    %v5974 = vunpack.c.h.b16 %v1106
    %v5975 = vunpack.c.l.b16 %v1107
    %v5976 = vunpack.c.h.b16 %v1107
    %v5977 = vunpack.c.l.b16 %v1108
    %v5978 = vunpack.c.h.b16 %v1108
    %v5979 = vunpack.c.l.b16 %v1109
    %v5980 = vunpack.c.h.b16 %v1109
    %v5981 = vunpack.c.l.b16 %v1110
    %v5982 = vunpack.c.h.b16 %v1110
    %v5983 = vunpack.c.l.b16 %v1111
    %v5984 = vunpack.c.h.b16 %v1111
    %v5985 = vunpack.c.l.b16 %v1112
    %v5986 = vunpack.c.h.b16 %v1112
    %v5987 = vunpack.c.l.b16 %v1113
    %v5988 = vunpack.c.h.b16 %v1113
    %v5989 = vunpack.c.l.b16 %v1114
    %v5990 = vunpack.c.h.b16 %v1114
    %v5991 = vunpack.c.l.b16 %v1115
    %v5992 = vunpack.c.h.b16 %v1115
    %v5993 = vunpack.c.l.b16 %v1116
    %v5994 = vunpack.c.h.b16 %v1116
    %v5995 = vunpack.c.l.b16 %v1117
    %v5996 = vunpack.c.h.b16 %v1117
    %v5997 = vunpack.c.l.b16 %v1118
    %v5998 = vunpack.c.h.b16 %v1118
    %v5999 = vunpack.c.l.b16 %v1119
    %v6000 = vunpack.c.h.b16 %v1119
    %v6001 = vunpack.c.l.b16 %v1120
    %v6002 = vunpack.c.h.b16 %v1120
    %v6003 = vunpack.c.l.b16 %v1121
    %v6004 = vunpack.c.h.b16 %v1121
    %v6005 = vunpack.c.l.b16 %v1122
    %v6006 = vunpack.c.h.b16 %v1122
    %v6007 = vunpack.c.l.b16 %v1123
    %v6008 = vunpack.c.h.b16 %v1123
    %v6009 = vunpack.c.l.b16 %v1124
    %v6010 = vunpack.c.h.b16 %v1124
    %v6011 = vunpack.c.l.b16 %v1125
    %v6012 = vunpack.c.h.b16 %v1125
    %v6013 = vunpack.c.l.b16 %v1126
    %v6014 = vunpack.c.h.b16 %v1126
    %v6015 = vunpack.c.l.b16 %v1127
    %v6016 = vunpack.c.h.b16 %v1127
    %v6017 = vunpack.c.l.b16 %v1128
    %v6018 = vunpack.c.h.b16 %v1128
    %v6019 = vunpack.c.l.b16 %v1129
    %v6020 = vunpack.c.h.b16 %v1129
    %v6021 = vunpack.c.l.b16 %v1130
    %v6022 = vunpack.c.h.b16 %v1130
    %v6023 = vunpack.c.l.b16 %v1131
    %v6024 = vunpack.c.h.b16 %v1131
    %v6025 = vunpack.c.l.b16 %v1132
    %v6026 = vunpack.c.h.b16 %v1132
    %v6027 = vunpack.c.l.b16 %v1133
    %v6028 = vunpack.c.h.b16 %v1133
    %v6029 = vunpack.c.l.b16 %v1134
    %v6030 = vunpack.c.h.b16 %v1134
    %v6031 = vunpack.c.l.b16 %v1135
    %v6032 = vunpack.c.h.b16 %v1135
    %v6033 = vunpack.c.l.b16 %v1136
    %v6034 = vunpack.c.h.b16 %v1136
    %v6035 = vunpack.c.l.b16 %v1137
    %v6036 = vunpack.c.h.b16 %v1137
    %v6037 = vunpack.c.l.b16 %v1138
    %v6038 = vunpack.c.h.b16 %v1138
    %v6039 = vunpack.c.l.b16 %v1139
    %v6040 = vunpack.c.h.b16 %v1139
    %v6041 = vunpack.c.l.b16 %v1140
    %v6042 = vunpack.c.h.b16 %v1140
    %v6043 = vunpack.c.l.b16 %v1141
    %v6044 = vunpack.c.h.b16 %v1141
    %v6045 = vunpack.c.l.b16 %v1142
    %v6046 = vunpack.c.h.b16 %v1142
    %v6047 = vunpack.c.l.b16 %v1143
    %v6048 = vunpack.c.h.b16 %v1143
    %v6049 = vunpack.c.l.b16 %v1144
    %v6050 = vunpack.c.h.b16 %v1144
    %v6051 = vunpack.c.l.b16 %v1145
    %v6052 = vunpack.c.h.b16 %v1145
    %v6053 = vunpack.c.l.b16 %v1146
    %v6054 = vunpack.c.h.b16 %v1146
    %v6055 = vunpack.c.l.b16 %v1147
    %v6056 = vunpack.c.h.b16 %v1147
    %v6057 = vunpack.c.l.b16 %v1148
    %v6058 = vunpack.c.h.b16 %v1148
    %v6059 = vunpack.c.l.b16 %v1149
    %v6060 = vunpack.c.h.b16 %v1149
    %v6061 = vunpack.c.l.b16 %v1150
    %v6062 = vunpack.c.h.b16 %v1150
    %v6063 = vunpack.c.l.b16 %v1151
    %v6064 = vunpack.c.h.b16 %v1151
    %v6065 = vunpack.c.l.b16 %v1152
    %v6066 = vunpack.c.h.b16 %v1152
    %v6067 = vunpack.c.l.b16 %v1153
    %v6068 = vunpack.c.h.b16 %v1153
    %v6069 = vunpack.c.l.b16 %v1154
    %v6070 = vunpack.c.h.b16 %v1154
    %v6071 = vunpack.c.l.b16 %v1155
    %v6072 = vunpack.c.h.b16 %v1155
    %v6073 = vunpack.c.l.b16 %v1156
    %v6074 = vunpack.c.h.b16 %v1156
    %v6075 = vunpack.c.l.b16 %v1157
    %v6076 = vunpack.c.h.b16 %v1157
    %v6077 = vunpack.c.l.b16 %v1158
    %v6078 = vunpack.c.h.b16 %v1158
    %v6079 = vunpack.c.l.b16 %v1159
    %v6080 = vunpack.c.h.b16 %v1159
    %v6081 = vunpack.c.l.b16 %v1160
    %v6082 = vunpack.c.h.b16 %v1160
    %v6083 = vunpack.c.l.b16 %v1161
    %v6084 = vunpack.c.h.b16 %v1161
    %v6085 = vunpack.c.l.b16 %v1162
    %v6086 = vunpack.c.h.b16 %v1162
    %v6087 = vunpack.c.l.b16 %v1163
    %v6088 = vunpack.c.h.b16 %v1163
    %v6089 = vunpack.c.l.b16 %v1164
    %v6090 = vunpack.c.h.b16 %v1164
    %v6091 = vunpack.c.l.b16 %v1165
    %v6092 = vunpack.c.h.b16 %v1165
    %v6093 = vunpack.c.l.b16 %v1166
    %v6094 = vunpack.c.h.b16 %v1166
    %v6095 = vunpack.c.l.b16 %v1167
    %v6096 = vunpack.c.h.b16 %v1167
    %v6097 = vunpack.c.l.b16 %v1168
    %v6098 = vunpack.c.h.b16 %v1168
    %v6099 = vunpack.c.l.b16 %v1169
    %v6100 = vunpack.c.h.b16 %v1169
    %v6101 = vunpack.c.l.b16 %v1170
    %v6102 = vunpack.c.h.b16 %v1170
    %v6103 = vunpack.c.l.b16 %v1171
    %v6104 = vunpack.c.h.b16 %v1171
    %v6105 = vunpack.c.l.b16 %v1172
    %v6106 = vunpack.c.h.b16 %v1172
    %v6107 = vunpack.c.l.b16 %v1173
    %v6108 = vunpack.c.h.b16 %v1173
    %v6109 = vunpack.c.l.b16 %v1174
    %v6110 = vunpack.c.h.b16 %v1174
    %v6111 = vunpack.c.l.b16 %v1175
    %v6112 = vunpack.c.h.b16 %v1175
    %v6113 = vunpack.c.l.b16 %v1176
    %v6114 = vunpack.c.h.b16 %v1176
    %v6115 = vunpack.c.l.b16 %v1177
    %v6116 = vunpack.c.h.b16 %v1177
    %v6117 = vunpack.c.l.b16 %v1178
    %v6118 = vunpack.c.h.b16 %v1178
    %v6119 = vunpack.c.l.b16 %v1179
    %v6120 = vunpack.c.h.b16 %v1179
    %v6121 = vunpack.c.l.b16 %v1180
    %v6122 = vunpack.c.h.b16 %v1180
    %v6123 = vunpack.c.l.b16 %v1181
    %v6124 = vunpack.c.h.b16 %v1181
    %v6125 = vunpack.c.l.b16 %v1182
    %v6126 = vunpack.c.h.b16 %v1182
    %v6127 = vunpack.c.l.b16 %v1183
    %v6128 = vunpack.c.h.b16 %v1183
    %v6129 = vunpack.c.l.b16 %v1184
    %v6130 = vunpack.c.h.b16 %v1184
    %v6131 = vunpack.c.l.b16 %v1185
    %v6132 = vunpack.c.h.b16 %v1185
    %v6133 = vunpack.c.l.b16 %v1186
    %v6134 = vunpack.c.h.b16 %v1186
    %v6135 = vunpack.c.l.b16 %v1187
    %v6136 = vunpack.c.h.b16 %v1187
    %v6137 = vunpack.c.l.b16 %v1188
    %v6138 = vunpack.c.h.b16 %v1188
    %v6139 = vunpack.c.l.b16 %v1189
    %v6140 = vunpack.c.h.b16 %v1189
    %v6141 = vunpack.c.l.b16 %v1190
    %v6142 = vunpack.c.h.b16 %v1190
    %v6143 = vunpack.c.l.b16 %v1191
    %v6144 = vunpack.c.h.b16 %v1191
    %v6145 = vunpack.c.l.b16 %v1192
    %v6146 = vunpack.c.h.b16 %v1192
    %v6147 = vunpack.c.l.b16 %v1193
    %v6148 = vunpack.c.h.b16 %v1193
    %v6149 = vunpack.c.l.b16 %v1194
    %v6150 = vunpack.c.h.b16 %v1194
    %v6151 = vunpack.c.l.b16 %v1195
    %v6152 = vunpack.c.h.b16 %v1195
    %v6153 = vunpack.c.l.b16 %v1196
    %v6154 = vunpack.c.h.b16 %v1196
    %v6155 = vunpack.c.l.b16 %v1197
    %v6156 = vunpack.c.h.b16 %v1197
    %v6157 = vunpack.c.l.b16 %v1198
    %v6158 = vunpack.c.h.b16 %v1198
    %v6159 = vunpack.c.l.b16 %v1199
    %v6160 = vunpack.c.h.b16 %v1199
    %v6161 = vunpack.c.l.b16 %v1200
    %v6162 = vunpack.c.h.b16 %v1200
    %v6163 = vunpack.c.l.b16 %v1201
    %v6164 = vunpack.c.h.b16 %v1201
    %v6165 = vunpack.c.l.b16 %v1202
    %v6166 = vunpack.c.h.b16 %v1202
    %v6167 = vunpack.c.l.b16 %v1203
    %v6168 = vunpack.c.h.b16 %v1203
    %v6169 = vunpack.c.l.b16 %v1204
    %v6170 = vunpack.c.h.b16 %v1204
    %v6171 = vunpack.c.l.b16 %v1205
    %v6172 = vunpack.c.h.b16 %v1205
    %v6173 = vunpack.c.l.b16 %v1206
    %v6174 = vunpack.c.h.b16 %v1206
    %v6175 = vunpack.c.l.b16 %v1207
    %v6176 = vunpack.c.h.b16 %v1207
    %v6177 = vunpack.c.l.b16 %v1208
    %v6178 = vunpack.c.h.b16 %v1208
    %v6179 = vunpack.c.l.b16 %v1209
    %v6180 = vunpack.c.h.b16 %v1209
    %v6181 = vunpack.c.l.b16 %v1210
    %v6182 = vunpack.c.h.b16 %v1210
    %v6183 = vunpack.c.l.b16 %v1211
    %v6184 = vunpack.c.h.b16 %v1211
    %v6185 = vunpack.c.l.b16 %v1212
    %v6186 = vunpack.c.h.b16 %v1212
    %v6187 = vunpack.c.l.b16 %v1213
    %v6188 = vunpack.c.h.b16 %v1213
    %v6189 = vunpack.c.l.b16 %v1214
    %v6190 = vunpack.c.h.b16 %v1214
    %v6191 = vunpack.c.l.b16 %v1215
    %v6192 = vunpack.c.h.b16 %v1215
    %v6193 = vunpack.c.l.b16 %v1216
    %v6194 = vunpack.c.h.b16 %v1216
    %v6195 = vunpack.c.l.b16 %v1217
    %v6196 = vunpack.c.h.b16 %v1217
    %v6197 = vunpack.c.l.b16 %v1218
    %v6198 = vunpack.c.h.b16 %v1218
    %v6199 = vunpack.c.l.b16 %v1219
    %v6200 = vunpack.c.h.b16 %v1219
    %v6201 = vunpack.c.l.b16 %v1220
    %v6202 = vunpack.c.h.b16 %v1220
    %v6203 = vunpack.c.l.b16 %v1221
    %v6204 = vunpack.c.h.b16 %v1221
    %v6205 = vunpack.c.l.b16 %v1222
    %v6206 = vunpack.c.h.b16 %v1222
    %v6207 = vunpack.c.l.b16 %v1223
    %v6208 = vunpack.c.h.b16 %v1223
    %v6209 = vunpack.c.l.b16 %v1224
    %v6210 = vunpack.c.h.b16 %v1224
    %v6211 = vunpack.c.l.b16 %v1225
    %v6212 = vunpack.c.h.b16 %v1225
    %v6213 = vunpack.c.l.b16 %v1226
    %v6214 = vunpack.c.h.b16 %v1226
    %v6215 = vunpack.c.l.b16 %v1227
    %v6216 = vunpack.c.h.b16 %v1227
    %v6217 = vunpack.c.l.b16 %v1228
    %v6218 = vunpack.c.h.b16 %v1228
    %v6219 = vunpack.c.l.b16 %v1229
    %v6220 = vunpack.c.h.b16 %v1229
    %v6221 = vunpack.c.l.b16 %v1230
    %v6222 = vunpack.c.h.b16 %v1230
    %v6223 = vunpack.c.l.b16 %v1231
    %v6224 = vunpack.c.h.b16 %v1231
    %v6225 = vunpack.c.l.b16 %v1232
    %v6226 = vunpack.c.h.b16 %v1232
    %v6227 = vunpack.c.l.b16 %v1233
    %v6228 = vunpack.c.h.b16 %v1233
    %v6229 = vunpack.c.l.b16 %v1234
    %v6230 = vunpack.c.h.b16 %v1234
    %v6231 = vunpack.c.l.b16 %v1235
    %v6232 = vunpack.c.h.b16 %v1235
    %v6233 = vunpack.c.l.b16 %v1236
    %v6234 = vunpack.c.h.b16 %v1236
    %v6235 = vunpack.c.l.b16 %v1237
    %v6236 = vunpack.c.h.b16 %v1237
    %v6237 = vunpack.c.l.b16 %v1238
    %v6238 = vunpack.c.h.b16 %v1238
    %v6239 = vunpack.c.l.b16 %v1239
    %v6240 = vunpack.c.h.b16 %v1239
    %v6241 = vunpack.c.l.b16 %v1240
    %v6242 = vunpack.c.h.b16 %v1240
    %v6243 = vunpack.c.l.b16 %v1241
    %v6244 = vunpack.c.h.b16 %v1241
    %v6245 = vunpack.c.l.b16 %v1242
    %v6246 = vunpack.c.h.b16 %v1242
    %v6247 = vunpack.c.l.b16 %v1243
    %v6248 = vunpack.c.h.b16 %v1243
    %v6249 = vunpack.c.l.b16 %v1244
    %v6250 = vunpack.c.h.b16 %v1244
    %v6251 = vunpack.c.l.b16 %v1245
    %v6252 = vunpack.c.h.b16 %v1245
    %v6253 = vunpack.c.l.b16 %v1246
    %v6254 = vunpack.c.h.b16 %v1246
    %v6255 = vunpack.c.l.b16 %v1247
    %v6256 = vunpack.c.h.b16 %v1247
    %v6257 = vunpack.c.l.b16 %v1248
    %v6258 = vunpack.c.h.b16 %v1248
    %v6259 = vunpack.c.l.b16 %v1249
    %v6260 = vunpack.c.h.b16 %v1249
    %v6261 = vunpack.c.l.b16 %v1250
    %v6262 = vunpack.c.h.b16 %v1250
    %v6263 = vunpack.c.l.b16 %v1251
    %v6264 = vunpack.c.h.b16 %v1251
    %v6265 = vunpack.c.l.b16 %v1252
    %v6266 = vunpack.c.h.b16 %v1252
    %v6267 = vunpack.c.l.b16 %v1253
    %v6268 = vunpack.c.h.b16 %v1253
    %v6269 = vunpack.c.l.b16 %v1254
    %v6270 = vunpack.c.h.b16 %v1254
    %v6271 = vunpack.c.l.b16 %v1255
    %v6272 = vunpack.c.h.b16 %v1255
    %v6273 = vunpack.c.l.b16 %v1256
    %v6274 = vunpack.c.h.b16 %v1256
    %v6275 = vunpack.c.l.b16 %v1257
    %v6276 = vunpack.c.h.b16 %v1257
    %v6277 = vunpack.c.l.b16 %v1258
    %v6278 = vunpack.c.h.b16 %v1258
    %v6279 = vunpack.c.l.b16 %v1259
    %v6280 = vunpack.c.h.b16 %v1259
    %v6281 = vunpack.c.l.b16 %v1260
    %v6282 = vunpack.c.h.b16 %v1260
    %v6283 = vunpack.c.l.b16 %v1261
    %v6284 = vunpack.c.h.b16 %v1261
    %v6285 = vunpack.c.l.b16 %v1262
    %v6286 = vunpack.c.h.b16 %v1262
    %v6287 = vunpack.c.l.b16 %v1263
    %v6288 = vunpack.c.h.b16 %v1263
    %v6289 = vunpack.c.l.b16 %v1264
    %v6290 = vunpack.c.h.b16 %v1264
    %v6291 = vunpack.c.l.b16 %v1265
    %v6292 = vunpack.c.h.b16 %v1265
    %v6293 = vunpack.c.l.b16 %v1266
    %v6294 = vunpack.c.h.b16 %v1266
    %v6295 = vunpack.c.l.b16 %v1267
    %v6296 = vunpack.c.h.b16 %v1267
    %v6297 = vunpack.c.l.b16 %v1268
    %v6298 = vunpack.c.h.b16 %v1268
    %v6299 = vunpack.c.l.b16 %v1269
    %v6300 = vunpack.c.h.b16 %v1269
    %v6301 = vunpack.c.l.b16 %v1270
    %v6302 = vunpack.c.h.b16 %v1270
    %v6303 = vunpack.c.l.b16 %v1271
    %v6304 = vunpack.c.h.b16 %v1271
    %v6305 = vunpack.c.l.b16 %v1272
    %v6306 = vunpack.c.h.b16 %v1272
    %v6307 = vunpack.c.l.b16 %v1273
    %v6308 = vunpack.c.h.b16 %v1273
    %v6309 = vunpack.c.l.b16 %v1274
    %v6310 = vunpack.c.h.b16 %v1274
    %v6311 = vunpack.c.l.b16 %v1275
    %v6312 = vunpack.c.h.b16 %v1275
    %v6313 = vunpack.c.l.b16 %v1276
    %v6314 = vunpack.c.h.b16 %v1276
    %v6315 = vunpack.c.l.b16 %v1277
    %v6316 = vunpack.c.h.b16 %v1277
    %v6317 = vunpack.c.l.b16 %v1278
    %v6318 = vunpack.c.h.b16 %v1278
    %v6319 = vunpack.c.l.b16 %v1279
    %v6320 = vunpack.c.h.b16 %v1279
    %v6321 = vunpack.c.l.b16 %v1280
    %v6322 = vunpack.c.h.b16 %v1280
    %v6323 = vunpack.c.l.b16 %v1281
    %v6324 = vunpack.c.h.b16 %v1281
    %v6325 = vunpack.c.l.b16 %v1282
    %v6326 = vunpack.c.h.b16 %v1282
    %v6327 = vunpack.c.l.b16 %v1283
    %v6328 = vunpack.c.h.b16 %v1283
    %v6329 = vunpack.c.l.b16 %v1284
    %v6330 = vunpack.c.h.b16 %v1284
    %v6331 = vunpack.c.l.b16 %v1285
    %v6332 = vunpack.c.h.b16 %v1285
    %v6333 = vunpack.c.l.b16 %v1286
    %v6334 = vunpack.c.h.b16 %v1286
    %v6335 = vunpack.c.l.b16 %v1287
    %v6336 = vunpack.c.h.b16 %v1287
    %v6337 = vunpack.c.l.b16 %v1288
    %v6338 = vunpack.c.h.b16 %v1288
    %v6339 = vunpack.c.l.b16 %v1289
    %v6340 = vunpack.c.h.b16 %v1289
    %v6341 = vunpack.c.l.b16 %v1290
    %v6342 = vunpack.c.h.b16 %v1290
    %v6343 = vunpack.c.l.b16 %v1291
    %v6344 = vunpack.c.h.b16 %v1291
    %v6345 = vunpack.c.l.b16 %v1292
    %v6346 = vunpack.c.h.b16 %v1292
    %v6347 = vunpack.c.l.b16 %v1293
    %v6348 = vunpack.c.h.b16 %v1293
    %v6349 = vunpack.c.l.b16 %v1294
    %v6350 = vunpack.c.h.b16 %v1294
    %v6351 = vunpack.c.l.b16 %v1295
    %v6352 = vunpack.c.h.b16 %v1295
    %v6353 = vunpack.c.l.b16 %v1296
    %v6354 = vunpack.c.h.b16 %v1296
    %v6355 = vunpack.c.l.b16 %v1297
    %v6356 = vunpack.c.h.b16 %v1297
    %v6357 = vunpack.c.l.b16 %v1298
    %v6358 = vunpack.c.h.b16 %v1298
    %v6359 = vunpack.c.l.b16 %v1299
    %v6360 = vunpack.c.h.b16 %v1299
    %v6361 = vunpack.c.l.b16 %v1300
    %v6362 = vunpack.c.h.b16 %v1300
    %v6363 = vunpack.c.l.b16 %v1301
    %v6364 = vunpack.c.h.b16 %v1301
    %v6365 = vunpack.c.l.b16 %v1302
    %v6366 = vunpack.c.h.b16 %v1302
    %v6367 = vunpack.c.l.b16 %v1303
    %v6368 = vunpack.c.h.b16 %v1303
    %v6369 = vunpack.c.l.b16 %v1304
    %v6370 = vunpack.c.h.b16 %v1304
    %v6371 = vunpack.c.l.b16 %v1305
    %v6372 = vunpack.c.h.b16 %v1305
    %v6373 = vunpack.c.l.b16 %v1306
    %v6374 = vunpack.c.h.b16 %v1306
    %v6375 = vunpack.c.l.b16 %v1307
    %v6376 = vunpack.c.h.b16 %v1307
    %v6377 = vunpack.c.l.b16 %v1308
    %v6378 = vunpack.c.h.b16 %v1308
    %v6379 = vunpack.c.l.b16 %v1309
    %v6380 = vunpack.c.h.b16 %v1309
    %v6381 = vunpack.c.l.b16 %v1310
    %v6382 = vunpack.c.h.b16 %v1310
    %v6383 = vunpack.c.l.b16 %v1311
    %v6384 = vunpack.c.h.b16 %v1311
    %v6385 = vunpack.c.l.b16 %v1312
    %v6386 = vunpack.c.h.b16 %v1312
    %v6387 = vunpack.c.l.b16 %v1313
    %v6388 = vunpack.c.h.b16 %v1313
    %v6389 = vunpack.c.l.b16 %v1314
    %v6390 = vunpack.c.h.b16 %v1314
    %v6391 = vunpack.c.l.b16 %v1315
    %v6392 = vunpack.c.h.b16 %v1315
    %v6393 = vunpack.c.l.b16 %v1316
    %v6394 = vunpack.c.h.b16 %v1316
    %v6395 = vunpack.c.l.b16 %v1317
    %v6396 = vunpack.c.h.b16 %v1317
    %v6397 = vunpack.c.l.b16 %v1318
    %v6398 = vunpack.c.h.b16 %v1318
    %v6399 = vunpack.c.l.b16 %v1319
    %v6400 = vunpack.c.h.b16 %v1319
    %v6401 = vunpack.c.l.b16 %v1320
    %v6402 = vunpack.c.h.b16 %v1320
    %v6403 = vunpack.c.l.b16 %v1321
    %v6404 = vunpack.c.h.b16 %v1321
    %v6405 = vunpack.c.l.b16 %v1322
    %v6406 = vunpack.c.h.b16 %v1322
    %v6407 = vunpack.c.l.b16 %v1323
    %v6408 = vunpack.c.h.b16 %v1323
    %v6409 = vunpack.c.l.b16 %v1324
    %v6410 = vunpack.c.h.b16 %v1324
    %v6411 = vunpack.c.l.b16 %v1325
    %v6412 = vunpack.c.h.b16 %v1325
    %v6413 = vunpack.c.l.b16 %v1326
    %v6414 = vunpack.c.h.b16 %v1326
    %v6415 = vunpack.c.l.b16 %v1327
    %v6416 = vunpack.c.h.b16 %v1327
    %v6417 = vunpack.c.l.b16 %v1328
    %v6418 = vunpack.c.h.b16 %v1328
    %v6419 = vunpack.c.l.b16 %v1329
    %v6420 = vunpack.c.h.b16 %v1329
    %v6421 = vunpack.c.l.b16 %v1330
    %v6422 = vunpack.c.h.b16 %v1330
    %v6423 = vunpack.c.l.b16 %v1331
    %v6424 = vunpack.c.h.b16 %v1331
    %v6425 = vunpack.c.l.b16 %v1332
    %v6426 = vunpack.c.h.b16 %v1332
    %v6427 = vunpack.c.l.b16 %v1333
    %v6428 = vunpack.c.h.b16 %v1333
    %v6429 = vunpack.c.l.b16 %v1334
    %v6430 = vunpack.c.h.b16 %v1334
    %v6431 = vunpack.c.l.b16 %v1335
    %v6432 = vunpack.c.h.b16 %v1335
    %v6433 = vpack.c.b16 %v5413, %v5409
    %v6434 = vpack.c.b16 %v5414, %v5410
    %v6435 = vpack.c.b16 %v5415, %v5411
    %v6436 = vpack.c.b16 %v5416, %v5412
    %v6437 = vpack.c.b16 %v5421, %v5417
    %v6438 = vpack.c.b16 %v5422, %v5418
    %v6439 = vpack.c.b16 %v5423, %v5419
    %v6440 = vpack.c.b16 %v5424, %v5420
    %v6441 = vpack.c.b16 %v5429, %v5425
    %v6442 = vpack.c.b16 %v5430, %v5426
    %v6443 = vpack.c.b16 %v5431, %v5427
    %v6444 = vpack.c.b16 %v5432, %v5428
    %v6445 = vpack.c.b16 %v5437, %v5433
    %v6446 = vpack.c.b16 %v5438, %v5434
    %v6447 = vpack.c.b16 %v5439, %v5435
    %v6448 = vpack.c.b16 %v5440, %v5436
    %v6449 = vpack.c.b16 %v5445, %v5441
    %v6450 = vpack.c.b16 %v5446, %v5442
    %v6451 = vpack.c.b16 %v5447, %v5443
    %v6452 = vpack.c.b16 %v5448, %v5444
    %v6453 = vpack.c.b16 %v5453, %v5449
    %v6454 = vpack.c.b16 %v5454, %v5450
    %v6455 = vpack.c.b16 %v5455, %v5451
    %v6456 = vpack.c.b16 %v5456, %v5452
    %v6457 = vpack.c.b16 %v5461, %v5457
    %v6458 = vpack.c.b16 %v5462, %v5458
    %v6459 = vpack.c.b16 %v5463, %v5459
    %v6460 = vpack.c.b16 %v5464, %v5460
    %v6461 = vpack.c.b16 %v5469, %v5465
    %v6462 = vpack.c.b16 %v5470, %v5466
    %v6463 = vpack.c.b16 %v5471, %v5467
    %v6464 = vpack.c.b16 %v5472, %v5468
    %v6465 = vpack.c.b16 %v5477, %v5473
    %v6466 = vpack.c.b16 %v5478, %v5474
    %v6467 = vpack.c.b16 %v5479, %v5475
    %v6468 = vpack.c.b16 %v5480, %v5476
    %v6469 = vpack.c.b16 %v5485, %v5481
    %v6470 = vpack.c.b16 %v5486, %v5482
    %v6471 = vpack.c.b16 %v5487, %v5483
    %v6472 = vpack.c.b16 %v5488, %v5484
    %v6473 = vpack.c.b16 %v5493, %v5489
    %v6474 = vpack.c.b16 %v5494, %v5490
    %v6475 = vpack.c.b16 %v5495, %v5491
    %v6476 = vpack.c.b16 %v5496, %v5492
    %v6477 = vpack.c.b16 %v5501, %v5497
    %v6478 = vpack.c.b16 %v5502, %v5498
    %v6479 = vpack.c.b16 %v5503, %v5499
    %v6480 = vpack.c.b16 %v5504, %v5500
    %v6481 = vpack.c.b16 %v5509, %v5505
    %v6482 = vpack.c.b16 %v5510, %v5506
    %v6483 = vpack.c.b16 %v5511, %v5507
    %v6484 = vpack.c.b16 %v5512, %v5508
    %v6485 = vpack.c.b16 %v5517, %v5513
    %v6486 = vpack.c.b16 %v5518, %v5514
    %v6487 = vpack.c.b16 %v5519, %v5515
    %v6488 = vpack.c.b16 %v5520, %v5516
    %v6489 = vpack.c.b16 %v5525, %v5521
    %v6490 = vpack.c.b16 %v5526, %v5522
    %v6491 = vpack.c.b16 %v5527, %v5523
    %v6492 = vpack.c.b16 %v5528, %v5524
    %v6493 = vpack.c.b16 %v5533, %v5529
    %v6494 = vpack.c.b16 %v5534, %v5530
    %v6495 = vpack.c.b16 %v5535, %v5531
    %v6496 = vpack.c.b16 %v5536, %v5532
    %v6497 = vpack.c.b16 %v5541, %v5537
    %v6498 = vpack.c.b16 %v5542, %v5538
    %v6499 = vpack.c.b16 %v5543, %v5539
    %v6500 = vpack.c.b16 %v5544, %v5540
    %v6501 = vpack.c.b16 %v5549, %v5545
    %v6502 = vpack.c.b16 %v5550, %v5546
    %v6503 = vpack.c.b16 %v5551, %v5547
    %v6504 = vpack.c.b16 %v5552, %v5548
    %v6505 = vpack.c.b16 %v5557, %v5553
    %v6506 = vpack.c.b16 %v5558, %v5554
    %v6507 = vpack.c.b16 %v5559, %v5555
    %v6508 = vpack.c.b16 %v5560, %v5556
    %v6509 = vpack.c.b16 %v5565, %v5561
    %v6510 = vpack.c.b16 %v5566, %v5562
    %v6511 = vpack.c.b16 %v5567, %v5563
    %v6512 = vpack.c.b16 %v5568, %v5564
    %v6513 = vpack.c.b16 %v5573, %v5569
    %v6514 = vpack.c.b16 %v5574, %v5570
    %v6515 = vpack.c.b16 %v5575, %v5571
    %v6516 = vpack.c.b16 %v5576, %v5572
    %v6517 = vpack.c.b16 %v5581, %v5577
    %v6518 = vpack.c.b16 %v5582, %v5578
    %v6519 = vpack.c.b16 %v5583, %v5579
    %v6520 = vpack.c.b16 %v5584, %v5580
    %v6521 = vpack.c.b16 %v5589, %v5585
    %v6522 = vpack.c.b16 %v5590, %v5586
    %v6523 = vpack.c.b16 %v5591, %v5587
    %v6524 = vpack.c.b16 %v5592, %v5588
    %v6525 = vpack.c.b16 %v5597, %v5593
    %v6526 = vpack.c.b16 %v5598, %v5594
    %v6527 = vpack.c.b16 %v5599, %v5595
    %v6528 = vpack.c.b16 %v5600, %v5596
    %v6529 = vpack.c.b16 %v5605, %v5601
    %v6530 = vpack.c.b16 %v5606, %v5602
    %v6531 = vpack.c.b16 %v5607, %v5603
    %v6532 = vpack.c.b16 %v5608, %v5604
    %v6533 = vpack.c.b16 %v5613, %v5609
    %v6534 = vpack.c.b16 %v5614, %v5610
    %v6535 = vpack.c.b16 %v5615, %v5611
    %v6536 = vpack.c.b16 %v5616, %v5612
    %v6537 = vpack.c.b16 %v5621, %v5617
    %v6538 = vpack.c.b16 %v5622, %v5618
    %v6539 = vpack.c.b16 %v5623, %v5619
    %v6540 = vpack.c.b16 %v5624, %v5620
    %v6541 = vpack.c.b16 %v5629, %v5625
    %v6542 = vpack.c.b16 %v5630, %v5626
    %v6543 = vpack.c.b16 %v5631, %v5627
    %v6544 = vpack.c.b16 %v5632, %v5628
    %v6545 = vpack.c.b16 %v5637, %v5633
    %v6546 = vpack.c.b16 %v5638, %v5634
    %v6547 = vpack.c.b16 %v5639, %v5635
    %v6548 = vpack.c.b16 %v5640, %v5636
    %v6549 = vpack.c.b16 %v5645, %v5641
    %v6550 = vpack.c.b16 %v5646, %v5642
    %v6551 = vpack.c.b16 %v5647, %v5643
    %v6552 = vpack.c.b16 %v5648, %v5644
    %v6553 = vpack.c.b16 %v5653, %v5649
    %v6554 = vpack.c.b16 %v5654, %v5650
    %v6555 = vpack.c.b16 %v5655, %v5651
    %v6556 = vpack.c.b16 %v5656, %v5652
    %v6557 = vpack.c.b16 %v5661, %v5657
    %v6558 = vpack.c.b16 %v5662, %v5658
    %v6559 = vpack.c.b16 %v5663, %v5659
    %v6560 = vpack.c.b16 %v5664, %v5660
    %v6561 = vpack.c.b16 %v5669, %v5665
    %v6562 = vpack.c.b16 %v5670, %v5666
    %v6563 = vpack.c.b16 %v5671, %v5667
    %v6564 = vpack.c.b16 %v5672, %v5668
    %v6565 = vpack.c.b16 %v5677, %v5673
    %v6566 = vpack.c.b16 %v5678, %v5674
    %v6567 = vpack.c.b16 %v5679, %v5675
    %v6568 = vpack.c.b16 %v5680, %v5676
    %v6569 = vpack.c.b16 %v5685, %v5681
    %v6570 = vpack.c.b16 %v5686, %v5682
    %v6571 = vpack.c.b16 %v5687, %v5683
    %v6572 = vpack.c.b16 %v5688, %v5684
    %v6573 = vpack.c.b16 %v5693, %v5689
    %v6574 = vpack.c.b16 %v5694, %v5690
    %v6575 = vpack.c.b16 %v5695, %v5691
    %v6576 = vpack.c.b16 %v5696, %v5692
    %v6577 = vpack.c.b16 %v5701, %v5697
    %v6578 = vpack.c.b16 %v5702, %v5698
    %v6579 = vpack.c.b16 %v5703, %v5699
    %v6580 = vpack.c.b16 %v5704, %v5700
    %v6581 = vpack.c.b16 %v5709, %v5705
    %v6582 = vpack.c.b16 %v5710, %v5706
    %v6583 = vpack.c.b16 %v5711, %v5707
    %v6584 = vpack.c.b16 %v5712, %v5708
    %v6585 = vpack.c.b16 %v5717, %v5713
    %v6586 = vpack.c.b16 %v5718, %v5714
    %v6587 = vpack.c.b16 %v5719, %v5715
    %v6588 = vpack.c.b16 %v5720, %v5716
    %v6589 = vpack.c.b16 %v5725, %v5721
    %v6590 = vpack.c.b16 %v5726, %v5722
    %v6591 = vpack.c.b16 %v5727, %v5723
    %v6592 = vpack.c.b16 %v5728, %v5724
    %v6593 = vpack.c.b16 %v5733, %v5729
    %v6594 = vpack.c.b16 %v5734, %v5730
    %v6595 = vpack.c.b16 %v5735, %v5731
    %v6596 = vpack.c.b16 %v5736, %v5732
    %v6597 = vpack.c.b16 %v5741, %v5737
    %v6598 = vpack.c.b16 %v5742, %v5738
    %v6599 = vpack.c.b16 %v5743, %v5739
    %v6600 = vpack.c.b16 %v5744, %v5740
    %v6601 = vpack.c.b16 %v5749, %v5745
    %v6602 = vpack.c.b16 %v5750, %v5746
    %v6603 = vpack.c.b16 %v5751, %v5747
    %v6604 = vpack.c.b16 %v5752, %v5748
    %v6605 = vpack.c.b16 %v5757, %v5753
    %v6606 = vpack.c.b16 %v5758, %v5754
    %v6607 = vpack.c.b16 %v5759, %v5755
    %v6608 = vpack.c.b16 %v5760, %v5756
    %v6609 = vpack.c.b16 %v5765, %v5761
    %v6610 = vpack.c.b16 %v5766, %v5762
    %v6611 = vpack.c.b16 %v5767, %v5763
    %v6612 = vpack.c.b16 %v5768, %v5764
    %v6613 = vpack.c.b16 %v5773, %v5769
    %v6614 = vpack.c.b16 %v5774, %v5770
    %v6615 = vpack.c.b16 %v5775, %v5771
    %v6616 = vpack.c.b16 %v5776, %v5772
    %v6617 = vpack.c.b16 %v5781, %v5777
    %v6618 = vpack.c.b16 %v5782, %v5778
    %v6619 = vpack.c.b16 %v5783, %v5779
    %v6620 = vpack.c.b16 %v5784, %v5780
    %v6621 = vpack.c.b16 %v5789, %v5785
    %v6622 = vpack.c.b16 %v5790, %v5786
    %v6623 = vpack.c.b16 %v5791, %v5787
    %v6624 = vpack.c.b16 %v5792, %v5788
    %v6625 = vpack.c.b16 %v5797, %v5793
    %v6626 = vpack.c.b16 %v5798, %v5794
    %v6627 = vpack.c.b16 %v5799, %v5795
    %v6628 = vpack.c.b16 %v5800, %v5796
    %v6629 = vpack.c.b16 %v5805, %v5801
    %v6630 = vpack.c.b16 %v5806, %v5802
    %v6631 = vpack.c.b16 %v5807, %v5803
    %v6632 = vpack.c.b16 %v5808, %v5804
    %v6633 = vpack.c.b16 %v5813, %v5809
    %v6634 = vpack.c.b16 %v5814, %v5810
    %v6635 = vpack.c.b16 %v5815, %v5811
    %v6636 = vpack.c.b16 %v5816, %v5812
    %v6637 = vpack.c.b16 %v5821, %v5817
    %v6638 = vpack.c.b16 %v5822, %v5818
    %v6639 = vpack.c.b16 %v5823, %v5819
    %v6640 = vpack.c.b16 %v5824, %v5820
    %v6641 = vpack.c.b16 %v5829, %v5825
    %v6642 = vpack.c.b16 %v5830, %v5826
    %v6643 = vpack.c.b16 %v5831, %v5827
    %v6644 = vpack.c.b16 %v5832, %v5828
    %v6645 = vpack.c.b16 %v5837, %v5833
    %v6646 = vpack.c.b16 %v5838, %v5834
    %v6647 = vpack.c.b16 %v5839, %v5835
    %v6648 = vpack.c.b16 %v5840, %v5836
    %v6649 = vpack.c.b16 %v5845, %v5841
    %v6650 = vpack.c.b16 %v5846, %v5842
    %v6651 = vpack.c.b16 %v5847, %v5843
    %v6652 = vpack.c.b16 %v5848, %v5844
    %v6653 = vpack.c.b16 %v5853, %v5849
    %v6654 = vpack.c.b16 %v5854, %v5850
    %v6655 = vpack.c.b16 %v5855, %v5851
    %v6656 = vpack.c.b16 %v5856, %v5852
    %v6657 = vpack.c.b16 %v5861, %v5857
    %v6658 = vpack.c.b16 %v5862, %v5858
    %v6659 = vpack.c.b16 %v5863, %v5859
    %v6660 = vpack.c.b16 %v5864, %v5860
    %v6661 = vpack.c.b16 %v5869, %v5865
    %v6662 = vpack.c.b16 %v5870, %v5866
    %v6663 = vpack.c.b16 %v5871, %v5867
    %v6664 = vpack.c.b16 %v5872, %v5868
    %v6665 = vpack.c.b16 %v5877, %v5873
    %v6666 = vpack.c.b16 %v5878, %v5874
    %v6667 = vpack.c.b16 %v5879, %v5875
    %v6668 = vpack.c.b16 %v5880, %v5876
    %v6669 = vpack.c.b16 %v5885, %v5881
    %v6670 = vpack.c.b16 %v5886, %v5882
    %v6671 = vpack.c.b16 %v5887, %v5883
    %v6672 = vpack.c.b16 %v5888, %v5884
    %v6673 = vpack.c.b16 %v5893, %v5889
    %v6674 = vpack.c.b16 %v5894, %v5890
    %v6675 = vpack.c.b16 %v5895, %v5891
    %v6676 = vpack.c.b16 %v5896, %v5892
    %v6677 = vpack.c.b16 %v5901, %v5897
    %v6678 = vpack.c.b16 %v5902, %v5898
    %v6679 = vpack.c.b16 %v5903, %v5899
    %v6680 = vpack.c.b16 %v5904, %v5900
    %v6681 = vpack.c.b16 %v5909, %v5905
    %v6682 = vpack.c.b16 %v5910, %v5906
    %v6683 = vpack.c.b16 %v5911, %v5907
    %v6684 = vpack.c.b16 %v5912, %v5908
    %v6685 = vpack.c.b16 %v5917, %v5913
    %v6686 = vpack.c.b16 %v5918, %v5914
    %v6687 = vpack.c.b16 %v5919, %v5915
    %v6688 = vpack.c.b16 %v5920, %v5916
    %v6689 = vpack.c.b16 %v5925, %v5921
    %v6690 = vpack.c.b16 %v5926, %v5922
    %v6691 = vpack.c.b16 %v5927, %v5923
    %v6692 = vpack.c.b16 %v5928, %v5924
    %v6693 = vpack.c.b16 %v5933, %v5929
    %v6694 = vpack.c.b16 %v5934, %v5930
    %v6695 = vpack.c.b16 %v5935, %v5931
    %v6696 = vpack.c.b16 %v5936, %v5932
    %v6697 = vpack.c.b16 %v5941, %v5937
    %v6698 = vpack.c.b16 %v5942, %v5938
    %v6699 = vpack.c.b16 %v5943, %v5939
    %v6700 = vpack.c.b16 %v5944, %v5940
    %v6701 = vpack.c.b16 %v5949, %v5945
    %v6702 = vpack.c.b16 %v5950, %v5946
    %v6703 = vpack.c.b16 %v5951, %v5947
    %v6704 = vpack.c.b16 %v5952, %v5948
    %v6705 = vpack.c.b16 %v5957, %v5953
    %v6706 = vpack.c.b16 %v5958, %v5954
    %v6707 = vpack.c.b16 %v5959, %v5955
    %v6708 = vpack.c.b16 %v5960, %v5956
    %v6709 = vpack.c.b16 %v5965, %v5961
    %v6710 = vpack.c.b16 %v5966, %v5962
    %v6711 = vpack.c.b16 %v5967, %v5963
    %v6712 = vpack.c.b16 %v5968, %v5964
    %v6713 = vpack.c.b16 %v5973, %v5969
    %v6714 = vpack.c.b16 %v5974, %v5970
    %v6715 = vpack.c.b16 %v5975, %v5971
    %v6716 = vpack.c.b16 %v5976, %v5972
    %v6717 = vpack.c.b16 %v5981, %v5977
    %v6718 = vpack.c.b16 %v5982, %v5978
    %v6719 = vpack.c.b16 %v5983, %v5979
    %v6720 = vpack.c.b16 %v5984, %v5980
    %v6721 = vpack.c.b16 %v5989, %v5985
    %v6722 = vpack.c.b16 %v5990, %v5986
    %v6723 = vpack.c.b16 %v5991, %v5987
    %v6724 = vpack.c.b16 %v5992, %v5988
    %v6725 = vpack.c.b16 %v5997, %v5993
    %v6726 = vpack.c.b16 %v5998, %v5994
    %v6727 = vpack.c.b16 %v5999, %v5995
    %v6728 = vpack.c.b16 %v6000, %v5996
    %v6729 = vpack.c.b16 %v6005, %v6001
    %v6730 = vpack.c.b16 %v6006, %v6002
    %v6731 = vpack.c.b16 %v6007, %v6003
    %v6732 = vpack.c.b16 %v6008, %v6004
    %v6733 = vpack.c.b16 %v6013, %v6009
    %v6734 = vpack.c.b16 %v6014, %v6010
    %v6735 = vpack.c.b16 %v6015, %v6011
    %v6736 = vpack.c.b16 %v6016, %v6012
    %v6737 = vpack.c.b16 %v6021, %v6017
    %v6738 = vpack.c.b16 %v6022, %v6018
    %v6739 = vpack.c.b16 %v6023, %v6019
    %v6740 = vpack.c.b16 %v6024, %v6020
    %v6741 = vpack.c.b16 %v6029, %v6025
    %v6742 = vpack.c.b16 %v6030, %v6026
    %v6743 = vpack.c.b16 %v6031, %v6027
    %v6744 = vpack.c.b16 %v6032, %v6028
    %v6745 = vpack.c.b16 %v6037, %v6033
    %v6746 = vpack.c.b16 %v6038, %v6034
    %v6747 = vpack.c.b16 %v6039, %v6035
    %v6748 = vpack.c.b16 %v6040, %v6036
    %v6749 = vpack.c.b16 %v6045, %v6041
    %v6750 = vpack.c.b16 %v6046, %v6042
    %v6751 = vpack.c.b16 %v6047, %v6043
    %v6752 = vpack.c.b16 %v6048, %v6044
    %v6753 = vpack.c.b16 %v6053, %v6049
    %v6754 = vpack.c.b16 %v6054, %v6050
    %v6755 = vpack.c.b16 %v6055, %v6051
    %v6756 = vpack.c.b16 %v6056, %v6052
    %v6757 = vpack.c.b16 %v6061, %v6057
    %v6758 = vpack.c.b16 %v6062, %v6058
    %v6759 = vpack.c.b16 %v6063, %v6059
    %v6760 = vpack.c.b16 %v6064, %v6060
    %v6761 = vpack.c.b16 %v6069, %v6065
    %v6762 = vpack.c.b16 %v6070, %v6066
    %v6763 = vpack.c.b16 %v6071, %v6067
    %v6764 = vpack.c.b16 %v6072, %v6068
    %v6765 = vpack.c.b16 %v6077, %v6073
    %v6766 = vpack.c.b16 %v6078, %v6074
    %v6767 = vpack.c.b16 %v6079, %v6075
    %v6768 = vpack.c.b16 %v6080, %v6076
    %v6769 = vpack.c.b16 %v6085, %v6081
    %v6770 = vpack.c.b16 %v6086, %v6082
    %v6771 = vpack.c.b16 %v6087, %v6083
    %v6772 = vpack.c.b16 %v6088, %v6084
    %v6773 = vpack.c.b16 %v6093, %v6089
    %v6774 = vpack.c.b16 %v6094, %v6090
    %v6775 = vpack.c.b16 %v6095, %v6091
    %v6776 = vpack.c.b16 %v6096, %v6092
    %v6777 = vpack.c.b16 %v6101, %v6097
    %v6778 = vpack.c.b16 %v6102, %v6098
    %v6779 = vpack.c.b16 %v6103, %v6099
    %v6780 = vpack.c.b16 %v6104, %v6100
    %v6781 = vpack.c.b16 %v6109, %v6105
    %v6782 = vpack.c.b16 %v6110, %v6106
    %v6783 = vpack.c.b16 %v6111, %v6107
    %v6784 = vpack.c.b16 %v6112, %v6108
    %v6785 = vpack.c.b16 %v6117, %v6113
    %v6786 = vpack.c.b16 %v6118, %v6114
    %v6787 = vpack.c.b16 %v6119, %v6115
    %v6788 = vpack.c.b16 %v6120, %v6116
    %v6789 = vpack.c.b16 %v6125, %v6121
    %v6790 = vpack.c.b16 %v6126, %v6122
    %v6791 = vpack.c.b16 %v6127, %v6123
    %v6792 = vpack.c.b16 %v6128, %v6124
    %v6793 = vpack.c.b16 %v6133, %v6129
    %v6794 = vpack.c.b16 %v6134, %v6130
    %v6795 = vpack.c.b16 %v6135, %v6131
    %v6796 = vpack.c.b16 %v6136, %v6132
    %v6797 = vpack.c.b16 %v6141, %v6137
    %v6798 = vpack.c.b16 %v6142, %v6138
    %v6799 = vpack.c.b16 %v6143, %v6139
    %v6800 = vpack.c.b16 %v6144, %v6140
    %v6801 = vpack.c.b16 %v6149, %v6145
    %v6802 = vpack.c.b16 %v6150, %v6146
    %v6803 = vpack.c.b16 %v6151, %v6147
    %v6804 = vpack.c.b16 %v6152, %v6148
    %v6805 = vpack.c.b16 %v6157, %v6153
    %v6806 = vpack.c.b16 %v6158, %v6154
    %v6807 = vpack.c.b16 %v6159, %v6155
    %v6808 = vpack.c.b16 %v6160, %v6156
    %v6809 = vpack.c.b16 %v6165, %v6161
    %v6810 = vpack.c.b16 %v6166, %v6162
    %v6811 = vpack.c.b16 %v6167, %v6163
    %v6812 = vpack.c.b16 %v6168, %v6164
    %v6813 = vpack.c.b16 %v6173, %v6169
    %v6814 = vpack.c.b16 %v6174, %v6170
    %v6815 = vpack.c.b16 %v6175, %v6171
    %v6816 = vpack.c.b16 %v6176, %v6172
    %v6817 = vpack.c.b16 %v6181, %v6177
    %v6818 = vpack.c.b16 %v6182, %v6178
    %v6819 = vpack.c.b16 %v6183, %v6179
    %v6820 = vpack.c.b16 %v6184, %v6180
    %v6821 = vpack.c.b16 %v6189, %v6185
    %v6822 = vpack.c.b16 %v6190, %v6186
    %v6823 = vpack.c.b16 %v6191, %v6187
    %v6824 = vpack.c.b16 %v6192, %v6188
    %v6825 = vpack.c.b16 %v6197, %v6193
    %v6826 = vpack.c.b16 %v6198, %v6194
    %v6827 = vpack.c.b16 %v6199, %v6195
    %v6828 = vpack.c.b16 %v6200, %v6196
    %v6829 = vpack.c.b16 %v6205, %v6201
    %v6830 = vpack.c.b16 %v6206, %v6202
    %v6831 = vpack.c.b16 %v6207, %v6203
    %v6832 = vpack.c.b16 %v6208, %v6204
    %v6833 = vpack.c.b16 %v6213, %v6209
    %v6834 = vpack.c.b16 %v6214, %v6210
    %v6835 = vpack.c.b16 %v6215, %v6211
    %v6836 = vpack.c.b16 %v6216, %v6212
    %v6837 = vpack.c.b16 %v6221, %v6217
    %v6838 = vpack.c.b16 %v6222, %v6218
    %v6839 = vpack.c.b16 %v6223, %v6219
    %v6840 = vpack.c.b16 %v6224, %v6220
    %v6841 = vpack.c.b16 %v6229, %v6225
    %v6842 = vpack.c.b16 %v6230, %v6226
    %v6843 = vpack.c.b16 %v6231, %v6227
    %v6844 = vpack.c.b16 %v6232, %v6228
    %v6845 = vpack.c.b16 %v6237, %v6233
    %v6846 = vpack.c.b16 %v6238, %v6234
    %v6847 = vpack.c.b16 %v6239, %v6235
    %v6848 = vpack.c.b16 %v6240, %v6236
    %v6849 = vpack.c.b16 %v6245, %v6241
    %v6850 = vpack.c.b16 %v6246, %v6242
    %v6851 = vpack.c.b16 %v6247, %v6243
    %v6852 = vpack.c.b16 %v6248, %v6244
    %v6853 = vpack.c.b16 %v6253, %v6249
    %v6854 = vpack.c.b16 %v6254, %v6250
    %v6855 = vpack.c.b16 %v6255, %v6251
    %v6856 = vpack.c.b16 %v6256, %v6252
    %v6857 = vpack.c.b16 %v6261, %v6257
    %v6858 = vpack.c.b16 %v6262, %v6258
    %v6859 = vpack.c.b16 %v6263, %v6259
    %v6860 = vpack.c.b16 %v6264, %v6260
    %v6861 = vpack.c.b16 %v6269, %v6265
    %v6862 = vpack.c.b16 %v6270, %v6266
    %v6863 = vpack.c.b16 %v6271, %v6267
    %v6864 = vpack.c.b16 %v6272, %v6268
    %v6865 = vpack.c.b16 %v6277, %v6273
    %v6866 = vpack.c.b16 %v6278, %v6274
    %v6867 = vpack.c.b16 %v6279, %v6275
    %v6868 = vpack.c.b16 %v6280, %v6276
    %v6869 = vpack.c.b16 %v6285, %v6281
    %v6870 = vpack.c.b16 %v6286, %v6282
    %v6871 = vpack.c.b16 %v6287, %v6283
    %v6872 = vpack.c.b16 %v6288, %v6284
    %v6873 = vpack.c.b16 %v6293, %v6289
    %v6874 = vpack.c.b16 %v6294, %v6290
    %v6875 = vpack.c.b16 %v6295, %v6291
    %v6876 = vpack.c.b16 %v6296, %v6292
    %v6877 = vpack.c.b16 %v6301, %v6297
    %v6878 = vpack.c.b16 %v6302, %v6298
    %v6879 = vpack.c.b16 %v6303, %v6299
    %v6880 = vpack.c.b16 %v6304, %v6300
    %v6881 = vpack.c.b16 %v6309, %v6305
    %v6882 = vpack.c.b16 %v6310, %v6306
    %v6883 = vpack.c.b16 %v6311, %v6307
    %v6884 = vpack.c.b16 %v6312, %v6308
    %v6885 = vpack.c.b16 %v6317, %v6313
    %v6886 = vpack.c.b16 %v6318, %v6314
    %v6887 = vpack.c.b16 %v6319, %v6315
    %v6888 = vpack.c.b16 %v6320, %v6316
    %v6889 = vpack.c.b16 %v6325, %v6321
    %v6890 = vpack.c.b16 %v6326, %v6322
    %v6891 = vpack.c.b16 %v6327, %v6323
    %v6892 = vpack.c.b16 %v6328, %v6324
    %v6893 = vpack.c.b16 %v6333, %v6329
    %v6894 = vpack.c.b16 %v6334, %v6330
    %v6895 = vpack.c.b16 %v6335, %v6331
    %v6896 = vpack.c.b16 %v6336, %v6332
    %v6897 = vpack.c.b16 %v6341, %v6337
    %v6898 = vpack.c.b16 %v6342, %v6338
    %v6899 = vpack.c.b16 %v6343, %v6339
    %v6900 = vpack.c.b16 %v6344, %v6340
    %v6901 = vpack.c.b16 %v6349, %v6345
    %v6902 = vpack.c.b16 %v6350, %v6346
    %v6903 = vpack.c.b16 %v6351, %v6347
    %v6904 = vpack.c.b16 %v6352, %v6348
    %v6905 = vpack.c.b16 %v6357, %v6353
    %v6906 = vpack.c.b16 %v6358, %v6354
    %v6907 = vpack.c.b16 %v6359, %v6355
    %v6908 = vpack.c.b16 %v6360, %v6356
    %v6909 = vpack.c.b16 %v6365, %v6361
    %v6910 = vpack.c.b16 %v6366, %v6362
    %v6911 = vpack.c.b16 %v6367, %v6363
    %v6912 = vpack.c.b16 %v6368, %v6364
    %v6913 = vpack.c.b16 %v6373, %v6369
    %v6914 = vpack.c.b16 %v6374, %v6370
    %v6915 = vpack.c.b16 %v6375, %v6371
    %v6916 = vpack.c.b16 %v6376, %v6372
    %v6917 = vpack.c.b16 %v6381, %v6377
    %v6918 = vpack.c.b16 %v6382, %v6378
    %v6919 = vpack.c.b16 %v6383, %v6379
    %v6920 = vpack.c.b16 %v6384, %v6380
    %v6921 = vpack.c.b16 %v6389, %v6385
    %v6922 = vpack.c.b16 %v6390, %v6386
    %v6923 = vpack.c.b16 %v6391, %v6387
    %v6924 = vpack.c.b16 %v6392, %v6388
    %v6925 = vpack.c.b16 %v6397, %v6393
    %v6926 = vpack.c.b16 %v6398, %v6394
    %v6927 = vpack.c.b16 %v6399, %v6395
    %v6928 = vpack.c.b16 %v6400, %v6396
    %v6929 = vpack.c.b16 %v6405, %v6401
    %v6930 = vpack.c.b16 %v6406, %v6402
    %v6931 = vpack.c.b16 %v6407, %v6403
    %v6932 = vpack.c.b16 %v6408, %v6404
    %v6933 = vpack.c.b16 %v6413, %v6409
    %v6934 = vpack.c.b16 %v6414, %v6410
    %v6935 = vpack.c.b16 %v6415, %v6411
    %v6936 = vpack.c.b16 %v6416, %v6412
    %v6937 = vpack.c.b16 %v6421, %v6417
    %v6938 = vpack.c.b16 %v6422, %v6418
    %v6939 = vpack.c.b16 %v6423, %v6419
    %v6940 = vpack.c.b16 %v6424, %v6420
    %v6941 = vpack.c.b16 %v6429, %v6425
    %v6942 = vpack.c.b16 %v6430, %v6426
    %v6943 = vpack.c.b16 %v6431, %v6427
    %v6944 = vpack.c.b16 %v6432, %v6428
    %7457 = vmatprep.subr.bf16.mxu0 %v6434
    %7458 = vmatpush1.bf16.msra.mxu0 %v6433
    %7459 = vmatprep.subr.bf16.mxu0 %v6438
    %7460 = vmatpush1.bf16.msra.mxu0 %v6437
    %7461 = vmatprep.subr.bf16.mxu0 %v6442
    %7462 = vmatpush1.bf16.msra.mxu0 %v6441
    %7463 = vmatprep.subr.bf16.mxu0 %v6446
    %7464 = vmatpush1.bf16.msra.mxu0 %v6445
    %7465 = vmatprep.subr.bf16.mxu0 %v6450
    %7466 = vmatpush1.bf16.msra.mxu0 %v6449
    %7467 = vmatprep.subr.bf16.mxu0 %v6454
    %7468 = vmatpush1.bf16.msra.mxu0 %v6453
    %7469 = vmatprep.subr.bf16.mxu0 %v6458
    %7470 = vmatpush1.bf16.msra.mxu0 %v6457
    %7471 = vmatprep.subr.bf16.mxu0 %v6462
    %7472 = vmatpush1.bf16.msra.mxu0 %v6461
    %7473 = vmatprep.subr.bf16.mxu0 %v6466
    %7474 = vmatpush1.bf16.msra.mxu0 %v6465
    %7475 = vmatprep.subr.bf16.mxu0 %v6470
    %7476 = vmatpush1.bf16.msra.mxu0 %v6469
    %7477 = vmatprep.subr.bf16.mxu0 %v6474
    %7478 = vmatpush1.bf16.msra.mxu0 %v6473
    %7479 = vmatprep.subr.bf16.mxu0 %v6478
    %7480 = vmatpush1.bf16.msra.mxu0 %v6477
    %7481 = vmatprep.subr.bf16.mxu0 %v6482
    %7482 = vmatpush1.bf16.msra.mxu0 %v6481
    %7483 = vmatprep.subr.bf16.mxu0 %v6486
    %7484 = vmatpush1.bf16.msra.mxu0 %v6485
    %7485 = vmatprep.subr.bf16.mxu0 %v6490
    %7486 = vmatpush1.bf16.msra.mxu0 %v6489
    %7487 = vmatprep.subr.bf16.mxu0 %v6494
    %7488 = vmatpush1.bf16.msra.mxu0 %v6493
    %7489 = vmatprep.mubr.bf16.mxu0 %v4861
    %7490 = vmatmul.mubr.bf16.gmra.mrb[0].mxu0 %v4860
    %v7491 = vpop.f32.mrb[0].mxu0
    %v7492 = vadd.f32 %v4880, %v7491
    %v7493 = vpop.f32.mrb[0].mxu0
    %v7494 = vadd.f32 %v4884, %v7493
    %v7495 = vpop.f32.mrb[0].mxu0
    %v7496 = vpop.f32.mrb[0].mxu0
    %7497 = vdwg.mxu0
    %7498 = vmatprep.subr.bf16.mxu0 %v6498
    %7499 = vmatpush1.bf16.msra.mxu0 %v6497
    %7500 = vmatprep.subr.bf16.mxu0 %v6502
    %7501 = vmatpush1.bf16.msra.mxu0 %v6501
    %7502 = vmatprep.subr.bf16.mxu0 %v6506
    %7503 = vmatpush1.bf16.msra.mxu0 %v6505
    %7504 = vmatprep.subr.bf16.mxu0 %v6510
    %7505 = vmatpush1.bf16.msra.mxu0 %v6509
    %7506 = vmatprep.subr.bf16.mxu0 %v6514
    %7507 = vmatpush1.bf16.msra.mxu0 %v6513
    %7508 = vmatprep.subr.bf16.mxu0 %v6518
    %7509 = vmatpush1.bf16.msra.mxu0 %v6517
    %7510 = vmatprep.subr.bf16.mxu0 %v6522
    %7511 = vmatpush1.bf16.msra.mxu0 %v6521
    %7512 = vmatprep.subr.bf16.mxu0 %v6526
    %7513 = vmatpush1.bf16.msra.mxu0 %v6525
    %7514 = vmatprep.subr.bf16.mxu0 %v6530
    %7515 = vmatpush1.bf16.msra.mxu0 %v6529
    %7516 = vmatprep.subr.bf16.mxu0 %v6534
    %7517 = vmatpush1.bf16.msra.mxu0 %v6533
    %7518 = vmatprep.subr.bf16.mxu0 %v6538
    %7519 = vmatpush1.bf16.msra.mxu0 %v6537
    %7520 = vmatprep.subr.bf16.mxu0 %v6542
    %7521 = vmatpush1.bf16.msra.mxu0 %v6541
    %7522 = vmatprep.subr.bf16.mxu0 %v6546
    %7523 = vmatpush1.bf16.msra.mxu0 %v6545
    %7524 = vmatprep.subr.bf16.mxu0 %v6550
    %7525 = vmatpush1.bf16.msra.mxu0 %v6549
    %7526 = vmatprep.subr.bf16.mxu0 %v6554
    %7527 = vmatpush1.bf16.msra.mxu0 %v6553
    %7528 = vmatprep.subr.bf16.mxu0 %v6558
    %7529 = vmatpush1.bf16.msra.mxu0 %v6557
    %7530 = vmatprep.mubr.bf16.mxu0 %v4863
    %7531 = vmatmul.mubr.bf16.gmra.mrb[0].mxu0 %v4862
    %v7532 = vpop.f32.mrb[0].mxu0
    %v7533 = vadd.f32 %v7492, %v7532
    %v7534 = vpop.f32.mrb[0].mxu0
    %v7535 = vadd.f32 %v7494, %v7534
    %v7536 = vpop.f32.mrb[0].mxu0
    %v7537 = vpop.f32.mrb[0].mxu0
    %7538 = vdwg.mxu0
    %7539 = vmatprep.subr.bf16.mxu0 %v6562
    %7540 = vmatpush1.bf16.msra.mxu0 %v6561
    %7541 = vmatprep.subr.bf16.mxu0 %v6566
    %7542 = vmatpush1.bf16.msra.mxu0 %v6565
    %7543 = vmatprep.subr.bf16.mxu0 %v6570
    %7544 = vmatpush1.bf16.msra.mxu0 %v6569
    %7545 = vmatprep.subr.bf16.mxu0 %v6574
    %7546 = vmatpush1.bf16.msra.mxu0 %v6573
    %7547 = vmatprep.subr.bf16.mxu0 %v6578
    %7548 = vmatpush1.bf16.msra.mxu0 %v6577
    %7549 = vmatprep.subr.bf16.mxu0 %v6582
    %7550 = vmatpush1.bf16.msra.mxu0 %v6581
    %7551 = vmatprep.subr.bf16.mxu0 %v6586
    %7552 = vmatpush1.bf16.msra.mxu0 %v6585
    %7553 = vmatprep.subr.bf16.mxu0 %v6590
    %7554 = vmatpush1.bf16.msra.mxu0 %v6589
    %7555 = vmatprep.subr.bf16.mxu0 %v6594
    %7556 = vmatpush1.bf16.msra.mxu0 %v6593
    %7557 = vmatprep.subr.bf16.mxu0 %v6598
    %7558 = vmatpush1.bf16.msra.mxu0 %v6597
    %7559 = vmatprep.subr.bf16.mxu0 %v6602
    %7560 = vmatpush1.bf16.msra.mxu0 %v6601
    %7561 = vmatprep.subr.bf16.mxu0 %v6606
    %7562 = vmatpush1.bf16.msra.mxu0 %v6605
    %7563 = vmatprep.subr.bf16.mxu0 %v6610
    %7564 = vmatpush1.bf16.msra.mxu0 %v6609
    %7565 = vmatprep.subr.bf16.mxu0 %v6614
    %7566 = vmatpush1.bf16.msra.mxu0 %v6613
    %7567 = vmatprep.subr.bf16.mxu0 %v6618
    %7568 = vmatpush1.bf16.msra.mxu0 %v6617
    %7569 = vmatprep.subr.bf16.mxu0 %v6622
    %7570 = vmatpush1.bf16.msra.mxu0 %v6621
    %7571 = vmatprep.mubr.bf16.mxu0 %v4865
    %7572 = vmatmul.mubr.bf16.gmra.mrb[0].mxu0 %v4864
    %v7573 = vpop.f32.mrb[0].mxu0
    %v7574 = vadd.f32 %v7533, %v7573
    %v7575 = vpop.f32.mrb[0].mxu0
    %v7576 = vadd.f32 %v7535, %v7575
    %v7577 = vpop.f32.mrb[0].mxu0
    %v7578 = vpop.f32.mrb[0].mxu0
    %7579 = vdwg.mxu0
    %7580 = vmatprep.subr.bf16.mxu0 %v6626
    %7581 = vmatpush1.bf16.msra.mxu0 %v6625
    %7582 = vmatprep.subr.bf16.mxu0 %v6630
    %7583 = vmatpush1.bf16.msra.mxu0 %v6629
    %7584 = vmatprep.subr.bf16.mxu0 %v6634
    %7585 = vmatpush1.bf16.msra.mxu0 %v6633
    %7586 = vmatprep.subr.bf16.mxu0 %v6638
    %7587 = vmatpush1.bf16.msra.mxu0 %v6637
    %7588 = vmatprep.subr.bf16.mxu0 %v6642
    %7589 = vmatpush1.bf16.msra.mxu0 %v6641
    %7590 = vmatprep.subr.bf16.mxu0 %v6646
    %7591 = vmatpush1.bf16.msra.mxu0 %v6645
    %7592 = vmatprep.subr.bf16.mxu0 %v6650
    %7593 = vmatpush1.bf16.msra.mxu0 %v6649
    %7594 = vmatprep.subr.bf16.mxu0 %v6654
    %7595 = vmatpush1.bf16.msra.mxu0 %v6653
    %7596 = vmatprep.subr.bf16.mxu0 %v6658
    %7597 = vmatpush1.bf16.msra.mxu0 %v6657
    %7598 = vmatprep.subr.bf16.mxu0 %v6662
    %7599 = vmatpush1.bf16.msra.mxu0 %v6661
    %7600 = vmatprep.subr.bf16.mxu0 %v6666
    %7601 = vmatpush1.bf16.msra.mxu0 %v6665
    %7602 = vmatprep.subr.bf16.mxu0 %v6670
    %7603 = vmatpush1.bf16.msra.mxu0 %v6669
    %7604 = vmatprep.subr.bf16.mxu0 %v6674
    %7605 = vmatpush1.bf16.msra.mxu0 %v6673
    %7606 = vmatprep.subr.bf16.mxu0 %v6678
    %7607 = vmatpush1.bf16.msra.mxu0 %v6677
    %7608 = vmatprep.subr.bf16.mxu0 %v6682
    %7609 = vmatpush1.bf16.msra.mxu0 %v6681
    %7610 = vmatprep.subr.bf16.mxu0 %v6686
    %7611 = vmatpush1.bf16.msra.mxu0 %v6685
    %7612 = vmatprep.mubr.bf16.mxu0 %v4867
    %7613 = vmatmul.mubr.bf16.gmra.mrb[0].mxu0 %v4866
    %v7614 = vpop.f32.mrb[0].mxu0
    %v7615 = vadd.f32 %v7574, %v7614
    %v7616 = vpop.f32.mrb[0].mxu0
    %v7617 = vadd.f32 %v7576, %v7616
    %v7618 = vpop.f32.mrb[0].mxu0
    %v7619 = vpop.f32.mrb[0].mxu0
    %7620 = vdwg.mxu0
    %7621 = vmatprep.subr.bf16.mxu0 %v6690
    %7622 = vmatpush1.bf16.msra.mxu0 %v6689
    %7623 = vmatprep.subr.bf16.mxu0 %v6694
    %7624 = vmatpush1.bf16.msra.mxu0 %v6693
    %7625 = vmatprep.subr.bf16.mxu0 %v6698
    %7626 = vmatpush1.bf16.msra.mxu0 %v6697
    %7627 = vmatprep.subr.bf16.mxu0 %v6702
    %7628 = vmatpush1.bf16.msra.mxu0 %v6701
    %7629 = vmatprep.subr.bf16.mxu0 %v6706
    %7630 = vmatpush1.bf16.msra.mxu0 %v6705
    %7631 = vmatprep.subr.bf16.mxu0 %v6710
    %7632 = vmatpush1.bf16.msra.mxu0 %v6709
    %7633 = vmatprep.subr.bf16.mxu0 %v6714
    %7634 = vmatpush1.bf16.msra.mxu0 %v6713
    %7635 = vmatprep.subr.bf16.mxu0 %v6718
    %7636 = vmatpush1.bf16.msra.mxu0 %v6717
    %7637 = vmatprep.subr.bf16.mxu0 %v6722
    %7638 = vmatpush1.bf16.msra.mxu0 %v6721
    %7639 = vmatprep.subr.bf16.mxu0 %v6726
    %7640 = vmatpush1.bf16.msra.mxu0 %v6725
    %7641 = vmatprep.subr.bf16.mxu0 %v6730
    %7642 = vmatpush1.bf16.msra.mxu0 %v6729
    %7643 = vmatprep.subr.bf16.mxu0 %v6734
    %7644 = vmatpush1.bf16.msra.mxu0 %v6733
    %7645 = vmatprep.subr.bf16.mxu0 %v6738
    %7646 = vmatpush1.bf16.msra.mxu0 %v6737
    %7647 = vmatprep.subr.bf16.mxu0 %v6742
    %7648 = vmatpush1.bf16.msra.mxu0 %v6741
    %7649 = vmatprep.subr.bf16.mxu0 %v6746
    %7650 = vmatpush1.bf16.msra.mxu0 %v6745
    %7651 = vmatprep.subr.bf16.mxu0 %v6750
    %7652 = vmatpush1.bf16.msra.mxu0 %v6749
    %7653 = vmatprep.mubr.bf16.mxu0 %v4869
    %7654 = vmatmul.mubr.bf16.gmra.mrb[0].mxu0 %v4868
    %v7655 = vpop.f32.mrb[0].mxu0
    %v7656 = vadd.f32 %v7615, %v7655
    %v7657 = vpop.f32.mrb[0].mxu0
    %v7658 = vadd.f32 %v7617, %v7657
    %v7659 = vpop.f32.mrb[0].mxu0
    %v7660 = vpop.f32.mrb[0].mxu0
    %7661 = vdwg.mxu0
    %7662 = vmatprep.subr.bf16.mxu0 %v6754
    %7663 = vmatpush1.bf16.msra.mxu0 %v6753
    %7664 = vmatprep.subr.bf16.mxu0 %v6758
    %7665 = vmatpush1.bf16.msra.mxu0 %v6757
    %7666 = vmatprep.subr.bf16.mxu0 %v6762
    %7667 = vmatpush1.bf16.msra.mxu0 %v6761
    %7668 = vmatprep.subr.bf16.mxu0 %v6766
    %7669 = vmatpush1.bf16.msra.mxu0 %v6765
    %7670 = vmatprep.subr.bf16.mxu0 %v6770
    %7671 = vmatpush1.bf16.msra.mxu0 %v6769
    %7672 = vmatprep.subr.bf16.mxu0 %v6774
    %7673 = vmatpush1.bf16.msra.mxu0 %v6773
    %7674 = vmatprep.subr.bf16.mxu0 %v6778
    %7675 = vmatpush1.bf16.msra.mxu0 %v6777
    %7676 = vmatprep.subr.bf16.mxu0 %v6782
    %7677 = vmatpush1.bf16.msra.mxu0 %v6781
    %7678 = vmatprep.subr.bf16.mxu0 %v6786
    %7679 = vmatpush1.bf16.msra.mxu0 %v6785
    %7680 = vmatprep.subr.bf16.mxu0 %v6790
    %7681 = vmatpush1.bf16.msra.mxu0 %v6789
    %7682 = vmatprep.subr.bf16.mxu0 %v6794
    %7683 = vmatpush1.bf16.msra.mxu0 %v6793
    %7684 = vmatprep.subr.bf16.mxu0 %v6798
    %7685 = vmatpush1.bf16.msra.mxu0 %v6797
    %7686 = vmatprep.subr.bf16.mxu0 %v6802
    %7687 = vmatpush1.bf16.msra.mxu0 %v6801
    %7688 = vmatprep.subr.bf16.mxu0 %v6806
    %7689 = vmatpush1.bf16.msra.mxu0 %v6805
    %7690 = vmatprep.subr.bf16.mxu0 %v6810
    %7691 = vmatpush1.bf16.msra.mxu0 %v6809
    %7692 = vmatprep.subr.bf16.mxu0 %v6814
    %7693 = vmatpush1.bf16.msra.mxu0 %v6813
    %7694 = vmatprep.mubr.bf16.mxu0 %v4871
    %7695 = vmatmul.mubr.bf16.gmra.mrb[0].mxu0 %v4870
    %v7696 = vpop.f32.mrb[0].mxu0
    %v7697 = vadd.f32 %v7656, %v7696
    %v7698 = vpop.f32.mrb[0].mxu0
    %v7699 = vadd.f32 %v7658, %v7698
    %v7700 = vpop.f32.mrb[0].mxu0
    %v7701 = vpop.f32.mrb[0].mxu0
    %7702 = vdwg.mxu0
    %7703 = vmatprep.subr.bf16.mxu0 %v6818
    %7704 = vmatpush1.bf16.msra.mxu0 %v6817
    %7705 = vmatprep.subr.bf16.mxu0 %v6822
    %7706 = vmatpush1.bf16.msra.mxu0 %v6821
    %7707 = vmatprep.subr.bf16.mxu0 %v6826
    %7708 = vmatpush1.bf16.msra.mxu0 %v6825
    %7709 = vmatprep.subr.bf16.mxu0 %v6830
    %7710 = vmatpush1.bf16.msra.mxu0 %v6829
    %7711 = vmatprep.subr.bf16.mxu0 %v6834
    %7712 = vmatpush1.bf16.msra.mxu0 %v6833
    %7713 = vmatprep.subr.bf16.mxu0 %v6838
    %7714 = vmatpush1.bf16.msra.mxu0 %v6837
    %7715 = vmatprep.subr.bf16.mxu0 %v6842
    %7716 = vmatpush1.bf16.msra.mxu0 %v6841
    %7717 = vmatprep.subr.bf16.mxu0 %v6846
    %7718 = vmatpush1.bf16.msra.mxu0 %v6845
    %7719 = vmatprep.subr.bf16.mxu0 %v6850
    %7720 = vmatpush1.bf16.msra.mxu0 %v6849
    %7721 = vmatprep.subr.bf16.mxu0 %v6854
    %7722 = vmatpush1.bf16.msra.mxu0 %v6853
    %7723 = vmatprep.subr.bf16.mxu0 %v6858
    %7724 = vmatpush1.bf16.msra.mxu0 %v6857
    %7725 = vmatprep.subr.bf16.mxu0 %v6862
    %7726 = vmatpush1.bf16.msra.mxu0 %v6861
    %7727 = vmatprep.subr.bf16.mxu0 %v6866
    %7728 = vmatpush1.bf16.msra.mxu0 %v6865
    %7729 = vmatprep.subr.bf16.mxu0 %v6870
    %7730 = vmatpush1.bf16.msra.mxu0 %v6869
    %7731 = vmatprep.subr.bf16.mxu0 %v6874
    %7732 = vmatpush1.bf16.msra.mxu0 %v6873
    %7733 = vmatprep.subr.bf16.mxu0 %v6878
    %7734 = vmatpush1.bf16.msra.mxu0 %v6877
    %7735 = vmatprep.mubr.bf16.mxu0 %v4873
    %7736 = vmatmul.mubr.bf16.gmra.mrb[0].mxu0 %v4872
    %v7737 = vpop.f32.mrb[0].mxu0
    %v7738 = vadd.f32 %v7697, %v7737
    %v7739 = vpop.f32.mrb[0].mxu0
    %v7740 = vadd.f32 %v7699, %v7739
    %v7741 = vpop.f32.mrb[0].mxu0
    %v7742 = vpop.f32.mrb[0].mxu0
    %7743 = vdwg.mxu0
    %7744 = vmatprep.subr.bf16.mxu0 %v6882
    %7745 = vmatpush1.bf16.msra.mxu0 %v6881
    %7746 = vmatprep.subr.bf16.mxu0 %v6886
    %7747 = vmatpush1.bf16.msra.mxu0 %v6885
    %7748 = vmatprep.subr.bf16.mxu0 %v6890
    %7749 = vmatpush1.bf16.msra.mxu0 %v6889
    %7750 = vmatprep.subr.bf16.mxu0 %v6894
    %7751 = vmatpush1.bf16.msra.mxu0 %v6893
    %7752 = vmatprep.subr.bf16.mxu0 %v6898
    %7753 = vmatpush1.bf16.msra.mxu0 %v6897
    %7754 = vmatprep.subr.bf16.mxu0 %v6902
    %7755 = vmatpush1.bf16.msra.mxu0 %v6901
    %7756 = vmatprep.subr.bf16.mxu0 %v6906
    %7757 = vmatpush1.bf16.msra.mxu0 %v6905
    %7758 = vmatprep.subr.bf16.mxu0 %v6910
    %7759 = vmatpush1.bf16.msra.mxu0 %v6909
    %7760 = vmatprep.subr.bf16.mxu0 %v6914
    %7761 = vmatpush1.bf16.msra.mxu0 %v6913
    %7762 = vmatprep.subr.bf16.mxu0 %v6918
    %7763 = vmatpush1.bf16.msra.mxu0 %v6917
    %7764 = vmatprep.subr.bf16.mxu0 %v6922
    %7765 = vmatpush1.bf16.msra.mxu0 %v6921
    %7766 = vmatprep.subr.bf16.mxu0 %v6926
    %7767 = vmatpush1.bf16.msra.mxu0 %v6925
    %7768 = vmatprep.subr.bf16.mxu0 %v6930
    %7769 = vmatpush1.bf16.msra.mxu0 %v6929
    %7770 = vmatprep.subr.bf16.mxu0 %v6934
    %7771 = vmatpush1.bf16.msra.mxu0 %v6933
    %7772 = vmatprep.subr.bf16.mxu0 %v6938
    %7773 = vmatpush1.bf16.msra.mxu0 %v6937
    %7774 = vmatprep.subr.bf16.mxu0 %v6942
    %7775 = vmatpush1.bf16.msra.mxu0 %v6941
    %7776 = vmatprep.mubr.bf16.mxu0 %v4875
    %7777 = vmatmul.mubr.bf16.gmra.mrb[0].mxu0 %v4874
    %v7778 = vpop.f32.mrb[0].mxu0
    %v7779 = vadd.f32 %v7738, %v7778
    %v7780 = vpop.f32.mrb[0].mxu0
    %v7781 = vadd.f32 %v7740, %v7780
    %v7782 = vpop.f32.mrb[0].mxu0
    %v7783 = vpop.f32.mrb[0].mxu0
    %7784 = vdwg.mxu0
    %7785 = vmatprep.subr.bf16.mxu0 %v6436
    %7786 = vmatpush1.bf16.msra.mxu0 %v6435
    %7787 = vmatprep.subr.bf16.mxu0 %v6440
    %7788 = vmatpush1.bf16.msra.mxu0 %v6439
    %7789 = vmatprep.subr.bf16.mxu0 %v6444
    %7790 = vmatpush1.bf16.msra.mxu0 %v6443
    %7791 = vmatprep.subr.bf16.mxu0 %v6448
    %7792 = vmatpush1.bf16.msra.mxu0 %v6447
    %7793 = vmatprep.subr.bf16.mxu0 %v6452
    %7794 = vmatpush1.bf16.msra.mxu0 %v6451
    %7795 = vmatprep.subr.bf16.mxu0 %v6456
    %7796 = vmatpush1.bf16.msra.mxu0 %v6455
    %7797 = vmatprep.subr.bf16.mxu0 %v6460
    %7798 = vmatpush1.bf16.msra.mxu0 %v6459
    %7799 = vmatprep.subr.bf16.mxu0 %v6464
    %7800 = vmatpush1.bf16.msra.mxu0 %v6463
    %7801 = vmatprep.subr.bf16.mxu0 %v6468
    %7802 = vmatpush1.bf16.msra.mxu0 %v6467
    %7803 = vmatprep.subr.bf16.mxu0 %v6472
    %7804 = vmatpush1.bf16.msra.mxu0 %v6471
    %7805 = vmatprep.subr.bf16.mxu0 %v6476
    %7806 = vmatpush1.bf16.msra.mxu0 %v6475
    %7807 = vmatprep.subr.bf16.mxu0 %v6480
    %7808 = vmatpush1.bf16.msra.mxu0 %v6479
    %7809 = vmatprep.subr.bf16.mxu0 %v6484
    %7810 = vmatpush1.bf16.msra.mxu0 %v6483
    %7811 = vmatprep.subr.bf16.mxu0 %v6488
    %7812 = vmatpush1.bf16.msra.mxu0 %v6487
    %7813 = vmatprep.subr.bf16.mxu0 %v6492
    %7814 = vmatpush1.bf16.msra.mxu0 %v6491
    %7815 = vmatprep.subr.bf16.mxu0 %v6496
    %7816 = vmatpush1.bf16.msra.mxu0 %v6495
    %7817 = vmatprep.mubr.bf16.mxu0 %v4861
    %7818 = vmatmul.mubr.bf16.gmra.mrb[0].mxu0 %v4860
    %v7819 = vpop.f32.mrb[0].mxu0
    %v7820 = vadd.f32 %v4888, %v7819
    %v7821 = vpop.f32.mrb[0].mxu0
    %v7822 = vadd.f32 %v4892, %v7821
    %v7823 = vpop.f32.mrb[0].mxu0
    %v7824 = vpop.f32.mrb[0].mxu0
    %7825 = vdwg.mxu0
    %7826 = vmatprep.subr.bf16.mxu0 %v6500
    %7827 = vmatpush1.bf16.msra.mxu0 %v6499
    %7828 = vmatprep.subr.bf16.mxu0 %v6504
    %7829 = vmatpush1.bf16.msra.mxu0 %v6503
    %7830 = vmatprep.subr.bf16.mxu0 %v6508
    %7831 = vmatpush1.bf16.msra.mxu0 %v6507
    %7832 = vmatprep.subr.bf16.mxu0 %v6512
    %7833 = vmatpush1.bf16.msra.mxu0 %v6511
    %7834 = vmatprep.subr.bf16.mxu0 %v6516
    %7835 = vmatpush1.bf16.msra.mxu0 %v6515
    %7836 = vmatprep.subr.bf16.mxu0 %v6520
    %7837 = vmatpush1.bf16.msra.mxu0 %v6519
    %7838 = vmatprep.subr.bf16.mxu0 %v6524
    %7839 = vmatpush1.bf16.msra.mxu0 %v6523
    %7840 = vmatprep.subr.bf16.mxu0 %v6528
    %7841 = vmatpush1.bf16.msra.mxu0 %v6527
    %7842 = vmatprep.subr.bf16.mxu0 %v6532
    %7843 = vmatpush1.bf16.msra.mxu0 %v6531
    %7844 = vmatprep.subr.bf16.mxu0 %v6536
    %7845 = vmatpush1.bf16.msra.mxu0 %v6535
    %7846 = vmatprep.subr.bf16.mxu0 %v6540
    %7847 = vmatpush1.bf16.msra.mxu0 %v6539
    %7848 = vmatprep.subr.bf16.mxu0 %v6544
    %7849 = vmatpush1.bf16.msra.mxu0 %v6543
    %7850 = vmatprep.subr.bf16.mxu0 %v6548
    %7851 = vmatpush1.bf16.msra.mxu0 %v6547
    %7852 = vmatprep.subr.bf16.mxu0 %v6552
    %7853 = vmatpush1.bf16.msra.mxu0 %v6551
    %7854 = vmatprep.subr.bf16.mxu0 %v6556
    %7855 = vmatpush1.bf16.msra.mxu0 %v6555
    %7856 = vmatprep.subr.bf16.mxu0 %v6560
    %7857 = vmatpush1.bf16.msra.mxu0 %v6559
    %7858 = vmatprep.mubr.bf16.mxu0 %v4863
    %7859 = vmatmul.mubr.bf16.gmra.mrb[0].mxu0 %v4862
    %v7860 = vpop.f32.mrb[0].mxu0
    %v7861 = vadd.f32 %v7820, %v7860
    %v7862 = vpop.f32.mrb[0].mxu0
    %v7863 = vadd.f32 %v7822, %v7862
    %v7864 = vpop.f32.mrb[0].mxu0
    %v7865 = vpop.f32.mrb[0].mxu0
    %7866 = vdwg.mxu0
    %7867 = vmatprep.subr.bf16.mxu0 %v6564
    %7868 = vmatpush1.bf16.msra.mxu0 %v6563
    %7869 = vmatprep.subr.bf16.mxu0 %v6568
    %7870 = vmatpush1.bf16.msra.mxu0 %v6567
    %7871 = vmatprep.subr.bf16.mxu0 %v6572
    %7872 = vmatpush1.bf16.msra.mxu0 %v6571
    %7873 = vmatprep.subr.bf16.mxu0 %v6576
    %7874 = vmatpush1.bf16.msra.mxu0 %v6575
    %7875 = vmatprep.subr.bf16.mxu0 %v6580
    %7876 = vmatpush1.bf16.msra.mxu0 %v6579
    %7877 = vmatprep.subr.bf16.mxu0 %v6584
    %7878 = vmatpush1.bf16.msra.mxu0 %v6583
    %7879 = vmatprep.subr.bf16.mxu0 %v6588
    %7880 = vmatpush1.bf16.msra.mxu0 %v6587
    %7881 = vmatprep.subr.bf16.mxu0 %v6592
    %7882 = vmatpush1.bf16.msra.mxu0 %v6591
    %7883 = vmatprep.subr.bf16.mxu0 %v6596
    %7884 = vmatpush1.bf16.msra.mxu0 %v6595
    %7885 = vmatprep.subr.bf16.mxu0 %v6600
    %7886 = vmatpush1.bf16.msra.mxu0 %v6599
    %7887 = vmatprep.subr.bf16.mxu0 %v6604
    %7888 = vmatpush1.bf16.msra.mxu0 %v6603
    %7889 = vmatprep.subr.bf16.mxu0 %v6608
    %7890 = vmatpush1.bf16.msra.mxu0 %v6607
    %7891 = vmatprep.subr.bf16.mxu0 %v6612
    %7892 = vmatpush1.bf16.msra.mxu0 %v6611
    %7893 = vmatprep.subr.bf16.mxu0 %v6616
    %7894 = vmatpush1.bf16.msra.mxu0 %v6615
    %7895 = vmatprep.subr.bf16.mxu0 %v6620
    %7896 = vmatpush1.bf16.msra.mxu0 %v6619
    %7897 = vmatprep.subr.bf16.mxu0 %v6624
    %7898 = vmatpush1.bf16.msra.mxu0 %v6623
    %7899 = vmatprep.mubr.bf16.mxu0 %v4865
    %7900 = vmatmul.mubr.bf16.gmra.mrb[0].mxu0 %v4864
    %v7901 = vpop.f32.mrb[0].mxu0
    %v7902 = vadd.f32 %v7861, %v7901
    %v7903 = vpop.f32.mrb[0].mxu0
    %v7904 = vadd.f32 %v7863, %v7903
    %v7905 = vpop.f32.mrb[0].mxu0
    %v7906 = vpop.f32.mrb[0].mxu0
    %7907 = vdwg.mxu0
    %7908 = vmatprep.subr.bf16.mxu0 %v6628
    %7909 = vmatpush1.bf16.msra.mxu0 %v6627
    %7910 = vmatprep.subr.bf16.mxu0 %v6632
    %7911 = vmatpush1.bf16.msra.mxu0 %v6631
    %7912 = vmatprep.subr.bf16.mxu0 %v6636
    %7913 = vmatpush1.bf16.msra.mxu0 %v6635
    %7914 = vmatprep.subr.bf16.mxu0 %v6640
    %7915 = vmatpush1.bf16.msra.mxu0 %v6639
    %7916 = vmatprep.subr.bf16.mxu0 %v6644
    %7917 = vmatpush1.bf16.msra.mxu0 %v6643
    %7918 = vmatprep.subr.bf16.mxu0 %v6648
    %7919 = vmatpush1.bf16.msra.mxu0 %v6647
    %7920 = vmatprep.subr.bf16.mxu0 %v6652
    %7921 = vmatpush1.bf16.msra.mxu0 %v6651
    %7922 = vmatprep.subr.bf16.mxu0 %v6656
    %7923 = vmatpush1.bf16.msra.mxu0 %v6655
    %7924 = vmatprep.subr.bf16.mxu0 %v6660
    %7925 = vmatpush1.bf16.msra.mxu0 %v6659
    %7926 = vmatprep.subr.bf16.mxu0 %v6664
    %7927 = vmatpush1.bf16.msra.mxu0 %v6663
    %7928 = vmatprep.subr.bf16.mxu0 %v6668
    %7929 = vmatpush1.bf16.msra.mxu0 %v6667
    %7930 = vmatprep.subr.bf16.mxu0 %v6672
    %7931 = vmatpush1.bf16.msra.mxu0 %v6671
    %7932 = vmatprep.subr.bf16.mxu0 %v6676
    %7933 = vmatpush1.bf16.msra.mxu0 %v6675
    %7934 = vmatprep.subr.bf16.mxu0 %v6680
    %7935 = vmatpush1.bf16.msra.mxu0 %v6679
    %7936 = vmatprep.subr.bf16.mxu0 %v6684
    %7937 = vmatpush1.bf16.msra.mxu0 %v6683
    %7938 = vmatprep.subr.bf16.mxu0 %v6688
    %7939 = vmatpush1.bf16.msra.mxu0 %v6687
    %7940 = vmatprep.mubr.bf16.mxu0 %v4867
    %7941 = vmatmul.mubr.bf16.gmra.mrb[0].mxu0 %v4866
    %v7942 = vpop.f32.mrb[0].mxu0
    %v7943 = vadd.f32 %v7902, %v7942
    %v7944 = vpop.f32.mrb[0].mxu0
    %v7945 = vadd.f32 %v7904, %v7944
    %v7946 = vpop.f32.mrb[0].mxu0
    %v7947 = vpop.f32.mrb[0].mxu0
    %7948 = vdwg.mxu0
    %7949 = vmatprep.subr.bf16.mxu0 %v6692
    %7950 = vmatpush1.bf16.msra.mxu0 %v6691
    %7951 = vmatprep.subr.bf16.mxu0 %v6696
    %7952 = vmatpush1.bf16.msra.mxu0 %v6695
    %7953 = vmatprep.subr.bf16.mxu0 %v6700
    %7954 = vmatpush1.bf16.msra.mxu0 %v6699
    %7955 = vmatprep.subr.bf16.mxu0 %v6704
    %7956 = vmatpush1.bf16.msra.mxu0 %v6703
    %7957 = vmatprep.subr.bf16.mxu0 %v6708
    %7958 = vmatpush1.bf16.msra.mxu0 %v6707
    %7959 = vmatprep.subr.bf16.mxu0 %v6712
    %7960 = vmatpush1.bf16.msra.mxu0 %v6711
    %7961 = vmatprep.subr.bf16.mxu0 %v6716
    %7962 = vmatpush1.bf16.msra.mxu0 %v6715
    %7963 = vmatprep.subr.bf16.mxu0 %v6720
    %7964 = vmatpush1.bf16.msra.mxu0 %v6719
    %7965 = vmatprep.subr.bf16.mxu0 %v6724
    %7966 = vmatpush1.bf16.msra.mxu0 %v6723
    %7967 = vmatprep.subr.bf16.mxu0 %v6728
    %7968 = vmatpush1.bf16.msra.mxu0 %v6727
    %7969 = vmatprep.subr.bf16.mxu0 %v6732
    %7970 = vmatpush1.bf16.msra.mxu0 %v6731
    %7971 = vmatprep.subr.bf16.mxu0 %v6736
    %7972 = vmatpush1.bf16.msra.mxu0 %v6735
    %7973 = vmatprep.subr.bf16.mxu0 %v6740
    %7974 = vmatpush1.bf16.msra.mxu0 %v6739
    %7975 = vmatprep.subr.bf16.mxu0 %v6744
    %7976 = vmatpush1.bf16.msra.mxu0 %v6743
    %7977 = vmatprep.subr.bf16.mxu0 %v6748
    %7978 = vmatpush1.bf16.msra.mxu0 %v6747
    %7979 = vmatprep.subr.bf16.mxu0 %v6752
    %7980 = vmatpush1.bf16.msra.mxu0 %v6751
    %7981 = vmatprep.mubr.bf16.mxu0 %v4869
    %7982 = vmatmul.mubr.bf16.gmra.mrb[0].mxu0 %v4868
    %v7983 = vpop.f32.mrb[0].mxu0
    %v7984 = vadd.f32 %v7943, %v7983
    %v7985 = vpop.f32.mrb[0].mxu0
    %v7986 = vadd.f32 %v7945, %v7985
    %v7987 = vpop.f32.mrb[0].mxu0
    %v7988 = vpop.f32.mrb[0].mxu0
    %7989 = vdwg.mxu0
    %7990 = vmatprep.subr.bf16.mxu0 %v6756
    %7991 = vmatpush1.bf16.msra.mxu0 %v6755
    %7992 = vmatprep.subr.bf16.mxu0 %v6760
    %7993 = vmatpush1.bf16.msra.mxu0 %v6759
    %7994 = vmatprep.subr.bf16.mxu0 %v6764
    %7995 = vmatpush1.bf16.msra.mxu0 %v6763
    %7996 = vmatprep.subr.bf16.mxu0 %v6768
    %7997 = vmatpush1.bf16.msra.mxu0 %v6767
    %7998 = vmatprep.subr.bf16.mxu0 %v6772
    %7999 = vmatpush1.bf16.msra.mxu0 %v6771
    %8000 = vmatprep.subr.bf16.mxu0 %v6776
    %8001 = vmatpush1.bf16.msra.mxu0 %v6775
    %8002 = vmatprep.subr.bf16.mxu0 %v6780
    %8003 = vmatpush1.bf16.msra.mxu0 %v6779
    %8004 = vmatprep.subr.bf16.mxu0 %v6784
    %8005 = vmatpush1.bf16.msra.mxu0 %v6783
    %8006 = vmatprep.subr.bf16.mxu0 %v6788
    %8007 = vmatpush1.bf16.msra.mxu0 %v6787
    %8008 = vmatprep.subr.bf16.mxu0 %v6792
    %8009 = vmatpush1.bf16.msra.mxu0 %v6791
    %8010 = vmatprep.subr.bf16.mxu0 %v6796
    %8011 = vmatpush1.bf16.msra.mxu0 %v6795
    %8012 = vmatprep.subr.bf16.mxu0 %v6800
    %8013 = vmatpush1.bf16.msra.mxu0 %v6799
    %8014 = vmatprep.subr.bf16.mxu0 %v6804
    %8015 = vmatpush1.bf16.msra.mxu0 %v6803
    %8016 = vmatprep.subr.bf16.mxu0 %v6808
    %8017 = vmatpush1.bf16.msra.mxu0 %v6807
    %8018 = vmatprep.subr.bf16.mxu0 %v6812
    %8019 = vmatpush1.bf16.msra.mxu0 %v6811
    %8020 = vmatprep.subr.bf16.mxu0 %v6816
    %8021 = vmatpush1.bf16.msra.mxu0 %v6815
    %8022 = vmatprep.mubr.bf16.mxu0 %v4871
    %8023 = vmatmul.mubr.bf16.gmra.mrb[0].mxu0 %v4870
    %v8024 = vpop.f32.mrb[0].mxu0
    %v8025 = vadd.f32 %v7984, %v8024
    %v8026 = vpop.f32.mrb[0].mxu0
    %v8027 = vadd.f32 %v7986, %v8026
    %v8028 = vpop.f32.mrb[0].mxu0
    %v8029 = vpop.f32.mrb[0].mxu0
    %8030 = vdwg.mxu0
    %8031 = vmatprep.subr.bf16.mxu0 %v6820
    %8032 = vmatpush1.bf16.msra.mxu0 %v6819
    %8033 = vmatprep.subr.bf16.mxu0 %v6824
    %8034 = vmatpush1.bf16.msra.mxu0 %v6823
    %8035 = vmatprep.subr.bf16.mxu0 %v6828
    %8036 = vmatpush1.bf16.msra.mxu0 %v6827
    %8037 = vmatprep.subr.bf16.mxu0 %v6832
    %8038 = vmatpush1.bf16.msra.mxu0 %v6831
    %8039 = vmatprep.subr.bf16.mxu0 %v6836
    %8040 = vmatpush1.bf16.msra.mxu0 %v6835
    %8041 = vmatprep.subr.bf16.mxu0 %v6840
    %8042 = vmatpush1.bf16.msra.mxu0 %v6839
    %8043 = vmatprep.subr.bf16.mxu0 %v6844
    %8044 = vmatpush1.bf16.msra.mxu0 %v6843
    %8045 = vmatprep.subr.bf16.mxu0 %v6848
    %8046 = vmatpush1.bf16.msra.mxu0 %v6847
    %8047 = vmatprep.subr.bf16.mxu0 %v6852
    %8048 = vmatpush1.bf16.msra.mxu0 %v6851
    %8049 = vmatprep.subr.bf16.mxu0 %v6856
    %8050 = vmatpush1.bf16.msra.mxu0 %v6855
    %8051 = vmatprep.subr.bf16.mxu0 %v6860
    %8052 = vmatpush1.bf16.msra.mxu0 %v6859
    %8053 = vmatprep.subr.bf16.mxu0 %v6864
    %8054 = vmatpush1.bf16.msra.mxu0 %v6863
    %8055 = vmatprep.subr.bf16.mxu0 %v6868
    %8056 = vmatpush1.bf16.msra.mxu0 %v6867
    %8057 = vmatprep.subr.bf16.mxu0 %v6872
    %8058 = vmatpush1.bf16.msra.mxu0 %v6871
    %8059 = vmatprep.subr.bf16.mxu0 %v6876
    %8060 = vmatpush1.bf16.msra.mxu0 %v6875
    %8061 = vmatprep.subr.bf16.mxu0 %v6880
    %8062 = vmatpush1.bf16.msra.mxu0 %v6879
    %8063 = vmatprep.mubr.bf16.mxu0 %v4873
    %8064 = vmatmul.mubr.bf16.gmra.mrb[0].mxu0 %v4872
    %v8065 = vpop.f32.mrb[0].mxu0
    %v8066 = vadd.f32 %v8025, %v8065
    %v8067 = vpop.f32.mrb[0].mxu0
    %v8068 = vadd.f32 %v8027, %v8067
    %v8069 = vpop.f32.mrb[0].mxu0
    %v8070 = vpop.f32.mrb[0].mxu0
    %8071 = vdwg.mxu0
    %8072 = vmatprep.subr.bf16.mxu0 %v6884
    %8073 = vmatpush1.bf16.msra.mxu0 %v6883
    %8074 = vmatprep.subr.bf16.mxu0 %v6888
    %8075 = vmatpush1.bf16.msra.mxu0 %v6887
    %8076 = vmatprep.subr.bf16.mxu0 %v6892
    %8077 = vmatpush1.bf16.msra.mxu0 %v6891
    %8078 = vmatprep.subr.bf16.mxu0 %v6896
    %8079 = vmatpush1.bf16.msra.mxu0 %v6895
    %8080 = vmatprep.subr.bf16.mxu0 %v6900
    %8081 = vmatpush1.bf16.msra.mxu0 %v6899
    %8082 = vmatprep.subr.bf16.mxu0 %v6904
    %8083 = vmatpush1.bf16.msra.mxu0 %v6903
    %8084 = vmatprep.subr.bf16.mxu0 %v6908
    %8085 = vmatpush1.bf16.msra.mxu0 %v6907
    %8086 = vmatprep.subr.bf16.mxu0 %v6912
    %8087 = vmatpush1.bf16.msra.mxu0 %v6911
    %8088 = vmatprep.subr.bf16.mxu0 %v6916
    %8089 = vmatpush1.bf16.msra.mxu0 %v6915
    %8090 = vmatprep.subr.bf16.mxu0 %v6920
    %8091 = vmatpush1.bf16.msra.mxu0 %v6919
    %8092 = vmatprep.subr.bf16.mxu0 %v6924
    %8093 = vmatpush1.bf16.msra.mxu0 %v6923
    %8094 = vmatprep.subr.bf16.mxu0 %v6928
    %8095 = vmatpush1.bf16.msra.mxu0 %v6927
    %8096 = vmatprep.subr.bf16.mxu0 %v6932
    %8097 = vmatpush1.bf16.msra.mxu0 %v6931
    %8098 = vmatprep.subr.bf16.mxu0 %v6936
    %8099 = vmatpush1.bf16.msra.mxu0 %v6935
    %8100 = vmatprep.subr.bf16.mxu0 %v6940
    %8101 = vmatpush1.bf16.msra.mxu0 %v6939
    %8102 = vmatprep.subr.bf16.mxu0 %v6944
    %8103 = vmatpush1.bf16.msra.mxu0 %v6943
    %8104 = vmatprep.mubr.bf16.mxu0 %v4875
    %8105 = vmatmul.mubr.bf16.gmra.mrb[0].mxu0 %v4874
    %v8106 = vpop.f32.mrb[0].mxu0
    %v8107 = vadd.f32 %v8066, %v8106
    %v8108 = vpop.f32.mrb[0].mxu0
    %v8109 = vadd.f32 %v8068, %v8108
    %v8110 = vpop.f32.mrb[0].mxu0
    %v8111 = vpop.f32.mrb[0].mxu0
    %8112 = vdwg.mxu0
    %v8113 = vadd.f32 %v261, %v7779
    %v8114 = vadd.f32 %v263, %v7781
    %v8115 = vadd.f32 %v302, %v8107
    %v8116 = vadd.f32 %v304, %v8109
    %8117 = vst [vmem:[#allocation19] sm:$0xff] %v8113
    %8118 = vst [vmem:[#allocation19 + $0x8] sm:$0xff] %v8114
    %8119 = vst [vmem:[#allocation19 + $0x10] sm:$0xff] %v8115
    %8120 = vst [vmem:[#allocation19 + $0x18] sm:$0xff] %v8116
    %s8121 = sld [smem:[#allocation2]]
    %v8122 = vmul.f32 %v261, %v261
    %v8123 = vmul.f32 %v263, %v263
    %v8124 = vmul.f32 %v302, %v302
    %v8125 = vmul.f32 %v304, %v304
    %v8126 = vadd.f32 %v8122, %v8123
    %v8127 = vadd.f32 %v8126, %v8124
    %v8128 = vadd.f32 %v8127, %v8125
    %8129 = vadd.xlane.f32.xlu0 %v8128
    %v8130 = vpop.xlane.xlu0 %8129
    %v8131 = vrsqrt.pop %v8130
    %v8132 = vmul.f32 %v261, %v8131
    %v8133 = vmul.f32 %v263, %v8131
    %v8134 = vmul.f32 %v302, %v8131
    %v8135 = vmul.f32 %v304, %v8131
    %v8136 = vmul.f32 %v8113, %v8113
    %v8137 = vmul.f32 %v8114, %v8114
    %v8138 = vmul.f32 %v8115, %v8115
    %v8139 = vmul.f32 %v8116, %v8116
    %v8140 = vadd.f32 %v8136, %v8137
    %v8141 = vadd.f32 %v8140, %v8138
    %v8142 = vadd.f32 %v8141, %v8139
    %8143 = vadd.xlane.f32.xlu0 %v8142
    %v8144 = vpop.xlane.xlu0 %8143
    %v8145 = vrsqrt.pop %v8144
    %v8146 = vmul.f32 %v8113, %v8145
    %v8147 = vmul.f32 %v8114, %v8145
    %v8148 = vmul.f32 %v8115, %v8145
    %v8149 = vmul.f32 %v8116, %v8145
    %v8150 = vstv %s8121
    %v8151 = vmul.f32 %v8150, 1.442695
    %v8152 = vpow.pop %v8151
    %s8153 = vtos %v8152
    %8154 = vmatprep.subr.mxu0 %v8147
    %8155 = vmatpush1.xpose.msra.mxu0 %v8146
    %8156 = vmatprep.subr.mxu0 0.0
    %8157 = vmatpush1.xpose.msra.mxu0 0.0
    %8158 = vmatprep.subr.mxu0 0.0
    %8159 = vmatpush1.xpose.msra.mxu0 0.0
    %8160 = vmatprep.subr.mxu0 0.0
    %8161 = vmatpush1.xpose.msra.mxu0 0.0
    %8162 = vmatprep.subr.mxu0 0.0
    %8163 = vmatpush1.xpose.msra.mxu0 0.0
    %8164 = vmatprep.subr.mxu0 0.0
    %8165 = vmatpush1.xpose.msra.mxu0 0.0
    %8166 = vmatprep.subr.mxu0 0.0
    %8167 = vmatpush1.xpose.msra.mxu0 0.0
    %8168 = vmatprep.subr.mxu0 0.0
    %8169 = vmatpush1.xpose.msra.mxu0 0.0
    %8170 = vmatprep.subr.mxu0 0.0
    %8171 = vmatpush1.xpose.msra.mxu0 0.0
    %8172 = vmatprep.subr.mxu0 0.0
    %8173 = vmatpush1.xpose.msra.mxu0 0.0
    %8174 = vmatprep.subr.mxu0 0.0
    %8175 = vmatpush1.xpose.msra.mxu0 0.0
    %8176 = vmatprep.subr.mxu0 0.0
    %8177 = vmatpush1.xpose.msra.mxu0 0.0
    %8178 = vmatprep.subr.mxu0 0.0
    %8179 = vmatpush1.xpose.msra.mxu0 0.0
    %8180 = vmatprep.subr.mxu0 0.0
    %8181 = vmatpush1.xpose.msra.mxu0 0.0
    %8182 = vmatprep.subr.mxu0 0.0
    %8183 = vmatpush1.xpose.msra.mxu0 0.0
    %8184 = vmatprep.subr.mxu0 0.0
    %8185 = vmatpush1.xpose.msra.mxu0 0.0
    %8186 = vmatprep.subr.mxu0 0.0
    %8187 = vmatpush1.xpose.msra.mxu0 0.0
    %8188 = vmatprep.subr.mxu0 0.0
    %8189 = vmatpush1.xpose.msra.mxu0 0.0
    %8190 = vmatprep.subr.mxu0 0.0
    %8191 = vmatpush1.xpose.msra.mxu0 0.0
    %8192 = vmatprep.subr.mxu0 0.0
    %8193 = vmatpush1.xpose.msra.mxu0 0.0
    %8194 = vmatprep.subr.mxu0 0.0
    %8195 = vmatpush1.xpose.msra.mxu0 0.0
    %8196 = vmatprep.subr.mxu0 0.0
    %8197 = vmatpush1.xpose.msra.mxu0 0.0
    %8198 = vmatprep.subr.mxu0 0.0
    %8199 = vmatpush1.xpose.msra.mxu0 0.0
    %8200 = vmatprep.subr.mxu0 0.0
    %8201 = vmatpush1.xpose.msra.mxu0 0.0
    %8202 = vmatprep.subr.mxu0 0.0
    %8203 = vmatpush1.xpose.msra.mxu0 0.0
    %8204 = vmatprep.subr.mxu0 0.0
    %8205 = vmatpush1.xpose.msra.mxu0 0.0
    %8206 = vmatprep.subr.mxu0 0.0
    %8207 = vmatpush1.xpose.msra.mxu0 0.0
    %8208 = vmatprep.subr.mxu0 0.0
    %8209 = vmatpush1.xpose.msra.mxu0 0.0
    %8210 = vmatprep.subr.mxu0 0.0
    %8211 = vmatpush1.xpose.msra.mxu0 0.0
    %8212 = vmatprep.subr.mxu0 0.0
    %8213 = vmatpush1.xpose.msra.mxu0 0.0
    %8214 = vmatprep.subr.mxu0 0.0
    %8215 = vmatpush1.xpose.msra.mxu0 0.0
    %8216 = vmatprep.subr.mxu0 0.0
    %8217 = vmatpush1.xpose.msra.mxu0 0.0
    %8218 = vmatprep.mubr.f32.mxu0 %v8133
    %8219 = vmatmul.mubr.f32.gmra.mrb[0].mxu0 %v8132
    %v8220 = vpop.f32.mrb[0].mxu0
    %v8221 = vadd.f32 0.0, %v8220
    %v8222 = vpop.f32.mrb[0].mxu0
    %8223 = vdwg.mxu0
    %8224 = vmatprep.subr.mxu0 %v8149
    %8225 = vmatpush1.xpose.msra.mxu0 %v8148
    %8226 = vmatprep.subr.mxu0 0.0
    %8227 = vmatpush1.xpose.msra.mxu0 0.0
    %8228 = vmatprep.subr.mxu0 0.0
    %8229 = vmatpush1.xpose.msra.mxu0 0.0
    %8230 = vmatprep.subr.mxu0 0.0
    %8231 = vmatpush1.xpose.msra.mxu0 0.0
    %8232 = vmatprep.subr.mxu0 0.0
    %8233 = vmatpush1.xpose.msra.mxu0 0.0
    %8234 = vmatprep.subr.mxu0 0.0
    %8235 = vmatpush1.xpose.msra.mxu0 0.0
    %8236 = vmatprep.subr.mxu0 0.0
    %8237 = vmatpush1.xpose.msra.mxu0 0.0
    %8238 = vmatprep.subr.mxu0 0.0
    %8239 = vmatpush1.xpose.msra.mxu0 0.0
    %8240 = vmatprep.subr.mxu0 0.0
    %8241 = vmatpush1.xpose.msra.mxu0 0.0
    %8242 = vmatprep.subr.mxu0 0.0
    %8243 = vmatpush1.xpose.msra.mxu0 0.0
    %8244 = vmatprep.subr.mxu0 0.0
    %8245 = vmatpush1.xpose.msra.mxu0 0.0
    %8246 = vmatprep.subr.mxu0 0.0
    %8247 = vmatpush1.xpose.msra.mxu0 0.0
    %8248 = vmatprep.subr.mxu0 0.0
    %8249 = vmatpush1.xpose.msra.mxu0 0.0
    %8250 = vmatprep.subr.mxu0 0.0
    %8251 = vmatpush1.xpose.msra.mxu0 0.0
    %8252 = vmatprep.subr.mxu0 0.0
    %8253 = vmatpush1.xpose.msra.mxu0 0.0
    %8254 = vmatprep.subr.mxu0 0.0
    %8255 = vmatpush1.xpose.msra.mxu0 0.0
    %8256 = vmatprep.subr.mxu0 0.0
    %8257 = vmatpush1.xpose.msra.mxu0 0.0
    %8258 = vmatprep.subr.mxu0 0.0
    %8259 = vmatpush1.xpose.msra.mxu0 0.0
    %8260 = vmatprep.subr.mxu0 0.0
    %8261 = vmatpush1.xpose.msra.mxu0 0.0
    %8262 = vmatprep.subr.mxu0 0.0
    %8263 = vmatpush1.xpose.msra.mxu0 0.0
    %8264 = vmatprep.subr.mxu0 0.0
    %8265 = vmatpush1.xpose.msra.mxu0 0.0
    %8266 = vmatprep.subr.mxu0 0.0
    %8267 = vmatpush1.xpose.msra.mxu0 0.0
    %8268 = vmatprep.subr.mxu0 0.0
    %8269 = vmatpush1.xpose.msra.mxu0 0.0
    %8270 = vmatprep.subr.mxu0 0.0
    %8271 = vmatpush1.xpose.msra.mxu0 0.0
    %8272 = vmatprep.subr.mxu0 0.0
    %8273 = vmatpush1.xpose.msra.mxu0 0.0
    %8274 = vmatprep.subr.mxu0 0.0
    %8275 = vmatpush1.xpose.msra.mxu0 0.0
    %8276 = vmatprep.subr.mxu0 0.0
    %8277 = vmatpush1.xpose.msra.mxu0 0.0
    %8278 = vmatprep.subr.mxu0 0.0
    %8279 = vmatpush1.xpose.msra.mxu0 0.0
    %8280 = vmatprep.subr.mxu0 0.0
    %8281 = vmatpush1.xpose.msra.mxu0 0.0
    %8282 = vmatprep.subr.mxu0 0.0
    %8283 = vmatpush1.xpose.msra.mxu0 0.0
    %8284 = vmatprep.subr.mxu0 0.0
    %8285 = vmatpush1.xpose.msra.mxu0 0.0
    %8286 = vmatprep.subr.mxu0 0.0
    %8287 = vmatpush1.xpose.msra.mxu0 0.0
    %8288 = vmatprep.mubr.f32.mxu0 %v8135
    %8289 = vmatmul.mubr.f32.gmra.mrb[0].mxu0 %v8134
    %v8290 = vpop.f32.mrb[0].mxu0
    %v8291 = vadd.f32 %v8221, %v8290
    %v8292 = vpop.f32.mrb[0].mxu0
    %8293 = vdwg.mxu0
    %v8294 = vstv %s8153
    %v8295 = vmul.f32 %v8294, %v8291
    %8296 = vmatprep.subr.mxu0 %v8133
    %8297 = vmatpush1.xpose.msra.mxu0 %v8132
    %8298 = vmatprep.subr.mxu0 0.0
    %8299 = vmatpush1.xpose.msra.mxu0 0.0
    %8300 = vmatprep.subr.mxu0 0.0
    %8301 = vmatpush1.xpose.msra.mxu0 0.0
    %8302 = vmatprep.subr.mxu0 0.0
    %8303 = vmatpush1.xpose.msra.mxu0 0.0
    %8304 = vmatprep.subr.mxu0 0.0
    %8305 = vmatpush1.xpose.msra.mxu0 0.0
    %8306 = vmatprep.subr.mxu0 0.0
    %8307 = vmatpush1.xpose.msra.mxu0 0.0
    %8308 = vmatprep.subr.mxu0 0.0
    %8309 = vmatpush1.xpose.msra.mxu0 0.0
    %8310 = vmatprep.subr.mxu0 0.0
    %8311 = vmatpush1.xpose.msra.mxu0 0.0
    %8312 = vmatprep.subr.mxu0 0.0
    %8313 = vmatpush1.xpose.msra.mxu0 0.0
    %8314 = vmatprep.subr.mxu0 0.0
    %8315 = vmatpush1.xpose.msra.mxu0 0.0
    %8316 = vmatprep.subr.mxu0 0.0
    %8317 = vmatpush1.xpose.msra.mxu0 0.0
    %8318 = vmatprep.subr.mxu0 0.0
    %8319 = vmatpush1.xpose.msra.mxu0 0.0
    %8320 = vmatprep.subr.mxu0 0.0
    %8321 = vmatpush1.xpose.msra.mxu0 0.0
    %8322 = vmatprep.subr.mxu0 0.0
    %8323 = vmatpush1.xpose.msra.mxu0 0.0
    %8324 = vmatprep.subr.mxu0 0.0
    %8325 = vmatpush1.xpose.msra.mxu0 0.0
    %8326 = vmatprep.subr.mxu0 0.0
    %8327 = vmatpush1.xpose.msra.mxu0 0.0
    %8328 = vmatprep.subr.mxu0 0.0
    %8329 = vmatpush1.xpose.msra.mxu0 0.0
    %8330 = vmatprep.subr.mxu0 0.0
    %8331 = vmatpush1.xpose.msra.mxu0 0.0
    %8332 = vmatprep.subr.mxu0 0.0
    %8333 = vmatpush1.xpose.msra.mxu0 0.0
    %8334 = vmatprep.subr.mxu0 0.0
    %8335 = vmatpush1.xpose.msra.mxu0 0.0
    %8336 = vmatprep.subr.mxu0 0.0
    %8337 = vmatpush1.xpose.msra.mxu0 0.0
    %8338 = vmatprep.subr.mxu0 0.0
    %8339 = vmatpush1.xpose.msra.mxu0 0.0
    %8340 = vmatprep.subr.mxu0 0.0
    %8341 = vmatpush1.xpose.msra.mxu0 0.0
    %8342 = vmatprep.subr.mxu0 0.0
    %8343 = vmatpush1.xpose.msra.mxu0 0.0
    %8344 = vmatprep.subr.mxu0 0.0
    %8345 = vmatpush1.xpose.msra.mxu0 0.0
    %8346 = vmatprep.subr.mxu0 0.0
    %8347 = vmatpush1.xpose.msra.mxu0 0.0
    %8348 = vmatprep.subr.mxu0 0.0
    %8349 = vmatpush1.xpose.msra.mxu0 0.0
    %8350 = vmatprep.subr.mxu0 0.0
    %8351 = vmatpush1.xpose.msra.mxu0 0.0
    %8352 = vmatprep.subr.mxu0 0.0
    %8353 = vmatpush1.xpose.msra.mxu0 0.0
    %8354 = vmatprep.subr.mxu0 0.0
    %8355 = vmatpush1.xpose.msra.mxu0 0.0
    %8356 = vmatprep.subr.mxu0 0.0
    %8357 = vmatpush1.xpose.msra.mxu0 0.0
    %8358 = vmatprep.subr.mxu0 0.0
    %8359 = vmatpush1.xpose.msra.mxu0 0.0
    %8360 = vmatprep.mubr.f32.mxu0 %v8147
    %8361 = vmatmul.mubr.f32.gmra.mrb[0].mxu0 %v8146
    %v8362 = vpop.f32.mrb[0].mxu0
    %v8363 = vadd.f32 0.0, %v8362
    %v8364 = vpop.f32.mrb[0].mxu0
    %8365 = vdwg.mxu0
    %8366 = vmatprep.subr.mxu0 %v8135
    %8367 = vmatpush1.xpose.msra.mxu0 %v8134
    %8368 = vmatprep.subr.mxu0 0.0
    %8369 = vmatpush1.xpose.msra.mxu0 0.0
    %8370 = vmatprep.subr.mxu0 0.0
    %8371 = vmatpush1.xpose.msra.mxu0 0.0
    %8372 = vmatprep.subr.mxu0 0.0
    %8373 = vmatpush1.xpose.msra.mxu0 0.0
    %8374 = vmatprep.subr.mxu0 0.0
    %8375 = vmatpush1.xpose.msra.mxu0 0.0
    %8376 = vmatprep.subr.mxu0 0.0
    %8377 = vmatpush1.xpose.msra.mxu0 0.0
    %8378 = vmatprep.subr.mxu0 0.0
    %8379 = vmatpush1.xpose.msra.mxu0 0.0
    %8380 = vmatprep.subr.mxu0 0.0
    %8381 = vmatpush1.xpose.msra.mxu0 0.0
    %8382 = vmatprep.subr.mxu0 0.0
    %8383 = vmatpush1.xpose.msra.mxu0 0.0
    %8384 = vmatprep.subr.mxu0 0.0
    %8385 = vmatpush1.xpose.msra.mxu0 0.0
    %8386 = vmatprep.subr.mxu0 0.0
    %8387 = vmatpush1.xpose.msra.mxu0 0.0
    %8388 = vmatprep.subr.mxu0 0.0
    %8389 = vmatpush1.xpose.msra.mxu0 0.0
    %8390 = vmatprep.subr.mxu0 0.0
    %8391 = vmatpush1.xpose.msra.mxu0 0.0
    %8392 = vmatprep.subr.mxu0 0.0
    %8393 = vmatpush1.xpose.msra.mxu0 0.0
    %8394 = vmatprep.subr.mxu0 0.0
    %8395 = vmatpush1.xpose.msra.mxu0 0.0
    %8396 = vmatprep.subr.mxu0 0.0
    %8397 = vmatpush1.xpose.msra.mxu0 0.0
    %8398 = vmatprep.subr.mxu0 0.0
    %8399 = vmatpush1.xpose.msra.mxu0 0.0
    %8400 = vmatprep.subr.mxu0 0.0
    %8401 = vmatpush1.xpose.msra.mxu0 0.0
    %8402 = vmatprep.subr.mxu0 0.0
    %8403 = vmatpush1.xpose.msra.mxu0 0.0
    %8404 = vmatprep.subr.mxu0 0.0
    %8405 = vmatpush1.xpose.msra.mxu0 0.0
    %8406 = vmatprep.subr.mxu0 0.0
    %8407 = vmatpush1.xpose.msra.mxu0 0.0
    %8408 = vmatprep.subr.mxu0 0.0
    %8409 = vmatpush1.xpose.msra.mxu0 0.0
    %8410 = vmatprep.subr.mxu0 0.0
    %8411 = vmatpush1.xpose.msra.mxu0 0.0
    %8412 = vmatprep.subr.mxu0 0.0
    %8413 = vmatpush1.xpose.msra.mxu0 0.0
    %8414 = vmatprep.subr.mxu0 0.0
    %8415 = vmatpush1.xpose.msra.mxu0 0.0
    %8416 = vmatprep.subr.mxu0 0.0
    %8417 = vmatpush1.xpose.msra.mxu0 0.0
    %8418 = vmatprep.subr.mxu0 0.0
    %8419 = vmatpush1.xpose.msra.mxu0 0.0
    %8420 = vmatprep.subr.mxu0 0.0
    %8421 = vmatpush1.xpose.msra.mxu0 0.0
    %8422 = vmatprep.subr.mxu0 0.0
    %8423 = vmatpush1.xpose.msra.mxu0 0.0
    %8424 = vmatprep.subr.mxu0 0.0
    %8425 = vmatpush1.xpose.msra.mxu0 0.0
    %8426 = vmatprep.subr.mxu0 0.0
    %8427 = vmatpush1.xpose.msra.mxu0 0.0
    %8428 = vmatprep.subr.mxu0 0.0
    %8429 = vmatpush1.xpose.msra.mxu0 0.0
    %8430 = vmatprep.mubr.f32.mxu0 %v8149
    %8431 = vmatmul.mubr.f32.gmra.mrb[0].mxu0 %v8148
    %v8432 = vpop.f32.mrb[0].mxu0
    %v8433 = vadd.f32 %v8363, %v8432
    %v8434 = vpop.f32.mrb[0].mxu0
    %8435 = vdwg.mxu0
    %v8436 = vmul.f32 %v8294, %v8433
    %v8437 = vmul.f32 %v8132, %v8146
    %v8438 = vmul.f32 %v8133, %v8147
    %v8439 = vmul.f32 %v8134, %v8148
    %v8440 = vmul.f32 %v8135, %v8149
    %v8441 = vadd.f32 %v8437, %v8438
    %v8442 = vadd.f32 %v8441, %v8439
    %v8443 = vadd.f32 %v8442, %v8440
    %8444 = vadd.xlane.f32.xlu0 %v8443
    %v8445 = vpop.xlane.xlu0 %8444
    %v8446 = vrot.slane %v8445, 4
    %v8447 = vadd.f32 %v8445, %v8446
    %v8448 = vrot.slane %v8447, 2
    %v8449 = vadd.f32 %v8447, %v8448
    %v8450 = vrot.slane %v8449, 1
    %v8451 = vadd.f32 %v8449, %v8450
    %s8452 = vtos %v8451
    %s8453 = smul.f32 %s8153, %s8452
    %vm8454 = vcmask 64512
    %v8455 = vsel %vm8454, %v8295, -inf
    %8456 = vmax.xlane.f32.xlu0 %v8455
    %v8457 = vpop.xlane.xlu0 %8456
    %v8458 = vsub.f32 %v8295, %v8457
    %v8459 = vmul.f32 %v8458, 1.442695
    %v8460 = vpow.pop %v8459
    %v8461 = vsel %vm8454, %v8460, 0.0
    %8462 = vadd.xlane.f32.xlu0 %v8461
    %v8463 = vpop.xlane.xlu0 %8462
    %v8464 = vlog2.pop %v8463
    %v8465 = vmul.f32 %v8464, 0.6931472
    %v8466 = vadd.f32 %v8465, %v8457
    %vm8467 = vcmask 7168
    %v8468 = vsel %vm8467, %v8466, 0.0
    %8469 = vadd.xlane.f32.xlu0 %v8468
    %v8470 = vpop.xlane.xlu0 %8469
    %v8471 = vrot.slane %v8470, 4
    %v8472 = vadd.f32 %v8470, %v8471
    %v8473 = vrot.slane %v8472, 2
    %v8474 = vadd.f32 %v8472, %v8473
    %v8475 = vrot.slane %v8474, 1
    %v8476 = vadd.f32 %v8474, %v8475
    %s8477 = vtos %v8476
    %s8478 = ssub.f32 %s8477, %s8453
    %v8479 = vrcp.pop 8.0
    %s8480 = vtos %v8479
    %s8481 = smul.f32 %s8478, %s8480
    %v8482 = vsel %vm8454, %v8436, -inf
    %8483 = vmax.xlane.f32.xlu0 %v8482
    %v8484 = vpop.xlane.xlu0 %8483
    %v8485 = vsub.f32 %v8436, %v8484
    %v8486 = vmul.f32 %v8485, 1.442695
    %v8487 = vpow.pop %v8486
    %v8488 = vsel %vm8454, %v8487, 0.0
    %8489 = vadd.xlane.f32.xlu0 %v8488
    %v8490 = vpop.xlane.xlu0 %8489
    %v8491 = vlog2.pop %v8490
    %v8492 = vmul.f32 %v8491, 0.6931472
    %v8493 = vadd.f32 %v8492, %v8484
    %v8494 = vsel %vm8467, %v8493, 0.0
    %8495 = vadd.xlane.f32.xlu0 %v8494
    %v8496 = vpop.xlane.xlu0 %8495
    %v8497 = vrot.slane %v8496, 4
    %v8498 = vadd.f32 %v8496, %v8497
    %v8499 = vrot.slane %v8498, 2
    %v8500 = vadd.f32 %v8498, %v8499
    %v8501 = vrot.slane %v8500, 1
    %v8502 = vadd.f32 %v8500, %v8501
    %s8503 = vtos %v8502
    %s8504 = ssub.f32 %s8503, %s8453
    %v8505 = vrcp.pop 8.0
    %s8506 = vtos %v8505
    %s8507 = smul.f32 %s8504, %s8506
    %s8508 = sadd.f32 %s8481, %s8507
    %s8509 = smul.f32 %s8508, 0.5
    %s8510 = scalar_lea.smem [#allocation20], 0
    %8511 = sst [smem:[%s8510]] %s8509
    // Predicated region
    $region78: #{tpu_custom_call.1} parent=1 // pred_check
      _
    $region79: #{tpu_custom_call.1} parent=1 // pred_check_branch
      %8513 = sbr.rel (0) target = $region81
    $region80: #{tpu_custom_call.1} parent=1 // pred_region
      %s8515 = ssub.s32 512, 512
      %8516 = vsyncadd [#allocation5], %s8515
      %s8518 = sshll.u32 [#allocation19], 4
      %s8519 = int_to_ptr.vmem [resolvable:$true] %s8518
      %8521 = dma.vmem_to_hbm [thread:$0]  %s8519, 512, %s10, [#allocation5]
    $region81: #{tpu_custom_call.1} parent=1 // pred_fallthru
      _
    // Predicated region
    $region82: #{tpu_custom_call.1} parent=1 // pred_check
      _
    $region83: #{tpu_custom_call.1} parent=1 // pred_check_branch
      %8523 = sbr.rel (0) target = $region85
    $region84: #{tpu_custom_call.1} parent=1 // pred_region
      %s8525 = ssub.s32 16, 16
      %8526 = vsyncadd [#allocation6], %s8525
      %8529 = dma.smem_to_hbm [#allocation20], 16, %s11, [#allocation6]
    $region85: #{tpu_custom_call.1} parent=1 // pred_fallthru
      _
    // Predicated region
    $region86: #{tpu_custom_call.1} parent=1 // pred_check
      _
    $region87: #{tpu_custom_call.1} parent=1 // pred_check_branch
      %8531 = sbr.rel (0) target = $region89
    $region88: #{tpu_custom_call.1} parent=1 // pred_region
      %8532 = dma.done [#allocation5], 512
    $region89: #{tpu_custom_call.1} parent=1 // pred_fallthru
      _
    // Predicated region
    $region90: #{tpu_custom_call.1} parent=1 // pred_check
      _
    $region91: #{tpu_custom_call.1} parent=1 // pred_check_branch
      %8534 = sbr.rel (0) target = $region93
    $region92: #{tpu_custom_call.1} parent=1 // pred_region
      %8535 = dma.done [#allocation6], 16
    $region93: #{tpu_custom_call.1} parent=1 // pred_fallthru
      _
    %8536 = sfence
    %8537 = vsyncpa [#allocation4], 1
    %8538 = vsyncpa [#allocation8], 1
    %8539 = vsyncpa [#allocation11], 1
    %8540 = vsyncpa [#allocation14], 1
    %8541 = vsyncpa [#allocation17], 1
    %8542 = vsyncpa [#allocation5], 1
    %8543 = vsyncpa [#allocation6], 1

</llo_original>
